<compile_context>
chip_gen: v7x
topology: tpu7x:2x2x1
jax: 0.10.0
libtpu: 0.0.40
codegen_flags: <defaults>
</compile_context>

<pallas_src>
import functools

import numpy as np
import jax
import jax.numpy as jnp
from jax.experimental import pallas as pl
from jax.experimental.pallas import tpu as pltpu

NUM_LAYERS = 6          # `numLayers` in the PyTorch script (input channels)
KSIZE = 4
STRIDE = 2
PAD = 1
CHANNELS = (NUM_LAYERS, 16, 32, 32)   # conv1: 6->16, conv2: 16->32, conv3: 32->32


def _out_hw(size):
    return (size + 2 * PAD - KSIZE) // STRIDE + 1


@functools.lru_cache(maxsize=None)
def _im2col_structure(h_in, w_in):
    """Constant 0/1 tensor S of shape (H*W, K*K, Ho*Wo).

    S[p_in, t, p_out] = 1 iff kernel tap t = kh*K + kw applied at output pixel
    p_out = oh*Wo + ow reads input pixel p_in = ih*W + iw.  Out-of-bounds taps
    (the implicit zero padding) are simply absent (all-zero).
    """
    h_out, w_out = _out_hw(h_in), _out_hw(w_in)
    s = np.zeros((h_in * w_in, KSIZE * KSIZE, h_out * w_out), np.float32)
    for kh in range(KSIZE):
        for kw in range(KSIZE):
            t = kh * KSIZE + kw
            for oh in range(h_out):
                ih = oh * STRIDE - PAD + kh
                if ih < 0 or ih >= h_in:
                    continue
                for ow in range(w_out):
                    iw = ow * STRIDE - PAD + kw
                    if iw < 0 or iw >= w_in:
                        continue
                    s[ih * w_in + iw, t, oh * w_out + ow] = 1.0
    return s


# ---------------------------------------------------------------------------
# Pallas kernel: the whole 3-layer CNN as 3 lane-dense MXU matmuls, all in VMEM.
# ---------------------------------------------------------------------------
def _fused_cnn_kernel(x_ref,
                      m1_ref, b1_ref,
                      m2_ref, b2_ref,
                      m3_ref, b3_ref,
                      o1_ref, o2_ref, o3_ref):
    def layer(x_bf16, m_ref, b_ref):
        # x: (N, Cin*H*W) bf16, m: (Cin*H*W, Cout*Ho*Wo) bf16, b: (1, Cout*Ho*Wo) f32
        y = jnp.dot(x_bf16, m_ref[...], preferred_element_type=jnp.float32)
        return jnp.maximum(y + b_ref[...], 0.0)            # (N, Cout*Ho*Wo) f32

    y1 = layer(x_ref[...], m1_ref, b1_ref)                 # (N, 1024)
    y2 = layer(y1.astype(m2_ref.dtype), m2_ref, b2_ref)    # (N, 512)
    y3 = layer(y2.astype(m3_ref.dtype), m3_ref, b3_ref)    # (N, 128)
    # Whole-tile, lane-dense stores (rows are flattened NCHW feature maps).
    o1_ref[...] = y1
    o2_ref[...] = y2
    o3_ref[...] = y3


# ---------------------------------------------------------------------------
# Module: parameters + forward
# ---------------------------------------------------------------------------
def init_params(key):
    """Deterministic init mimicking torch Conv2d default (kaiming-uniform-ish)."""
    def conv_params(k, cin, cout, ksz):
        kw_key, kb_key = jax.random.split(k)
        fan_in = cin * ksz * ksz
        bound = 1.0 / jnp.sqrt(jnp.float32(fan_in))
        w = jax.random.uniform(kw_key, (cout, cin, ksz, ksz), jnp.float32, -bound, bound)
        bb = jax.random.uniform(kb_key, (cout,), jnp.float32, -bound, bound)
        return w, bb

    k1, k2, k3 = jax.random.split(key, 3)
    return {
        "conv1": conv_params(k1, CHANNELS[0], CHANNELS[1], KSIZE),
        "conv2": conv_params(k2, CHANNELS[1], CHANNELS[2], KSIZE),
        "conv3": conv_params(k3, CHANNELS[2], CHANNELS[3], KSIZE),
    }


def cnn_features_forward(params, x_nchw):
    """Matches CNNFeatures.forward: returns (flat, [feat1, feat2, feat3]) in NCHW."""
    n, c_in, h, w = x_nchw.shape
    assert c_in == CHANNELS[0]

    # Static per-layer dims: (cin, cout, h_in, w_in, h_out, w_out).
    dims = []
    hh, ww = h, w
    for li in range(3):
        ho, wo = _out_hw(hh), _out_hw(ww)
        dims.append((CHANNELS[li], CHANNELS[li + 1], hh, ww, ho, wo))
        hh, ww = ho, wo

    def fold_layer(li):
        # Fold conv weights + im2col structure into one (Cin*H*W, Cout*Ho*Wo)
        # matrix and a pre-broadcast (1, Cout*Ho*Wo) bias row (review items 1,5,8).
        cin, cout, hi, wi, ho, wo = dims[li]
        wgt, bias = params[f"conv{li + 1}"]                 # (Cout,Cin,K,K), (Cout,)
        s = jnp.asarray(_im2col_structure(hi, wi))          # (H*W, K*K, Ho*Wo) const
        w_taps = wgt.reshape(cout, cin, KSIZE * KSIZE)
        m = jnp.einsum('oit,ptq->ipoq', w_taps, s)
        m = m.reshape(cin * hi * wi, cout * ho * wo).astype(jnp.bfloat16)
        brow = jnp.broadcast_to(bias[:, None], (cout, ho * wo))
        return m, brow.reshape(1, cout * ho * wo).astype(jnp.float32)

    (m1, b1), (m2, b2), (m3, b3) = fold_layer(0), fold_layer(1), fold_layer(2)

    flat_sizes = [dims[li][1] * dims[li][4] * dims[li][5] for li in range(3)]

    # (N, C, H, W) -> (N, C*H*W): free row-major reshape (already NCHW order);
    # bf16 matmul operands, f32 accumulation inside the kernel.
    x2 = x_nchw.reshape(n, c_in * h * w).astype(jnp.bfloat16)

    full = lambda arr: pl.BlockSpec(arr.shape, lambda b: (0, 0))

    o1, o2, o3 = pl.pallas_call(
        _fused_cnn_kernel,
        grid=(1,),   # single step over the whole batch; see v7x TODO above
        out_shape=tuple(
            jax.ShapeDtypeStruct((n, fs), jnp.float32) for fs in flat_sizes),
        in_specs=[
            pl.BlockSpec((n, c_in * h * w), lambda b: (0, 0)),   # activations
            full(m1), full(b1),                                  # layer 1 consts
            full(m2), full(b2),                                  # layer 2 consts
            full(m3), full(b3),                                  # layer 3 consts
        ],
        out_specs=tuple(
            pl.BlockSpec((n, fs), lambda b: (0, 0)) for fs in flat_sizes),
        compiler_params=pltpu.CompilerParams(
            dimension_semantics=("arbitrary",)),
    )(x2, m1, b1, m2, b2, m3, b3)

    # Free row-major reshapes back to torch conventions (no transposes needed).
    feat1 = o1.reshape(n, dims[0][1], dims[0][4], dims[0][5])
    feat2 = o2.reshape(n, dims[1][1], dims[1][4], dims[1][5])
    feat3 = o3.reshape(n, dims[2][1], dims[2][4], dims[2][5])
    flat = o3.reshape(n, flat_sizes[2])   # nn.Flatten() on NCHW, channel-major
    # note: torch's x.clone() is a no-op under JAX functional semantics
    return flat, [feat1, feat2, feat3]


# Pure-JAX reference (lax.conv) for correctness checking
def _ref_forward(params, x_nchw):
    def conv(x, w, b):
        y = jax.lax.conv_general_dilated(
            x, w, window_strides=(STRIDE, STRIDE),
            padding=((PAD, PAD), (PAD, PAD)),
            dimension_numbers=("NCHW", "OIHW", "NCHW"))
        return jnp.maximum(y + b[None, :, None, None], 0.0)

    y1 = conv(x_nchw, *params["conv1"])
    y2 = conv(y1, *params["conv2"])
    y3 = conv(y2, *params["conv3"])
    return y3.reshape(y3.shape[0], -1), [y1, y2, y3]


if __name__ == "__main__":
    key = jax.random.PRNGKey(0)
    k_x, k_p = jax.random.split(key)

    # Small shapes consistent with the module: batch=2, channels=numLayers=6, 16x16 spatial
    x = jax.random.normal(k_x, (2, NUM_LAYERS, 16, 16), jnp.float32)
    params = init_params(k_p)

    fwd = jax.jit(cnn_features_forward)
    flat, feats = fwd(params, x)
    jax.block_until_ready(flat)
    for f in feats:
        jax.block_until_ready(f)

    # Shape checks (16x16 -> 8x8 -> 4x4 -> 2x2)
    assert flat.shape == (2, 32 * 2 * 2)
    assert feats[0].shape == (2, 16, 8, 8)
    assert feats[1].shape == (2, 32, 4, 4)
    assert feats[2].shape == (2, 32, 2, 2)

    # Numerical check against pure-JAX f32 convolution reference.
    # (2e-2: matmul operands are bf16 with f32 accumulation, per the review.)
    ref_flat, ref_feats = _ref_forward(params, x)
    assert jnp.allclose(flat, ref_flat, rtol=2e-2, atol=2e-2)
    for got, ref in zip(feats, ref_feats):
        assert jnp.allclose(got, ref, rtol=2e-2, atol=2e-2)

    print("KERNEL_OK")
</pallas_src>

<mosaic_0001>
module attributes {stable_mosaic.version = 11 : i64} {
  func.func @_fused_cnn_kernel(%arg0: i32, %arg1: memref<2x1536xbf16, #tpu.memory_space<vmem>>, %arg2: memref<1536x1024xbf16, #tpu.memory_space<vmem>>, %arg3: memref<1x1024xf32, #tpu.memory_space<vmem>>, %arg4: memref<1024x512xbf16, #tpu.memory_space<vmem>>, %arg5: memref<1x512xf32, #tpu.memory_space<vmem>>, %arg6: memref<512x128xbf16, #tpu.memory_space<vmem>>, %arg7: memref<1x128xf32, #tpu.memory_space<vmem>>, %arg8: memref<2x1024xf32, #tpu.memory_space<vmem>>, %arg9: memref<2x512xf32, #tpu.memory_space<vmem>>, %arg10: memref<2x128xf32, #tpu.memory_space<vmem>>) attributes {dimension_semantics = [#tpu.dimension_semantics<arbitrary>], iteration_bounds = array<i64: 1>, scalar_prefetch = 0 : i64, scratch_operands = 0 : i64, tpu.core_type = #tpu.core_type<tc>, window_params = [{pipeline_mode = #tpu.pipeline_mode<synchronous>, transform_indices = @transform_0, window_bounds = array<i64: 2, 1536>}, {pipeline_mode = #tpu.pipeline_mode<synchronous>, transform_indices = @transform_1, window_bounds = array<i64: 1536, 1024>}, {pipeline_mode = #tpu.pipeline_mode<synchronous>, transform_indices = @transform_2, window_bounds = array<i64: 1, 1024>}, {pipeline_mode = #tpu.pipeline_mode<synchronous>, transform_indices = @transform_3, window_bounds = array<i64: 1024, 512>}, {pipeline_mode = #tpu.pipeline_mode<synchronous>, transform_indices = @transform_4, window_bounds = array<i64: 1, 512>}, {pipeline_mode = #tpu.pipeline_mode<synchronous>, transform_indices = @transform_5, window_bounds = array<i64: 512, 128>}, {pipeline_mode = #tpu.pipeline_mode<synchronous>, transform_indices = @transform_6, window_bounds = array<i64: 1, 128>}, {pipeline_mode = #tpu.pipeline_mode<synchronous>, transform_indices = @transform_7, window_bounds = array<i64: 2, 1024>}, {pipeline_mode = #tpu.pipeline_mode<synchronous>, transform_indices = @transform_8, window_bounds = array<i64: 2, 512>}, {pipeline_mode = #tpu.pipeline_mode<synchronous>, transform_indices = @transform_9, window_bounds = array<i64: 2, 128>}]} {
    %c0 = arith.constant 0 : index
    %c0_0 = arith.constant 0 : index
    %0 = vector.load %arg1[%c0, %c0_0] : memref<2x1536xbf16, #tpu.memory_space<vmem>>, vector<2x1536xbf16>
    %c0_1 = arith.constant 0 : index
    %c0_2 = arith.constant 0 : index
    %1 = vector.load %arg2[%c0_1, %c0_2] : memref<1536x1024xbf16, #tpu.memory_space<vmem>>, vector<1536x1024xbf16>
    %cst = arith.constant dense<0.000000e+00> : vector<2x1024xf32>
    %2 = tpu.matmul %0, %1, %cst {dimension_numbers = #tpu.dot_dimension_numbers<[1], [0], [0], [1], [0, 0, 1, 1], [], []>} : vector<2x1536xbf16>, vector<1536x1024xbf16>, vector<2x1024xf32> -> vector<2x1024xf32>
    %c0_3 = arith.constant 0 : index
    %c0_4 = arith.constant 0 : index
    %3 = vector.load %arg3[%c0_3, %c0_4] : memref<1x1024xf32, #tpu.memory_space<vmem>>, vector<1x1024xf32>
    %4 = vector.broadcast %3 : vector<1x1024xf32> to vector<2x1024xf32>
    %5 = arith.addf %2, %4 : vector<2x1024xf32>
    %cst_5 = arith.constant 0.000000e+00 : f32
    %6 = vector.broadcast %cst_5 : f32 to vector<2x1024xf32>
    %7 = arith.maximumf %5, %6 : vector<2x1024xf32>
    %8 = arith.truncf %7 : vector<2x1024xf32> to vector<2x1024xbf16>
    %c0_6 = arith.constant 0 : index
    %c0_7 = arith.constant 0 : index
    %9 = vector.load %arg4[%c0_6, %c0_7] : memref<1024x512xbf16, #tpu.memory_space<vmem>>, vector<1024x512xbf16>
    %cst_8 = arith.constant dense<0.000000e+00> : vector<2x512xf32>
    %10 = tpu.matmul %8, %9, %cst_8 {dimension_numbers = #tpu.dot_dimension_numbers<[1], [0], [0], [1], [0, 0, 1, 1], [], []>} : vector<2x1024xbf16>, vector<1024x512xbf16>, vector<2x512xf32> -> vector<2x512xf32>
    %c0_9 = arith.constant 0 : index
    %c0_10 = arith.constant 0 : index
    %11 = vector.load %arg5[%c0_9, %c0_10] : memref<1x512xf32, #tpu.memory_space<vmem>>, vector<1x512xf32>
    %12 = vector.broadcast %11 : vector<1x512xf32> to vector<2x512xf32>
    %13 = arith.addf %10, %12 : vector<2x512xf32>
    %cst_11 = arith.constant 0.000000e+00 : f32
    %14 = vector.broadcast %cst_11 : f32 to vector<2x512xf32>
    %15 = arith.maximumf %13, %14 : vector<2x512xf32>
    %16 = arith.truncf %15 : vector<2x512xf32> to vector<2x512xbf16>
    %c0_12 = arith.constant 0 : index
    %c0_13 = arith.constant 0 : index
    %17 = vector.load %arg6[%c0_12, %c0_13] : memref<512x128xbf16, #tpu.memory_space<vmem>>, vector<512x128xbf16>
    %cst_14 = arith.constant dense<0.000000e+00> : vector<2x128xf32>
    %18 = tpu.matmul %16, %17, %cst_14 {dimension_numbers = #tpu.dot_dimension_numbers<[1], [0], [0], [1], [0, 0, 1, 1], [], []>} : vector<2x512xbf16>, vector<512x128xbf16>, vector<2x128xf32> -> vector<2x128xf32>
    %c0_15 = arith.constant 0 : index
    %c0_16 = arith.constant 0 : index
    %19 = vector.load %arg7[%c0_15, %c0_16] : memref<1x128xf32, #tpu.memory_space<vmem>>, vector<1x128xf32>
    %20 = vector.broadcast %19 : vector<1x128xf32> to vector<2x128xf32>
    %21 = arith.addf %18, %20 : vector<2x128xf32>
    %cst_17 = arith.constant 0.000000e+00 : f32
    %22 = vector.broadcast %cst_17 : f32 to vector<2x128xf32>
    %23 = arith.maximumf %21, %22 : vector<2x128xf32>
    %c0_18 = arith.constant 0 : index
    %c0_19 = arith.constant 0 : index
    %24 = vector.load %arg8[%c0_18, %c0_19] : memref<2x1024xf32, #tpu.memory_space<vmem>>, vector<2x1024xf32>
    tpu.vector_store %arg8[%c0_18, %c0_19], %7 {strides = array<i32>} : memref<2x1024xf32, #tpu.memory_space<vmem>>, vector<2x1024xf32>,
    %c0_20 = arith.constant 0 : index
    %c0_21 = arith.constant 0 : index
    %25 = vector.load %arg9[%c0_20, %c0_21] : memref<2x512xf32, #tpu.memory_space<vmem>>, vector<2x512xf32>
    tpu.vector_store %arg9[%c0_20, %c0_21], %15 {strides = array<i32>} : memref<2x512xf32, #tpu.memory_space<vmem>>, vector<2x512xf32>,
    %c0_22 = arith.constant 0 : index
    %c0_23 = arith.constant 0 : index
    %26 = vector.load %arg10[%c0_22, %c0_23] : memref<2x128xf32, #tpu.memory_space<vmem>>, vector<2x128xf32>
    tpu.vector_store %arg10[%c0_22, %c0_23], %23 {strides = array<i32>} : memref<2x128xf32, #tpu.memory_space<vmem>>, vector<2x128xf32>,
    return
  }
  func.func @transform_0(%arg0: i32) -> (i32, i32) {
    %c0_i32 = arith.constant 0 : i32
    %c0_i32_0 = arith.constant 0 : i32
    %c0_i32_1 = arith.constant 0 : i32
    return %c0_i32, %c0_i32_0 : i32, i32
  }
  func.func @transform_1(%arg0: i32) -> (i32, i32) {
    %c0_i32 = arith.constant 0 : i32
    %c0_i32_0 = arith.constant 0 : i32
    %c0_i32_1 = arith.constant 0 : i32
    return %c0_i32, %c0_i32_0 : i32, i32
  }
  func.func @transform_2(%arg0: i32) -> (i32, i32) {
    %c0_i32 = arith.constant 0 : i32
    %c0_i32_0 = arith.constant 0 : i32
    %c0_i32_1 = arith.constant 0 : i32
    return %c0_i32, %c0_i32_0 : i32, i32
  }
  func.func @transform_3(%arg0: i32) -> (i32, i32) {
    %c0_i32 = arith.constant 0 : i32
    %c0_i32_0 = arith.constant 0 : i32
    %c0_i32_1 = arith.constant 0 : i32
    return %c0_i32, %c0_i32_0 : i32, i32
  }
  func.func @transform_4(%arg0: i32) -> (i32, i32) {
    %c0_i32 = arith.constant 0 : i32
    %c0_i32_0 = arith.constant 0 : i32
    %c0_i32_1 = arith.constant 0 : i32
    return %c0_i32, %c0_i32_0 : i32, i32
  }
  func.func @transform_5(%arg0: i32) -> (i32, i32) {
    %c0_i32 = arith.constant 0 : i32
    %c0_i32_0 = arith.constant 0 : i32
    %c0_i32_1 = arith.constant 0 : i32
    return %c0_i32, %c0_i32_0 : i32, i32
  }
  func.func @transform_6(%arg0: i32) -> (i32, i32) {
    %c0_i32 = arith.constant 0 : i32
    %c0_i32_0 = arith.constant 0 : i32
    %c0_i32_1 = arith.constant 0 : i32
    return %c0_i32, %c0_i32_0 : i32, i32
  }
  func.func @transform_7(%arg0: i32) -> (i32, i32) {
    %c0_i32 = arith.constant 0 : i32
    %c0_i32_0 = arith.constant 0 : i32
    %c0_i32_1 = arith.constant 0 : i32
    return %c0_i32, %c0_i32_0 : i32, i32
  }
  func.func @transform_8(%arg0: i32) -> (i32, i32) {
    %c0_i32 = arith.constant 0 : i32
    %c0_i32_0 = arith.constant 0 : i32
    %c0_i32_1 = arith.constant 0 : i32
    return %c0_i32, %c0_i32_0 : i32, i32
  }
  func.func @transform_9(%arg0: i32) -> (i32, i32) {
    %c0_i32 = arith.constant 0 : i32
    %c0_i32_0 = arith.constant 0 : i32
    %c0_i32_1 = arith.constant 0 : i32
    return %c0_i32, %c0_i32_0 : i32, i32
  }
}

</mosaic_0001>

<llo_original>
// kernel: cnn_features_forward.1
$region0: #{cnn_features_forward.1}
  #allocation0 [shape = 'u32[]', space=smem, size = 0x4, offset = 0x4, fixed_abs, tag = 'smem constant byte address 0x4 - core index']
  #allocation1 [shape = 'u32[144,128]{1,0:T(1,128)}', space=vmem, size = 0x12000, scoped, tag = 'internal scratch']
  %s0 = inlined_call_operand.vmem [shape: bf16[2,1536], index: 0, kind: input, shape index: {}]
  %s1 = inlined_call_operand.vmem [shape: bf16[1536,1024], index: 1, kind: input, shape index: {}]
  %s2 = inlined_call_operand.vmem [shape: f32[1,1024], index: 2, kind: input, shape index: {}]
  %s3 = inlined_call_operand.vmem [shape: bf16[1024,512], index: 3, kind: input, shape index: {}]
  %s4 = inlined_call_operand.vmem [shape: f32[1,512], index: 4, kind: input, shape index: {}]
  %s5 = inlined_call_operand.vmem [shape: bf16[512,128], index: 5, kind: input, shape index: {}]
  %s6 = inlined_call_operand.vmem [shape: f32[1,128], index: 6, kind: input, shape index: {}]
  %s7 = inlined_call_operand.vmem [shape: f32[2,1024], index: 7, kind: output, shape index: {0}]
  %s8 = inlined_call_operand.vmem [shape: f32[2,512], index: 8, kind: output, shape index: {1}]
  %s9 = inlined_call_operand.vmem [shape: f32[2,128], index: 9, kind: output, shape index: {2}]
  %10 = xla_tuple %s7, %s8, %s9
  %s11 = sld [smem:[#allocation0]]
  $region54: #{cnn_features_forward.1} parent=0
    _
  %s13 = ssub.s32 1, %s11
  %s14 = scalar_select 0, %s13, %s11
  // Predicated region
  $region2: #{cnn_features_forward.1} parent=0 // pred_check
    _
  $region3: #{cnn_features_forward.1} parent=0 // pred_check_branch
    %16 = sbr.rel (0) target = $region5
  $region4: #{cnn_features_forward.1} parent=0 // pred_region
    _
  $region5: #{cnn_features_forward.1} parent=0 // pred_fallthru
    _
  // Predicated region
  $region6: #{cnn_features_forward.1} parent=0 // pred_check
    _
  $region7: #{cnn_features_forward.1} parent=0 // pred_check_branch
    %18 = sbr.rel (0) target = $region9
  $region8: #{cnn_features_forward.1} parent=0 // pred_region
    _
  $region9: #{cnn_features_forward.1} parent=0 // pred_fallthru
    _
  // Predicated region
  $region10: #{cnn_features_forward.1} parent=0 // pred_check
    _
  $region11: #{cnn_features_forward.1} parent=0 // pred_check_branch
    %20 = sbr.rel (0) target = $region13
  $region12: #{cnn_features_forward.1} parent=0 // pred_region
    _
  $region13: #{cnn_features_forward.1} parent=0 // pred_fallthru
    _
  // Predicated region
  $region14: #{cnn_features_forward.1} parent=0 // pred_check
    _
  $region15: #{cnn_features_forward.1} parent=0 // pred_check_branch
    %22 = sbr.rel (0) target = $region17
  $region16: #{cnn_features_forward.1} parent=0 // pred_region
    _
  $region17: #{cnn_features_forward.1} parent=0 // pred_fallthru
    _
  // Predicated region
  $region18: #{cnn_features_forward.1} parent=0 // pred_check
    _
  $region19: #{cnn_features_forward.1} parent=0 // pred_check_branch
    %24 = sbr.rel (0) target = $region21
  $region20: #{cnn_features_forward.1} parent=0 // pred_region
    _
  $region21: #{cnn_features_forward.1} parent=0 // pred_fallthru
    _
  // Predicated region
  $region22: #{cnn_features_forward.1} parent=0 // pred_check
    _
  $region23: #{cnn_features_forward.1} parent=0 // pred_check_branch
    %26 = sbr.rel (0) target = $region25
  $region24: #{cnn_features_forward.1} parent=0 // pred_region
    _
  $region25: #{cnn_features_forward.1} parent=0 // pred_fallthru
    _
  // Predicated region
  $region26: #{cnn_features_forward.1} parent=0 // pred_check
    _
  $region27: #{cnn_features_forward.1} parent=0 // pred_check_branch
    %28 = sbr.rel (0) target = $region29
  $region28: #{cnn_features_forward.1} parent=0 // pred_region
    _
  $region29: #{cnn_features_forward.1} parent=0 // pred_fallthru
    _
  %v30 = vld [vmem:[%s0] sm:$0xff]
  %v31 = vld [vmem:[%s0 + $0x8] sm:$0xf]
  %v32 = vld [vmem:[%s1] sm:$0xff]
  %v33 = vld [vmem:[%s1 + $0x8] sm:$0xff]
  %v34 = vld [vmem:[%s1 + $0x10] sm:$0xff]
  %v35 = vld [vmem:[%s1 + $0x18] sm:$0xff]
  %v36 = vld [vmem:[%s1 + $0x20] sm:$0xff]
  %v37 = vld [vmem:[%s1 + $0x28] sm:$0xff]
  %v38 = vld [vmem:[%s1 + $0x30] sm:$0xff]
  %v39 = vld [vmem:[%s1 + $0x38] sm:$0xff]
  %v40 = vld [vmem:[%s1 + $0x40] sm:$0xff]
  %v41 = vld [vmem:[%s1 + $0x48] sm:$0xff]
  %v42 = vld [vmem:[%s1 + $0x50] sm:$0xff]
  %v43 = vld [vmem:[%s1 + $0x58] sm:$0xff]
  %v44 = vld [vmem:[%s1 + $0x60] sm:$0xff]
  %v45 = vld [vmem:[%s1 + $0x68] sm:$0xff]
  %v46 = vld [vmem:[%s1 + $0x70] sm:$0xff]
  %v47 = vld [vmem:[%s1 + $0x78] sm:$0xff]
  %v48 = vld [vmem:[%s1 + $0x80] sm:$0xff]
  %v49 = vld [vmem:[%s1 + $0x88] sm:$0xff]
  %v50 = vld [vmem:[%s1 + $0x90] sm:$0xff]
  %v51 = vld [vmem:[%s1 + $0x98] sm:$0xff]
  %v52 = vld [vmem:[%s1 + $0xa0] sm:$0xff]
  %v53 = vld [vmem:[%s1 + $0xa8] sm:$0xff]
  %v54 = vld [vmem:[%s1 + $0xb0] sm:$0xff]
  %v55 = vld [vmem:[%s1 + $0xb8] sm:$0xff]
  %v56 = vld [vmem:[%s1 + $0xc0] sm:$0xff]
  %v57 = vld [vmem:[%s1 + $0xc8] sm:$0xff]
  %v58 = vld [vmem:[%s1 + $0xd0] sm:$0xff]
  %v59 = vld [vmem:[%s1 + $0xd8] sm:$0xff]
  %v60 = vld [vmem:[%s1 + $0xe0] sm:$0xff]
  %v61 = vld [vmem:[%s1 + $0xe8] sm:$0xff]
  %v62 = vld [vmem:[%s1 + $0xf0] sm:$0xff]
  %v63 = vld [vmem:[%s1 + $0xf8] sm:$0xff]
  %v64 = vld [vmem:[%s1 + $0x100] sm:$0xff]
  %v65 = vld [vmem:[%s1 + $0x108] sm:$0xff]
  %v66 = vld [vmem:[%s1 + $0x110] sm:$0xff]
  %v67 = vld [vmem:[%s1 + $0x118] sm:$0xff]
  %v68 = vld [vmem:[%s1 + $0x120] sm:$0xff]
  %v69 = vld [vmem:[%s1 + $0x128] sm:$0xff]
  %v70 = vld [vmem:[%s1 + $0x130] sm:$0xff]
  %v71 = vld [vmem:[%s1 + $0x138] sm:$0xff]
  %v72 = vld [vmem:[%s1 + $0x140] sm:$0xff]
  %v73 = vld [vmem:[%s1 + $0x148] sm:$0xff]
  %v74 = vld [vmem:[%s1 + $0x150] sm:$0xff]
  %v75 = vld [vmem:[%s1 + $0x158] sm:$0xff]
  %v76 = vld [vmem:[%s1 + $0x160] sm:$0xff]
  %v77 = vld [vmem:[%s1 + $0x168] sm:$0xff]
  %v78 = vld [vmem:[%s1 + $0x170] sm:$0xff]
  %v79 = vld [vmem:[%s1 + $0x178] sm:$0xff]
  %v80 = vld [vmem:[%s1 + $0x180] sm:$0xff]
  %v81 = vld [vmem:[%s1 + $0x188] sm:$0xff]
  %v82 = vld [vmem:[%s1 + $0x190] sm:$0xff]
  %v83 = vld [vmem:[%s1 + $0x198] sm:$0xff]
  %v84 = vld [vmem:[%s1 + $0x1a0] sm:$0xff]
  %v85 = vld [vmem:[%s1 + $0x1a8] sm:$0xff]
  %v86 = vld [vmem:[%s1 + $0x1b0] sm:$0xff]
  %v87 = vld [vmem:[%s1 + $0x1b8] sm:$0xff]
  %v88 = vld [vmem:[%s1 + $0x1c0] sm:$0xff]
  %v89 = vld [vmem:[%s1 + $0x1c8] sm:$0xff]
  %v90 = vld [vmem:[%s1 + $0x1d0] sm:$0xff]
  %v91 = vld [vmem:[%s1 + $0x1d8] sm:$0xff]
  %v92 = vld [vmem:[%s1 + $0x1e0] sm:$0xff]
  %v93 = vld [vmem:[%s1 + $0x1e8] sm:$0xff]
  %v94 = vld [vmem:[%s1 + $0x1f0] sm:$0xff]
  %v95 = vld [vmem:[%s1 + $0x1f8] sm:$0xff]
  %v96 = vld [vmem:[%s1 + $0x200] sm:$0xff]
  %v97 = vld [vmem:[%s1 + $0x208] sm:$0xff]
  %v98 = vld [vmem:[%s1 + $0x210] sm:$0xff]
  %v99 = vld [vmem:[%s1 + $0x218] sm:$0xff]
  %v100 = vld [vmem:[%s1 + $0x220] sm:$0xff]
  %v101 = vld [vmem:[%s1 + $0x228] sm:$0xff]
  %v102 = vld [vmem:[%s1 + $0x230] sm:$0xff]
  %v103 = vld [vmem:[%s1 + $0x238] sm:$0xff]
  %v104 = vld [vmem:[%s1 + $0x240] sm:$0xff]
  %v105 = vld [vmem:[%s1 + $0x248] sm:$0xff]
  %v106 = vld [vmem:[%s1 + $0x250] sm:$0xff]
  %v107 = vld [vmem:[%s1 + $0x258] sm:$0xff]
  %v108 = vld [vmem:[%s1 + $0x260] sm:$0xff]
  %v109 = vld [vmem:[%s1 + $0x268] sm:$0xff]
  %v110 = vld [vmem:[%s1 + $0x270] sm:$0xff]
  %v111 = vld [vmem:[%s1 + $0x278] sm:$0xff]
  %v112 = vld [vmem:[%s1 + $0x280] sm:$0xff]
  %v113 = vld [vmem:[%s1 + $0x288] sm:$0xff]
  %v114 = vld [vmem:[%s1 + $0x290] sm:$0xff]
  %v115 = vld [vmem:[%s1 + $0x298] sm:$0xff]
  %v116 = vld [vmem:[%s1 + $0x2a0] sm:$0xff]
  %v117 = vld [vmem:[%s1 + $0x2a8] sm:$0xff]
  %v118 = vld [vmem:[%s1 + $0x2b0] sm:$0xff]
  %v119 = vld [vmem:[%s1 + $0x2b8] sm:$0xff]
  %v120 = vld [vmem:[%s1 + $0x2c0] sm:$0xff]
  %v121 = vld [vmem:[%s1 + $0x2c8] sm:$0xff]
  %v122 = vld [vmem:[%s1 + $0x2d0] sm:$0xff]
  %v123 = vld [vmem:[%s1 + $0x2d8] sm:$0xff]
  %v124 = vld [vmem:[%s1 + $0x2e0] sm:$0xff]
  %v125 = vld [vmem:[%s1 + $0x2e8] sm:$0xff]
  %v126 = vld [vmem:[%s1 + $0x2f0] sm:$0xff]
  %v127 = vld [vmem:[%s1 + $0x2f8] sm:$0xff]
  %v128 = vld [vmem:[%s1 + $0x300] sm:$0xff]
  %v129 = vld [vmem:[%s1 + $0x308] sm:$0xff]
  %v130 = vld [vmem:[%s1 + $0x310] sm:$0xff]
  %v131 = vld [vmem:[%s1 + $0x318] sm:$0xff]
  %v132 = vld [vmem:[%s1 + $0x320] sm:$0xff]
  %v133 = vld [vmem:[%s1 + $0x328] sm:$0xff]
  %v134 = vld [vmem:[%s1 + $0x330] sm:$0xff]
  %v135 = vld [vmem:[%s1 + $0x338] sm:$0xff]
  %v136 = vld [vmem:[%s1 + $0x340] sm:$0xff]
  %v137 = vld [vmem:[%s1 + $0x348] sm:$0xff]
  %v138 = vld [vmem:[%s1 + $0x350] sm:$0xff]
  %v139 = vld [vmem:[%s1 + $0x358] sm:$0xff]
  %v140 = vld [vmem:[%s1 + $0x360] sm:$0xff]
  %v141 = vld [vmem:[%s1 + $0x368] sm:$0xff]
  %v142 = vld [vmem:[%s1 + $0x370] sm:$0xff]
  %v143 = vld [vmem:[%s1 + $0x378] sm:$0xff]
  %v144 = vld [vmem:[%s1 + $0x380] sm:$0xff]
  %v145 = vld [vmem:[%s1 + $0x388] sm:$0xff]
  %v146 = vld [vmem:[%s1 + $0x390] sm:$0xff]
  %v147 = vld [vmem:[%s1 + $0x398] sm:$0xff]
  %v148 = vld [vmem:[%s1 + $0x3a0] sm:$0xff]
  %v149 = vld [vmem:[%s1 + $0x3a8] sm:$0xff]
  %v150 = vld [vmem:[%s1 + $0x3b0] sm:$0xff]
  %v151 = vld [vmem:[%s1 + $0x3b8] sm:$0xff]
  %v152 = vld [vmem:[%s1 + $0x3c0] sm:$0xff]
  %v153 = vld [vmem:[%s1 + $0x3c8] sm:$0xff]
  %v154 = vld [vmem:[%s1 + $0x3d0] sm:$0xff]
  %v155 = vld [vmem:[%s1 + $0x3d8] sm:$0xff]
  %v156 = vld [vmem:[%s1 + $0x3e0] sm:$0xff]
  %v157 = vld [vmem:[%s1 + $0x3e8] sm:$0xff]
  %v158 = vld [vmem:[%s1 + $0x3f0] sm:$0xff]
  %v159 = vld [vmem:[%s1 + $0x3f8] sm:$0xff]
  %v160 = vld [vmem:[%s1 + $0x400] sm:$0xff]
  %v161 = vld [vmem:[%s1 + $0x408] sm:$0xff]
  %v162 = vld [vmem:[%s1 + $0x410] sm:$0xff]
  %v163 = vld [vmem:[%s1 + $0x418] sm:$0xff]
  %v164 = vld [vmem:[%s1 + $0x420] sm:$0xff]
  %v165 = vld [vmem:[%s1 + $0x428] sm:$0xff]
  %v166 = vld [vmem:[%s1 + $0x430] sm:$0xff]
  %v167 = vld [vmem:[%s1 + $0x438] sm:$0xff]
  %v168 = vld [vmem:[%s1 + $0x440] sm:$0xff]
  %v169 = vld [vmem:[%s1 + $0x448] sm:$0xff]
  %v170 = vld [vmem:[%s1 + $0x450] sm:$0xff]
  %v171 = vld [vmem:[%s1 + $0x458] sm:$0xff]
  %v172 = vld [vmem:[%s1 + $0x460] sm:$0xff]
  %v173 = vld [vmem:[%s1 + $0x468] sm:$0xff]
  %v174 = vld [vmem:[%s1 + $0x470] sm:$0xff]
  %v175 = vld [vmem:[%s1 + $0x478] sm:$0xff]
  %v176 = vld [vmem:[%s1 + $0x480] sm:$0xff]
  %v177 = vld [vmem:[%s1 + $0x488] sm:$0xff]
  %v178 = vld [vmem:[%s1 + $0x490] sm:$0xff]
  %v179 = vld [vmem:[%s1 + $0x498] sm:$0xff]
  %v180 = vld [vmem:[%s1 + $0x4a0] sm:$0xff]
  %v181 = vld [vmem:[%s1 + $0x4a8] sm:$0xff]
  %v182 = vld [vmem:[%s1 + $0x4b0] sm:$0xff]
  %v183 = vld [vmem:[%s1 + $0x4b8] sm:$0xff]
  %v184 = vld [vmem:[%s1 + $0x4c0] sm:$0xff]
  %v185 = vld [vmem:[%s1 + $0x4c8] sm:$0xff]
  %v186 = vld [vmem:[%s1 + $0x4d0] sm:$0xff]
  %v187 = vld [vmem:[%s1 + $0x4d8] sm:$0xff]
  %v188 = vld [vmem:[%s1 + $0x4e0] sm:$0xff]
  %v189 = vld [vmem:[%s1 + $0x4e8] sm:$0xff]
  %v190 = vld [vmem:[%s1 + $0x4f0] sm:$0xff]
  %v191 = vld [vmem:[%s1 + $0x4f8] sm:$0xff]
  %v192 = vld [vmem:[%s1 + $0x500] sm:$0xff]
  %v193 = vld [vmem:[%s1 + $0x508] sm:$0xff]
  %v194 = vld [vmem:[%s1 + $0x510] sm:$0xff]
  %v195 = vld [vmem:[%s1 + $0x518] sm:$0xff]
  %v196 = vld [vmem:[%s1 + $0x520] sm:$0xff]
  %v197 = vld [vmem:[%s1 + $0x528] sm:$0xff]
  %v198 = vld [vmem:[%s1 + $0x530] sm:$0xff]
  %v199 = vld [vmem:[%s1 + $0x538] sm:$0xff]
  %v200 = vld [vmem:[%s1 + $0x540] sm:$0xff]
  %v201 = vld [vmem:[%s1 + $0x548] sm:$0xff]
  %v202 = vld [vmem:[%s1 + $0x550] sm:$0xff]
  %v203 = vld [vmem:[%s1 + $0x558] sm:$0xff]
  %v204 = vld [vmem:[%s1 + $0x560] sm:$0xff]
  %v205 = vld [vmem:[%s1 + $0x568] sm:$0xff]
  %v206 = vld [vmem:[%s1 + $0x570] sm:$0xff]
  %v207 = vld [vmem:[%s1 + $0x578] sm:$0xff]
  %v208 = vld [vmem:[%s1 + $0x580] sm:$0xff]
  %v209 = vld [vmem:[%s1 + $0x588] sm:$0xff]
  %v210 = vld [vmem:[%s1 + $0x590] sm:$0xff]
  %v211 = vld [vmem:[%s1 + $0x598] sm:$0xff]
  %v212 = vld [vmem:[%s1 + $0x5a0] sm:$0xff]
  %v213 = vld [vmem:[%s1 + $0x5a8] sm:$0xff]
  %v214 = vld [vmem:[%s1 + $0x5b0] sm:$0xff]
  %v215 = vld [vmem:[%s1 + $0x5b8] sm:$0xff]
  %v216 = vld [vmem:[%s1 + $0x5c0] sm:$0xff]
  %v217 = vld [vmem:[%s1 + $0x5c8] sm:$0xff]
  %v218 = vld [vmem:[%s1 + $0x5d0] sm:$0xff]
  %v219 = vld [vmem:[%s1 + $0x5d8] sm:$0xff]
  %v220 = vld [vmem:[%s1 + $0x5e0] sm:$0xff]
  %v221 = vld [vmem:[%s1 + $0x5e8] sm:$0xff]
  %v222 = vld [vmem:[%s1 + $0x5f0] sm:$0xff]
  %v223 = vld [vmem:[%s1 + $0x5f8] sm:$0xff]
  %v224 = vld [vmem:[%s1 + $0x600] sm:$0xff]
  %v225 = vld [vmem:[%s1 + $0x608] sm:$0xff]
  %v226 = vld [vmem:[%s1 + $0x610] sm:$0xff]
  %v227 = vld [vmem:[%s1 + $0x618] sm:$0xff]
  %v228 = vld [vmem:[%s1 + $0x620] sm:$0xff]
  %v229 = vld [vmem:[%s1 + $0x628] sm:$0xff]
  %v230 = vld [vmem:[%s1 + $0x630] sm:$0xff]
  %v231 = vld [vmem:[%s1 + $0x638] sm:$0xff]
  %v232 = vld [vmem:[%s1 + $0x640] sm:$0xff]
  %v233 = vld [vmem:[%s1 + $0x648] sm:$0xff]
  %v234 = vld [vmem:[%s1 + $0x650] sm:$0xff]
  %v235 = vld [vmem:[%s1 + $0x658] sm:$0xff]
  %v236 = vld [vmem:[%s1 + $0x660] sm:$0xff]
  %v237 = vld [vmem:[%s1 + $0x668] sm:$0xff]
  %v238 = vld [vmem:[%s1 + $0x670] sm:$0xff]
  %v239 = vld [vmem:[%s1 + $0x678] sm:$0xff]
  %v240 = vld [vmem:[%s1 + $0x680] sm:$0xff]
  %v241 = vld [vmem:[%s1 + $0x688] sm:$0xff]
  %v242 = vld [vmem:[%s1 + $0x690] sm:$0xff]
  %v243 = vld [vmem:[%s1 + $0x698] sm:$0xff]
  %v244 = vld [vmem:[%s1 + $0x6a0] sm:$0xff]
  %v245 = vld [vmem:[%s1 + $0x6a8] sm:$0xff]
  %v246 = vld [vmem:[%s1 + $0x6b0] sm:$0xff]
  %v247 = vld [vmem:[%s1 + $0x6b8] sm:$0xff]
  %v248 = vld [vmem:[%s1 + $0x6c0] sm:$0xff]
  %v249 = vld [vmem:[%s1 + $0x6c8] sm:$0xff]
  %v250 = vld [vmem:[%s1 + $0x6d0] sm:$0xff]
  %v251 = vld [vmem:[%s1 + $0x6d8] sm:$0xff]
  %v252 = vld [vmem:[%s1 + $0x6e0] sm:$0xff]
  %v253 = vld [vmem:[%s1 + $0x6e8] sm:$0xff]
  %v254 = vld [vmem:[%s1 + $0x6f0] sm:$0xff]
  %v255 = vld [vmem:[%s1 + $0x6f8] sm:$0xff]
  %v256 = vld [vmem:[%s1 + $0x700] sm:$0xff]
  %v257 = vld [vmem:[%s1 + $0x708] sm:$0xff]
  %v258 = vld [vmem:[%s1 + $0x710] sm:$0xff]
  %v259 = vld [vmem:[%s1 + $0x718] sm:$0xff]
  %v260 = vld [vmem:[%s1 + $0x720] sm:$0xff]
  %v261 = vld [vmem:[%s1 + $0x728] sm:$0xff]
  %v262 = vld [vmem:[%s1 + $0x730] sm:$0xff]
  %v263 = vld [vmem:[%s1 + $0x738] sm:$0xff]
  %v264 = vld [vmem:[%s1 + $0x740] sm:$0xff]
  %v265 = vld [vmem:[%s1 + $0x748] sm:$0xff]
  %v266 = vld [vmem:[%s1 + $0x750] sm:$0xff]
  %v267 = vld [vmem:[%s1 + $0x758] sm:$0xff]
  %v268 = vld [vmem:[%s1 + $0x760] sm:$0xff]
  %v269 = vld [vmem:[%s1 + $0x768] sm:$0xff]
  %v270 = vld [vmem:[%s1 + $0x770] sm:$0xff]
  %v271 = vld [vmem:[%s1 + $0x778] sm:$0xff]
  %v272 = vld [vmem:[%s1 + $0x780] sm:$0xff]
  %v273 = vld [vmem:[%s1 + $0x788] sm:$0xff]
  %v274 = vld [vmem:[%s1 + $0x790] sm:$0xff]
  %v275 = vld [vmem:[%s1 + $0x798] sm:$0xff]
  %v276 = vld [vmem:[%s1 + $0x7a0] sm:$0xff]
  %v277 = vld [vmem:[%s1 + $0x7a8] sm:$0xff]
  %v278 = vld [vmem:[%s1 + $0x7b0] sm:$0xff]
  %v279 = vld [vmem:[%s1 + $0x7b8] sm:$0xff]
  %v280 = vld [vmem:[%s1 + $0x7c0] sm:$0xff]
  %v281 = vld [vmem:[%s1 + $0x7c8] sm:$0xff]
  %v282 = vld [vmem:[%s1 + $0x7d0] sm:$0xff]
  %v283 = vld [vmem:[%s1 + $0x7d8] sm:$0xff]
  %v284 = vld [vmem:[%s1 + $0x7e0] sm:$0xff]
  %v285 = vld [vmem:[%s1 + $0x7e8] sm:$0xff]
  %v286 = vld [vmem:[%s1 + $0x7f0] sm:$0xff]
  %v287 = vld [vmem:[%s1 + $0x7f8] sm:$0xff]
  %v288 = vld [vmem:[%s1 + $0x800] sm:$0xff]
  %v289 = vld [vmem:[%s1 + $0x808] sm:$0xff]
  %v290 = vld [vmem:[%s1 + $0x810] sm:$0xff]
  %v291 = vld [vmem:[%s1 + $0x818] sm:$0xff]
  %v292 = vld [vmem:[%s1 + $0x820] sm:$0xff]
  %v293 = vld [vmem:[%s1 + $0x828] sm:$0xff]
  %v294 = vld [vmem:[%s1 + $0x830] sm:$0xff]
  %v295 = vld [vmem:[%s1 + $0x838] sm:$0xff]
  %v296 = vld [vmem:[%s1 + $0x840] sm:$0xff]
  %v297 = vld [vmem:[%s1 + $0x848] sm:$0xff]
  %v298 = vld [vmem:[%s1 + $0x850] sm:$0xff]
  %v299 = vld [vmem:[%s1 + $0x858] sm:$0xff]
  %v300 = vld [vmem:[%s1 + $0x860] sm:$0xff]
  %v301 = vld [vmem:[%s1 + $0x868] sm:$0xff]
  %v302 = vld [vmem:[%s1 + $0x870] sm:$0xff]
  %v303 = vld [vmem:[%s1 + $0x878] sm:$0xff]
  %v304 = vld [vmem:[%s1 + $0x880] sm:$0xff]
  %v305 = vld [vmem:[%s1 + $0x888] sm:$0xff]
  %v306 = vld [vmem:[%s1 + $0x890] sm:$0xff]
  %v307 = vld [vmem:[%s1 + $0x898] sm:$0xff]
  %v308 = vld [vmem:[%s1 + $0x8a0] sm:$0xff]
  %v309 = vld [vmem:[%s1 + $0x8a8] sm:$0xff]
  %v310 = vld [vmem:[%s1 + $0x8b0] sm:$0xff]
  %v311 = vld [vmem:[%s1 + $0x8b8] sm:$0xff]
  %v312 = vld [vmem:[%s1 + $0x8c0] sm:$0xff]
  %v313 = vld [vmem:[%s1 + $0x8c8] sm:$0xff]
  %v314 = vld [vmem:[%s1 + $0x8d0] sm:$0xff]
  %v315 = vld [vmem:[%s1 + $0x8d8] sm:$0xff]
  %v316 = vld [vmem:[%s1 + $0x8e0] sm:$0xff]
  %v317 = vld [vmem:[%s1 + $0x8e8] sm:$0xff]
  %v318 = vld [vmem:[%s1 + $0x8f0] sm:$0xff]
  %v319 = vld [vmem:[%s1 + $0x8f8] sm:$0xff]
  %v320 = vld [vmem:[%s1 + $0x900] sm:$0xff]
  %v321 = vld [vmem:[%s1 + $0x908] sm:$0xff]
  %v322 = vld [vmem:[%s1 + $0x910] sm:$0xff]
  %v323 = vld [vmem:[%s1 + $0x918] sm:$0xff]
  %v324 = vld [vmem:[%s1 + $0x920] sm:$0xff]
  %v325 = vld [vmem:[%s1 + $0x928] sm:$0xff]
  %v326 = vld [vmem:[%s1 + $0x930] sm:$0xff]
  %v327 = vld [vmem:[%s1 + $0x938] sm:$0xff]
  %v328 = vld [vmem:[%s1 + $0x940] sm:$0xff]
  %v329 = vld [vmem:[%s1 + $0x948] sm:$0xff]
  %v330 = vld [vmem:[%s1 + $0x950] sm:$0xff]
  %v331 = vld [vmem:[%s1 + $0x958] sm:$0xff]
  %v332 = vld [vmem:[%s1 + $0x960] sm:$0xff]
  %v333 = vld [vmem:[%s1 + $0x968] sm:$0xff]
  %v334 = vld [vmem:[%s1 + $0x970] sm:$0xff]
  %v335 = vld [vmem:[%s1 + $0x978] sm:$0xff]
  %v336 = vld [vmem:[%s1 + $0x980] sm:$0xff]
  %v337 = vld [vmem:[%s1 + $0x988] sm:$0xff]
  %v338 = vld [vmem:[%s1 + $0x990] sm:$0xff]
  %v339 = vld [vmem:[%s1 + $0x998] sm:$0xff]
  %v340 = vld [vmem:[%s1 + $0x9a0] sm:$0xff]
  %v341 = vld [vmem:[%s1 + $0x9a8] sm:$0xff]
  %v342 = vld [vmem:[%s1 + $0x9b0] sm:$0xff]
  %v343 = vld [vmem:[%s1 + $0x9b8] sm:$0xff]
  %v344 = vld [vmem:[%s1 + $0x9c0] sm:$0xff]
  %v345 = vld [vmem:[%s1 + $0x9c8] sm:$0xff]
  %v346 = vld [vmem:[%s1 + $0x9d0] sm:$0xff]
  %v347 = vld [vmem:[%s1 + $0x9d8] sm:$0xff]
  %v348 = vld [vmem:[%s1 + $0x9e0] sm:$0xff]
  %v349 = vld [vmem:[%s1 + $0x9e8] sm:$0xff]
  %v350 = vld [vmem:[%s1 + $0x9f0] sm:$0xff]
  %v351 = vld [vmem:[%s1 + $0x9f8] sm:$0xff]
  %v352 = vld [vmem:[%s1 + $0xa00] sm:$0xff]
  %v353 = vld [vmem:[%s1 + $0xa08] sm:$0xff]
  %v354 = vld [vmem:[%s1 + $0xa10] sm:$0xff]
  %v355 = vld [vmem:[%s1 + $0xa18] sm:$0xff]
  %v356 = vld [vmem:[%s1 + $0xa20] sm:$0xff]
  %v357 = vld [vmem:[%s1 + $0xa28] sm:$0xff]
  %v358 = vld [vmem:[%s1 + $0xa30] sm:$0xff]
  %v359 = vld [vmem:[%s1 + $0xa38] sm:$0xff]
  %v360 = vld [vmem:[%s1 + $0xa40] sm:$0xff]
  %v361 = vld [vmem:[%s1 + $0xa48] sm:$0xff]
  %v362 = vld [vmem:[%s1 + $0xa50] sm:$0xff]
  %v363 = vld [vmem:[%s1 + $0xa58] sm:$0xff]
  %v364 = vld [vmem:[%s1 + $0xa60] sm:$0xff]
  %v365 = vld [vmem:[%s1 + $0xa68] sm:$0xff]
  %v366 = vld [vmem:[%s1 + $0xa70] sm:$0xff]
  %v367 = vld [vmem:[%s1 + $0xa78] sm:$0xff]
  %v368 = vld [vmem:[%s1 + $0xa80] sm:$0xff]
  %v369 = vld [vmem:[%s1 + $0xa88] sm:$0xff]
  %v370 = vld [vmem:[%s1 + $0xa90] sm:$0xff]
  %v371 = vld [vmem:[%s1 + $0xa98] sm:$0xff]
  %v372 = vld [vmem:[%s1 + $0xaa0] sm:$0xff]
  %v373 = vld [vmem:[%s1 + $0xaa8] sm:$0xff]
  %v374 = vld [vmem:[%s1 + $0xab0] sm:$0xff]
  %v375 = vld [vmem:[%s1 + $0xab8] sm:$0xff]
  %v376 = vld [vmem:[%s1 + $0xac0] sm:$0xff]
  %v377 = vld [vmem:[%s1 + $0xac8] sm:$0xff]
  %v378 = vld [vmem:[%s1 + $0xad0] sm:$0xff]
  %v379 = vld [vmem:[%s1 + $0xad8] sm:$0xff]
  %v380 = vld [vmem:[%s1 + $0xae0] sm:$0xff]
  %v381 = vld [vmem:[%s1 + $0xae8] sm:$0xff]
  %v382 = vld [vmem:[%s1 + $0xaf0] sm:$0xff]
  %v383 = vld [vmem:[%s1 + $0xaf8] sm:$0xff]
  %v384 = vld [vmem:[%s1 + $0xb00] sm:$0xff]
  %v385 = vld [vmem:[%s1 + $0xb08] sm:$0xff]
  %v386 = vld [vmem:[%s1 + $0xb10] sm:$0xff]
  %v387 = vld [vmem:[%s1 + $0xb18] sm:$0xff]
  %v388 = vld [vmem:[%s1 + $0xb20] sm:$0xff]
  %v389 = vld [vmem:[%s1 + $0xb28] sm:$0xff]
  %v390 = vld [vmem:[%s1 + $0xb30] sm:$0xff]
  %v391 = vld [vmem:[%s1 + $0xb38] sm:$0xff]
  %v392 = vld [vmem:[%s1 + $0xb40] sm:$0xff]
  %v393 = vld [vmem:[%s1 + $0xb48] sm:$0xff]
  %v394 = vld [vmem:[%s1 + $0xb50] sm:$0xff]
  %v395 = vld [vmem:[%s1 + $0xb58] sm:$0xff]
  %v396 = vld [vmem:[%s1 + $0xb60] sm:$0xff]
  %v397 = vld [vmem:[%s1 + $0xb68] sm:$0xff]
  %v398 = vld [vmem:[%s1 + $0xb70] sm:$0xff]
  %v399 = vld [vmem:[%s1 + $0xb78] sm:$0xff]
  %v400 = vld [vmem:[%s1 + $0xb80] sm:$0xff]
  %v401 = vld [vmem:[%s1 + $0xb88] sm:$0xff]
  %v402 = vld [vmem:[%s1 + $0xb90] sm:$0xff]
  %v403 = vld [vmem:[%s1 + $0xb98] sm:$0xff]
  %v404 = vld [vmem:[%s1 + $0xba0] sm:$0xff]
  %v405 = vld [vmem:[%s1 + $0xba8] sm:$0xff]
  %v406 = vld [vmem:[%s1 + $0xbb0] sm:$0xff]
  %v407 = vld [vmem:[%s1 + $0xbb8] sm:$0xff]
  %v408 = vld [vmem:[%s1 + $0xbc0] sm:$0xff]
  %v409 = vld [vmem:[%s1 + $0xbc8] sm:$0xff]
  %v410 = vld [vmem:[%s1 + $0xbd0] sm:$0xff]
  %v411 = vld [vmem:[%s1 + $0xbd8] sm:$0xff]
  %v412 = vld [vmem:[%s1 + $0xbe0] sm:$0xff]
  %v413 = vld [vmem:[%s1 + $0xbe8] sm:$0xff]
  %v414 = vld [vmem:[%s1 + $0xbf0] sm:$0xff]
  %v415 = vld [vmem:[%s1 + $0xbf8] sm:$0xff]
  %v416 = vld [vmem:[%s1 + $0xc00] sm:$0xff]
  %v417 = vld [vmem:[%s1 + $0xc08] sm:$0xff]
  %v418 = vld [vmem:[%s1 + $0xc10] sm:$0xff]
  %v419 = vld [vmem:[%s1 + $0xc18] sm:$0xff]
  %v420 = vld [vmem:[%s1 + $0xc20] sm:$0xff]
  %v421 = vld [vmem:[%s1 + $0xc28] sm:$0xff]
  %v422 = vld [vmem:[%s1 + $0xc30] sm:$0xff]
  %v423 = vld [vmem:[%s1 + $0xc38] sm:$0xff]
  %v424 = vld [vmem:[%s1 + $0xc40] sm:$0xff]
  %v425 = vld [vmem:[%s1 + $0xc48] sm:$0xff]
  %v426 = vld [vmem:[%s1 + $0xc50] sm:$0xff]
  %v427 = vld [vmem:[%s1 + $0xc58] sm:$0xff]
  %v428 = vld [vmem:[%s1 + $0xc60] sm:$0xff]
  %v429 = vld [vmem:[%s1 + $0xc68] sm:$0xff]
  %v430 = vld [vmem:[%s1 + $0xc70] sm:$0xff]
  %v431 = vld [vmem:[%s1 + $0xc78] sm:$0xff]
  %v432 = vld [vmem:[%s1 + $0xc80] sm:$0xff]
  %v433 = vld [vmem:[%s1 + $0xc88] sm:$0xff]
  %v434 = vld [vmem:[%s1 + $0xc90] sm:$0xff]
  %v435 = vld [vmem:[%s1 + $0xc98] sm:$0xff]
  %v436 = vld [vmem:[%s1 + $0xca0] sm:$0xff]
  %v437 = vld [vmem:[%s1 + $0xca8] sm:$0xff]
  %v438 = vld [vmem:[%s1 + $0xcb0] sm:$0xff]
  %v439 = vld [vmem:[%s1 + $0xcb8] sm:$0xff]
  %v440 = vld [vmem:[%s1 + $0xcc0] sm:$0xff]
  %v441 = vld [vmem:[%s1 + $0xcc8] sm:$0xff]
  %v442 = vld [vmem:[%s1 + $0xcd0] sm:$0xff]
  %v443 = vld [vmem:[%s1 + $0xcd8] sm:$0xff]
  %v444 = vld [vmem:[%s1 + $0xce0] sm:$0xff]
  %v445 = vld [vmem:[%s1 + $0xce8] sm:$0xff]
  %v446 = vld [vmem:[%s1 + $0xcf0] sm:$0xff]
  %v447 = vld [vmem:[%s1 + $0xcf8] sm:$0xff]
  %v448 = vld [vmem:[%s1 + $0xd00] sm:$0xff]
  %v449 = vld [vmem:[%s1 + $0xd08] sm:$0xff]
  %v450 = vld [vmem:[%s1 + $0xd10] sm:$0xff]
  %v451 = vld [vmem:[%s1 + $0xd18] sm:$0xff]
  %v452 = vld [vmem:[%s1 + $0xd20] sm:$0xff]
  %v453 = vld [vmem:[%s1 + $0xd28] sm:$0xff]
  %v454 = vld [vmem:[%s1 + $0xd30] sm:$0xff]
  %v455 = vld [vmem:[%s1 + $0xd38] sm:$0xff]
  %v456 = vld [vmem:[%s1 + $0xd40] sm:$0xff]
  %v457 = vld [vmem:[%s1 + $0xd48] sm:$0xff]
  %v458 = vld [vmem:[%s1 + $0xd50] sm:$0xff]
  %v459 = vld [vmem:[%s1 + $0xd58] sm:$0xff]
  %v460 = vld [vmem:[%s1 + $0xd60] sm:$0xff]
  %v461 = vld [vmem:[%s1 + $0xd68] sm:$0xff]
  %v462 = vld [vmem:[%s1 + $0xd70] sm:$0xff]
  %v463 = vld [vmem:[%s1 + $0xd78] sm:$0xff]
  %v464 = vld [vmem:[%s1 + $0xd80] sm:$0xff]
  %v465 = vld [vmem:[%s1 + $0xd88] sm:$0xff]
  %v466 = vld [vmem:[%s1 + $0xd90] sm:$0xff]
  %v467 = vld [vmem:[%s1 + $0xd98] sm:$0xff]
  %v468 = vld [vmem:[%s1 + $0xda0] sm:$0xff]
  %v469 = vld [vmem:[%s1 + $0xda8] sm:$0xff]
  %v470 = vld [vmem:[%s1 + $0xdb0] sm:$0xff]
  %v471 = vld [vmem:[%s1 + $0xdb8] sm:$0xff]
  %v472 = vld [vmem:[%s1 + $0xdc0] sm:$0xff]
  %v473 = vld [vmem:[%s1 + $0xdc8] sm:$0xff]
  %v474 = vld [vmem:[%s1 + $0xdd0] sm:$0xff]
  %v475 = vld [vmem:[%s1 + $0xdd8] sm:$0xff]
  %v476 = vld [vmem:[%s1 + $0xde0] sm:$0xff]
  %v477 = vld [vmem:[%s1 + $0xde8] sm:$0xff]
  %v478 = vld [vmem:[%s1 + $0xdf0] sm:$0xff]
  %v479 = vld [vmem:[%s1 + $0xdf8] sm:$0xff]
  %v480 = vld [vmem:[%s1 + $0xe00] sm:$0xff]
  %v481 = vld [vmem:[%s1 + $0xe08] sm:$0xff]
  %v482 = vld [vmem:[%s1 + $0xe10] sm:$0xff]
  %v483 = vld [vmem:[%s1 + $0xe18] sm:$0xff]
  %v484 = vld [vmem:[%s1 + $0xe20] sm:$0xff]
  %v485 = vld [vmem:[%s1 + $0xe28] sm:$0xff]
  %v486 = vld [vmem:[%s1 + $0xe30] sm:$0xff]
  %v487 = vld [vmem:[%s1 + $0xe38] sm:$0xff]
  %v488 = vld [vmem:[%s1 + $0xe40] sm:$0xff]
  %v489 = vld [vmem:[%s1 + $0xe48] sm:$0xff]
  %v490 = vld [vmem:[%s1 + $0xe50] sm:$0xff]
  %v491 = vld [vmem:[%s1 + $0xe58] sm:$0xff]
  %v492 = vld [vmem:[%s1 + $0xe60] sm:$0xff]
  %v493 = vld [vmem:[%s1 + $0xe68] sm:$0xff]
  %v494 = vld [vmem:[%s1 + $0xe70] sm:$0xff]
  %v495 = vld [vmem:[%s1 + $0xe78] sm:$0xff]
  %v496 = vld [vmem:[%s1 + $0xe80] sm:$0xff]
  %v497 = vld [vmem:[%s1 + $0xe88] sm:$0xff]
  %v498 = vld [vmem:[%s1 + $0xe90] sm:$0xff]
  %v499 = vld [vmem:[%s1 + $0xe98] sm:$0xff]
  %v500 = vld [vmem:[%s1 + $0xea0] sm:$0xff]
  %v501 = vld [vmem:[%s1 + $0xea8] sm:$0xff]
  %v502 = vld [vmem:[%s1 + $0xeb0] sm:$0xff]
  %v503 = vld [vmem:[%s1 + $0xeb8] sm:$0xff]
  %v504 = vld [vmem:[%s1 + $0xec0] sm:$0xff]
  %v505 = vld [vmem:[%s1 + $0xec8] sm:$0xff]
  %v506 = vld [vmem:[%s1 + $0xed0] sm:$0xff]
  %v507 = vld [vmem:[%s1 + $0xed8] sm:$0xff]
  %v508 = vld [vmem:[%s1 + $0xee0] sm:$0xff]
  %v509 = vld [vmem:[%s1 + $0xee8] sm:$0xff]
  %v510 = vld [vmem:[%s1 + $0xef0] sm:$0xff]
  %v511 = vld [vmem:[%s1 + $0xef8] sm:$0xff]
  %v512 = vld [vmem:[%s1 + $0xf00] sm:$0xff]
  %v513 = vld [vmem:[%s1 + $0xf08] sm:$0xff]
  %v514 = vld [vmem:[%s1 + $0xf10] sm:$0xff]
  %v515 = vld [vmem:[%s1 + $0xf18] sm:$0xff]
  %v516 = vld [vmem:[%s1 + $0xf20] sm:$0xff]
  %v517 = vld [vmem:[%s1 + $0xf28] sm:$0xff]
  %v518 = vld [vmem:[%s1 + $0xf30] sm:$0xff]
  %v519 = vld [vmem:[%s1 + $0xf38] sm:$0xff]
  %v520 = vld [vmem:[%s1 + $0xf40] sm:$0xff]
  %v521 = vld [vmem:[%s1 + $0xf48] sm:$0xff]
  %v522 = vld [vmem:[%s1 + $0xf50] sm:$0xff]
  %v523 = vld [vmem:[%s1 + $0xf58] sm:$0xff]
  %v524 = vld [vmem:[%s1 + $0xf60] sm:$0xff]
  %v525 = vld [vmem:[%s1 + $0xf68] sm:$0xff]
  %v526 = vld [vmem:[%s1 + $0xf70] sm:$0xff]
  %v527 = vld [vmem:[%s1 + $0xf78] sm:$0xff]
  %v528 = vld [vmem:[%s1 + $0xf80] sm:$0xff]
  %v529 = vld [vmem:[%s1 + $0xf88] sm:$0xff]
  %v530 = vld [vmem:[%s1 + $0xf90] sm:$0xff]
  %v531 = vld [vmem:[%s1 + $0xf98] sm:$0xff]
  %v532 = vld [vmem:[%s1 + $0xfa0] sm:$0xff]
  %v533 = vld [vmem:[%s1 + $0xfa8] sm:$0xff]
  %v534 = vld [vmem:[%s1 + $0xfb0] sm:$0xff]
  %v535 = vld [vmem:[%s1 + $0xfb8] sm:$0xff]
  %v536 = vld [vmem:[%s1 + $0xfc0] sm:$0xff]
  %v537 = vld [vmem:[%s1 + $0xfc8] sm:$0xff]
  %v538 = vld [vmem:[%s1 + $0xfd0] sm:$0xff]
  %v539 = vld [vmem:[%s1 + $0xfd8] sm:$0xff]
  %v540 = vld [vmem:[%s1 + $0xfe0] sm:$0xff]
  %v541 = vld [vmem:[%s1 + $0xfe8] sm:$0xff]
  %v542 = vld [vmem:[%s1 + $0xff0] sm:$0xff]
  %v543 = vld [vmem:[%s1 + $0xff8] sm:$0xff]
  %v544 = vld [vmem:[%s1 + $0x1000] sm:$0xff]
  %v545 = vld [vmem:[%s1 + $0x1008] sm:$0xff]
  %v546 = vld [vmem:[%s1 + $0x1010] sm:$0xff]
  %v547 = vld [vmem:[%s1 + $0x1018] sm:$0xff]
  %v548 = vld [vmem:[%s1 + $0x1020] sm:$0xff]
  %v549 = vld [vmem:[%s1 + $0x1028] sm:$0xff]
  %v550 = vld [vmem:[%s1 + $0x1030] sm:$0xff]
  %v551 = vld [vmem:[%s1 + $0x1038] sm:$0xff]
  %v552 = vld [vmem:[%s1 + $0x1040] sm:$0xff]
  %v553 = vld [vmem:[%s1 + $0x1048] sm:$0xff]
  %v554 = vld [vmem:[%s1 + $0x1050] sm:$0xff]
  %v555 = vld [vmem:[%s1 + $0x1058] sm:$0xff]
  %v556 = vld [vmem:[%s1 + $0x1060] sm:$0xff]
  %v557 = vld [vmem:[%s1 + $0x1068] sm:$0xff]
  %v558 = vld [vmem:[%s1 + $0x1070] sm:$0xff]
  %v559 = vld [vmem:[%s1 + $0x1078] sm:$0xff]
  %v560 = vld [vmem:[%s1 + $0x1080] sm:$0xff]
  %v561 = vld [vmem:[%s1 + $0x1088] sm:$0xff]
  %v562 = vld [vmem:[%s1 + $0x1090] sm:$0xff]
  %v563 = vld [vmem:[%s1 + $0x1098] sm:$0xff]
  %v564 = vld [vmem:[%s1 + $0x10a0] sm:$0xff]
  %v565 = vld [vmem:[%s1 + $0x10a8] sm:$0xff]
  %v566 = vld [vmem:[%s1 + $0x10b0] sm:$0xff]
  %v567 = vld [vmem:[%s1 + $0x10b8] sm:$0xff]
  %v568 = vld [vmem:[%s1 + $0x10c0] sm:$0xff]
  %v569 = vld [vmem:[%s1 + $0x10c8] sm:$0xff]
  %v570 = vld [vmem:[%s1 + $0x10d0] sm:$0xff]
  %v571 = vld [vmem:[%s1 + $0x10d8] sm:$0xff]
  %v572 = vld [vmem:[%s1 + $0x10e0] sm:$0xff]
  %v573 = vld [vmem:[%s1 + $0x10e8] sm:$0xff]
  %v574 = vld [vmem:[%s1 + $0x10f0] sm:$0xff]
  %v575 = vld [vmem:[%s1 + $0x10f8] sm:$0xff]
  %v576 = vld [vmem:[%s1 + $0x1100] sm:$0xff]
  %v577 = vld [vmem:[%s1 + $0x1108] sm:$0xff]
  %v578 = vld [vmem:[%s1 + $0x1110] sm:$0xff]
  %v579 = vld [vmem:[%s1 + $0x1118] sm:$0xff]
  %v580 = vld [vmem:[%s1 + $0x1120] sm:$0xff]
  %v581 = vld [vmem:[%s1 + $0x1128] sm:$0xff]
  %v582 = vld [vmem:[%s1 + $0x1130] sm:$0xff]
  %v583 = vld [vmem:[%s1 + $0x1138] sm:$0xff]
  %v584 = vld [vmem:[%s1 + $0x1140] sm:$0xff]
  %v585 = vld [vmem:[%s1 + $0x1148] sm:$0xff]
  %v586 = vld [vmem:[%s1 + $0x1150] sm:$0xff]
  %v587 = vld [vmem:[%s1 + $0x1158] sm:$0xff]
  %v588 = vld [vmem:[%s1 + $0x1160] sm:$0xff]
  %v589 = vld [vmem:[%s1 + $0x1168] sm:$0xff]
  %v590 = vld [vmem:[%s1 + $0x1170] sm:$0xff]
  %v591 = vld [vmem:[%s1 + $0x1178] sm:$0xff]
  %v592 = vld [vmem:[%s1 + $0x1180] sm:$0xff]
  %v593 = vld [vmem:[%s1 + $0x1188] sm:$0xff]
  %v594 = vld [vmem:[%s1 + $0x1190] sm:$0xff]
  %v595 = vld [vmem:[%s1 + $0x1198] sm:$0xff]
  %v596 = vld [vmem:[%s1 + $0x11a0] sm:$0xff]
  %v597 = vld [vmem:[%s1 + $0x11a8] sm:$0xff]
  %v598 = vld [vmem:[%s1 + $0x11b0] sm:$0xff]
  %v599 = vld [vmem:[%s1 + $0x11b8] sm:$0xff]
  %v600 = vld [vmem:[%s1 + $0x11c0] sm:$0xff]
  %v601 = vld [vmem:[%s1 + $0x11c8] sm:$0xff]
  %v602 = vld [vmem:[%s1 + $0x11d0] sm:$0xff]
  %v603 = vld [vmem:[%s1 + $0x11d8] sm:$0xff]
  %v604 = vld [vmem:[%s1 + $0x11e0] sm:$0xff]
  %v605 = vld [vmem:[%s1 + $0x11e8] sm:$0xff]
  %v606 = vld [vmem:[%s1 + $0x11f0] sm:$0xff]
  %v607 = vld [vmem:[%s1 + $0x11f8] sm:$0xff]
  %v608 = vld [vmem:[%s1 + $0x1200] sm:$0xff]
  %v609 = vld [vmem:[%s1 + $0x1208] sm:$0xff]
  %v610 = vld [vmem:[%s1 + $0x1210] sm:$0xff]
  %v611 = vld [vmem:[%s1 + $0x1218] sm:$0xff]
  %v612 = vld [vmem:[%s1 + $0x1220] sm:$0xff]
  %v613 = vld [vmem:[%s1 + $0x1228] sm:$0xff]
  %v614 = vld [vmem:[%s1 + $0x1230] sm:$0xff]
  %v615 = vld [vmem:[%s1 + $0x1238] sm:$0xff]
  %v616 = vld [vmem:[%s1 + $0x1240] sm:$0xff]
  %v617 = vld [vmem:[%s1 + $0x1248] sm:$0xff]
  %v618 = vld [vmem:[%s1 + $0x1250] sm:$0xff]
  %v619 = vld [vmem:[%s1 + $0x1258] sm:$0xff]
  %v620 = vld [vmem:[%s1 + $0x1260] sm:$0xff]
  %v621 = vld [vmem:[%s1 + $0x1268] sm:$0xff]
  %v622 = vld [vmem:[%s1 + $0x1270] sm:$0xff]
  %v623 = vld [vmem:[%s1 + $0x1278] sm:$0xff]
  %v624 = vld [vmem:[%s1 + $0x1280] sm:$0xff]
  %v625 = vld [vmem:[%s1 + $0x1288] sm:$0xff]
  %v626 = vld [vmem:[%s1 + $0x1290] sm:$0xff]
  %v627 = vld [vmem:[%s1 + $0x1298] sm:$0xff]
  %v628 = vld [vmem:[%s1 + $0x12a0] sm:$0xff]
  %v629 = vld [vmem:[%s1 + $0x12a8] sm:$0xff]
  %v630 = vld [vmem:[%s1 + $0x12b0] sm:$0xff]
  %v631 = vld [vmem:[%s1 + $0x12b8] sm:$0xff]
  %v632 = vld [vmem:[%s1 + $0x12c0] sm:$0xff]
  %v633 = vld [vmem:[%s1 + $0x12c8] sm:$0xff]
  %v634 = vld [vmem:[%s1 + $0x12d0] sm:$0xff]
  %v635 = vld [vmem:[%s1 + $0x12d8] sm:$0xff]
  %v636 = vld [vmem:[%s1 + $0x12e0] sm:$0xff]
  %v637 = vld [vmem:[%s1 + $0x12e8] sm:$0xff]
  %v638 = vld [vmem:[%s1 + $0x12f0] sm:$0xff]
  %v639 = vld [vmem:[%s1 + $0x12f8] sm:$0xff]
  %v640 = vld [vmem:[%s1 + $0x1300] sm:$0xff]
  %v641 = vld [vmem:[%s1 + $0x1308] sm:$0xff]
  %v642 = vld [vmem:[%s1 + $0x1310] sm:$0xff]
  %v643 = vld [vmem:[%s1 + $0x1318] sm:$0xff]
  %v644 = vld [vmem:[%s1 + $0x1320] sm:$0xff]
  %v645 = vld [vmem:[%s1 + $0x1328] sm:$0xff]
  %v646 = vld [vmem:[%s1 + $0x1330] sm:$0xff]
  %v647 = vld [vmem:[%s1 + $0x1338] sm:$0xff]
  %v648 = vld [vmem:[%s1 + $0x1340] sm:$0xff]
  %v649 = vld [vmem:[%s1 + $0x1348] sm:$0xff]
  %v650 = vld [vmem:[%s1 + $0x1350] sm:$0xff]
  %v651 = vld [vmem:[%s1 + $0x1358] sm:$0xff]
  %v652 = vld [vmem:[%s1 + $0x1360] sm:$0xff]
  %v653 = vld [vmem:[%s1 + $0x1368] sm:$0xff]
  %v654 = vld [vmem:[%s1 + $0x1370] sm:$0xff]
  %v655 = vld [vmem:[%s1 + $0x1378] sm:$0xff]
  %v656 = vld [vmem:[%s1 + $0x1380] sm:$0xff]
  %v657 = vld [vmem:[%s1 + $0x1388] sm:$0xff]
  %v658 = vld [vmem:[%s1 + $0x1390] sm:$0xff]
  %v659 = vld [vmem:[%s1 + $0x1398] sm:$0xff]
  %v660 = vld [vmem:[%s1 + $0x13a0] sm:$0xff]
  %v661 = vld [vmem:[%s1 + $0x13a8] sm:$0xff]
  %v662 = vld [vmem:[%s1 + $0x13b0] sm:$0xff]
  %v663 = vld [vmem:[%s1 + $0x13b8] sm:$0xff]
  %v664 = vld [vmem:[%s1 + $0x13c0] sm:$0xff]
  %v665 = vld [vmem:[%s1 + $0x13c8] sm:$0xff]
  %v666 = vld [vmem:[%s1 + $0x13d0] sm:$0xff]
  %v667 = vld [vmem:[%s1 + $0x13d8] sm:$0xff]
  %v668 = vld [vmem:[%s1 + $0x13e0] sm:$0xff]
  %v669 = vld [vmem:[%s1 + $0x13e8] sm:$0xff]
  %v670 = vld [vmem:[%s1 + $0x13f0] sm:$0xff]
  %v671 = vld [vmem:[%s1 + $0x13f8] sm:$0xff]
  %v672 = vld [vmem:[%s1 + $0x1400] sm:$0xff]
  %v673 = vld [vmem:[%s1 + $0x1408] sm:$0xff]
  %v674 = vld [vmem:[%s1 + $0x1410] sm:$0xff]
  %v675 = vld [vmem:[%s1 + $0x1418] sm:$0xff]
  %v676 = vld [vmem:[%s1 + $0x1420] sm:$0xff]
  %v677 = vld [vmem:[%s1 + $0x1428] sm:$0xff]
  %v678 = vld [vmem:[%s1 + $0x1430] sm:$0xff]
  %v679 = vld [vmem:[%s1 + $0x1438] sm:$0xff]
  %v680 = vld [vmem:[%s1 + $0x1440] sm:$0xff]
  %v681 = vld [vmem:[%s1 + $0x1448] sm:$0xff]
  %v682 = vld [vmem:[%s1 + $0x1450] sm:$0xff]
  %v683 = vld [vmem:[%s1 + $0x1458] sm:$0xff]
  %v684 = vld [vmem:[%s1 + $0x1460] sm:$0xff]
  %v685 = vld [vmem:[%s1 + $0x1468] sm:$0xff]
  %v686 = vld [vmem:[%s1 + $0x1470] sm:$0xff]
  %v687 = vld [vmem:[%s1 + $0x1478] sm:$0xff]
  %v688 = vld [vmem:[%s1 + $0x1480] sm:$0xff]
  %v689 = vld [vmem:[%s1 + $0x1488] sm:$0xff]
  %v690 = vld [vmem:[%s1 + $0x1490] sm:$0xff]
  %v691 = vld [vmem:[%s1 + $0x1498] sm:$0xff]
  %v692 = vld [vmem:[%s1 + $0x14a0] sm:$0xff]
  %v693 = vld [vmem:[%s1 + $0x14a8] sm:$0xff]
  %v694 = vld [vmem:[%s1 + $0x14b0] sm:$0xff]
  %v695 = vld [vmem:[%s1 + $0x14b8] sm:$0xff]
  %v696 = vld [vmem:[%s1 + $0x14c0] sm:$0xff]
  %v697 = vld [vmem:[%s1 + $0x14c8] sm:$0xff]
  %v698 = vld [vmem:[%s1 + $0x14d0] sm:$0xff]
  %v699 = vld [vmem:[%s1 + $0x14d8] sm:$0xff]
  %v700 = vld [vmem:[%s1 + $0x14e0] sm:$0xff]
  %v701 = vld [vmem:[%s1 + $0x14e8] sm:$0xff]
  %v702 = vld [vmem:[%s1 + $0x14f0] sm:$0xff]
  %v703 = vld [vmem:[%s1 + $0x14f8] sm:$0xff]
  %v704 = vld [vmem:[%s1 + $0x1500] sm:$0xff]
  %v705 = vld [vmem:[%s1 + $0x1508] sm:$0xff]
  %v706 = vld [vmem:[%s1 + $0x1510] sm:$0xff]
  %v707 = vld [vmem:[%s1 + $0x1518] sm:$0xff]
  %v708 = vld [vmem:[%s1 + $0x1520] sm:$0xff]
  %v709 = vld [vmem:[%s1 + $0x1528] sm:$0xff]
  %v710 = vld [vmem:[%s1 + $0x1530] sm:$0xff]
  %v711 = vld [vmem:[%s1 + $0x1538] sm:$0xff]
  %v712 = vld [vmem:[%s1 + $0x1540] sm:$0xff]
  %v713 = vld [vmem:[%s1 + $0x1548] sm:$0xff]
  %v714 = vld [vmem:[%s1 + $0x1550] sm:$0xff]
  %v715 = vld [vmem:[%s1 + $0x1558] sm:$0xff]
  %v716 = vld [vmem:[%s1 + $0x1560] sm:$0xff]
  %v717 = vld [vmem:[%s1 + $0x1568] sm:$0xff]
  %v718 = vld [vmem:[%s1 + $0x1570] sm:$0xff]
  %v719 = vld [vmem:[%s1 + $0x1578] sm:$0xff]
  %v720 = vld [vmem:[%s1 + $0x1580] sm:$0xff]
  %v721 = vld [vmem:[%s1 + $0x1588] sm:$0xff]
  %v722 = vld [vmem:[%s1 + $0x1590] sm:$0xff]
  %v723 = vld [vmem:[%s1 + $0x1598] sm:$0xff]
  %v724 = vld [vmem:[%s1 + $0x15a0] sm:$0xff]
  %v725 = vld [vmem:[%s1 + $0x15a8] sm:$0xff]
  %v726 = vld [vmem:[%s1 + $0x15b0] sm:$0xff]
  %v727 = vld [vmem:[%s1 + $0x15b8] sm:$0xff]
  %v728 = vld [vmem:[%s1 + $0x15c0] sm:$0xff]
  %v729 = vld [vmem:[%s1 + $0x15c8] sm:$0xff]
  %v730 = vld [vmem:[%s1 + $0x15d0] sm:$0xff]
  %v731 = vld [vmem:[%s1 + $0x15d8] sm:$0xff]
  %v732 = vld [vmem:[%s1 + $0x15e0] sm:$0xff]
  %v733 = vld [vmem:[%s1 + $0x15e8] sm:$0xff]
  %v734 = vld [vmem:[%s1 + $0x15f0] sm:$0xff]
  %v735 = vld [vmem:[%s1 + $0x15f8] sm:$0xff]
  %v736 = vld [vmem:[%s1 + $0x1600] sm:$0xff]
  %v737 = vld [vmem:[%s1 + $0x1608] sm:$0xff]
  %v738 = vld [vmem:[%s1 + $0x1610] sm:$0xff]
  %v739 = vld [vmem:[%s1 + $0x1618] sm:$0xff]
  %v740 = vld [vmem:[%s1 + $0x1620] sm:$0xff]
  %v741 = vld [vmem:[%s1 + $0x1628] sm:$0xff]
  %v742 = vld [vmem:[%s1 + $0x1630] sm:$0xff]
  %v743 = vld [vmem:[%s1 + $0x1638] sm:$0xff]
  %v744 = vld [vmem:[%s1 + $0x1640] sm:$0xff]
  %v745 = vld [vmem:[%s1 + $0x1648] sm:$0xff]
  %v746 = vld [vmem:[%s1 + $0x1650] sm:$0xff]
  %v747 = vld [vmem:[%s1 + $0x1658] sm:$0xff]
  %v748 = vld [vmem:[%s1 + $0x1660] sm:$0xff]
  %v749 = vld [vmem:[%s1 + $0x1668] sm:$0xff]
  %v750 = vld [vmem:[%s1 + $0x1670] sm:$0xff]
  %v751 = vld [vmem:[%s1 + $0x1678] sm:$0xff]
  %v752 = vld [vmem:[%s1 + $0x1680] sm:$0xff]
  %v753 = vld [vmem:[%s1 + $0x1688] sm:$0xff]
  %v754 = vld [vmem:[%s1 + $0x1690] sm:$0xff]
  %v755 = vld [vmem:[%s1 + $0x1698] sm:$0xff]
  %v756 = vld [vmem:[%s1 + $0x16a0] sm:$0xff]
  %v757 = vld [vmem:[%s1 + $0x16a8] sm:$0xff]
  %v758 = vld [vmem:[%s1 + $0x16b0] sm:$0xff]
  %v759 = vld [vmem:[%s1 + $0x16b8] sm:$0xff]
  %v760 = vld [vmem:[%s1 + $0x16c0] sm:$0xff]
  %v761 = vld [vmem:[%s1 + $0x16c8] sm:$0xff]
  %v762 = vld [vmem:[%s1 + $0x16d0] sm:$0xff]
  %v763 = vld [vmem:[%s1 + $0x16d8] sm:$0xff]
  %v764 = vld [vmem:[%s1 + $0x16e0] sm:$0xff]
  %v765 = vld [vmem:[%s1 + $0x16e8] sm:$0xff]
  %v766 = vld [vmem:[%s1 + $0x16f0] sm:$0xff]
  %v767 = vld [vmem:[%s1 + $0x16f8] sm:$0xff]
  %v768 = vld [vmem:[%s1 + $0x1700] sm:$0xff]
  %v769 = vld [vmem:[%s1 + $0x1708] sm:$0xff]
  %v770 = vld [vmem:[%s1 + $0x1710] sm:$0xff]
  %v771 = vld [vmem:[%s1 + $0x1718] sm:$0xff]
  %v772 = vld [vmem:[%s1 + $0x1720] sm:$0xff]
  %v773 = vld [vmem:[%s1 + $0x1728] sm:$0xff]
  %v774 = vld [vmem:[%s1 + $0x1730] sm:$0xff]
  %v775 = vld [vmem:[%s1 + $0x1738] sm:$0xff]
  %v776 = vld [vmem:[%s1 + $0x1740] sm:$0xff]
  %v777 = vld [vmem:[%s1 + $0x1748] sm:$0xff]
  %v778 = vld [vmem:[%s1 + $0x1750] sm:$0xff]
  %v779 = vld [vmem:[%s1 + $0x1758] sm:$0xff]
  %v780 = vld [vmem:[%s1 + $0x1760] sm:$0xff]
  %v781 = vld [vmem:[%s1 + $0x1768] sm:$0xff]
  %v782 = vld [vmem:[%s1 + $0x1770] sm:$0xff]
  %v783 = vld [vmem:[%s1 + $0x1778] sm:$0xff]
  %v784 = vld [vmem:[%s1 + $0x1780] sm:$0xff]
  %v785 = vld [vmem:[%s1 + $0x1788] sm:$0xff]
  %v786 = vld [vmem:[%s1 + $0x1790] sm:$0xff]
  %v787 = vld [vmem:[%s1 + $0x1798] sm:$0xff]
  %v788 = vld [vmem:[%s1 + $0x17a0] sm:$0xff]
  %v789 = vld [vmem:[%s1 + $0x17a8] sm:$0xff]
  %v790 = vld [vmem:[%s1 + $0x17b0] sm:$0xff]
  %v791 = vld [vmem:[%s1 + $0x17b8] sm:$0xff]
  %v792 = vld [vmem:[%s1 + $0x17c0] sm:$0xff]
  %v793 = vld [vmem:[%s1 + $0x17c8] sm:$0xff]
  %v794 = vld [vmem:[%s1 + $0x17d0] sm:$0xff]
  %v795 = vld [vmem:[%s1 + $0x17d8] sm:$0xff]
  %v796 = vld [vmem:[%s1 + $0x17e0] sm:$0xff]
  %v797 = vld [vmem:[%s1 + $0x17e8] sm:$0xff]
  %v798 = vld [vmem:[%s1 + $0x17f0] sm:$0xff]
  %v799 = vld [vmem:[%s1 + $0x17f8] sm:$0xff]
  %v800 = vld [vmem:[%s2] sm:$0xff]
  %v802 = vlaneseq
  %v803 = vshrl.u32 %v802, 7
  %v804 = vsub.s32 0, %v803
  %v805 = vrot.slane %v800, %v804
  %v806 = vlaneseq
  %v807 = vshrl.u32 %v806, 7
  %v808 = vsub.s32 1, %v807
  %v809 = vrot.slane %v800, %v808
  %v810 = vlaneseq
  %v811 = vshrl.u32 %v810, 7
  %v812 = vsub.s32 2, %v811
  %v813 = vrot.slane %v800, %v812
  %v814 = vlaneseq
  %v815 = vshrl.u32 %v814, 7
  %v816 = vsub.s32 3, %v815
  %v817 = vrot.slane %v800, %v816
  %v818 = vlaneseq
  %v819 = vshrl.u32 %v818, 7
  %v820 = vsub.s32 4, %v819
  %v821 = vrot.slane %v800, %v820
  %v822 = vlaneseq
  %v823 = vshrl.u32 %v822, 7
  %v824 = vsub.s32 5, %v823
  %v825 = vrot.slane %v800, %v824
  %v826 = vlaneseq
  %v827 = vshrl.u32 %v826, 7
  %v828 = vsub.s32 6, %v827
  %v829 = vrot.slane %v800, %v828
  %v830 = vlaneseq
  %v831 = vshrl.u32 %v830, 7
  %v832 = vsub.s32 7, %v831
  %v833 = vrot.slane %v800, %v832
  %v844 = vcombine.high %v30, %v30
  %v846 = vunpack.c.l.s4 1966171168
  %v847 = vunpack.c.0.s8 %v846
  %v848 = vlaneseq
  %v849 = vshrl.u32 %v848, 7
  %v850 = vsub.s32 %v847, %v849
  %v851 = vrot.slane %v30, %v850
  %v853 = vunpack.c.l.s4 1966171168
  %v854 = vunpack.c.0.s8 %v853
  %v855 = vlaneseq
  %v856 = vshrl.u32 %v855, 7
  %v857 = vsub.s32 %v854, %v856
  %v858 = vrot.slane %v844, %v857
  %v859 = vcombine.high %v851, %v851
  %v860 = vcombine.high %v858, %v858
  %v862 = vunpack.c.l.s4 1966171168
  %v863 = vunpack.c.0.s8 %v862
  %v864 = vlaneseq
  %v865 = vshrl.u32 %v864, 7
  %v866 = vsub.s32 %v863, %v865
  %v867 = vrot.slane %v851, %v866
  %v869 = vunpack.c.l.s4 1966171168
  %v870 = vunpack.c.0.s8 %v869
  %v871 = vlaneseq
  %v872 = vshrl.u32 %v871, 7
  %v873 = vsub.s32 %v870, %v872
  %v874 = vrot.slane %v858, %v873
  %v876 = vunpack.c.l.s4 1966171168
  %v877 = vunpack.c.0.s8 %v876
  %v878 = vlaneseq
  %v879 = vshrl.u32 %v878, 7
  %v880 = vsub.s32 %v877, %v879
  %v881 = vrot.slane %v859, %v880
  %v883 = vunpack.c.l.s4 1966171168
  %v884 = vunpack.c.0.s8 %v883
  %v885 = vlaneseq
  %v886 = vshrl.u32 %v885, 7
  %v887 = vsub.s32 %v884, %v886
  %v888 = vrot.slane %v860, %v887
  %v889 = vcombine.high %v867, %v867
  %v890 = vcombine.high %v874, %v874
  %v891 = vcombine.high %v881, %v881
  %v892 = vcombine.high %v888, %v888
  %v894 = vunpack.c.l.s4 1966171168
  %v895 = vunpack.c.0.s8 %v894
  %v896 = vlaneseq
  %v897 = vshrl.u32 %v896, 7
  %v898 = vsub.s32 %v895, %v897
  %v899 = vrot.slane %v31, %v898
  %v900 = vcombine.high %v899, %v899
  %v902 = vunpack.c.l.s4 1966171168
  %v903 = vunpack.c.0.s8 %v902
  %v904 = vlaneseq
  %v905 = vshrl.u32 %v904, 7
  %v906 = vsub.s32 %v903, %v905
  %v907 = vrot.slane %v899, %v906
  %v909 = vunpack.c.l.s4 1966171168
  %v910 = vunpack.c.0.s8 %v909
  %v911 = vlaneseq
  %v912 = vshrl.u32 %v911, 7
  %v913 = vsub.s32 %v910, %v912
  %v914 = vrot.slane %v900, %v913
  %v915 = vcombine.high %v907, %v907
  %v916 = vcombine.high %v914, %v914
  %v1697 = vunpack.c.l.b16 %v32
  %v1698 = vunpack.c.h.b16 %v32
  %v1699 = vunpack.c.l.b16 %v33
  %v1700 = vunpack.c.h.b16 %v33
  %v1701 = vunpack.c.l.b16 %v34
  %v1702 = vunpack.c.h.b16 %v34
  %v1703 = vunpack.c.l.b16 %v35
  %v1704 = vunpack.c.h.b16 %v35
  %v1705 = vunpack.c.l.b16 %v36
  %v1706 = vunpack.c.h.b16 %v36
  %v1707 = vunpack.c.l.b16 %v37
  %v1708 = vunpack.c.h.b16 %v37
  %v1709 = vunpack.c.l.b16 %v38
  %v1710 = vunpack.c.h.b16 %v38
  %v1711 = vunpack.c.l.b16 %v39
  %v1712 = vunpack.c.h.b16 %v39
  %v1713 = vunpack.c.l.b16 %v40
  %v1714 = vunpack.c.h.b16 %v40
  %v1715 = vunpack.c.l.b16 %v41
  %v1716 = vunpack.c.h.b16 %v41
  %v1717 = vunpack.c.l.b16 %v42
  %v1718 = vunpack.c.h.b16 %v42
  %v1719 = vunpack.c.l.b16 %v43
  %v1720 = vunpack.c.h.b16 %v43
  %v1721 = vunpack.c.l.b16 %v44
  %v1722 = vunpack.c.h.b16 %v44
  %v1723 = vunpack.c.l.b16 %v45
  %v1724 = vunpack.c.h.b16 %v45
  %v1725 = vunpack.c.l.b16 %v46
  %v1726 = vunpack.c.h.b16 %v46
  %v1727 = vunpack.c.l.b16 %v47
  %v1728 = vunpack.c.h.b16 %v47
  %v1729 = vunpack.c.l.b16 %v48
  %v1730 = vunpack.c.h.b16 %v48
  %v1731 = vunpack.c.l.b16 %v49
  %v1732 = vunpack.c.h.b16 %v49
  %v1733 = vunpack.c.l.b16 %v50
  %v1734 = vunpack.c.h.b16 %v50
  %v1735 = vunpack.c.l.b16 %v51
  %v1736 = vunpack.c.h.b16 %v51
  %v1737 = vunpack.c.l.b16 %v52
  %v1738 = vunpack.c.h.b16 %v52
  %v1739 = vunpack.c.l.b16 %v53
  %v1740 = vunpack.c.h.b16 %v53
  %v1741 = vunpack.c.l.b16 %v54
  %v1742 = vunpack.c.h.b16 %v54
  %v1743 = vunpack.c.l.b16 %v55
  %v1744 = vunpack.c.h.b16 %v55
  %v1745 = vunpack.c.l.b16 %v56
  %v1746 = vunpack.c.h.b16 %v56
  %v1747 = vunpack.c.l.b16 %v57
  %v1748 = vunpack.c.h.b16 %v57
  %v1749 = vunpack.c.l.b16 %v58
  %v1750 = vunpack.c.h.b16 %v58
  %v1751 = vunpack.c.l.b16 %v59
  %v1752 = vunpack.c.h.b16 %v59
  %v1753 = vunpack.c.l.b16 %v60
  %v1754 = vunpack.c.h.b16 %v60
  %v1755 = vunpack.c.l.b16 %v61
  %v1756 = vunpack.c.h.b16 %v61
  %v1757 = vunpack.c.l.b16 %v62
  %v1758 = vunpack.c.h.b16 %v62
  %v1759 = vunpack.c.l.b16 %v63
  %v1760 = vunpack.c.h.b16 %v63
  %v1761 = vunpack.c.l.b16 %v64
  %v1762 = vunpack.c.h.b16 %v64
  %v1763 = vunpack.c.l.b16 %v65
  %v1764 = vunpack.c.h.b16 %v65
  %v1765 = vunpack.c.l.b16 %v66
  %v1766 = vunpack.c.h.b16 %v66
  %v1767 = vunpack.c.l.b16 %v67
  %v1768 = vunpack.c.h.b16 %v67
  %v1769 = vunpack.c.l.b16 %v68
  %v1770 = vunpack.c.h.b16 %v68
  %v1771 = vunpack.c.l.b16 %v69
  %v1772 = vunpack.c.h.b16 %v69
  %v1773 = vunpack.c.l.b16 %v70
  %v1774 = vunpack.c.h.b16 %v70
  %v1775 = vunpack.c.l.b16 %v71
  %v1776 = vunpack.c.h.b16 %v71
  %v1777 = vunpack.c.l.b16 %v72
  %v1778 = vunpack.c.h.b16 %v72
  %v1779 = vunpack.c.l.b16 %v73
  %v1780 = vunpack.c.h.b16 %v73
  %v1781 = vunpack.c.l.b16 %v74
  %v1782 = vunpack.c.h.b16 %v74
  %v1783 = vunpack.c.l.b16 %v75
  %v1784 = vunpack.c.h.b16 %v75
  %v1785 = vunpack.c.l.b16 %v76
  %v1786 = vunpack.c.h.b16 %v76
  %v1787 = vunpack.c.l.b16 %v77
  %v1788 = vunpack.c.h.b16 %v77
  %v1789 = vunpack.c.l.b16 %v78
  %v1790 = vunpack.c.h.b16 %v78
  %v1791 = vunpack.c.l.b16 %v79
  %v1792 = vunpack.c.h.b16 %v79
  %v1793 = vunpack.c.l.b16 %v80
  %v1794 = vunpack.c.h.b16 %v80
  %v1795 = vunpack.c.l.b16 %v81
  %v1796 = vunpack.c.h.b16 %v81
  %v1797 = vunpack.c.l.b16 %v82
  %v1798 = vunpack.c.h.b16 %v82
  %v1799 = vunpack.c.l.b16 %v83
  %v1800 = vunpack.c.h.b16 %v83
  %v1801 = vunpack.c.l.b16 %v84
  %v1802 = vunpack.c.h.b16 %v84
  %v1803 = vunpack.c.l.b16 %v85
  %v1804 = vunpack.c.h.b16 %v85
  %v1805 = vunpack.c.l.b16 %v86
  %v1806 = vunpack.c.h.b16 %v86
  %v1807 = vunpack.c.l.b16 %v87
  %v1808 = vunpack.c.h.b16 %v87
  %v1809 = vunpack.c.l.b16 %v88
  %v1810 = vunpack.c.h.b16 %v88
  %v1811 = vunpack.c.l.b16 %v89
  %v1812 = vunpack.c.h.b16 %v89
  %v1813 = vunpack.c.l.b16 %v90
  %v1814 = vunpack.c.h.b16 %v90
  %v1815 = vunpack.c.l.b16 %v91
  %v1816 = vunpack.c.h.b16 %v91
  %v1817 = vunpack.c.l.b16 %v92
  %v1818 = vunpack.c.h.b16 %v92
  %v1819 = vunpack.c.l.b16 %v93
  %v1820 = vunpack.c.h.b16 %v93
  %v1821 = vunpack.c.l.b16 %v94
  %v1822 = vunpack.c.h.b16 %v94
  %v1823 = vunpack.c.l.b16 %v95
  %v1824 = vunpack.c.h.b16 %v95
  %v1825 = vunpack.c.l.b16 %v96
  %v1826 = vunpack.c.h.b16 %v96
  %v1827 = vunpack.c.l.b16 %v97
  %v1828 = vunpack.c.h.b16 %v97
  %v1829 = vunpack.c.l.b16 %v98
  %v1830 = vunpack.c.h.b16 %v98
  %v1831 = vunpack.c.l.b16 %v99
  %v1832 = vunpack.c.h.b16 %v99
  %v1833 = vunpack.c.l.b16 %v100
  %v1834 = vunpack.c.h.b16 %v100
  %v1835 = vunpack.c.l.b16 %v101
  %v1836 = vunpack.c.h.b16 %v101
  %v1837 = vunpack.c.l.b16 %v102
  %v1838 = vunpack.c.h.b16 %v102
  %v1839 = vunpack.c.l.b16 %v103
  %v1840 = vunpack.c.h.b16 %v103
  %v1841 = vunpack.c.l.b16 %v104
  %v1842 = vunpack.c.h.b16 %v104
  %v1843 = vunpack.c.l.b16 %v105
  %v1844 = vunpack.c.h.b16 %v105
  %v1845 = vunpack.c.l.b16 %v106
  %v1846 = vunpack.c.h.b16 %v106
  %v1847 = vunpack.c.l.b16 %v107
  %v1848 = vunpack.c.h.b16 %v107
  %v1849 = vunpack.c.l.b16 %v108
  %v1850 = vunpack.c.h.b16 %v108
  %v1851 = vunpack.c.l.b16 %v109
  %v1852 = vunpack.c.h.b16 %v109
  %v1853 = vunpack.c.l.b16 %v110
  %v1854 = vunpack.c.h.b16 %v110
  %v1855 = vunpack.c.l.b16 %v111
  %v1856 = vunpack.c.h.b16 %v111
  %v1857 = vunpack.c.l.b16 %v112
  %v1858 = vunpack.c.h.b16 %v112
  %v1859 = vunpack.c.l.b16 %v113
  %v1860 = vunpack.c.h.b16 %v113
  %v1861 = vunpack.c.l.b16 %v114
  %v1862 = vunpack.c.h.b16 %v114
  %v1863 = vunpack.c.l.b16 %v115
  %v1864 = vunpack.c.h.b16 %v115
  %v1865 = vunpack.c.l.b16 %v116
  %v1866 = vunpack.c.h.b16 %v116
  %v1867 = vunpack.c.l.b16 %v117
  %v1868 = vunpack.c.h.b16 %v117
  %v1869 = vunpack.c.l.b16 %v118
  %v1870 = vunpack.c.h.b16 %v118
  %v1871 = vunpack.c.l.b16 %v119
  %v1872 = vunpack.c.h.b16 %v119
  %v1873 = vunpack.c.l.b16 %v120
  %v1874 = vunpack.c.h.b16 %v120
  %v1875 = vunpack.c.l.b16 %v121
  %v1876 = vunpack.c.h.b16 %v121
  %v1877 = vunpack.c.l.b16 %v122
  %v1878 = vunpack.c.h.b16 %v122
  %v1879 = vunpack.c.l.b16 %v123
  %v1880 = vunpack.c.h.b16 %v123
  %v1881 = vunpack.c.l.b16 %v124
  %v1882 = vunpack.c.h.b16 %v124
  %v1883 = vunpack.c.l.b16 %v125
  %v1884 = vunpack.c.h.b16 %v125
  %v1885 = vunpack.c.l.b16 %v126
  %v1886 = vunpack.c.h.b16 %v126
  %v1887 = vunpack.c.l.b16 %v127
  %v1888 = vunpack.c.h.b16 %v127
  %v1889 = vunpack.c.l.b16 %v128
  %v1890 = vunpack.c.h.b16 %v128
  %v1891 = vunpack.c.l.b16 %v129
  %v1892 = vunpack.c.h.b16 %v129
  %v1893 = vunpack.c.l.b16 %v130
  %v1894 = vunpack.c.h.b16 %v130
  %v1895 = vunpack.c.l.b16 %v131
  %v1896 = vunpack.c.h.b16 %v131
  %v1897 = vunpack.c.l.b16 %v132
  %v1898 = vunpack.c.h.b16 %v132
  %v1899 = vunpack.c.l.b16 %v133
  %v1900 = vunpack.c.h.b16 %v133
  %v1901 = vunpack.c.l.b16 %v134
  %v1902 = vunpack.c.h.b16 %v134
  %v1903 = vunpack.c.l.b16 %v135
  %v1904 = vunpack.c.h.b16 %v135
  %v1905 = vunpack.c.l.b16 %v136
  %v1906 = vunpack.c.h.b16 %v136
  %v1907 = vunpack.c.l.b16 %v137
  %v1908 = vunpack.c.h.b16 %v137
  %v1909 = vunpack.c.l.b16 %v138
  %v1910 = vunpack.c.h.b16 %v138
  %v1911 = vunpack.c.l.b16 %v139
  %v1912 = vunpack.c.h.b16 %v139
  %v1913 = vunpack.c.l.b16 %v140
  %v1914 = vunpack.c.h.b16 %v140
  %v1915 = vunpack.c.l.b16 %v141
  %v1916 = vunpack.c.h.b16 %v141
  %v1917 = vunpack.c.l.b16 %v142
  %v1918 = vunpack.c.h.b16 %v142
  %v1919 = vunpack.c.l.b16 %v143
  %v1920 = vunpack.c.h.b16 %v143
  %v1921 = vunpack.c.l.b16 %v144
  %v1922 = vunpack.c.h.b16 %v144
  %v1923 = vunpack.c.l.b16 %v145
  %v1924 = vunpack.c.h.b16 %v145
  %v1925 = vunpack.c.l.b16 %v146
  %v1926 = vunpack.c.h.b16 %v146
  %v1927 = vunpack.c.l.b16 %v147
  %v1928 = vunpack.c.h.b16 %v147
  %v1929 = vunpack.c.l.b16 %v148
  %v1930 = vunpack.c.h.b16 %v148
  %v1931 = vunpack.c.l.b16 %v149
  %v1932 = vunpack.c.h.b16 %v149
  %v1933 = vunpack.c.l.b16 %v150
  %v1934 = vunpack.c.h.b16 %v150
  %v1935 = vunpack.c.l.b16 %v151
  %v1936 = vunpack.c.h.b16 %v151
  %v1937 = vunpack.c.l.b16 %v152
  %v1938 = vunpack.c.h.b16 %v152
  %v1939 = vunpack.c.l.b16 %v153
  %v1940 = vunpack.c.h.b16 %v153
  %v1941 = vunpack.c.l.b16 %v154
  %v1942 = vunpack.c.h.b16 %v154
  %v1943 = vunpack.c.l.b16 %v155
  %v1944 = vunpack.c.h.b16 %v155
  %v1945 = vunpack.c.l.b16 %v156
  %v1946 = vunpack.c.h.b16 %v156
  %v1947 = vunpack.c.l.b16 %v157
  %v1948 = vunpack.c.h.b16 %v157
  %v1949 = vunpack.c.l.b16 %v158
  %v1950 = vunpack.c.h.b16 %v158
  %v1951 = vunpack.c.l.b16 %v159
  %v1952 = vunpack.c.h.b16 %v159
  %v1953 = vunpack.c.l.b16 %v160
  %v1954 = vunpack.c.h.b16 %v160
  %v1955 = vunpack.c.l.b16 %v161
  %v1956 = vunpack.c.h.b16 %v161
  %v1957 = vunpack.c.l.b16 %v162
  %v1958 = vunpack.c.h.b16 %v162
  %v1959 = vunpack.c.l.b16 %v163
  %v1960 = vunpack.c.h.b16 %v163
  %v1961 = vunpack.c.l.b16 %v164
  %v1962 = vunpack.c.h.b16 %v164
  %v1963 = vunpack.c.l.b16 %v165
  %v1964 = vunpack.c.h.b16 %v165
  %v1965 = vunpack.c.l.b16 %v166
  %v1966 = vunpack.c.h.b16 %v166
  %v1967 = vunpack.c.l.b16 %v167
  %v1968 = vunpack.c.h.b16 %v167
  %v1969 = vunpack.c.l.b16 %v168
  %v1970 = vunpack.c.h.b16 %v168
  %v1971 = vunpack.c.l.b16 %v169
  %v1972 = vunpack.c.h.b16 %v169
  %v1973 = vunpack.c.l.b16 %v170
  %v1974 = vunpack.c.h.b16 %v170
  %v1975 = vunpack.c.l.b16 %v171
  %v1976 = vunpack.c.h.b16 %v171
  %v1977 = vunpack.c.l.b16 %v172
  %v1978 = vunpack.c.h.b16 %v172
  %v1979 = vunpack.c.l.b16 %v173
  %v1980 = vunpack.c.h.b16 %v173
  %v1981 = vunpack.c.l.b16 %v174
  %v1982 = vunpack.c.h.b16 %v174
  %v1983 = vunpack.c.l.b16 %v175
  %v1984 = vunpack.c.h.b16 %v175
  %v1985 = vunpack.c.l.b16 %v176
  %v1986 = vunpack.c.h.b16 %v176
  %v1987 = vunpack.c.l.b16 %v177
  %v1988 = vunpack.c.h.b16 %v177
  %v1989 = vunpack.c.l.b16 %v178
  %v1990 = vunpack.c.h.b16 %v178
  %v1991 = vunpack.c.l.b16 %v179
  %v1992 = vunpack.c.h.b16 %v179
  %v1993 = vunpack.c.l.b16 %v180
  %v1994 = vunpack.c.h.b16 %v180
  %v1995 = vunpack.c.l.b16 %v181
  %v1996 = vunpack.c.h.b16 %v181
  %v1997 = vunpack.c.l.b16 %v182
  %v1998 = vunpack.c.h.b16 %v182
  %v1999 = vunpack.c.l.b16 %v183
  %v2000 = vunpack.c.h.b16 %v183
  %v2001 = vunpack.c.l.b16 %v184
  %v2002 = vunpack.c.h.b16 %v184
  %v2003 = vunpack.c.l.b16 %v185
  %v2004 = vunpack.c.h.b16 %v185
  %v2005 = vunpack.c.l.b16 %v186
  %v2006 = vunpack.c.h.b16 %v186
  %v2007 = vunpack.c.l.b16 %v187
  %v2008 = vunpack.c.h.b16 %v187
  %v2009 = vunpack.c.l.b16 %v188
  %v2010 = vunpack.c.h.b16 %v188
  %v2011 = vunpack.c.l.b16 %v189
  %v2012 = vunpack.c.h.b16 %v189
  %v2013 = vunpack.c.l.b16 %v190
  %v2014 = vunpack.c.h.b16 %v190
  %v2015 = vunpack.c.l.b16 %v191
  %v2016 = vunpack.c.h.b16 %v191
  %v2017 = vunpack.c.l.b16 %v192
  %v2018 = vunpack.c.h.b16 %v192
  %v2019 = vunpack.c.l.b16 %v193
  %v2020 = vunpack.c.h.b16 %v193
  %v2021 = vunpack.c.l.b16 %v194
  %v2022 = vunpack.c.h.b16 %v194
  %v2023 = vunpack.c.l.b16 %v195
  %v2024 = vunpack.c.h.b16 %v195
  %v2025 = vunpack.c.l.b16 %v196
  %v2026 = vunpack.c.h.b16 %v196
  %v2027 = vunpack.c.l.b16 %v197
  %v2028 = vunpack.c.h.b16 %v197
  %v2029 = vunpack.c.l.b16 %v198
  %v2030 = vunpack.c.h.b16 %v198
  %v2031 = vunpack.c.l.b16 %v199
  %v2032 = vunpack.c.h.b16 %v199
  %v2033 = vunpack.c.l.b16 %v200
  %v2034 = vunpack.c.h.b16 %v200
  %v2035 = vunpack.c.l.b16 %v201
  %v2036 = vunpack.c.h.b16 %v201
  %v2037 = vunpack.c.l.b16 %v202
  %v2038 = vunpack.c.h.b16 %v202
  %v2039 = vunpack.c.l.b16 %v203
  %v2040 = vunpack.c.h.b16 %v203
  %v2041 = vunpack.c.l.b16 %v204
  %v2042 = vunpack.c.h.b16 %v204
  %v2043 = vunpack.c.l.b16 %v205
  %v2044 = vunpack.c.h.b16 %v205
  %v2045 = vunpack.c.l.b16 %v206
  %v2046 = vunpack.c.h.b16 %v206
  %v2047 = vunpack.c.l.b16 %v207
  %v2048 = vunpack.c.h.b16 %v207
  %v2049 = vunpack.c.l.b16 %v208
  %v2050 = vunpack.c.h.b16 %v208
  %v2051 = vunpack.c.l.b16 %v209
  %v2052 = vunpack.c.h.b16 %v209
  %v2053 = vunpack.c.l.b16 %v210
  %v2054 = vunpack.c.h.b16 %v210
  %v2055 = vunpack.c.l.b16 %v211
  %v2056 = vunpack.c.h.b16 %v211
  %v2057 = vunpack.c.l.b16 %v212
  %v2058 = vunpack.c.h.b16 %v212
  %v2059 = vunpack.c.l.b16 %v213
  %v2060 = vunpack.c.h.b16 %v213
  %v2061 = vunpack.c.l.b16 %v214
  %v2062 = vunpack.c.h.b16 %v214
  %v2063 = vunpack.c.l.b16 %v215
  %v2064 = vunpack.c.h.b16 %v215
  %v2065 = vunpack.c.l.b16 %v216
  %v2066 = vunpack.c.h.b16 %v216
  %v2067 = vunpack.c.l.b16 %v217
  %v2068 = vunpack.c.h.b16 %v217
  %v2069 = vunpack.c.l.b16 %v218
  %v2070 = vunpack.c.h.b16 %v218
  %v2071 = vunpack.c.l.b16 %v219
  %v2072 = vunpack.c.h.b16 %v219
  %v2073 = vunpack.c.l.b16 %v220
  %v2074 = vunpack.c.h.b16 %v220
  %v2075 = vunpack.c.l.b16 %v221
  %v2076 = vunpack.c.h.b16 %v221
  %v2077 = vunpack.c.l.b16 %v222
  %v2078 = vunpack.c.h.b16 %v222
  %v2079 = vunpack.c.l.b16 %v223
  %v2080 = vunpack.c.h.b16 %v223
  %v2081 = vunpack.c.l.b16 %v224
  %v2082 = vunpack.c.h.b16 %v224
  %v2083 = vunpack.c.l.b16 %v225
  %v2084 = vunpack.c.h.b16 %v225
  %v2085 = vunpack.c.l.b16 %v226
  %v2086 = vunpack.c.h.b16 %v226
  %v2087 = vunpack.c.l.b16 %v227
  %v2088 = vunpack.c.h.b16 %v227
  %v2089 = vunpack.c.l.b16 %v228
  %v2090 = vunpack.c.h.b16 %v228
  %v2091 = vunpack.c.l.b16 %v229
  %v2092 = vunpack.c.h.b16 %v229
  %v2093 = vunpack.c.l.b16 %v230
  %v2094 = vunpack.c.h.b16 %v230
  %v2095 = vunpack.c.l.b16 %v231
  %v2096 = vunpack.c.h.b16 %v231
  %v2097 = vunpack.c.l.b16 %v232
  %v2098 = vunpack.c.h.b16 %v232
  %v2099 = vunpack.c.l.b16 %v233
  %v2100 = vunpack.c.h.b16 %v233
  %v2101 = vunpack.c.l.b16 %v234
  %v2102 = vunpack.c.h.b16 %v234
  %v2103 = vunpack.c.l.b16 %v235
  %v2104 = vunpack.c.h.b16 %v235
  %v2105 = vunpack.c.l.b16 %v236
  %v2106 = vunpack.c.h.b16 %v236
  %v2107 = vunpack.c.l.b16 %v237
  %v2108 = vunpack.c.h.b16 %v237
  %v2109 = vunpack.c.l.b16 %v238
  %v2110 = vunpack.c.h.b16 %v238
  %v2111 = vunpack.c.l.b16 %v239
  %v2112 = vunpack.c.h.b16 %v239
  %v2113 = vunpack.c.l.b16 %v240
  %v2114 = vunpack.c.h.b16 %v240
  %v2115 = vunpack.c.l.b16 %v241
  %v2116 = vunpack.c.h.b16 %v241
  %v2117 = vunpack.c.l.b16 %v242
  %v2118 = vunpack.c.h.b16 %v242
  %v2119 = vunpack.c.l.b16 %v243
  %v2120 = vunpack.c.h.b16 %v243
  %v2121 = vunpack.c.l.b16 %v244
  %v2122 = vunpack.c.h.b16 %v244
  %v2123 = vunpack.c.l.b16 %v245
  %v2124 = vunpack.c.h.b16 %v245
  %v2125 = vunpack.c.l.b16 %v246
  %v2126 = vunpack.c.h.b16 %v246
  %v2127 = vunpack.c.l.b16 %v247
  %v2128 = vunpack.c.h.b16 %v247
  %v2129 = vunpack.c.l.b16 %v248
  %v2130 = vunpack.c.h.b16 %v248
  %v2131 = vunpack.c.l.b16 %v249
  %v2132 = vunpack.c.h.b16 %v249
  %v2133 = vunpack.c.l.b16 %v250
  %v2134 = vunpack.c.h.b16 %v250
  %v2135 = vunpack.c.l.b16 %v251
  %v2136 = vunpack.c.h.b16 %v251
  %v2137 = vunpack.c.l.b16 %v252
  %v2138 = vunpack.c.h.b16 %v252
  %v2139 = vunpack.c.l.b16 %v253
  %v2140 = vunpack.c.h.b16 %v253
  %v2141 = vunpack.c.l.b16 %v254
  %v2142 = vunpack.c.h.b16 %v254
  %v2143 = vunpack.c.l.b16 %v255
  %v2144 = vunpack.c.h.b16 %v255
  %v2145 = vunpack.c.l.b16 %v256
  %v2146 = vunpack.c.h.b16 %v256
  %v2147 = vunpack.c.l.b16 %v257
  %v2148 = vunpack.c.h.b16 %v257
  %v2149 = vunpack.c.l.b16 %v258
  %v2150 = vunpack.c.h.b16 %v258
  %v2151 = vunpack.c.l.b16 %v259
  %v2152 = vunpack.c.h.b16 %v259
  %v2153 = vunpack.c.l.b16 %v260
  %v2154 = vunpack.c.h.b16 %v260
  %v2155 = vunpack.c.l.b16 %v261
  %v2156 = vunpack.c.h.b16 %v261
  %v2157 = vunpack.c.l.b16 %v262
  %v2158 = vunpack.c.h.b16 %v262
  %v2159 = vunpack.c.l.b16 %v263
  %v2160 = vunpack.c.h.b16 %v263
  %v2161 = vunpack.c.l.b16 %v264
  %v2162 = vunpack.c.h.b16 %v264
  %v2163 = vunpack.c.l.b16 %v265
  %v2164 = vunpack.c.h.b16 %v265
  %v2165 = vunpack.c.l.b16 %v266
  %v2166 = vunpack.c.h.b16 %v266
  %v2167 = vunpack.c.l.b16 %v267
  %v2168 = vunpack.c.h.b16 %v267
  %v2169 = vunpack.c.l.b16 %v268
  %v2170 = vunpack.c.h.b16 %v268
  %v2171 = vunpack.c.l.b16 %v269
  %v2172 = vunpack.c.h.b16 %v269
  %v2173 = vunpack.c.l.b16 %v270
  %v2174 = vunpack.c.h.b16 %v270
  %v2175 = vunpack.c.l.b16 %v271
  %v2176 = vunpack.c.h.b16 %v271
  %v2177 = vunpack.c.l.b16 %v272
  %v2178 = vunpack.c.h.b16 %v272
  %v2179 = vunpack.c.l.b16 %v273
  %v2180 = vunpack.c.h.b16 %v273
  %v2181 = vunpack.c.l.b16 %v274
  %v2182 = vunpack.c.h.b16 %v274
  %v2183 = vunpack.c.l.b16 %v275
  %v2184 = vunpack.c.h.b16 %v275
  %v2185 = vunpack.c.l.b16 %v276
  %v2186 = vunpack.c.h.b16 %v276
  %v2187 = vunpack.c.l.b16 %v277
  %v2188 = vunpack.c.h.b16 %v277
  %v2189 = vunpack.c.l.b16 %v278
  %v2190 = vunpack.c.h.b16 %v278
  %v2191 = vunpack.c.l.b16 %v279
  %v2192 = vunpack.c.h.b16 %v279
  %v2193 = vunpack.c.l.b16 %v280
  %v2194 = vunpack.c.h.b16 %v280
  %v2195 = vunpack.c.l.b16 %v281
  %v2196 = vunpack.c.h.b16 %v281
  %v2197 = vunpack.c.l.b16 %v282
  %v2198 = vunpack.c.h.b16 %v282
  %v2199 = vunpack.c.l.b16 %v283
  %v2200 = vunpack.c.h.b16 %v283
  %v2201 = vunpack.c.l.b16 %v284
  %v2202 = vunpack.c.h.b16 %v284
  %v2203 = vunpack.c.l.b16 %v285
  %v2204 = vunpack.c.h.b16 %v285
  %v2205 = vunpack.c.l.b16 %v286
  %v2206 = vunpack.c.h.b16 %v286
  %v2207 = vunpack.c.l.b16 %v287
  %v2208 = vunpack.c.h.b16 %v287
  %v2209 = vunpack.c.l.b16 %v288
  %v2210 = vunpack.c.h.b16 %v288
  %v2211 = vunpack.c.l.b16 %v289
  %v2212 = vunpack.c.h.b16 %v289
  %v2213 = vunpack.c.l.b16 %v290
  %v2214 = vunpack.c.h.b16 %v290
  %v2215 = vunpack.c.l.b16 %v291
  %v2216 = vunpack.c.h.b16 %v291
  %v2217 = vunpack.c.l.b16 %v292
  %v2218 = vunpack.c.h.b16 %v292
  %v2219 = vunpack.c.l.b16 %v293
  %v2220 = vunpack.c.h.b16 %v293
  %v2221 = vunpack.c.l.b16 %v294
  %v2222 = vunpack.c.h.b16 %v294
  %v2223 = vunpack.c.l.b16 %v295
  %v2224 = vunpack.c.h.b16 %v295
  %v2225 = vunpack.c.l.b16 %v296
  %v2226 = vunpack.c.h.b16 %v296
  %v2227 = vunpack.c.l.b16 %v297
  %v2228 = vunpack.c.h.b16 %v297
  %v2229 = vunpack.c.l.b16 %v298
  %v2230 = vunpack.c.h.b16 %v298
  %v2231 = vunpack.c.l.b16 %v299
  %v2232 = vunpack.c.h.b16 %v299
  %v2233 = vunpack.c.l.b16 %v300
  %v2234 = vunpack.c.h.b16 %v300
  %v2235 = vunpack.c.l.b16 %v301
  %v2236 = vunpack.c.h.b16 %v301
  %v2237 = vunpack.c.l.b16 %v302
  %v2238 = vunpack.c.h.b16 %v302
  %v2239 = vunpack.c.l.b16 %v303
  %v2240 = vunpack.c.h.b16 %v303
  %v2241 = vunpack.c.l.b16 %v304
  %v2242 = vunpack.c.h.b16 %v304
  %v2243 = vunpack.c.l.b16 %v305
  %v2244 = vunpack.c.h.b16 %v305
  %v2245 = vunpack.c.l.b16 %v306
  %v2246 = vunpack.c.h.b16 %v306
  %v2247 = vunpack.c.l.b16 %v307
  %v2248 = vunpack.c.h.b16 %v307
  %v2249 = vunpack.c.l.b16 %v308
  %v2250 = vunpack.c.h.b16 %v308
  %v2251 = vunpack.c.l.b16 %v309
  %v2252 = vunpack.c.h.b16 %v309
  %v2253 = vunpack.c.l.b16 %v310
  %v2254 = vunpack.c.h.b16 %v310
  %v2255 = vunpack.c.l.b16 %v311
  %v2256 = vunpack.c.h.b16 %v311
  %v2257 = vunpack.c.l.b16 %v312
  %v2258 = vunpack.c.h.b16 %v312
  %v2259 = vunpack.c.l.b16 %v313
  %v2260 = vunpack.c.h.b16 %v313
  %v2261 = vunpack.c.l.b16 %v314
  %v2262 = vunpack.c.h.b16 %v314
  %v2263 = vunpack.c.l.b16 %v315
  %v2264 = vunpack.c.h.b16 %v315
  %v2265 = vunpack.c.l.b16 %v316
  %v2266 = vunpack.c.h.b16 %v316
  %v2267 = vunpack.c.l.b16 %v317
  %v2268 = vunpack.c.h.b16 %v317
  %v2269 = vunpack.c.l.b16 %v318
  %v2270 = vunpack.c.h.b16 %v318
  %v2271 = vunpack.c.l.b16 %v319
  %v2272 = vunpack.c.h.b16 %v319
  %v2273 = vunpack.c.l.b16 %v320
  %v2274 = vunpack.c.h.b16 %v320
  %v2275 = vunpack.c.l.b16 %v321
  %v2276 = vunpack.c.h.b16 %v321
  %v2277 = vunpack.c.l.b16 %v322
  %v2278 = vunpack.c.h.b16 %v322
  %v2279 = vunpack.c.l.b16 %v323
  %v2280 = vunpack.c.h.b16 %v323
  %v2281 = vunpack.c.l.b16 %v324
  %v2282 = vunpack.c.h.b16 %v324
  %v2283 = vunpack.c.l.b16 %v325
  %v2284 = vunpack.c.h.b16 %v325
  %v2285 = vunpack.c.l.b16 %v326
  %v2286 = vunpack.c.h.b16 %v326
  %v2287 = vunpack.c.l.b16 %v327
  %v2288 = vunpack.c.h.b16 %v327
  %v2289 = vunpack.c.l.b16 %v328
  %v2290 = vunpack.c.h.b16 %v328
  %v2291 = vunpack.c.l.b16 %v329
  %v2292 = vunpack.c.h.b16 %v329
  %v2293 = vunpack.c.l.b16 %v330
  %v2294 = vunpack.c.h.b16 %v330
  %v2295 = vunpack.c.l.b16 %v331
  %v2296 = vunpack.c.h.b16 %v331
  %v2297 = vunpack.c.l.b16 %v332
  %v2298 = vunpack.c.h.b16 %v332
  %v2299 = vunpack.c.l.b16 %v333
  %v2300 = vunpack.c.h.b16 %v333
  %v2301 = vunpack.c.l.b16 %v334
  %v2302 = vunpack.c.h.b16 %v334
  %v2303 = vunpack.c.l.b16 %v335
  %v2304 = vunpack.c.h.b16 %v335
  %v2305 = vunpack.c.l.b16 %v336
  %v2306 = vunpack.c.h.b16 %v336
  %v2307 = vunpack.c.l.b16 %v337
  %v2308 = vunpack.c.h.b16 %v337
  %v2309 = vunpack.c.l.b16 %v338
  %v2310 = vunpack.c.h.b16 %v338
  %v2311 = vunpack.c.l.b16 %v339
  %v2312 = vunpack.c.h.b16 %v339
  %v2313 = vunpack.c.l.b16 %v340
  %v2314 = vunpack.c.h.b16 %v340
  %v2315 = vunpack.c.l.b16 %v341
  %v2316 = vunpack.c.h.b16 %v341
  %v2317 = vunpack.c.l.b16 %v342
  %v2318 = vunpack.c.h.b16 %v342
  %v2319 = vunpack.c.l.b16 %v343
  %v2320 = vunpack.c.h.b16 %v343
  %v2321 = vunpack.c.l.b16 %v344
  %v2322 = vunpack.c.h.b16 %v344
  %v2323 = vunpack.c.l.b16 %v345
  %v2324 = vunpack.c.h.b16 %v345
  %v2325 = vunpack.c.l.b16 %v346
  %v2326 = vunpack.c.h.b16 %v346
  %v2327 = vunpack.c.l.b16 %v347
  %v2328 = vunpack.c.h.b16 %v347
  %v2329 = vunpack.c.l.b16 %v348
  %v2330 = vunpack.c.h.b16 %v348
  %v2331 = vunpack.c.l.b16 %v349
  %v2332 = vunpack.c.h.b16 %v349
  %v2333 = vunpack.c.l.b16 %v350
  %v2334 = vunpack.c.h.b16 %v350
  %v2335 = vunpack.c.l.b16 %v351
  %v2336 = vunpack.c.h.b16 %v351
  %v2337 = vunpack.c.l.b16 %v352
  %v2338 = vunpack.c.h.b16 %v352
  %v2339 = vunpack.c.l.b16 %v353
  %v2340 = vunpack.c.h.b16 %v353
  %v2341 = vunpack.c.l.b16 %v354
  %v2342 = vunpack.c.h.b16 %v354
  %v2343 = vunpack.c.l.b16 %v355
  %v2344 = vunpack.c.h.b16 %v355
  %v2345 = vunpack.c.l.b16 %v356
  %v2346 = vunpack.c.h.b16 %v356
  %v2347 = vunpack.c.l.b16 %v357
  %v2348 = vunpack.c.h.b16 %v357
  %v2349 = vunpack.c.l.b16 %v358
  %v2350 = vunpack.c.h.b16 %v358
  %v2351 = vunpack.c.l.b16 %v359
  %v2352 = vunpack.c.h.b16 %v359
  %v2353 = vunpack.c.l.b16 %v360
  %v2354 = vunpack.c.h.b16 %v360
  %v2355 = vunpack.c.l.b16 %v361
  %v2356 = vunpack.c.h.b16 %v361
  %v2357 = vunpack.c.l.b16 %v362
  %v2358 = vunpack.c.h.b16 %v362
  %v2359 = vunpack.c.l.b16 %v363
  %v2360 = vunpack.c.h.b16 %v363
  %v2361 = vunpack.c.l.b16 %v364
  %v2362 = vunpack.c.h.b16 %v364
  %v2363 = vunpack.c.l.b16 %v365
  %v2364 = vunpack.c.h.b16 %v365
  %v2365 = vunpack.c.l.b16 %v366
  %v2366 = vunpack.c.h.b16 %v366
  %v2367 = vunpack.c.l.b16 %v367
  %v2368 = vunpack.c.h.b16 %v367
  %v2369 = vunpack.c.l.b16 %v368
  %v2370 = vunpack.c.h.b16 %v368
  %v2371 = vunpack.c.l.b16 %v369
  %v2372 = vunpack.c.h.b16 %v369
  %v2373 = vunpack.c.l.b16 %v370
  %v2374 = vunpack.c.h.b16 %v370
  %v2375 = vunpack.c.l.b16 %v371
  %v2376 = vunpack.c.h.b16 %v371
  %v2377 = vunpack.c.l.b16 %v372
  %v2378 = vunpack.c.h.b16 %v372
  %v2379 = vunpack.c.l.b16 %v373
  %v2380 = vunpack.c.h.b16 %v373
  %v2381 = vunpack.c.l.b16 %v374
  %v2382 = vunpack.c.h.b16 %v374
  %v2383 = vunpack.c.l.b16 %v375
  %v2384 = vunpack.c.h.b16 %v375
  %v2385 = vunpack.c.l.b16 %v376
  %v2386 = vunpack.c.h.b16 %v376
  %v2387 = vunpack.c.l.b16 %v377
  %v2388 = vunpack.c.h.b16 %v377
  %v2389 = vunpack.c.l.b16 %v378
  %v2390 = vunpack.c.h.b16 %v378
  %v2391 = vunpack.c.l.b16 %v379
  %v2392 = vunpack.c.h.b16 %v379
  %v2393 = vunpack.c.l.b16 %v380
  %v2394 = vunpack.c.h.b16 %v380
  %v2395 = vunpack.c.l.b16 %v381
  %v2396 = vunpack.c.h.b16 %v381
  %v2397 = vunpack.c.l.b16 %v382
  %v2398 = vunpack.c.h.b16 %v382
  %v2399 = vunpack.c.l.b16 %v383
  %v2400 = vunpack.c.h.b16 %v383
  %v2401 = vunpack.c.l.b16 %v384
  %v2402 = vunpack.c.h.b16 %v384
  %v2403 = vunpack.c.l.b16 %v385
  %v2404 = vunpack.c.h.b16 %v385
  %v2405 = vunpack.c.l.b16 %v386
  %v2406 = vunpack.c.h.b16 %v386
  %v2407 = vunpack.c.l.b16 %v387
  %v2408 = vunpack.c.h.b16 %v387
  %v2409 = vunpack.c.l.b16 %v388
  %v2410 = vunpack.c.h.b16 %v388
  %v2411 = vunpack.c.l.b16 %v389
  %v2412 = vunpack.c.h.b16 %v389
  %v2413 = vunpack.c.l.b16 %v390
  %v2414 = vunpack.c.h.b16 %v390
  %v2415 = vunpack.c.l.b16 %v391
  %v2416 = vunpack.c.h.b16 %v391
  %v2417 = vunpack.c.l.b16 %v392
  %v2418 = vunpack.c.h.b16 %v392
  %v2419 = vunpack.c.l.b16 %v393
  %v2420 = vunpack.c.h.b16 %v393
  %v2421 = vunpack.c.l.b16 %v394
  %v2422 = vunpack.c.h.b16 %v394
  %v2423 = vunpack.c.l.b16 %v395
  %v2424 = vunpack.c.h.b16 %v395
  %v2425 = vunpack.c.l.b16 %v396
  %v2426 = vunpack.c.h.b16 %v396
  %v2427 = vunpack.c.l.b16 %v397
  %v2428 = vunpack.c.h.b16 %v397
  %v2429 = vunpack.c.l.b16 %v398
  %v2430 = vunpack.c.h.b16 %v398
  %v2431 = vunpack.c.l.b16 %v399
  %v2432 = vunpack.c.h.b16 %v399
  %v2433 = vunpack.c.l.b16 %v400
  %v2434 = vunpack.c.h.b16 %v400
  %v2435 = vunpack.c.l.b16 %v401
  %v2436 = vunpack.c.h.b16 %v401
  %v2437 = vunpack.c.l.b16 %v402
  %v2438 = vunpack.c.h.b16 %v402
  %v2439 = vunpack.c.l.b16 %v403
  %v2440 = vunpack.c.h.b16 %v403
  %v2441 = vunpack.c.l.b16 %v404
  %v2442 = vunpack.c.h.b16 %v404
  %v2443 = vunpack.c.l.b16 %v405
  %v2444 = vunpack.c.h.b16 %v405
  %v2445 = vunpack.c.l.b16 %v406
  %v2446 = vunpack.c.h.b16 %v406
  %v2447 = vunpack.c.l.b16 %v407
  %v2448 = vunpack.c.h.b16 %v407
  %v2449 = vunpack.c.l.b16 %v408
  %v2450 = vunpack.c.h.b16 %v408
  %v2451 = vunpack.c.l.b16 %v409
  %v2452 = vunpack.c.h.b16 %v409
  %v2453 = vunpack.c.l.b16 %v410
  %v2454 = vunpack.c.h.b16 %v410
  %v2455 = vunpack.c.l.b16 %v411
  %v2456 = vunpack.c.h.b16 %v411
  %v2457 = vunpack.c.l.b16 %v412
  %v2458 = vunpack.c.h.b16 %v412
  %v2459 = vunpack.c.l.b16 %v413
  %v2460 = vunpack.c.h.b16 %v413
  %v2461 = vunpack.c.l.b16 %v414
  %v2462 = vunpack.c.h.b16 %v414
  %v2463 = vunpack.c.l.b16 %v415
  %v2464 = vunpack.c.h.b16 %v415
  %v2465 = vunpack.c.l.b16 %v416
  %v2466 = vunpack.c.h.b16 %v416
  %v2467 = vunpack.c.l.b16 %v417
  %v2468 = vunpack.c.h.b16 %v417
  %v2469 = vunpack.c.l.b16 %v418
  %v2470 = vunpack.c.h.b16 %v418
  %v2471 = vunpack.c.l.b16 %v419
  %v2472 = vunpack.c.h.b16 %v419
  %v2473 = vunpack.c.l.b16 %v420
  %v2474 = vunpack.c.h.b16 %v420
  %v2475 = vunpack.c.l.b16 %v421
  %v2476 = vunpack.c.h.b16 %v421
  %v2477 = vunpack.c.l.b16 %v422
  %v2478 = vunpack.c.h.b16 %v422
  %v2479 = vunpack.c.l.b16 %v423
  %v2480 = vunpack.c.h.b16 %v423
  %v2481 = vunpack.c.l.b16 %v424
  %v2482 = vunpack.c.h.b16 %v424
  %v2483 = vunpack.c.l.b16 %v425
  %v2484 = vunpack.c.h.b16 %v425
  %v2485 = vunpack.c.l.b16 %v426
  %v2486 = vunpack.c.h.b16 %v426
  %v2487 = vunpack.c.l.b16 %v427
  %v2488 = vunpack.c.h.b16 %v427
  %v2489 = vunpack.c.l.b16 %v428
  %v2490 = vunpack.c.h.b16 %v428
  %v2491 = vunpack.c.l.b16 %v429
  %v2492 = vunpack.c.h.b16 %v429
  %v2493 = vunpack.c.l.b16 %v430
  %v2494 = vunpack.c.h.b16 %v430
  %v2495 = vunpack.c.l.b16 %v431
  %v2496 = vunpack.c.h.b16 %v431
  %v2497 = vunpack.c.l.b16 %v432
  %v2498 = vunpack.c.h.b16 %v432
  %v2499 = vunpack.c.l.b16 %v433
  %v2500 = vunpack.c.h.b16 %v433
  %v2501 = vunpack.c.l.b16 %v434
  %v2502 = vunpack.c.h.b16 %v434
  %v2503 = vunpack.c.l.b16 %v435
  %v2504 = vunpack.c.h.b16 %v435
  %v2505 = vunpack.c.l.b16 %v436
  %v2506 = vunpack.c.h.b16 %v436
  %v2507 = vunpack.c.l.b16 %v437
  %v2508 = vunpack.c.h.b16 %v437
  %v2509 = vunpack.c.l.b16 %v438
  %v2510 = vunpack.c.h.b16 %v438
  %v2511 = vunpack.c.l.b16 %v439
  %v2512 = vunpack.c.h.b16 %v439
  %v2513 = vunpack.c.l.b16 %v440
  %v2514 = vunpack.c.h.b16 %v440
  %v2515 = vunpack.c.l.b16 %v441
  %v2516 = vunpack.c.h.b16 %v441
  %v2517 = vunpack.c.l.b16 %v442
  %v2518 = vunpack.c.h.b16 %v442
  %v2519 = vunpack.c.l.b16 %v443
  %v2520 = vunpack.c.h.b16 %v443
  %v2521 = vunpack.c.l.b16 %v444
  %v2522 = vunpack.c.h.b16 %v444
  %v2523 = vunpack.c.l.b16 %v445
  %v2524 = vunpack.c.h.b16 %v445
  %v2525 = vunpack.c.l.b16 %v446
  %v2526 = vunpack.c.h.b16 %v446
  %v2527 = vunpack.c.l.b16 %v447
  %v2528 = vunpack.c.h.b16 %v447
  %v2529 = vunpack.c.l.b16 %v448
  %v2530 = vunpack.c.h.b16 %v448
  %v2531 = vunpack.c.l.b16 %v449
  %v2532 = vunpack.c.h.b16 %v449
  %v2533 = vunpack.c.l.b16 %v450
  %v2534 = vunpack.c.h.b16 %v450
  %v2535 = vunpack.c.l.b16 %v451
  %v2536 = vunpack.c.h.b16 %v451
  %v2537 = vunpack.c.l.b16 %v452
  %v2538 = vunpack.c.h.b16 %v452
  %v2539 = vunpack.c.l.b16 %v453
  %v2540 = vunpack.c.h.b16 %v453
  %v2541 = vunpack.c.l.b16 %v454
  %v2542 = vunpack.c.h.b16 %v454
  %v2543 = vunpack.c.l.b16 %v455
  %v2544 = vunpack.c.h.b16 %v455
  %v2545 = vunpack.c.l.b16 %v456
  %v2546 = vunpack.c.h.b16 %v456
  %v2547 = vunpack.c.l.b16 %v457
  %v2548 = vunpack.c.h.b16 %v457
  %v2549 = vunpack.c.l.b16 %v458
  %v2550 = vunpack.c.h.b16 %v458
  %v2551 = vunpack.c.l.b16 %v459
  %v2552 = vunpack.c.h.b16 %v459
  %v2553 = vunpack.c.l.b16 %v460
  %v2554 = vunpack.c.h.b16 %v460
  %v2555 = vunpack.c.l.b16 %v461
  %v2556 = vunpack.c.h.b16 %v461
  %v2557 = vunpack.c.l.b16 %v462
  %v2558 = vunpack.c.h.b16 %v462
  %v2559 = vunpack.c.l.b16 %v463
  %v2560 = vunpack.c.h.b16 %v463
  %v2561 = vunpack.c.l.b16 %v464
  %v2562 = vunpack.c.h.b16 %v464
  %v2563 = vunpack.c.l.b16 %v465
  %v2564 = vunpack.c.h.b16 %v465
  %v2565 = vunpack.c.l.b16 %v466
  %v2566 = vunpack.c.h.b16 %v466
  %v2567 = vunpack.c.l.b16 %v467
  %v2568 = vunpack.c.h.b16 %v467
  %v2569 = vunpack.c.l.b16 %v468
  %v2570 = vunpack.c.h.b16 %v468
  %v2571 = vunpack.c.l.b16 %v469
  %v2572 = vunpack.c.h.b16 %v469
  %v2573 = vunpack.c.l.b16 %v470
  %v2574 = vunpack.c.h.b16 %v470
  %v2575 = vunpack.c.l.b16 %v471
  %v2576 = vunpack.c.h.b16 %v471
  %v2577 = vunpack.c.l.b16 %v472
  %v2578 = vunpack.c.h.b16 %v472
  %v2579 = vunpack.c.l.b16 %v473
  %v2580 = vunpack.c.h.b16 %v473
  %v2581 = vunpack.c.l.b16 %v474
  %v2582 = vunpack.c.h.b16 %v474
  %v2583 = vunpack.c.l.b16 %v475
  %v2584 = vunpack.c.h.b16 %v475
  %v2585 = vunpack.c.l.b16 %v476
  %v2586 = vunpack.c.h.b16 %v476
  %v2587 = vunpack.c.l.b16 %v477
  %v2588 = vunpack.c.h.b16 %v477
  %v2589 = vunpack.c.l.b16 %v478
  %v2590 = vunpack.c.h.b16 %v478
  %v2591 = vunpack.c.l.b16 %v479
  %v2592 = vunpack.c.h.b16 %v479
  %v2593 = vunpack.c.l.b16 %v480
  %v2594 = vunpack.c.h.b16 %v480
  %v2595 = vunpack.c.l.b16 %v481
  %v2596 = vunpack.c.h.b16 %v481
  %v2597 = vunpack.c.l.b16 %v482
  %v2598 = vunpack.c.h.b16 %v482
  %v2599 = vunpack.c.l.b16 %v483
  %v2600 = vunpack.c.h.b16 %v483
  %v2601 = vunpack.c.l.b16 %v484
  %v2602 = vunpack.c.h.b16 %v484
  %v2603 = vunpack.c.l.b16 %v485
  %v2604 = vunpack.c.h.b16 %v485
  %v2605 = vunpack.c.l.b16 %v486
  %v2606 = vunpack.c.h.b16 %v486
  %v2607 = vunpack.c.l.b16 %v487
  %v2608 = vunpack.c.h.b16 %v487
  %v2609 = vunpack.c.l.b16 %v488
  %v2610 = vunpack.c.h.b16 %v488
  %v2611 = vunpack.c.l.b16 %v489
  %v2612 = vunpack.c.h.b16 %v489
  %v2613 = vunpack.c.l.b16 %v490
  %v2614 = vunpack.c.h.b16 %v490
  %v2615 = vunpack.c.l.b16 %v491
  %v2616 = vunpack.c.h.b16 %v491
  %v2617 = vunpack.c.l.b16 %v492
  %v2618 = vunpack.c.h.b16 %v492
  %v2619 = vunpack.c.l.b16 %v493
  %v2620 = vunpack.c.h.b16 %v493
  %v2621 = vunpack.c.l.b16 %v494
  %v2622 = vunpack.c.h.b16 %v494
  %v2623 = vunpack.c.l.b16 %v495
  %v2624 = vunpack.c.h.b16 %v495
  %v2625 = vunpack.c.l.b16 %v496
  %v2626 = vunpack.c.h.b16 %v496
  %v2627 = vunpack.c.l.b16 %v497
  %v2628 = vunpack.c.h.b16 %v497
  %v2629 = vunpack.c.l.b16 %v498
  %v2630 = vunpack.c.h.b16 %v498
  %v2631 = vunpack.c.l.b16 %v499
  %v2632 = vunpack.c.h.b16 %v499
  %v2633 = vunpack.c.l.b16 %v500
  %v2634 = vunpack.c.h.b16 %v500
  %v2635 = vunpack.c.l.b16 %v501
  %v2636 = vunpack.c.h.b16 %v501
  %v2637 = vunpack.c.l.b16 %v502
  %v2638 = vunpack.c.h.b16 %v502
  %v2639 = vunpack.c.l.b16 %v503
  %v2640 = vunpack.c.h.b16 %v503
  %v2641 = vunpack.c.l.b16 %v504
  %v2642 = vunpack.c.h.b16 %v504
  %v2643 = vunpack.c.l.b16 %v505
  %v2644 = vunpack.c.h.b16 %v505
  %v2645 = vunpack.c.l.b16 %v506
  %v2646 = vunpack.c.h.b16 %v506
  %v2647 = vunpack.c.l.b16 %v507
  %v2648 = vunpack.c.h.b16 %v507
  %v2649 = vunpack.c.l.b16 %v508
  %v2650 = vunpack.c.h.b16 %v508
  %v2651 = vunpack.c.l.b16 %v509
  %v2652 = vunpack.c.h.b16 %v509
  %v2653 = vunpack.c.l.b16 %v510
  %v2654 = vunpack.c.h.b16 %v510
  %v2655 = vunpack.c.l.b16 %v511
  %v2656 = vunpack.c.h.b16 %v511
  %v2657 = vunpack.c.l.b16 %v512
  %v2658 = vunpack.c.h.b16 %v512
  %v2659 = vunpack.c.l.b16 %v513
  %v2660 = vunpack.c.h.b16 %v513
  %v2661 = vunpack.c.l.b16 %v514
  %v2662 = vunpack.c.h.b16 %v514
  %v2663 = vunpack.c.l.b16 %v515
  %v2664 = vunpack.c.h.b16 %v515
  %v2665 = vunpack.c.l.b16 %v516
  %v2666 = vunpack.c.h.b16 %v516
  %v2667 = vunpack.c.l.b16 %v517
  %v2668 = vunpack.c.h.b16 %v517
  %v2669 = vunpack.c.l.b16 %v518
  %v2670 = vunpack.c.h.b16 %v518
  %v2671 = vunpack.c.l.b16 %v519
  %v2672 = vunpack.c.h.b16 %v519
  %v2673 = vunpack.c.l.b16 %v520
  %v2674 = vunpack.c.h.b16 %v520
  %v2675 = vunpack.c.l.b16 %v521
  %v2676 = vunpack.c.h.b16 %v521
  %v2677 = vunpack.c.l.b16 %v522
  %v2678 = vunpack.c.h.b16 %v522
  %v2679 = vunpack.c.l.b16 %v523
  %v2680 = vunpack.c.h.b16 %v523
  %v2681 = vunpack.c.l.b16 %v524
  %v2682 = vunpack.c.h.b16 %v524
  %v2683 = vunpack.c.l.b16 %v525
  %v2684 = vunpack.c.h.b16 %v525
  %v2685 = vunpack.c.l.b16 %v526
  %v2686 = vunpack.c.h.b16 %v526
  %v2687 = vunpack.c.l.b16 %v527
  %v2688 = vunpack.c.h.b16 %v527
  %v2689 = vunpack.c.l.b16 %v528
  %v2690 = vunpack.c.h.b16 %v528
  %v2691 = vunpack.c.l.b16 %v529
  %v2692 = vunpack.c.h.b16 %v529
  %v2693 = vunpack.c.l.b16 %v530
  %v2694 = vunpack.c.h.b16 %v530
  %v2695 = vunpack.c.l.b16 %v531
  %v2696 = vunpack.c.h.b16 %v531
  %v2697 = vunpack.c.l.b16 %v532
  %v2698 = vunpack.c.h.b16 %v532
  %v2699 = vunpack.c.l.b16 %v533
  %v2700 = vunpack.c.h.b16 %v533
  %v2701 = vunpack.c.l.b16 %v534
  %v2702 = vunpack.c.h.b16 %v534
  %v2703 = vunpack.c.l.b16 %v535
  %v2704 = vunpack.c.h.b16 %v535
  %v2705 = vunpack.c.l.b16 %v536
  %v2706 = vunpack.c.h.b16 %v536
  %v2707 = vunpack.c.l.b16 %v537
  %v2708 = vunpack.c.h.b16 %v537
  %v2709 = vunpack.c.l.b16 %v538
  %v2710 = vunpack.c.h.b16 %v538
  %v2711 = vunpack.c.l.b16 %v539
  %v2712 = vunpack.c.h.b16 %v539
  %v2713 = vunpack.c.l.b16 %v540
  %v2714 = vunpack.c.h.b16 %v540
  %v2715 = vunpack.c.l.b16 %v541
  %v2716 = vunpack.c.h.b16 %v541
  %v2717 = vunpack.c.l.b16 %v542
  %v2718 = vunpack.c.h.b16 %v542
  %v2719 = vunpack.c.l.b16 %v543
  %v2720 = vunpack.c.h.b16 %v543
  %v2721 = vunpack.c.l.b16 %v544
  %v2722 = vunpack.c.h.b16 %v544
  %v2723 = vunpack.c.l.b16 %v545
  %v2724 = vunpack.c.h.b16 %v545
  %v2725 = vunpack.c.l.b16 %v546
  %v2726 = vunpack.c.h.b16 %v546
  %v2727 = vunpack.c.l.b16 %v547
  %v2728 = vunpack.c.h.b16 %v547
  %v2729 = vunpack.c.l.b16 %v548
  %v2730 = vunpack.c.h.b16 %v548
  %v2731 = vunpack.c.l.b16 %v549
  %v2732 = vunpack.c.h.b16 %v549
  %v2733 = vunpack.c.l.b16 %v550
  %v2734 = vunpack.c.h.b16 %v550
  %v2735 = vunpack.c.l.b16 %v551
  %v2736 = vunpack.c.h.b16 %v551
  %v2737 = vunpack.c.l.b16 %v552
  %v2738 = vunpack.c.h.b16 %v552
  %v2739 = vunpack.c.l.b16 %v553
  %v2740 = vunpack.c.h.b16 %v553
  %v2741 = vunpack.c.l.b16 %v554
  %v2742 = vunpack.c.h.b16 %v554
  %v2743 = vunpack.c.l.b16 %v555
  %v2744 = vunpack.c.h.b16 %v555
  %v2745 = vunpack.c.l.b16 %v556
  %v2746 = vunpack.c.h.b16 %v556
  %v2747 = vunpack.c.l.b16 %v557
  %v2748 = vunpack.c.h.b16 %v557
  %v2749 = vunpack.c.l.b16 %v558
  %v2750 = vunpack.c.h.b16 %v558
  %v2751 = vunpack.c.l.b16 %v559
  %v2752 = vunpack.c.h.b16 %v559
  %v2753 = vunpack.c.l.b16 %v560
  %v2754 = vunpack.c.h.b16 %v560
  %v2755 = vunpack.c.l.b16 %v561
  %v2756 = vunpack.c.h.b16 %v561
  %v2757 = vunpack.c.l.b16 %v562
  %v2758 = vunpack.c.h.b16 %v562
  %v2759 = vunpack.c.l.b16 %v563
  %v2760 = vunpack.c.h.b16 %v563
  %v2761 = vunpack.c.l.b16 %v564
  %v2762 = vunpack.c.h.b16 %v564
  %v2763 = vunpack.c.l.b16 %v565
  %v2764 = vunpack.c.h.b16 %v565
  %v2765 = vunpack.c.l.b16 %v566
  %v2766 = vunpack.c.h.b16 %v566
  %v2767 = vunpack.c.l.b16 %v567
  %v2768 = vunpack.c.h.b16 %v567
  %v2769 = vunpack.c.l.b16 %v568
  %v2770 = vunpack.c.h.b16 %v568
  %v2771 = vunpack.c.l.b16 %v569
  %v2772 = vunpack.c.h.b16 %v569
  %v2773 = vunpack.c.l.b16 %v570
  %v2774 = vunpack.c.h.b16 %v570
  %v2775 = vunpack.c.l.b16 %v571
  %v2776 = vunpack.c.h.b16 %v571
  %v2777 = vunpack.c.l.b16 %v572
  %v2778 = vunpack.c.h.b16 %v572
  %v2779 = vunpack.c.l.b16 %v573
  %v2780 = vunpack.c.h.b16 %v573
  %v2781 = vunpack.c.l.b16 %v574
  %v2782 = vunpack.c.h.b16 %v574
  %v2783 = vunpack.c.l.b16 %v575
  %v2784 = vunpack.c.h.b16 %v575
  %v2785 = vunpack.c.l.b16 %v576
  %v2786 = vunpack.c.h.b16 %v576
  %v2787 = vunpack.c.l.b16 %v577
  %v2788 = vunpack.c.h.b16 %v577
  %v2789 = vunpack.c.l.b16 %v578
  %v2790 = vunpack.c.h.b16 %v578
  %v2791 = vunpack.c.l.b16 %v579
  %v2792 = vunpack.c.h.b16 %v579
  %v2793 = vunpack.c.l.b16 %v580
  %v2794 = vunpack.c.h.b16 %v580
  %v2795 = vunpack.c.l.b16 %v581
  %v2796 = vunpack.c.h.b16 %v581
  %v2797 = vunpack.c.l.b16 %v582
  %v2798 = vunpack.c.h.b16 %v582
  %v2799 = vunpack.c.l.b16 %v583
  %v2800 = vunpack.c.h.b16 %v583
  %v2801 = vunpack.c.l.b16 %v584
  %v2802 = vunpack.c.h.b16 %v584
  %v2803 = vunpack.c.l.b16 %v585
  %v2804 = vunpack.c.h.b16 %v585
  %v2805 = vunpack.c.l.b16 %v586
  %v2806 = vunpack.c.h.b16 %v586
  %v2807 = vunpack.c.l.b16 %v587
  %v2808 = vunpack.c.h.b16 %v587
  %v2809 = vunpack.c.l.b16 %v588
  %v2810 = vunpack.c.h.b16 %v588
  %v2811 = vunpack.c.l.b16 %v589
  %v2812 = vunpack.c.h.b16 %v589
  %v2813 = vunpack.c.l.b16 %v590
  %v2814 = vunpack.c.h.b16 %v590
  %v2815 = vunpack.c.l.b16 %v591
  %v2816 = vunpack.c.h.b16 %v591
  %v2817 = vunpack.c.l.b16 %v592
  %v2818 = vunpack.c.h.b16 %v592
  %v2819 = vunpack.c.l.b16 %v593
  %v2820 = vunpack.c.h.b16 %v593
  %v2821 = vunpack.c.l.b16 %v594
  %v2822 = vunpack.c.h.b16 %v594
  %v2823 = vunpack.c.l.b16 %v595
  %v2824 = vunpack.c.h.b16 %v595
  %v2825 = vunpack.c.l.b16 %v596
  %v2826 = vunpack.c.h.b16 %v596
  %v2827 = vunpack.c.l.b16 %v597
  %v2828 = vunpack.c.h.b16 %v597
  %v2829 = vunpack.c.l.b16 %v598
  %v2830 = vunpack.c.h.b16 %v598
  %v2831 = vunpack.c.l.b16 %v599
  %v2832 = vunpack.c.h.b16 %v599
  %v2833 = vunpack.c.l.b16 %v600
  %v2834 = vunpack.c.h.b16 %v600
  %v2835 = vunpack.c.l.b16 %v601
  %v2836 = vunpack.c.h.b16 %v601
  %v2837 = vunpack.c.l.b16 %v602
  %v2838 = vunpack.c.h.b16 %v602
  %v2839 = vunpack.c.l.b16 %v603
  %v2840 = vunpack.c.h.b16 %v603
  %v2841 = vunpack.c.l.b16 %v604
  %v2842 = vunpack.c.h.b16 %v604
  %v2843 = vunpack.c.l.b16 %v605
  %v2844 = vunpack.c.h.b16 %v605
  %v2845 = vunpack.c.l.b16 %v606
  %v2846 = vunpack.c.h.b16 %v606
  %v2847 = vunpack.c.l.b16 %v607
  %v2848 = vunpack.c.h.b16 %v607
  %v2849 = vunpack.c.l.b16 %v608
  %v2850 = vunpack.c.h.b16 %v608
  %v2851 = vunpack.c.l.b16 %v609
  %v2852 = vunpack.c.h.b16 %v609
  %v2853 = vunpack.c.l.b16 %v610
  %v2854 = vunpack.c.h.b16 %v610
  %v2855 = vunpack.c.l.b16 %v611
  %v2856 = vunpack.c.h.b16 %v611
  %v2857 = vunpack.c.l.b16 %v612
  %v2858 = vunpack.c.h.b16 %v612
  %v2859 = vunpack.c.l.b16 %v613
  %v2860 = vunpack.c.h.b16 %v613
  %v2861 = vunpack.c.l.b16 %v614
  %v2862 = vunpack.c.h.b16 %v614
  %v2863 = vunpack.c.l.b16 %v615
  %v2864 = vunpack.c.h.b16 %v615
  %v2865 = vunpack.c.l.b16 %v616
  %v2866 = vunpack.c.h.b16 %v616
  %v2867 = vunpack.c.l.b16 %v617
  %v2868 = vunpack.c.h.b16 %v617
  %v2869 = vunpack.c.l.b16 %v618
  %v2870 = vunpack.c.h.b16 %v618
  %v2871 = vunpack.c.l.b16 %v619
  %v2872 = vunpack.c.h.b16 %v619
  %v2873 = vunpack.c.l.b16 %v620
  %v2874 = vunpack.c.h.b16 %v620
  %v2875 = vunpack.c.l.b16 %v621
  %v2876 = vunpack.c.h.b16 %v621
  %v2877 = vunpack.c.l.b16 %v622
  %v2878 = vunpack.c.h.b16 %v622
  %v2879 = vunpack.c.l.b16 %v623
  %v2880 = vunpack.c.h.b16 %v623
  %v2881 = vunpack.c.l.b16 %v624
  %v2882 = vunpack.c.h.b16 %v624
  %v2883 = vunpack.c.l.b16 %v625
  %v2884 = vunpack.c.h.b16 %v625
  %v2885 = vunpack.c.l.b16 %v626
  %v2886 = vunpack.c.h.b16 %v626
  %v2887 = vunpack.c.l.b16 %v627
  %v2888 = vunpack.c.h.b16 %v627
  %v2889 = vunpack.c.l.b16 %v628
  %v2890 = vunpack.c.h.b16 %v628
  %v2891 = vunpack.c.l.b16 %v629
  %v2892 = vunpack.c.h.b16 %v629
  %v2893 = vunpack.c.l.b16 %v630
  %v2894 = vunpack.c.h.b16 %v630
  %v2895 = vunpack.c.l.b16 %v631
  %v2896 = vunpack.c.h.b16 %v631
  %v2897 = vunpack.c.l.b16 %v632
  %v2898 = vunpack.c.h.b16 %v632
  %v2899 = vunpack.c.l.b16 %v633
  %v2900 = vunpack.c.h.b16 %v633
  %v2901 = vunpack.c.l.b16 %v634
  %v2902 = vunpack.c.h.b16 %v634
  %v2903 = vunpack.c.l.b16 %v635
  %v2904 = vunpack.c.h.b16 %v635
  %v2905 = vunpack.c.l.b16 %v636
  %v2906 = vunpack.c.h.b16 %v636
  %v2907 = vunpack.c.l.b16 %v637
  %v2908 = vunpack.c.h.b16 %v637
  %v2909 = vunpack.c.l.b16 %v638
  %v2910 = vunpack.c.h.b16 %v638
  %v2911 = vunpack.c.l.b16 %v639
  %v2912 = vunpack.c.h.b16 %v639
  %v2913 = vunpack.c.l.b16 %v640
  %v2914 = vunpack.c.h.b16 %v640
  %v2915 = vunpack.c.l.b16 %v641
  %v2916 = vunpack.c.h.b16 %v641
  %v2917 = vunpack.c.l.b16 %v642
  %v2918 = vunpack.c.h.b16 %v642
  %v2919 = vunpack.c.l.b16 %v643
  %v2920 = vunpack.c.h.b16 %v643
  %v2921 = vunpack.c.l.b16 %v644
  %v2922 = vunpack.c.h.b16 %v644
  %v2923 = vunpack.c.l.b16 %v645
  %v2924 = vunpack.c.h.b16 %v645
  %v2925 = vunpack.c.l.b16 %v646
  %v2926 = vunpack.c.h.b16 %v646
  %v2927 = vunpack.c.l.b16 %v647
  %v2928 = vunpack.c.h.b16 %v647
  %v2929 = vunpack.c.l.b16 %v648
  %v2930 = vunpack.c.h.b16 %v648
  %v2931 = vunpack.c.l.b16 %v649
  %v2932 = vunpack.c.h.b16 %v649
  %v2933 = vunpack.c.l.b16 %v650
  %v2934 = vunpack.c.h.b16 %v650
  %v2935 = vunpack.c.l.b16 %v651
  %v2936 = vunpack.c.h.b16 %v651
  %v2937 = vunpack.c.l.b16 %v652
  %v2938 = vunpack.c.h.b16 %v652
  %v2939 = vunpack.c.l.b16 %v653
  %v2940 = vunpack.c.h.b16 %v653
  %v2941 = vunpack.c.l.b16 %v654
  %v2942 = vunpack.c.h.b16 %v654
  %v2943 = vunpack.c.l.b16 %v655
  %v2944 = vunpack.c.h.b16 %v655
  %v2945 = vunpack.c.l.b16 %v656
  %v2946 = vunpack.c.h.b16 %v656
  %v2947 = vunpack.c.l.b16 %v657
  %v2948 = vunpack.c.h.b16 %v657
  %v2949 = vunpack.c.l.b16 %v658
  %v2950 = vunpack.c.h.b16 %v658
  %v2951 = vunpack.c.l.b16 %v659
  %v2952 = vunpack.c.h.b16 %v659
  %v2953 = vunpack.c.l.b16 %v660
  %v2954 = vunpack.c.h.b16 %v660
  %v2955 = vunpack.c.l.b16 %v661
  %v2956 = vunpack.c.h.b16 %v661
  %v2957 = vunpack.c.l.b16 %v662
  %v2958 = vunpack.c.h.b16 %v662
  %v2959 = vunpack.c.l.b16 %v663
  %v2960 = vunpack.c.h.b16 %v663
  %v2961 = vunpack.c.l.b16 %v664
  %v2962 = vunpack.c.h.b16 %v664
  %v2963 = vunpack.c.l.b16 %v665
  %v2964 = vunpack.c.h.b16 %v665
  %v2965 = vunpack.c.l.b16 %v666
  %v2966 = vunpack.c.h.b16 %v666
  %v2967 = vunpack.c.l.b16 %v667
  %v2968 = vunpack.c.h.b16 %v667
  %v2969 = vunpack.c.l.b16 %v668
  %v2970 = vunpack.c.h.b16 %v668
  %v2971 = vunpack.c.l.b16 %v669
  %v2972 = vunpack.c.h.b16 %v669
  %v2973 = vunpack.c.l.b16 %v670
  %v2974 = vunpack.c.h.b16 %v670
  %v2975 = vunpack.c.l.b16 %v671
  %v2976 = vunpack.c.h.b16 %v671
  %v2977 = vunpack.c.l.b16 %v672
  %v2978 = vunpack.c.h.b16 %v672
  %v2979 = vunpack.c.l.b16 %v673
  %v2980 = vunpack.c.h.b16 %v673
  %v2981 = vunpack.c.l.b16 %v674
  %v2982 = vunpack.c.h.b16 %v674
  %v2983 = vunpack.c.l.b16 %v675
  %v2984 = vunpack.c.h.b16 %v675
  %v2985 = vunpack.c.l.b16 %v676
  %v2986 = vunpack.c.h.b16 %v676
  %v2987 = vunpack.c.l.b16 %v677
  %v2988 = vunpack.c.h.b16 %v677
  %v2989 = vunpack.c.l.b16 %v678
  %v2990 = vunpack.c.h.b16 %v678
  %v2991 = vunpack.c.l.b16 %v679
  %v2992 = vunpack.c.h.b16 %v679
  %v2993 = vunpack.c.l.b16 %v680
  %v2994 = vunpack.c.h.b16 %v680
  %v2995 = vunpack.c.l.b16 %v681
  %v2996 = vunpack.c.h.b16 %v681
  %v2997 = vunpack.c.l.b16 %v682
  %v2998 = vunpack.c.h.b16 %v682
  %v2999 = vunpack.c.l.b16 %v683
  %v3000 = vunpack.c.h.b16 %v683
  %v3001 = vunpack.c.l.b16 %v684
  %v3002 = vunpack.c.h.b16 %v684
  %v3003 = vunpack.c.l.b16 %v685
  %v3004 = vunpack.c.h.b16 %v685
  %v3005 = vunpack.c.l.b16 %v686
  %v3006 = vunpack.c.h.b16 %v686
  %v3007 = vunpack.c.l.b16 %v687
  %v3008 = vunpack.c.h.b16 %v687
  %v3009 = vunpack.c.l.b16 %v688
  %v3010 = vunpack.c.h.b16 %v688
  %v3011 = vunpack.c.l.b16 %v689
  %v3012 = vunpack.c.h.b16 %v689
  %v3013 = vunpack.c.l.b16 %v690
  %v3014 = vunpack.c.h.b16 %v690
  %v3015 = vunpack.c.l.b16 %v691
  %v3016 = vunpack.c.h.b16 %v691
  %v3017 = vunpack.c.l.b16 %v692
  %v3018 = vunpack.c.h.b16 %v692
  %v3019 = vunpack.c.l.b16 %v693
  %v3020 = vunpack.c.h.b16 %v693
  %v3021 = vunpack.c.l.b16 %v694
  %v3022 = vunpack.c.h.b16 %v694
  %v3023 = vunpack.c.l.b16 %v695
  %v3024 = vunpack.c.h.b16 %v695
  %v3025 = vunpack.c.l.b16 %v696
  %v3026 = vunpack.c.h.b16 %v696
  %v3027 = vunpack.c.l.b16 %v697
  %v3028 = vunpack.c.h.b16 %v697
  %v3029 = vunpack.c.l.b16 %v698
  %v3030 = vunpack.c.h.b16 %v698
  %v3031 = vunpack.c.l.b16 %v699
  %v3032 = vunpack.c.h.b16 %v699
  %v3033 = vunpack.c.l.b16 %v700
  %v3034 = vunpack.c.h.b16 %v700
  %v3035 = vunpack.c.l.b16 %v701
  %v3036 = vunpack.c.h.b16 %v701
  %v3037 = vunpack.c.l.b16 %v702
  %v3038 = vunpack.c.h.b16 %v702
  %v3039 = vunpack.c.l.b16 %v703
  %v3040 = vunpack.c.h.b16 %v703
  %v3041 = vunpack.c.l.b16 %v704
  %v3042 = vunpack.c.h.b16 %v704
  %v3043 = vunpack.c.l.b16 %v705
  %v3044 = vunpack.c.h.b16 %v705
  %v3045 = vunpack.c.l.b16 %v706
  %v3046 = vunpack.c.h.b16 %v706
  %v3047 = vunpack.c.l.b16 %v707
  %v3048 = vunpack.c.h.b16 %v707
  %v3049 = vunpack.c.l.b16 %v708
  %v3050 = vunpack.c.h.b16 %v708
  %v3051 = vunpack.c.l.b16 %v709
  %v3052 = vunpack.c.h.b16 %v709
  %v3053 = vunpack.c.l.b16 %v710
  %v3054 = vunpack.c.h.b16 %v710
  %v3055 = vunpack.c.l.b16 %v711
  %v3056 = vunpack.c.h.b16 %v711
  %v3057 = vunpack.c.l.b16 %v712
  %v3058 = vunpack.c.h.b16 %v712
  %v3059 = vunpack.c.l.b16 %v713
  %v3060 = vunpack.c.h.b16 %v713
  %v3061 = vunpack.c.l.b16 %v714
  %v3062 = vunpack.c.h.b16 %v714
  %v3063 = vunpack.c.l.b16 %v715
  %v3064 = vunpack.c.h.b16 %v715
  %v3065 = vunpack.c.l.b16 %v716
  %v3066 = vunpack.c.h.b16 %v716
  %v3067 = vunpack.c.l.b16 %v717
  %v3068 = vunpack.c.h.b16 %v717
  %v3069 = vunpack.c.l.b16 %v718
  %v3070 = vunpack.c.h.b16 %v718
  %v3071 = vunpack.c.l.b16 %v719
  %v3072 = vunpack.c.h.b16 %v719
  %v3073 = vunpack.c.l.b16 %v720
  %v3074 = vunpack.c.h.b16 %v720
  %v3075 = vunpack.c.l.b16 %v721
  %v3076 = vunpack.c.h.b16 %v721
  %v3077 = vunpack.c.l.b16 %v722
  %v3078 = vunpack.c.h.b16 %v722
  %v3079 = vunpack.c.l.b16 %v723
  %v3080 = vunpack.c.h.b16 %v723
  %v3081 = vunpack.c.l.b16 %v724
  %v3082 = vunpack.c.h.b16 %v724
  %v3083 = vunpack.c.l.b16 %v725
  %v3084 = vunpack.c.h.b16 %v725
  %v3085 = vunpack.c.l.b16 %v726
  %v3086 = vunpack.c.h.b16 %v726
  %v3087 = vunpack.c.l.b16 %v727
  %v3088 = vunpack.c.h.b16 %v727
  %v3089 = vunpack.c.l.b16 %v728
  %v3090 = vunpack.c.h.b16 %v728
  %v3091 = vunpack.c.l.b16 %v729
  %v3092 = vunpack.c.h.b16 %v729
  %v3093 = vunpack.c.l.b16 %v730
  %v3094 = vunpack.c.h.b16 %v730
  %v3095 = vunpack.c.l.b16 %v731
  %v3096 = vunpack.c.h.b16 %v731
  %v3097 = vunpack.c.l.b16 %v732
  %v3098 = vunpack.c.h.b16 %v732
  %v3099 = vunpack.c.l.b16 %v733
  %v3100 = vunpack.c.h.b16 %v733
  %v3101 = vunpack.c.l.b16 %v734
  %v3102 = vunpack.c.h.b16 %v734
  %v3103 = vunpack.c.l.b16 %v735
  %v3104 = vunpack.c.h.b16 %v735
  %v3105 = vunpack.c.l.b16 %v736
  %v3106 = vunpack.c.h.b16 %v736
  %v3107 = vunpack.c.l.b16 %v737
  %v3108 = vunpack.c.h.b16 %v737
  %v3109 = vunpack.c.l.b16 %v738
  %v3110 = vunpack.c.h.b16 %v738
  %v3111 = vunpack.c.l.b16 %v739
  %v3112 = vunpack.c.h.b16 %v739
  %v3113 = vunpack.c.l.b16 %v740
  %v3114 = vunpack.c.h.b16 %v740
  %v3115 = vunpack.c.l.b16 %v741
  %v3116 = vunpack.c.h.b16 %v741
  %v3117 = vunpack.c.l.b16 %v742
  %v3118 = vunpack.c.h.b16 %v742
  %v3119 = vunpack.c.l.b16 %v743
  %v3120 = vunpack.c.h.b16 %v743
  %v3121 = vunpack.c.l.b16 %v744
  %v3122 = vunpack.c.h.b16 %v744
  %v3123 = vunpack.c.l.b16 %v745
  %v3124 = vunpack.c.h.b16 %v745
  %v3125 = vunpack.c.l.b16 %v746
  %v3126 = vunpack.c.h.b16 %v746
  %v3127 = vunpack.c.l.b16 %v747
  %v3128 = vunpack.c.h.b16 %v747
  %v3129 = vunpack.c.l.b16 %v748
  %v3130 = vunpack.c.h.b16 %v748
  %v3131 = vunpack.c.l.b16 %v749
  %v3132 = vunpack.c.h.b16 %v749
  %v3133 = vunpack.c.l.b16 %v750
  %v3134 = vunpack.c.h.b16 %v750
  %v3135 = vunpack.c.l.b16 %v751
  %v3136 = vunpack.c.h.b16 %v751
  %v3137 = vunpack.c.l.b16 %v752
  %v3138 = vunpack.c.h.b16 %v752
  %v3139 = vunpack.c.l.b16 %v753
  %v3140 = vunpack.c.h.b16 %v753
  %v3141 = vunpack.c.l.b16 %v754
  %v3142 = vunpack.c.h.b16 %v754
  %v3143 = vunpack.c.l.b16 %v755
  %v3144 = vunpack.c.h.b16 %v755
  %v3145 = vunpack.c.l.b16 %v756
  %v3146 = vunpack.c.h.b16 %v756
  %v3147 = vunpack.c.l.b16 %v757
  %v3148 = vunpack.c.h.b16 %v757
  %v3149 = vunpack.c.l.b16 %v758
  %v3150 = vunpack.c.h.b16 %v758
  %v3151 = vunpack.c.l.b16 %v759
  %v3152 = vunpack.c.h.b16 %v759
  %v3153 = vunpack.c.l.b16 %v760
  %v3154 = vunpack.c.h.b16 %v760
  %v3155 = vunpack.c.l.b16 %v761
  %v3156 = vunpack.c.h.b16 %v761
  %v3157 = vunpack.c.l.b16 %v762
  %v3158 = vunpack.c.h.b16 %v762
  %v3159 = vunpack.c.l.b16 %v763
  %v3160 = vunpack.c.h.b16 %v763
  %v3161 = vunpack.c.l.b16 %v764
  %v3162 = vunpack.c.h.b16 %v764
  %v3163 = vunpack.c.l.b16 %v765
  %v3164 = vunpack.c.h.b16 %v765
  %v3165 = vunpack.c.l.b16 %v766
  %v3166 = vunpack.c.h.b16 %v766
  %v3167 = vunpack.c.l.b16 %v767
  %v3168 = vunpack.c.h.b16 %v767
  %v3169 = vunpack.c.l.b16 %v768
  %v3170 = vunpack.c.h.b16 %v768
  %v3171 = vunpack.c.l.b16 %v769
  %v3172 = vunpack.c.h.b16 %v769
  %v3173 = vunpack.c.l.b16 %v770
  %v3174 = vunpack.c.h.b16 %v770
  %v3175 = vunpack.c.l.b16 %v771
  %v3176 = vunpack.c.h.b16 %v771
  %v3177 = vunpack.c.l.b16 %v772
  %v3178 = vunpack.c.h.b16 %v772
  %v3179 = vunpack.c.l.b16 %v773
  %v3180 = vunpack.c.h.b16 %v773
  %v3181 = vunpack.c.l.b16 %v774
  %v3182 = vunpack.c.h.b16 %v774
  %v3183 = vunpack.c.l.b16 %v775
  %v3184 = vunpack.c.h.b16 %v775
  %v3185 = vunpack.c.l.b16 %v776
  %v3186 = vunpack.c.h.b16 %v776
  %v3187 = vunpack.c.l.b16 %v777
  %v3188 = vunpack.c.h.b16 %v777
  %v3189 = vunpack.c.l.b16 %v778
  %v3190 = vunpack.c.h.b16 %v778
  %v3191 = vunpack.c.l.b16 %v779
  %v3192 = vunpack.c.h.b16 %v779
  %v3193 = vunpack.c.l.b16 %v780
  %v3194 = vunpack.c.h.b16 %v780
  %v3195 = vunpack.c.l.b16 %v781
  %v3196 = vunpack.c.h.b16 %v781
  %v3197 = vunpack.c.l.b16 %v782
  %v3198 = vunpack.c.h.b16 %v782
  %v3199 = vunpack.c.l.b16 %v783
  %v3200 = vunpack.c.h.b16 %v783
  %v3201 = vunpack.c.l.b16 %v784
  %v3202 = vunpack.c.h.b16 %v784
  %v3203 = vunpack.c.l.b16 %v785
  %v3204 = vunpack.c.h.b16 %v785
  %v3205 = vunpack.c.l.b16 %v786
  %v3206 = vunpack.c.h.b16 %v786
  %v3207 = vunpack.c.l.b16 %v787
  %v3208 = vunpack.c.h.b16 %v787
  %v3209 = vunpack.c.l.b16 %v788
  %v3210 = vunpack.c.h.b16 %v788
  %v3211 = vunpack.c.l.b16 %v789
  %v3212 = vunpack.c.h.b16 %v789
  %v3213 = vunpack.c.l.b16 %v790
  %v3214 = vunpack.c.h.b16 %v790
  %v3215 = vunpack.c.l.b16 %v791
  %v3216 = vunpack.c.h.b16 %v791
  %v3217 = vunpack.c.l.b16 %v792
  %v3218 = vunpack.c.h.b16 %v792
  %v3219 = vunpack.c.l.b16 %v793
  %v3220 = vunpack.c.h.b16 %v793
  %v3221 = vunpack.c.l.b16 %v794
  %v3222 = vunpack.c.h.b16 %v794
  %v3223 = vunpack.c.l.b16 %v795
  %v3224 = vunpack.c.h.b16 %v795
  %v3225 = vunpack.c.l.b16 %v796
  %v3226 = vunpack.c.h.b16 %v796
  %v3227 = vunpack.c.l.b16 %v797
  %v3228 = vunpack.c.h.b16 %v797
  %v3229 = vunpack.c.l.b16 %v798
  %v3230 = vunpack.c.h.b16 %v798
  %v3231 = vunpack.c.l.b16 %v799
  %v3232 = vunpack.c.h.b16 %v799
  %v3233 = vpack.c.b16 %v1705, %v1697
  %v3234 = vpack.c.b16 %v1706, %v1698
  %v3235 = vpack.c.b16 %v1707, %v1699
  %v3236 = vpack.c.b16 %v1708, %v1700
  %v3237 = vpack.c.b16 %v1709, %v1701
  %v3238 = vpack.c.b16 %v1710, %v1702
  %v3239 = vpack.c.b16 %v1711, %v1703
  %v3240 = vpack.c.b16 %v1712, %v1704
  %v3241 = vpack.c.b16 %v1721, %v1713
  %v3242 = vpack.c.b16 %v1722, %v1714
  %v3243 = vpack.c.b16 %v1723, %v1715
  %v3244 = vpack.c.b16 %v1724, %v1716
  %v3245 = vpack.c.b16 %v1725, %v1717
  %v3246 = vpack.c.b16 %v1726, %v1718
  %v3247 = vpack.c.b16 %v1727, %v1719
  %v3248 = vpack.c.b16 %v1728, %v1720
  %v3249 = vpack.c.b16 %v1737, %v1729
  %v3250 = vpack.c.b16 %v1738, %v1730
  %v3251 = vpack.c.b16 %v1739, %v1731
  %v3252 = vpack.c.b16 %v1740, %v1732
  %v3253 = vpack.c.b16 %v1741, %v1733
  %v3254 = vpack.c.b16 %v1742, %v1734
  %v3255 = vpack.c.b16 %v1743, %v1735
  %v3256 = vpack.c.b16 %v1744, %v1736
  %v3257 = vpack.c.b16 %v1753, %v1745
  %v3258 = vpack.c.b16 %v1754, %v1746
  %v3259 = vpack.c.b16 %v1755, %v1747
  %v3260 = vpack.c.b16 %v1756, %v1748
  %v3261 = vpack.c.b16 %v1757, %v1749
  %v3262 = vpack.c.b16 %v1758, %v1750
  %v3263 = vpack.c.b16 %v1759, %v1751
  %v3264 = vpack.c.b16 %v1760, %v1752
  %v3265 = vpack.c.b16 %v1769, %v1761
  %v3266 = vpack.c.b16 %v1770, %v1762
  %v3267 = vpack.c.b16 %v1771, %v1763
  %v3268 = vpack.c.b16 %v1772, %v1764
  %v3269 = vpack.c.b16 %v1773, %v1765
  %v3270 = vpack.c.b16 %v1774, %v1766
  %v3271 = vpack.c.b16 %v1775, %v1767
  %v3272 = vpack.c.b16 %v1776, %v1768
  %v3273 = vpack.c.b16 %v1785, %v1777
  %v3274 = vpack.c.b16 %v1786, %v1778
  %v3275 = vpack.c.b16 %v1787, %v1779
  %v3276 = vpack.c.b16 %v1788, %v1780
  %v3277 = vpack.c.b16 %v1789, %v1781
  %v3278 = vpack.c.b16 %v1790, %v1782
  %v3279 = vpack.c.b16 %v1791, %v1783
  %v3280 = vpack.c.b16 %v1792, %v1784
  %v3281 = vpack.c.b16 %v1801, %v1793
  %v3282 = vpack.c.b16 %v1802, %v1794
  %v3283 = vpack.c.b16 %v1803, %v1795
  %v3284 = vpack.c.b16 %v1804, %v1796
  %v3285 = vpack.c.b16 %v1805, %v1797
  %v3286 = vpack.c.b16 %v1806, %v1798
  %v3287 = vpack.c.b16 %v1807, %v1799
  %v3288 = vpack.c.b16 %v1808, %v1800
  %v3289 = vpack.c.b16 %v1817, %v1809
  %v3290 = vpack.c.b16 %v1818, %v1810
  %v3291 = vpack.c.b16 %v1819, %v1811
  %v3292 = vpack.c.b16 %v1820, %v1812
  %v3293 = vpack.c.b16 %v1821, %v1813
  %v3294 = vpack.c.b16 %v1822, %v1814
  %v3295 = vpack.c.b16 %v1823, %v1815
  %v3296 = vpack.c.b16 %v1824, %v1816
  %v3297 = vpack.c.b16 %v1833, %v1825
  %v3298 = vpack.c.b16 %v1834, %v1826
  %v3299 = vpack.c.b16 %v1835, %v1827
  %v3300 = vpack.c.b16 %v1836, %v1828
  %v3301 = vpack.c.b16 %v1837, %v1829
  %v3302 = vpack.c.b16 %v1838, %v1830
  %v3303 = vpack.c.b16 %v1839, %v1831
  %v3304 = vpack.c.b16 %v1840, %v1832
  %v3305 = vpack.c.b16 %v1849, %v1841
  %v3306 = vpack.c.b16 %v1850, %v1842
  %v3307 = vpack.c.b16 %v1851, %v1843
  %v3308 = vpack.c.b16 %v1852, %v1844
  %v3309 = vpack.c.b16 %v1853, %v1845
  %v3310 = vpack.c.b16 %v1854, %v1846
  %v3311 = vpack.c.b16 %v1855, %v1847
  %v3312 = vpack.c.b16 %v1856, %v1848
  %v3313 = vpack.c.b16 %v1865, %v1857
  %v3314 = vpack.c.b16 %v1866, %v1858
  %v3315 = vpack.c.b16 %v1867, %v1859
  %v3316 = vpack.c.b16 %v1868, %v1860
  %v3317 = vpack.c.b16 %v1869, %v1861
  %v3318 = vpack.c.b16 %v1870, %v1862
  %v3319 = vpack.c.b16 %v1871, %v1863
  %v3320 = vpack.c.b16 %v1872, %v1864
  %v3321 = vpack.c.b16 %v1881, %v1873
  %v3322 = vpack.c.b16 %v1882, %v1874
  %v3323 = vpack.c.b16 %v1883, %v1875
  %v3324 = vpack.c.b16 %v1884, %v1876
  %v3325 = vpack.c.b16 %v1885, %v1877
  %v3326 = vpack.c.b16 %v1886, %v1878
  %v3327 = vpack.c.b16 %v1887, %v1879
  %v3328 = vpack.c.b16 %v1888, %v1880
  %v3329 = vpack.c.b16 %v1897, %v1889
  %v3330 = vpack.c.b16 %v1898, %v1890
  %v3331 = vpack.c.b16 %v1899, %v1891
  %v3332 = vpack.c.b16 %v1900, %v1892
  %v3333 = vpack.c.b16 %v1901, %v1893
  %v3334 = vpack.c.b16 %v1902, %v1894
  %v3335 = vpack.c.b16 %v1903, %v1895
  %v3336 = vpack.c.b16 %v1904, %v1896
  %v3337 = vpack.c.b16 %v1913, %v1905
  %v3338 = vpack.c.b16 %v1914, %v1906
  %v3339 = vpack.c.b16 %v1915, %v1907
  %v3340 = vpack.c.b16 %v1916, %v1908
  %v3341 = vpack.c.b16 %v1917, %v1909
  %v3342 = vpack.c.b16 %v1918, %v1910
  %v3343 = vpack.c.b16 %v1919, %v1911
  %v3344 = vpack.c.b16 %v1920, %v1912
  %v3345 = vpack.c.b16 %v1929, %v1921
  %v3346 = vpack.c.b16 %v1930, %v1922
  %v3347 = vpack.c.b16 %v1931, %v1923
  %v3348 = vpack.c.b16 %v1932, %v1924
  %v3349 = vpack.c.b16 %v1933, %v1925
  %v3350 = vpack.c.b16 %v1934, %v1926
  %v3351 = vpack.c.b16 %v1935, %v1927
  %v3352 = vpack.c.b16 %v1936, %v1928
  %v3353 = vpack.c.b16 %v1945, %v1937
  %v3354 = vpack.c.b16 %v1946, %v1938
  %v3355 = vpack.c.b16 %v1947, %v1939
  %v3356 = vpack.c.b16 %v1948, %v1940
  %v3357 = vpack.c.b16 %v1949, %v1941
  %v3358 = vpack.c.b16 %v1950, %v1942
  %v3359 = vpack.c.b16 %v1951, %v1943
  %v3360 = vpack.c.b16 %v1952, %v1944
  %v3361 = vpack.c.b16 %v1961, %v1953
  %v3362 = vpack.c.b16 %v1962, %v1954
  %v3363 = vpack.c.b16 %v1963, %v1955
  %v3364 = vpack.c.b16 %v1964, %v1956
  %v3365 = vpack.c.b16 %v1965, %v1957
  %v3366 = vpack.c.b16 %v1966, %v1958
  %v3367 = vpack.c.b16 %v1967, %v1959
  %v3368 = vpack.c.b16 %v1968, %v1960
  %v3369 = vpack.c.b16 %v1977, %v1969
  %v3370 = vpack.c.b16 %v1978, %v1970
  %v3371 = vpack.c.b16 %v1979, %v1971
  %v3372 = vpack.c.b16 %v1980, %v1972
  %v3373 = vpack.c.b16 %v1981, %v1973
  %v3374 = vpack.c.b16 %v1982, %v1974
  %v3375 = vpack.c.b16 %v1983, %v1975
  %v3376 = vpack.c.b16 %v1984, %v1976
  %v3377 = vpack.c.b16 %v1993, %v1985
  %v3378 = vpack.c.b16 %v1994, %v1986
  %v3379 = vpack.c.b16 %v1995, %v1987
  %v3380 = vpack.c.b16 %v1996, %v1988
  %v3381 = vpack.c.b16 %v1997, %v1989
  %v3382 = vpack.c.b16 %v1998, %v1990
  %v3383 = vpack.c.b16 %v1999, %v1991
  %v3384 = vpack.c.b16 %v2000, %v1992
  %v3385 = vpack.c.b16 %v2009, %v2001
  %v3386 = vpack.c.b16 %v2010, %v2002
  %v3387 = vpack.c.b16 %v2011, %v2003
  %v3388 = vpack.c.b16 %v2012, %v2004
  %v3389 = vpack.c.b16 %v2013, %v2005
  %v3390 = vpack.c.b16 %v2014, %v2006
  %v3391 = vpack.c.b16 %v2015, %v2007
  %v3392 = vpack.c.b16 %v2016, %v2008
  %v3393 = vpack.c.b16 %v2025, %v2017
  %v3394 = vpack.c.b16 %v2026, %v2018
  %v3395 = vpack.c.b16 %v2027, %v2019
  %v3396 = vpack.c.b16 %v2028, %v2020
  %v3397 = vpack.c.b16 %v2029, %v2021
  %v3398 = vpack.c.b16 %v2030, %v2022
  %v3399 = vpack.c.b16 %v2031, %v2023
  %v3400 = vpack.c.b16 %v2032, %v2024
  %v3401 = vpack.c.b16 %v2041, %v2033
  %v3402 = vpack.c.b16 %v2042, %v2034
  %v3403 = vpack.c.b16 %v2043, %v2035
  %v3404 = vpack.c.b16 %v2044, %v2036
  %v3405 = vpack.c.b16 %v2045, %v2037
  %v3406 = vpack.c.b16 %v2046, %v2038
  %v3407 = vpack.c.b16 %v2047, %v2039
  %v3408 = vpack.c.b16 %v2048, %v2040
  %v3409 = vpack.c.b16 %v2057, %v2049
  %v3410 = vpack.c.b16 %v2058, %v2050
  %v3411 = vpack.c.b16 %v2059, %v2051
  %v3412 = vpack.c.b16 %v2060, %v2052
  %v3413 = vpack.c.b16 %v2061, %v2053
  %v3414 = vpack.c.b16 %v2062, %v2054
  %v3415 = vpack.c.b16 %v2063, %v2055
  %v3416 = vpack.c.b16 %v2064, %v2056
  %v3417 = vpack.c.b16 %v2073, %v2065
  %v3418 = vpack.c.b16 %v2074, %v2066
  %v3419 = vpack.c.b16 %v2075, %v2067
  %v3420 = vpack.c.b16 %v2076, %v2068
  %v3421 = vpack.c.b16 %v2077, %v2069
  %v3422 = vpack.c.b16 %v2078, %v2070
  %v3423 = vpack.c.b16 %v2079, %v2071
  %v3424 = vpack.c.b16 %v2080, %v2072
  %v3425 = vpack.c.b16 %v2089, %v2081
  %v3426 = vpack.c.b16 %v2090, %v2082
  %v3427 = vpack.c.b16 %v2091, %v2083
  %v3428 = vpack.c.b16 %v2092, %v2084
  %v3429 = vpack.c.b16 %v2093, %v2085
  %v3430 = vpack.c.b16 %v2094, %v2086
  %v3431 = vpack.c.b16 %v2095, %v2087
  %v3432 = vpack.c.b16 %v2096, %v2088
  %v3433 = vpack.c.b16 %v2105, %v2097
  %v3434 = vpack.c.b16 %v2106, %v2098
  %v3435 = vpack.c.b16 %v2107, %v2099
  %v3436 = vpack.c.b16 %v2108, %v2100
  %v3437 = vpack.c.b16 %v2109, %v2101
  %v3438 = vpack.c.b16 %v2110, %v2102
  %v3439 = vpack.c.b16 %v2111, %v2103
  %v3440 = vpack.c.b16 %v2112, %v2104
  %v3441 = vpack.c.b16 %v2121, %v2113
  %v3442 = vpack.c.b16 %v2122, %v2114
  %v3443 = vpack.c.b16 %v2123, %v2115
  %v3444 = vpack.c.b16 %v2124, %v2116
  %v3445 = vpack.c.b16 %v2125, %v2117
  %v3446 = vpack.c.b16 %v2126, %v2118
  %v3447 = vpack.c.b16 %v2127, %v2119
  %v3448 = vpack.c.b16 %v2128, %v2120
  %v3449 = vpack.c.b16 %v2137, %v2129
  %v3450 = vpack.c.b16 %v2138, %v2130
  %v3451 = vpack.c.b16 %v2139, %v2131
  %v3452 = vpack.c.b16 %v2140, %v2132
  %v3453 = vpack.c.b16 %v2141, %v2133
  %v3454 = vpack.c.b16 %v2142, %v2134
  %v3455 = vpack.c.b16 %v2143, %v2135
  %v3456 = vpack.c.b16 %v2144, %v2136
  %v3457 = vpack.c.b16 %v2153, %v2145
  %v3458 = vpack.c.b16 %v2154, %v2146
  %v3459 = vpack.c.b16 %v2155, %v2147
  %v3460 = vpack.c.b16 %v2156, %v2148
  %v3461 = vpack.c.b16 %v2157, %v2149
  %v3462 = vpack.c.b16 %v2158, %v2150
  %v3463 = vpack.c.b16 %v2159, %v2151
  %v3464 = vpack.c.b16 %v2160, %v2152
  %v3465 = vpack.c.b16 %v2169, %v2161
  %v3466 = vpack.c.b16 %v2170, %v2162
  %v3467 = vpack.c.b16 %v2171, %v2163
  %v3468 = vpack.c.b16 %v2172, %v2164
  %v3469 = vpack.c.b16 %v2173, %v2165
  %v3470 = vpack.c.b16 %v2174, %v2166
  %v3471 = vpack.c.b16 %v2175, %v2167
  %v3472 = vpack.c.b16 %v2176, %v2168
  %v3473 = vpack.c.b16 %v2185, %v2177
  %v3474 = vpack.c.b16 %v2186, %v2178
  %v3475 = vpack.c.b16 %v2187, %v2179
  %v3476 = vpack.c.b16 %v2188, %v2180
  %v3477 = vpack.c.b16 %v2189, %v2181
  %v3478 = vpack.c.b16 %v2190, %v2182
  %v3479 = vpack.c.b16 %v2191, %v2183
  %v3480 = vpack.c.b16 %v2192, %v2184
  %v3481 = vpack.c.b16 %v2201, %v2193
  %v3482 = vpack.c.b16 %v2202, %v2194
  %v3483 = vpack.c.b16 %v2203, %v2195
  %v3484 = vpack.c.b16 %v2204, %v2196
  %v3485 = vpack.c.b16 %v2205, %v2197
  %v3486 = vpack.c.b16 %v2206, %v2198
  %v3487 = vpack.c.b16 %v2207, %v2199
  %v3488 = vpack.c.b16 %v2208, %v2200
  %v3489 = vpack.c.b16 %v2217, %v2209
  %v3490 = vpack.c.b16 %v2218, %v2210
  %v3491 = vpack.c.b16 %v2219, %v2211
  %v3492 = vpack.c.b16 %v2220, %v2212
  %v3493 = vpack.c.b16 %v2221, %v2213
  %v3494 = vpack.c.b16 %v2222, %v2214
  %v3495 = vpack.c.b16 %v2223, %v2215
  %v3496 = vpack.c.b16 %v2224, %v2216
  %v3497 = vpack.c.b16 %v2233, %v2225
  %v3498 = vpack.c.b16 %v2234, %v2226
  %v3499 = vpack.c.b16 %v2235, %v2227
  %v3500 = vpack.c.b16 %v2236, %v2228
  %v3501 = vpack.c.b16 %v2237, %v2229
  %v3502 = vpack.c.b16 %v2238, %v2230
  %v3503 = vpack.c.b16 %v2239, %v2231
  %v3504 = vpack.c.b16 %v2240, %v2232
  %v3505 = vpack.c.b16 %v2249, %v2241
  %v3506 = vpack.c.b16 %v2250, %v2242
  %v3507 = vpack.c.b16 %v2251, %v2243
  %v3508 = vpack.c.b16 %v2252, %v2244
  %v3509 = vpack.c.b16 %v2253, %v2245
  %v3510 = vpack.c.b16 %v2254, %v2246
  %v3511 = vpack.c.b16 %v2255, %v2247
  %v3512 = vpack.c.b16 %v2256, %v2248
  %v3513 = vpack.c.b16 %v2265, %v2257
  %v3514 = vpack.c.b16 %v2266, %v2258
  %v3515 = vpack.c.b16 %v2267, %v2259
  %v3516 = vpack.c.b16 %v2268, %v2260
  %v3517 = vpack.c.b16 %v2269, %v2261
  %v3518 = vpack.c.b16 %v2270, %v2262
  %v3519 = vpack.c.b16 %v2271, %v2263
  %v3520 = vpack.c.b16 %v2272, %v2264
  %v3521 = vpack.c.b16 %v2281, %v2273
  %v3522 = vpack.c.b16 %v2282, %v2274
  %v3523 = vpack.c.b16 %v2283, %v2275
  %v3524 = vpack.c.b16 %v2284, %v2276
  %v3525 = vpack.c.b16 %v2285, %v2277
  %v3526 = vpack.c.b16 %v2286, %v2278
  %v3527 = vpack.c.b16 %v2287, %v2279
  %v3528 = vpack.c.b16 %v2288, %v2280
  %v3529 = vpack.c.b16 %v2297, %v2289
  %v3530 = vpack.c.b16 %v2298, %v2290
  %v3531 = vpack.c.b16 %v2299, %v2291
  %v3532 = vpack.c.b16 %v2300, %v2292
  %v3533 = vpack.c.b16 %v2301, %v2293
  %v3534 = vpack.c.b16 %v2302, %v2294
  %v3535 = vpack.c.b16 %v2303, %v2295
  %v3536 = vpack.c.b16 %v2304, %v2296
  %v3537 = vpack.c.b16 %v2313, %v2305
  %v3538 = vpack.c.b16 %v2314, %v2306
  %v3539 = vpack.c.b16 %v2315, %v2307
  %v3540 = vpack.c.b16 %v2316, %v2308
  %v3541 = vpack.c.b16 %v2317, %v2309
  %v3542 = vpack.c.b16 %v2318, %v2310
  %v3543 = vpack.c.b16 %v2319, %v2311
  %v3544 = vpack.c.b16 %v2320, %v2312
  %v3545 = vpack.c.b16 %v2329, %v2321
  %v3546 = vpack.c.b16 %v2330, %v2322
  %v3547 = vpack.c.b16 %v2331, %v2323
  %v3548 = vpack.c.b16 %v2332, %v2324
  %v3549 = vpack.c.b16 %v2333, %v2325
  %v3550 = vpack.c.b16 %v2334, %v2326
  %v3551 = vpack.c.b16 %v2335, %v2327
  %v3552 = vpack.c.b16 %v2336, %v2328
  %v3553 = vpack.c.b16 %v2345, %v2337
  %v3554 = vpack.c.b16 %v2346, %v2338
  %v3555 = vpack.c.b16 %v2347, %v2339
  %v3556 = vpack.c.b16 %v2348, %v2340
  %v3557 = vpack.c.b16 %v2349, %v2341
  %v3558 = vpack.c.b16 %v2350, %v2342
  %v3559 = vpack.c.b16 %v2351, %v2343
  %v3560 = vpack.c.b16 %v2352, %v2344
  %v3561 = vpack.c.b16 %v2361, %v2353
  %v3562 = vpack.c.b16 %v2362, %v2354
  %v3563 = vpack.c.b16 %v2363, %v2355
  %v3564 = vpack.c.b16 %v2364, %v2356
  %v3565 = vpack.c.b16 %v2365, %v2357
  %v3566 = vpack.c.b16 %v2366, %v2358
  %v3567 = vpack.c.b16 %v2367, %v2359
  %v3568 = vpack.c.b16 %v2368, %v2360
  %v3569 = vpack.c.b16 %v2377, %v2369
  %v3570 = vpack.c.b16 %v2378, %v2370
  %v3571 = vpack.c.b16 %v2379, %v2371
  %v3572 = vpack.c.b16 %v2380, %v2372
  %v3573 = vpack.c.b16 %v2381, %v2373
  %v3574 = vpack.c.b16 %v2382, %v2374
  %v3575 = vpack.c.b16 %v2383, %v2375
  %v3576 = vpack.c.b16 %v2384, %v2376
  %v3577 = vpack.c.b16 %v2393, %v2385
  %v3578 = vpack.c.b16 %v2394, %v2386
  %v3579 = vpack.c.b16 %v2395, %v2387
  %v3580 = vpack.c.b16 %v2396, %v2388
  %v3581 = vpack.c.b16 %v2397, %v2389
  %v3582 = vpack.c.b16 %v2398, %v2390
  %v3583 = vpack.c.b16 %v2399, %v2391
  %v3584 = vpack.c.b16 %v2400, %v2392
  %v3585 = vpack.c.b16 %v2409, %v2401
  %v3586 = vpack.c.b16 %v2410, %v2402
  %v3587 = vpack.c.b16 %v2411, %v2403
  %v3588 = vpack.c.b16 %v2412, %v2404
  %v3589 = vpack.c.b16 %v2413, %v2405
  %v3590 = vpack.c.b16 %v2414, %v2406
  %v3591 = vpack.c.b16 %v2415, %v2407
  %v3592 = vpack.c.b16 %v2416, %v2408
  %v3593 = vpack.c.b16 %v2425, %v2417
  %v3594 = vpack.c.b16 %v2426, %v2418
  %v3595 = vpack.c.b16 %v2427, %v2419
  %v3596 = vpack.c.b16 %v2428, %v2420
  %v3597 = vpack.c.b16 %v2429, %v2421
  %v3598 = vpack.c.b16 %v2430, %v2422
  %v3599 = vpack.c.b16 %v2431, %v2423
  %v3600 = vpack.c.b16 %v2432, %v2424
  %v3601 = vpack.c.b16 %v2441, %v2433
  %v3602 = vpack.c.b16 %v2442, %v2434
  %v3603 = vpack.c.b16 %v2443, %v2435
  %v3604 = vpack.c.b16 %v2444, %v2436
  %v3605 = vpack.c.b16 %v2445, %v2437
  %v3606 = vpack.c.b16 %v2446, %v2438
  %v3607 = vpack.c.b16 %v2447, %v2439
  %v3608 = vpack.c.b16 %v2448, %v2440
  %v3609 = vpack.c.b16 %v2457, %v2449
  %v3610 = vpack.c.b16 %v2458, %v2450
  %v3611 = vpack.c.b16 %v2459, %v2451
  %v3612 = vpack.c.b16 %v2460, %v2452
  %v3613 = vpack.c.b16 %v2461, %v2453
  %v3614 = vpack.c.b16 %v2462, %v2454
  %v3615 = vpack.c.b16 %v2463, %v2455
  %v3616 = vpack.c.b16 %v2464, %v2456
  %v3617 = vpack.c.b16 %v2473, %v2465
  %v3618 = vpack.c.b16 %v2474, %v2466
  %v3619 = vpack.c.b16 %v2475, %v2467
  %v3620 = vpack.c.b16 %v2476, %v2468
  %v3621 = vpack.c.b16 %v2477, %v2469
  %v3622 = vpack.c.b16 %v2478, %v2470
  %v3623 = vpack.c.b16 %v2479, %v2471
  %v3624 = vpack.c.b16 %v2480, %v2472
  %v3625 = vpack.c.b16 %v2489, %v2481
  %v3626 = vpack.c.b16 %v2490, %v2482
  %v3627 = vpack.c.b16 %v2491, %v2483
  %v3628 = vpack.c.b16 %v2492, %v2484
  %v3629 = vpack.c.b16 %v2493, %v2485
  %v3630 = vpack.c.b16 %v2494, %v2486
  %v3631 = vpack.c.b16 %v2495, %v2487
  %v3632 = vpack.c.b16 %v2496, %v2488
  %v3633 = vpack.c.b16 %v2505, %v2497
  %v3634 = vpack.c.b16 %v2506, %v2498
  %v3635 = vpack.c.b16 %v2507, %v2499
  %v3636 = vpack.c.b16 %v2508, %v2500
  %v3637 = vpack.c.b16 %v2509, %v2501
  %v3638 = vpack.c.b16 %v2510, %v2502
  %v3639 = vpack.c.b16 %v2511, %v2503
  %v3640 = vpack.c.b16 %v2512, %v2504
  %v3641 = vpack.c.b16 %v2521, %v2513
  %v3642 = vpack.c.b16 %v2522, %v2514
  %v3643 = vpack.c.b16 %v2523, %v2515
  %v3644 = vpack.c.b16 %v2524, %v2516
  %v3645 = vpack.c.b16 %v2525, %v2517
  %v3646 = vpack.c.b16 %v2526, %v2518
  %v3647 = vpack.c.b16 %v2527, %v2519
  %v3648 = vpack.c.b16 %v2528, %v2520
  %v3649 = vpack.c.b16 %v2537, %v2529
  %v3650 = vpack.c.b16 %v2538, %v2530
  %v3651 = vpack.c.b16 %v2539, %v2531
  %v3652 = vpack.c.b16 %v2540, %v2532
  %v3653 = vpack.c.b16 %v2541, %v2533
  %v3654 = vpack.c.b16 %v2542, %v2534
  %v3655 = vpack.c.b16 %v2543, %v2535
  %v3656 = vpack.c.b16 %v2544, %v2536
  %v3657 = vpack.c.b16 %v2553, %v2545
  %v3658 = vpack.c.b16 %v2554, %v2546
  %v3659 = vpack.c.b16 %v2555, %v2547
  %v3660 = vpack.c.b16 %v2556, %v2548
  %v3661 = vpack.c.b16 %v2557, %v2549
  %v3662 = vpack.c.b16 %v2558, %v2550
  %v3663 = vpack.c.b16 %v2559, %v2551
  %v3664 = vpack.c.b16 %v2560, %v2552
  %v3665 = vpack.c.b16 %v2569, %v2561
  %v3666 = vpack.c.b16 %v2570, %v2562
  %v3667 = vpack.c.b16 %v2571, %v2563
  %v3668 = vpack.c.b16 %v2572, %v2564
  %v3669 = vpack.c.b16 %v2573, %v2565
  %v3670 = vpack.c.b16 %v2574, %v2566
  %v3671 = vpack.c.b16 %v2575, %v2567
  %v3672 = vpack.c.b16 %v2576, %v2568
  %v3673 = vpack.c.b16 %v2585, %v2577
  %v3674 = vpack.c.b16 %v2586, %v2578
  %v3675 = vpack.c.b16 %v2587, %v2579
  %v3676 = vpack.c.b16 %v2588, %v2580
  %v3677 = vpack.c.b16 %v2589, %v2581
  %v3678 = vpack.c.b16 %v2590, %v2582
  %v3679 = vpack.c.b16 %v2591, %v2583
  %v3680 = vpack.c.b16 %v2592, %v2584
  %v3681 = vpack.c.b16 %v2601, %v2593
  %v3682 = vpack.c.b16 %v2602, %v2594
  %v3683 = vpack.c.b16 %v2603, %v2595
  %v3684 = vpack.c.b16 %v2604, %v2596
  %v3685 = vpack.c.b16 %v2605, %v2597
  %v3686 = vpack.c.b16 %v2606, %v2598
  %v3687 = vpack.c.b16 %v2607, %v2599
  %v3688 = vpack.c.b16 %v2608, %v2600
  %v3689 = vpack.c.b16 %v2617, %v2609
  %v3690 = vpack.c.b16 %v2618, %v2610
  %v3691 = vpack.c.b16 %v2619, %v2611
  %v3692 = vpack.c.b16 %v2620, %v2612
  %v3693 = vpack.c.b16 %v2621, %v2613
  %v3694 = vpack.c.b16 %v2622, %v2614
  %v3695 = vpack.c.b16 %v2623, %v2615
  %v3696 = vpack.c.b16 %v2624, %v2616
  %v3697 = vpack.c.b16 %v2633, %v2625
  %v3698 = vpack.c.b16 %v2634, %v2626
  %v3699 = vpack.c.b16 %v2635, %v2627
  %v3700 = vpack.c.b16 %v2636, %v2628
  %v3701 = vpack.c.b16 %v2637, %v2629
  %v3702 = vpack.c.b16 %v2638, %v2630
  %v3703 = vpack.c.b16 %v2639, %v2631
  %v3704 = vpack.c.b16 %v2640, %v2632
  %v3705 = vpack.c.b16 %v2649, %v2641
  %v3706 = vpack.c.b16 %v2650, %v2642
  %v3707 = vpack.c.b16 %v2651, %v2643
  %v3708 = vpack.c.b16 %v2652, %v2644
  %v3709 = vpack.c.b16 %v2653, %v2645
  %v3710 = vpack.c.b16 %v2654, %v2646
  %v3711 = vpack.c.b16 %v2655, %v2647
  %v3712 = vpack.c.b16 %v2656, %v2648
  %v3713 = vpack.c.b16 %v2665, %v2657
  %v3714 = vpack.c.b16 %v2666, %v2658
  %v3715 = vpack.c.b16 %v2667, %v2659
  %v3716 = vpack.c.b16 %v2668, %v2660
  %v3717 = vpack.c.b16 %v2669, %v2661
  %v3718 = vpack.c.b16 %v2670, %v2662
  %v3719 = vpack.c.b16 %v2671, %v2663
  %v3720 = vpack.c.b16 %v2672, %v2664
  %v3721 = vpack.c.b16 %v2681, %v2673
  %v3722 = vpack.c.b16 %v2682, %v2674
  %v3723 = vpack.c.b16 %v2683, %v2675
  %v3724 = vpack.c.b16 %v2684, %v2676
  %v3725 = vpack.c.b16 %v2685, %v2677
  %v3726 = vpack.c.b16 %v2686, %v2678
  %v3727 = vpack.c.b16 %v2687, %v2679
  %v3728 = vpack.c.b16 %v2688, %v2680
  %v3729 = vpack.c.b16 %v2697, %v2689
  %v3730 = vpack.c.b16 %v2698, %v2690
  %v3731 = vpack.c.b16 %v2699, %v2691
  %v3732 = vpack.c.b16 %v2700, %v2692
  %v3733 = vpack.c.b16 %v2701, %v2693
  %v3734 = vpack.c.b16 %v2702, %v2694
  %v3735 = vpack.c.b16 %v2703, %v2695
  %v3736 = vpack.c.b16 %v2704, %v2696
  %v3737 = vpack.c.b16 %v2713, %v2705
  %v3738 = vpack.c.b16 %v2714, %v2706
  %v3739 = vpack.c.b16 %v2715, %v2707
  %v3740 = vpack.c.b16 %v2716, %v2708
  %v3741 = vpack.c.b16 %v2717, %v2709
  %v3742 = vpack.c.b16 %v2718, %v2710
  %v3743 = vpack.c.b16 %v2719, %v2711
  %v3744 = vpack.c.b16 %v2720, %v2712
  %v3745 = vpack.c.b16 %v2729, %v2721
  %v3746 = vpack.c.b16 %v2730, %v2722
  %v3747 = vpack.c.b16 %v2731, %v2723
  %v3748 = vpack.c.b16 %v2732, %v2724
  %v3749 = vpack.c.b16 %v2733, %v2725
  %v3750 = vpack.c.b16 %v2734, %v2726
  %v3751 = vpack.c.b16 %v2735, %v2727
  %v3752 = vpack.c.b16 %v2736, %v2728
  %v3753 = vpack.c.b16 %v2745, %v2737
  %v3754 = vpack.c.b16 %v2746, %v2738
  %v3755 = vpack.c.b16 %v2747, %v2739
  %v3756 = vpack.c.b16 %v2748, %v2740
  %v3757 = vpack.c.b16 %v2749, %v2741
  %v3758 = vpack.c.b16 %v2750, %v2742
  %v3759 = vpack.c.b16 %v2751, %v2743
  %v3760 = vpack.c.b16 %v2752, %v2744
  %v3761 = vpack.c.b16 %v2761, %v2753
  %v3762 = vpack.c.b16 %v2762, %v2754
  %v3763 = vpack.c.b16 %v2763, %v2755
  %v3764 = vpack.c.b16 %v2764, %v2756
  %v3765 = vpack.c.b16 %v2765, %v2757
  %v3766 = vpack.c.b16 %v2766, %v2758
  %v3767 = vpack.c.b16 %v2767, %v2759
  %v3768 = vpack.c.b16 %v2768, %v2760
  %v3769 = vpack.c.b16 %v2777, %v2769
  %v3770 = vpack.c.b16 %v2778, %v2770
  %v3771 = vpack.c.b16 %v2779, %v2771
  %v3772 = vpack.c.b16 %v2780, %v2772
  %v3773 = vpack.c.b16 %v2781, %v2773
  %v3774 = vpack.c.b16 %v2782, %v2774
  %v3775 = vpack.c.b16 %v2783, %v2775
  %v3776 = vpack.c.b16 %v2784, %v2776
  %v3777 = vpack.c.b16 %v2793, %v2785
  %v3778 = vpack.c.b16 %v2794, %v2786
  %v3779 = vpack.c.b16 %v2795, %v2787
  %v3780 = vpack.c.b16 %v2796, %v2788
  %v3781 = vpack.c.b16 %v2797, %v2789
  %v3782 = vpack.c.b16 %v2798, %v2790
  %v3783 = vpack.c.b16 %v2799, %v2791
  %v3784 = vpack.c.b16 %v2800, %v2792
  %v3785 = vpack.c.b16 %v2809, %v2801
  %v3786 = vpack.c.b16 %v2810, %v2802
  %v3787 = vpack.c.b16 %v2811, %v2803
  %v3788 = vpack.c.b16 %v2812, %v2804
  %v3789 = vpack.c.b16 %v2813, %v2805
  %v3790 = vpack.c.b16 %v2814, %v2806
  %v3791 = vpack.c.b16 %v2815, %v2807
  %v3792 = vpack.c.b16 %v2816, %v2808
  %v3793 = vpack.c.b16 %v2825, %v2817
  %v3794 = vpack.c.b16 %v2826, %v2818
  %v3795 = vpack.c.b16 %v2827, %v2819
  %v3796 = vpack.c.b16 %v2828, %v2820
  %v3797 = vpack.c.b16 %v2829, %v2821
  %v3798 = vpack.c.b16 %v2830, %v2822
  %v3799 = vpack.c.b16 %v2831, %v2823
  %v3800 = vpack.c.b16 %v2832, %v2824
  %v3801 = vpack.c.b16 %v2841, %v2833
  %v3802 = vpack.c.b16 %v2842, %v2834
  %v3803 = vpack.c.b16 %v2843, %v2835
  %v3804 = vpack.c.b16 %v2844, %v2836
  %v3805 = vpack.c.b16 %v2845, %v2837
  %v3806 = vpack.c.b16 %v2846, %v2838
  %v3807 = vpack.c.b16 %v2847, %v2839
  %v3808 = vpack.c.b16 %v2848, %v2840
  %v3809 = vpack.c.b16 %v2857, %v2849
  %v3810 = vpack.c.b16 %v2858, %v2850
  %v3811 = vpack.c.b16 %v2859, %v2851
  %v3812 = vpack.c.b16 %v2860, %v2852
  %v3813 = vpack.c.b16 %v2861, %v2853
  %v3814 = vpack.c.b16 %v2862, %v2854
  %v3815 = vpack.c.b16 %v2863, %v2855
  %v3816 = vpack.c.b16 %v2864, %v2856
  %v3817 = vpack.c.b16 %v2873, %v2865
  %v3818 = vpack.c.b16 %v2874, %v2866
  %v3819 = vpack.c.b16 %v2875, %v2867
  %v3820 = vpack.c.b16 %v2876, %v2868
  %v3821 = vpack.c.b16 %v2877, %v2869
  %v3822 = vpack.c.b16 %v2878, %v2870
  %v3823 = vpack.c.b16 %v2879, %v2871
  %v3824 = vpack.c.b16 %v2880, %v2872
  %v3825 = vpack.c.b16 %v2889, %v2881
  %v3826 = vpack.c.b16 %v2890, %v2882
  %v3827 = vpack.c.b16 %v2891, %v2883
  %v3828 = vpack.c.b16 %v2892, %v2884
  %v3829 = vpack.c.b16 %v2893, %v2885
  %v3830 = vpack.c.b16 %v2894, %v2886
  %v3831 = vpack.c.b16 %v2895, %v2887
  %v3832 = vpack.c.b16 %v2896, %v2888
  %v3833 = vpack.c.b16 %v2905, %v2897
  %v3834 = vpack.c.b16 %v2906, %v2898
  %v3835 = vpack.c.b16 %v2907, %v2899
  %v3836 = vpack.c.b16 %v2908, %v2900
  %v3837 = vpack.c.b16 %v2909, %v2901
  %v3838 = vpack.c.b16 %v2910, %v2902
  %v3839 = vpack.c.b16 %v2911, %v2903
  %v3840 = vpack.c.b16 %v2912, %v2904
  %v3841 = vpack.c.b16 %v2921, %v2913
  %v3842 = vpack.c.b16 %v2922, %v2914
  %v3843 = vpack.c.b16 %v2923, %v2915
  %v3844 = vpack.c.b16 %v2924, %v2916
  %v3845 = vpack.c.b16 %v2925, %v2917
  %v3846 = vpack.c.b16 %v2926, %v2918
  %v3847 = vpack.c.b16 %v2927, %v2919
  %v3848 = vpack.c.b16 %v2928, %v2920
  %v3849 = vpack.c.b16 %v2937, %v2929
  %v3850 = vpack.c.b16 %v2938, %v2930
  %v3851 = vpack.c.b16 %v2939, %v2931
  %v3852 = vpack.c.b16 %v2940, %v2932
  %v3853 = vpack.c.b16 %v2941, %v2933
  %v3854 = vpack.c.b16 %v2942, %v2934
  %v3855 = vpack.c.b16 %v2943, %v2935
  %v3856 = vpack.c.b16 %v2944, %v2936
  %v3857 = vpack.c.b16 %v2953, %v2945
  %v3858 = vpack.c.b16 %v2954, %v2946
  %v3859 = vpack.c.b16 %v2955, %v2947
  %v3860 = vpack.c.b16 %v2956, %v2948
  %v3861 = vpack.c.b16 %v2957, %v2949
  %v3862 = vpack.c.b16 %v2958, %v2950
  %v3863 = vpack.c.b16 %v2959, %v2951
  %v3864 = vpack.c.b16 %v2960, %v2952
  %v3865 = vpack.c.b16 %v2969, %v2961
  %v3866 = vpack.c.b16 %v2970, %v2962
  %v3867 = vpack.c.b16 %v2971, %v2963
  %v3868 = vpack.c.b16 %v2972, %v2964
  %v3869 = vpack.c.b16 %v2973, %v2965
  %v3870 = vpack.c.b16 %v2974, %v2966
  %v3871 = vpack.c.b16 %v2975, %v2967
  %v3872 = vpack.c.b16 %v2976, %v2968
  %v3873 = vpack.c.b16 %v2985, %v2977
  %v3874 = vpack.c.b16 %v2986, %v2978
  %v3875 = vpack.c.b16 %v2987, %v2979
  %v3876 = vpack.c.b16 %v2988, %v2980
  %v3877 = vpack.c.b16 %v2989, %v2981
  %v3878 = vpack.c.b16 %v2990, %v2982
  %v3879 = vpack.c.b16 %v2991, %v2983
  %v3880 = vpack.c.b16 %v2992, %v2984
  %v3881 = vpack.c.b16 %v3001, %v2993
  %v3882 = vpack.c.b16 %v3002, %v2994
  %v3883 = vpack.c.b16 %v3003, %v2995
  %v3884 = vpack.c.b16 %v3004, %v2996
  %v3885 = vpack.c.b16 %v3005, %v2997
  %v3886 = vpack.c.b16 %v3006, %v2998
  %v3887 = vpack.c.b16 %v3007, %v2999
  %v3888 = vpack.c.b16 %v3008, %v3000
  %v3889 = vpack.c.b16 %v3017, %v3009
  %v3890 = vpack.c.b16 %v3018, %v3010
  %v3891 = vpack.c.b16 %v3019, %v3011
  %v3892 = vpack.c.b16 %v3020, %v3012
  %v3893 = vpack.c.b16 %v3021, %v3013
  %v3894 = vpack.c.b16 %v3022, %v3014
  %v3895 = vpack.c.b16 %v3023, %v3015
  %v3896 = vpack.c.b16 %v3024, %v3016
  %v3897 = vpack.c.b16 %v3033, %v3025
  %v3898 = vpack.c.b16 %v3034, %v3026
  %v3899 = vpack.c.b16 %v3035, %v3027
  %v3900 = vpack.c.b16 %v3036, %v3028
  %v3901 = vpack.c.b16 %v3037, %v3029
  %v3902 = vpack.c.b16 %v3038, %v3030
  %v3903 = vpack.c.b16 %v3039, %v3031
  %v3904 = vpack.c.b16 %v3040, %v3032
  %v3905 = vpack.c.b16 %v3049, %v3041
  %v3906 = vpack.c.b16 %v3050, %v3042
  %v3907 = vpack.c.b16 %v3051, %v3043
  %v3908 = vpack.c.b16 %v3052, %v3044
  %v3909 = vpack.c.b16 %v3053, %v3045
  %v3910 = vpack.c.b16 %v3054, %v3046
  %v3911 = vpack.c.b16 %v3055, %v3047
  %v3912 = vpack.c.b16 %v3056, %v3048
  %v3913 = vpack.c.b16 %v3065, %v3057
  %v3914 = vpack.c.b16 %v3066, %v3058
  %v3915 = vpack.c.b16 %v3067, %v3059
  %v3916 = vpack.c.b16 %v3068, %v3060
  %v3917 = vpack.c.b16 %v3069, %v3061
  %v3918 = vpack.c.b16 %v3070, %v3062
  %v3919 = vpack.c.b16 %v3071, %v3063
  %v3920 = vpack.c.b16 %v3072, %v3064
  %v3921 = vpack.c.b16 %v3081, %v3073
  %v3922 = vpack.c.b16 %v3082, %v3074
  %v3923 = vpack.c.b16 %v3083, %v3075
  %v3924 = vpack.c.b16 %v3084, %v3076
  %v3925 = vpack.c.b16 %v3085, %v3077
  %v3926 = vpack.c.b16 %v3086, %v3078
  %v3927 = vpack.c.b16 %v3087, %v3079
  %v3928 = vpack.c.b16 %v3088, %v3080
  %v3929 = vpack.c.b16 %v3097, %v3089
  %v3930 = vpack.c.b16 %v3098, %v3090
  %v3931 = vpack.c.b16 %v3099, %v3091
  %v3932 = vpack.c.b16 %v3100, %v3092
  %v3933 = vpack.c.b16 %v3101, %v3093
  %v3934 = vpack.c.b16 %v3102, %v3094
  %v3935 = vpack.c.b16 %v3103, %v3095
  %v3936 = vpack.c.b16 %v3104, %v3096
  %v3937 = vpack.c.b16 %v3113, %v3105
  %v3938 = vpack.c.b16 %v3114, %v3106
  %v3939 = vpack.c.b16 %v3115, %v3107
  %v3940 = vpack.c.b16 %v3116, %v3108
  %v3941 = vpack.c.b16 %v3117, %v3109
  %v3942 = vpack.c.b16 %v3118, %v3110
  %v3943 = vpack.c.b16 %v3119, %v3111
  %v3944 = vpack.c.b16 %v3120, %v3112
  %v3945 = vpack.c.b16 %v3129, %v3121
  %v3946 = vpack.c.b16 %v3130, %v3122
  %v3947 = vpack.c.b16 %v3131, %v3123
  %v3948 = vpack.c.b16 %v3132, %v3124
  %v3949 = vpack.c.b16 %v3133, %v3125
  %v3950 = vpack.c.b16 %v3134, %v3126
  %v3951 = vpack.c.b16 %v3135, %v3127
  %v3952 = vpack.c.b16 %v3136, %v3128
  %v3953 = vpack.c.b16 %v3145, %v3137
  %v3954 = vpack.c.b16 %v3146, %v3138
  %v3955 = vpack.c.b16 %v3147, %v3139
  %v3956 = vpack.c.b16 %v3148, %v3140
  %v3957 = vpack.c.b16 %v3149, %v3141
  %v3958 = vpack.c.b16 %v3150, %v3142
  %v3959 = vpack.c.b16 %v3151, %v3143
  %v3960 = vpack.c.b16 %v3152, %v3144
  %v3961 = vpack.c.b16 %v3161, %v3153
  %v3962 = vpack.c.b16 %v3162, %v3154
  %v3963 = vpack.c.b16 %v3163, %v3155
  %v3964 = vpack.c.b16 %v3164, %v3156
  %v3965 = vpack.c.b16 %v3165, %v3157
  %v3966 = vpack.c.b16 %v3166, %v3158
  %v3967 = vpack.c.b16 %v3167, %v3159
  %v3968 = vpack.c.b16 %v3168, %v3160
  %v3969 = vpack.c.b16 %v3177, %v3169
  %v3970 = vpack.c.b16 %v3178, %v3170
  %v3971 = vpack.c.b16 %v3179, %v3171
  %v3972 = vpack.c.b16 %v3180, %v3172
  %v3973 = vpack.c.b16 %v3181, %v3173
  %v3974 = vpack.c.b16 %v3182, %v3174
  %v3975 = vpack.c.b16 %v3183, %v3175
  %v3976 = vpack.c.b16 %v3184, %v3176
  %v3977 = vpack.c.b16 %v3193, %v3185
  %v3978 = vpack.c.b16 %v3194, %v3186
  %v3979 = vpack.c.b16 %v3195, %v3187
  %v3980 = vpack.c.b16 %v3196, %v3188
  %v3981 = vpack.c.b16 %v3197, %v3189
  %v3982 = vpack.c.b16 %v3198, %v3190
  %v3983 = vpack.c.b16 %v3199, %v3191
  %v3984 = vpack.c.b16 %v3200, %v3192
  %v3985 = vpack.c.b16 %v3209, %v3201
  %v3986 = vpack.c.b16 %v3210, %v3202
  %v3987 = vpack.c.b16 %v3211, %v3203
  %v3988 = vpack.c.b16 %v3212, %v3204
  %v3989 = vpack.c.b16 %v3213, %v3205
  %v3990 = vpack.c.b16 %v3214, %v3206
  %v3991 = vpack.c.b16 %v3215, %v3207
  %v3992 = vpack.c.b16 %v3216, %v3208
  %v3993 = vpack.c.b16 %v3225, %v3217
  %v3994 = vpack.c.b16 %v3226, %v3218
  %v3995 = vpack.c.b16 %v3227, %v3219
  %v3996 = vpack.c.b16 %v3228, %v3220
  %v3997 = vpack.c.b16 %v3229, %v3221
  %v3998 = vpack.c.b16 %v3230, %v3222
  %v3999 = vpack.c.b16 %v3231, %v3223
  %v4000 = vpack.c.b16 %v3232, %v3224
  %4769 = vmatprep.subr.bf16.mxu0 %v3234
  %4770 = vmatpush1.bf16.msra.mxu0 %v3233
  %4771 = vmatprep.subr.bf16.mxu0 %v3242
  %4772 = vmatpush1.bf16.msra.mxu0 %v3241
  %4773 = vmatprep.subr.bf16.mxu0 %v3250
  %4774 = vmatpush1.bf16.msra.mxu0 %v3249
  %4775 = vmatprep.subr.bf16.mxu0 %v3258
  %4776 = vmatpush1.bf16.msra.mxu0 %v3257
  %4777 = vmatprep.subr.bf16.mxu0 %v3266
  %4778 = vmatpush1.bf16.msra.mxu0 %v3265
  %4779 = vmatprep.subr.bf16.mxu0 %v3274
  %4780 = vmatpush1.bf16.msra.mxu0 %v3273
  %4781 = vmatprep.subr.bf16.mxu0 %v3282
  %4782 = vmatpush1.bf16.msra.mxu0 %v3281
  %4783 = vmatprep.subr.bf16.mxu0 %v3290
  %4784 = vmatpush1.bf16.msra.mxu0 %v3289
  %4785 = vmatprep.subr.bf16.mxu0 %v3298
  %4786 = vmatpush1.bf16.msra.mxu0 %v3297
  %4787 = vmatprep.subr.bf16.mxu0 %v3306
  %4788 = vmatpush1.bf16.msra.mxu0 %v3305
  %4789 = vmatprep.subr.bf16.mxu0 %v3314
  %4790 = vmatpush1.bf16.msra.mxu0 %v3313
  %4791 = vmatprep.subr.bf16.mxu0 %v3322
  %4792 = vmatpush1.bf16.msra.mxu0 %v3321
  %4793 = vmatprep.subr.bf16.mxu0 %v3330
  %4794 = vmatpush1.bf16.msra.mxu0 %v3329
  %4795 = vmatprep.subr.bf16.mxu0 %v3338
  %4796 = vmatpush1.bf16.msra.mxu0 %v3337
  %4797 = vmatprep.subr.bf16.mxu0 %v3346
  %4798 = vmatpush1.bf16.msra.mxu0 %v3345
  %4799 = vmatprep.subr.bf16.mxu0 %v3354
  %4800 = vmatpush1.bf16.msra.mxu0 %v3353
  %4801 = vmatprep.mubr.bf16.mxu0 %v881
  %4802 = vmatmul.mubr.bf16.gmra.mrb[0].mxu0 %v867
  %v4803 = vpop.f32.mrb[0].mxu0
  %v4804 = vadd.f32 %v805, %v4803
  %v4805 = vpop.f32.mrb[0].mxu0
  %v4806 = vadd.f32 %v809, %v4805
  %v4807 = vpop.f32.mrb[0].mxu0
  %v4808 = vpop.f32.mrb[0].mxu0
  %4809 = vdwg.mxu0
  %4810 = vmatprep.subr.bf16.mxu0 %v3362
  %4811 = vmatpush1.bf16.msra.mxu0 %v3361
  %4812 = vmatprep.subr.bf16.mxu0 %v3370
  %4813 = vmatpush1.bf16.msra.mxu0 %v3369
  %4814 = vmatprep.subr.bf16.mxu0 %v3378
  %4815 = vmatpush1.bf16.msra.mxu0 %v3377
  %4816 = vmatprep.subr.bf16.mxu0 %v3386
  %4817 = vmatpush1.bf16.msra.mxu0 %v3385
  %4818 = vmatprep.subr.bf16.mxu0 %v3394
  %4819 = vmatpush1.bf16.msra.mxu0 %v3393
  %4820 = vmatprep.subr.bf16.mxu0 %v3402
  %4821 = vmatpush1.bf16.msra.mxu0 %v3401
  %4822 = vmatprep.subr.bf16.mxu0 %v3410
  %4823 = vmatpush1.bf16.msra.mxu0 %v3409
  %4824 = vmatprep.subr.bf16.mxu0 %v3418
  %4825 = vmatpush1.bf16.msra.mxu0 %v3417
  %4826 = vmatprep.subr.bf16.mxu0 %v3426
  %4827 = vmatpush1.bf16.msra.mxu0 %v3425
  %4828 = vmatprep.subr.bf16.mxu0 %v3434
  %4829 = vmatpush1.bf16.msra.mxu0 %v3433
  %4830 = vmatprep.subr.bf16.mxu0 %v3442
  %4831 = vmatpush1.bf16.msra.mxu0 %v3441
  %4832 = vmatprep.subr.bf16.mxu0 %v3450
  %4833 = vmatpush1.bf16.msra.mxu0 %v3449
  %4834 = vmatprep.subr.bf16.mxu0 %v3458
  %4835 = vmatpush1.bf16.msra.mxu0 %v3457
  %4836 = vmatprep.subr.bf16.mxu0 %v3466
  %4837 = vmatpush1.bf16.msra.mxu0 %v3465
  %4838 = vmatprep.subr.bf16.mxu0 %v3474
  %4839 = vmatpush1.bf16.msra.mxu0 %v3473
  %4840 = vmatprep.subr.bf16.mxu0 %v3482
  %4841 = vmatpush1.bf16.msra.mxu0 %v3481
  %4842 = vmatprep.mubr.bf16.mxu0 %v891
  %4843 = vmatmul.mubr.bf16.gmra.mrb[0].mxu0 %v889
  %v4844 = vpop.f32.mrb[0].mxu0
  %v4845 = vadd.f32 %v4804, %v4844
  %v4846 = vpop.f32.mrb[0].mxu0
  %v4847 = vadd.f32 %v4806, %v4846
  %v4848 = vpop.f32.mrb[0].mxu0
  %v4849 = vpop.f32.mrb[0].mxu0
  %4850 = vdwg.mxu0
  %4851 = vmatprep.subr.bf16.mxu0 %v3490
  %4852 = vmatpush1.bf16.msra.mxu0 %v3489
  %4853 = vmatprep.subr.bf16.mxu0 %v3498
  %4854 = vmatpush1.bf16.msra.mxu0 %v3497
  %4855 = vmatprep.subr.bf16.mxu0 %v3506
  %4856 = vmatpush1.bf16.msra.mxu0 %v3505
  %4857 = vmatprep.subr.bf16.mxu0 %v3514
  %4858 = vmatpush1.bf16.msra.mxu0 %v3513
  %4859 = vmatprep.subr.bf16.mxu0 %v3522
  %4860 = vmatpush1.bf16.msra.mxu0 %v3521
  %4861 = vmatprep.subr.bf16.mxu0 %v3530
  %4862 = vmatpush1.bf16.msra.mxu0 %v3529
  %4863 = vmatprep.subr.bf16.mxu0 %v3538
  %4864 = vmatpush1.bf16.msra.mxu0 %v3537
  %4865 = vmatprep.subr.bf16.mxu0 %v3546
  %4866 = vmatpush1.bf16.msra.mxu0 %v3545
  %4867 = vmatprep.subr.bf16.mxu0 %v3554
  %4868 = vmatpush1.bf16.msra.mxu0 %v3553
  %4869 = vmatprep.subr.bf16.mxu0 %v3562
  %4870 = vmatpush1.bf16.msra.mxu0 %v3561
  %4871 = vmatprep.subr.bf16.mxu0 %v3570
  %4872 = vmatpush1.bf16.msra.mxu0 %v3569
  %4873 = vmatprep.subr.bf16.mxu0 %v3578
  %4874 = vmatpush1.bf16.msra.mxu0 %v3577
  %4875 = vmatprep.subr.bf16.mxu0 %v3586
  %4876 = vmatpush1.bf16.msra.mxu0 %v3585
  %4877 = vmatprep.subr.bf16.mxu0 %v3594
  %4878 = vmatpush1.bf16.msra.mxu0 %v3593
  %4879 = vmatprep.subr.bf16.mxu0 %v3602
  %4880 = vmatpush1.bf16.msra.mxu0 %v3601
  %4881 = vmatprep.subr.bf16.mxu0 %v3610
  %4882 = vmatpush1.bf16.msra.mxu0 %v3609
  %4883 = vmatprep.mubr.bf16.mxu0 %v888
  %4884 = vmatmul.mubr.bf16.gmra.mrb[0].mxu0 %v874
  %v4885 = vpop.f32.mrb[0].mxu0
  %v4886 = vadd.f32 %v4845, %v4885
  %v4887 = vpop.f32.mrb[0].mxu0
  %v4888 = vadd.f32 %v4847, %v4887
  %v4889 = vpop.f32.mrb[0].mxu0
  %v4890 = vpop.f32.mrb[0].mxu0
  %4891 = vdwg.mxu0
  %4892 = vmatprep.subr.bf16.mxu0 %v3618
  %4893 = vmatpush1.bf16.msra.mxu0 %v3617
  %4894 = vmatprep.subr.bf16.mxu0 %v3626
  %4895 = vmatpush1.bf16.msra.mxu0 %v3625
  %4896 = vmatprep.subr.bf16.mxu0 %v3634
  %4897 = vmatpush1.bf16.msra.mxu0 %v3633
  %4898 = vmatprep.subr.bf16.mxu0 %v3642
  %4899 = vmatpush1.bf16.msra.mxu0 %v3641
  %4900 = vmatprep.subr.bf16.mxu0 %v3650
  %4901 = vmatpush1.bf16.msra.mxu0 %v3649
  %4902 = vmatprep.subr.bf16.mxu0 %v3658
  %4903 = vmatpush1.bf16.msra.mxu0 %v3657
  %4904 = vmatprep.subr.bf16.mxu0 %v3666
  %4905 = vmatpush1.bf16.msra.mxu0 %v3665
  %4906 = vmatprep.subr.bf16.mxu0 %v3674
  %4907 = vmatpush1.bf16.msra.mxu0 %v3673
  %4908 = vmatprep.subr.bf16.mxu0 %v3682
  %4909 = vmatpush1.bf16.msra.mxu0 %v3681
  %4910 = vmatprep.subr.bf16.mxu0 %v3690
  %4911 = vmatpush1.bf16.msra.mxu0 %v3689
  %4912 = vmatprep.subr.bf16.mxu0 %v3698
  %4913 = vmatpush1.bf16.msra.mxu0 %v3697
  %4914 = vmatprep.subr.bf16.mxu0 %v3706
  %4915 = vmatpush1.bf16.msra.mxu0 %v3705
  %4916 = vmatprep.subr.bf16.mxu0 %v3714
  %4917 = vmatpush1.bf16.msra.mxu0 %v3713
  %4918 = vmatprep.subr.bf16.mxu0 %v3722
  %4919 = vmatpush1.bf16.msra.mxu0 %v3721
  %4920 = vmatprep.subr.bf16.mxu0 %v3730
  %4921 = vmatpush1.bf16.msra.mxu0 %v3729
  %4922 = vmatprep.subr.bf16.mxu0 %v3738
  %4923 = vmatpush1.bf16.msra.mxu0 %v3737
  %4924 = vmatprep.mubr.bf16.mxu0 %v892
  %4925 = vmatmul.mubr.bf16.gmra.mrb[0].mxu0 %v890
  %v4926 = vpop.f32.mrb[0].mxu0
  %v4927 = vadd.f32 %v4886, %v4926
  %v4928 = vpop.f32.mrb[0].mxu0
  %v4929 = vadd.f32 %v4888, %v4928
  %v4930 = vpop.f32.mrb[0].mxu0
  %v4931 = vpop.f32.mrb[0].mxu0
  %4932 = vdwg.mxu0
  %4933 = vmatprep.subr.bf16.mxu0 %v3746
  %4934 = vmatpush1.bf16.msra.mxu0 %v3745
  %4935 = vmatprep.subr.bf16.mxu0 %v3754
  %4936 = vmatpush1.bf16.msra.mxu0 %v3753
  %4937 = vmatprep.subr.bf16.mxu0 %v3762
  %4938 = vmatpush1.bf16.msra.mxu0 %v3761
  %4939 = vmatprep.subr.bf16.mxu0 %v3770
  %4940 = vmatpush1.bf16.msra.mxu0 %v3769
  %4941 = vmatprep.subr.bf16.mxu0 %v3778
  %4942 = vmatpush1.bf16.msra.mxu0 %v3777
  %4943 = vmatprep.subr.bf16.mxu0 %v3786
  %4944 = vmatpush1.bf16.msra.mxu0 %v3785
  %4945 = vmatprep.subr.bf16.mxu0 %v3794
  %4946 = vmatpush1.bf16.msra.mxu0 %v3793
  %4947 = vmatprep.subr.bf16.mxu0 %v3802
  %4948 = vmatpush1.bf16.msra.mxu0 %v3801
  %4949 = vmatprep.subr.bf16.mxu0 %v3810
  %4950 = vmatpush1.bf16.msra.mxu0 %v3809
  %4951 = vmatprep.subr.bf16.mxu0 %v3818
  %4952 = vmatpush1.bf16.msra.mxu0 %v3817
  %4953 = vmatprep.subr.bf16.mxu0 %v3826
  %4954 = vmatpush1.bf16.msra.mxu0 %v3825
  %4955 = vmatprep.subr.bf16.mxu0 %v3834
  %4956 = vmatpush1.bf16.msra.mxu0 %v3833
  %4957 = vmatprep.subr.bf16.mxu0 %v3842
  %4958 = vmatpush1.bf16.msra.mxu0 %v3841
  %4959 = vmatprep.subr.bf16.mxu0 %v3850
  %4960 = vmatpush1.bf16.msra.mxu0 %v3849
  %4961 = vmatprep.subr.bf16.mxu0 %v3858
  %4962 = vmatpush1.bf16.msra.mxu0 %v3857
  %4963 = vmatprep.subr.bf16.mxu0 %v3866
  %4964 = vmatpush1.bf16.msra.mxu0 %v3865
  %4965 = vmatprep.mubr.bf16.mxu0 %v914
  %4966 = vmatmul.mubr.bf16.gmra.mrb[0].mxu0 %v907
  %v4967 = vpop.f32.mrb[0].mxu0
  %v4968 = vadd.f32 %v4927, %v4967
  %v4969 = vpop.f32.mrb[0].mxu0
  %v4970 = vadd.f32 %v4929, %v4969
  %v4971 = vpop.f32.mrb[0].mxu0
  %v4972 = vpop.f32.mrb[0].mxu0
  %4973 = vdwg.mxu0
  %4974 = vmatprep.subr.bf16.mxu0 %v3874
  %4975 = vmatpush1.bf16.msra.mxu0 %v3873
  %4976 = vmatprep.subr.bf16.mxu0 %v3882
  %4977 = vmatpush1.bf16.msra.mxu0 %v3881
  %4978 = vmatprep.subr.bf16.mxu0 %v3890
  %4979 = vmatpush1.bf16.msra.mxu0 %v3889
  %4980 = vmatprep.subr.bf16.mxu0 %v3898
  %4981 = vmatpush1.bf16.msra.mxu0 %v3897
  %4982 = vmatprep.subr.bf16.mxu0 %v3906
  %4983 = vmatpush1.bf16.msra.mxu0 %v3905
  %4984 = vmatprep.subr.bf16.mxu0 %v3914
  %4985 = vmatpush1.bf16.msra.mxu0 %v3913
  %4986 = vmatprep.subr.bf16.mxu0 %v3922
  %4987 = vmatpush1.bf16.msra.mxu0 %v3921
  %4988 = vmatprep.subr.bf16.mxu0 %v3930
  %4989 = vmatpush1.bf16.msra.mxu0 %v3929
  %4990 = vmatprep.subr.bf16.mxu0 %v3938
  %4991 = vmatpush1.bf16.msra.mxu0 %v3937
  %4992 = vmatprep.subr.bf16.mxu0 %v3946
  %4993 = vmatpush1.bf16.msra.mxu0 %v3945
  %4994 = vmatprep.subr.bf16.mxu0 %v3954
  %4995 = vmatpush1.bf16.msra.mxu0 %v3953
  %4996 = vmatprep.subr.bf16.mxu0 %v3962
  %4997 = vmatpush1.bf16.msra.mxu0 %v3961
  %4998 = vmatprep.subr.bf16.mxu0 %v3970
  %4999 = vmatpush1.bf16.msra.mxu0 %v3969
  %5000 = vmatprep.subr.bf16.mxu0 %v3978
  %5001 = vmatpush1.bf16.msra.mxu0 %v3977
  %5002 = vmatprep.subr.bf16.mxu0 %v3986
  %5003 = vmatpush1.bf16.msra.mxu0 %v3985
  %5004 = vmatprep.subr.bf16.mxu0 %v3994
  %5005 = vmatpush1.bf16.msra.mxu0 %v3993
  %5006 = vmatprep.mubr.bf16.mxu0 %v916
  %5007 = vmatmul.mubr.bf16.gmra.mrb[0].mxu0 %v915
  %v5008 = vpop.f32.mrb[0].mxu0
  %v5009 = vadd.f32 %v4968, %v5008
  %v5010 = vpop.f32.mrb[0].mxu0
  %v5011 = vadd.f32 %v4970, %v5010
  %v5012 = vpop.f32.mrb[0].mxu0
  %v5013 = vpop.f32.mrb[0].mxu0
  %5014 = vdwg.mxu0
  %5015 = vmatprep.subr.bf16.mxu0 %v3236
  %5016 = vmatpush1.bf16.msra.mxu0 %v3235
  %5017 = vmatprep.subr.bf16.mxu0 %v3244
  %5018 = vmatpush1.bf16.msra.mxu0 %v3243
  %5019 = vmatprep.subr.bf16.mxu0 %v3252
  %5020 = vmatpush1.bf16.msra.mxu0 %v3251
  %5021 = vmatprep.subr.bf16.mxu0 %v3260
  %5022 = vmatpush1.bf16.msra.mxu0 %v3259
  %5023 = vmatprep.subr.bf16.mxu0 %v3268
  %5024 = vmatpush1.bf16.msra.mxu0 %v3267
  %5025 = vmatprep.subr.bf16.mxu0 %v3276
  %5026 = vmatpush1.bf16.msra.mxu0 %v3275
  %5027 = vmatprep.subr.bf16.mxu0 %v3284
  %5028 = vmatpush1.bf16.msra.mxu0 %v3283
  %5029 = vmatprep.subr.bf16.mxu0 %v3292
  %5030 = vmatpush1.bf16.msra.mxu0 %v3291
  %5031 = vmatprep.subr.bf16.mxu0 %v3300
  %5032 = vmatpush1.bf16.msra.mxu0 %v3299
  %5033 = vmatprep.subr.bf16.mxu0 %v3308
  %5034 = vmatpush1.bf16.msra.mxu0 %v3307
  %5035 = vmatprep.subr.bf16.mxu0 %v3316
  %5036 = vmatpush1.bf16.msra.mxu0 %v3315
  %5037 = vmatprep.subr.bf16.mxu0 %v3324
  %5038 = vmatpush1.bf16.msra.mxu0 %v3323
  %5039 = vmatprep.subr.bf16.mxu0 %v3332
  %5040 = vmatpush1.bf16.msra.mxu0 %v3331
  %5041 = vmatprep.subr.bf16.mxu0 %v3340
  %5042 = vmatpush1.bf16.msra.mxu0 %v3339
  %5043 = vmatprep.subr.bf16.mxu0 %v3348
  %5044 = vmatpush1.bf16.msra.mxu0 %v3347
  %5045 = vmatprep.subr.bf16.mxu0 %v3356
  %5046 = vmatpush1.bf16.msra.mxu0 %v3355
  %5047 = vmatprep.mubr.bf16.mxu0 %v881
  %5048 = vmatmul.mubr.bf16.gmra.mrb[0].mxu0 %v867
  %v5049 = vpop.f32.mrb[0].mxu0
  %v5050 = vadd.f32 %v813, %v5049
  %v5051 = vpop.f32.mrb[0].mxu0
  %v5052 = vadd.f32 %v817, %v5051
  %v5053 = vpop.f32.mrb[0].mxu0
  %v5054 = vpop.f32.mrb[0].mxu0
  %5055 = vdwg.mxu0
  %5056 = vmatprep.subr.bf16.mxu0 %v3364
  %5057 = vmatpush1.bf16.msra.mxu0 %v3363
  %5058 = vmatprep.subr.bf16.mxu0 %v3372
  %5059 = vmatpush1.bf16.msra.mxu0 %v3371
  %5060 = vmatprep.subr.bf16.mxu0 %v3380
  %5061 = vmatpush1.bf16.msra.mxu0 %v3379
  %5062 = vmatprep.subr.bf16.mxu0 %v3388
  %5063 = vmatpush1.bf16.msra.mxu0 %v3387
  %5064 = vmatprep.subr.bf16.mxu0 %v3396
  %5065 = vmatpush1.bf16.msra.mxu0 %v3395
  %5066 = vmatprep.subr.bf16.mxu0 %v3404
  %5067 = vmatpush1.bf16.msra.mxu0 %v3403
  %5068 = vmatprep.subr.bf16.mxu0 %v3412
  %5069 = vmatpush1.bf16.msra.mxu0 %v3411
  %5070 = vmatprep.subr.bf16.mxu0 %v3420
  %5071 = vmatpush1.bf16.msra.mxu0 %v3419
  %5072 = vmatprep.subr.bf16.mxu0 %v3428
  %5073 = vmatpush1.bf16.msra.mxu0 %v3427
  %5074 = vmatprep.subr.bf16.mxu0 %v3436
  %5075 = vmatpush1.bf16.msra.mxu0 %v3435
  %5076 = vmatprep.subr.bf16.mxu0 %v3444
  %5077 = vmatpush1.bf16.msra.mxu0 %v3443
  %5078 = vmatprep.subr.bf16.mxu0 %v3452
  %5079 = vmatpush1.bf16.msra.mxu0 %v3451
  %5080 = vmatprep.subr.bf16.mxu0 %v3460
  %5081 = vmatpush1.bf16.msra.mxu0 %v3459
  %5082 = vmatprep.subr.bf16.mxu0 %v3468
  %5083 = vmatpush1.bf16.msra.mxu0 %v3467
  %5084 = vmatprep.subr.bf16.mxu0 %v3476
  %5085 = vmatpush1.bf16.msra.mxu0 %v3475
  %5086 = vmatprep.subr.bf16.mxu0 %v3484
  %5087 = vmatpush1.bf16.msra.mxu0 %v3483
  %5088 = vmatprep.mubr.bf16.mxu0 %v891
  %5089 = vmatmul.mubr.bf16.gmra.mrb[0].mxu0 %v889
  %v5090 = vpop.f32.mrb[0].mxu0
  %v5091 = vadd.f32 %v5050, %v5090
  %v5092 = vpop.f32.mrb[0].mxu0
  %v5093 = vadd.f32 %v5052, %v5092
  %v5094 = vpop.f32.mrb[0].mxu0
  %v5095 = vpop.f32.mrb[0].mxu0
  %5096 = vdwg.mxu0
  %5097 = vmatprep.subr.bf16.mxu0 %v3492
  %5098 = vmatpush1.bf16.msra.mxu0 %v3491
  %5099 = vmatprep.subr.bf16.mxu0 %v3500
  %5100 = vmatpush1.bf16.msra.mxu0 %v3499
  %5101 = vmatprep.subr.bf16.mxu0 %v3508
  %5102 = vmatpush1.bf16.msra.mxu0 %v3507
  %5103 = vmatprep.subr.bf16.mxu0 %v3516
  %5104 = vmatpush1.bf16.msra.mxu0 %v3515
  %5105 = vmatprep.subr.bf16.mxu0 %v3524
  %5106 = vmatpush1.bf16.msra.mxu0 %v3523
  %5107 = vmatprep.subr.bf16.mxu0 %v3532
  %5108 = vmatpush1.bf16.msra.mxu0 %v3531
  %5109 = vmatprep.subr.bf16.mxu0 %v3540
  %5110 = vmatpush1.bf16.msra.mxu0 %v3539
  %5111 = vmatprep.subr.bf16.mxu0 %v3548
  %5112 = vmatpush1.bf16.msra.mxu0 %v3547
  %5113 = vmatprep.subr.bf16.mxu0 %v3556
  %5114 = vmatpush1.bf16.msra.mxu0 %v3555
  %5115 = vmatprep.subr.bf16.mxu0 %v3564
  %5116 = vmatpush1.bf16.msra.mxu0 %v3563
  %5117 = vmatprep.subr.bf16.mxu0 %v3572
  %5118 = vmatpush1.bf16.msra.mxu0 %v3571
  %5119 = vmatprep.subr.bf16.mxu0 %v3580
  %5120 = vmatpush1.bf16.msra.mxu0 %v3579
  %5121 = vmatprep.subr.bf16.mxu0 %v3588
  %5122 = vmatpush1.bf16.msra.mxu0 %v3587
  %5123 = vmatprep.subr.bf16.mxu0 %v3596
  %5124 = vmatpush1.bf16.msra.mxu0 %v3595
  %5125 = vmatprep.subr.bf16.mxu0 %v3604
  %5126 = vmatpush1.bf16.msra.mxu0 %v3603
  %5127 = vmatprep.subr.bf16.mxu0 %v3612
  %5128 = vmatpush1.bf16.msra.mxu0 %v3611
  %5129 = vmatprep.mubr.bf16.mxu0 %v888
  %5130 = vmatmul.mubr.bf16.gmra.mrb[0].mxu0 %v874
  %v5131 = vpop.f32.mrb[0].mxu0
  %v5132 = vadd.f32 %v5091, %v5131
  %v5133 = vpop.f32.mrb[0].mxu0
  %v5134 = vadd.f32 %v5093, %v5133
  %v5135 = vpop.f32.mrb[0].mxu0
  %v5136 = vpop.f32.mrb[0].mxu0
  %5137 = vdwg.mxu0
  %5138 = vmatprep.subr.bf16.mxu0 %v3620
  %5139 = vmatpush1.bf16.msra.mxu0 %v3619
  %5140 = vmatprep.subr.bf16.mxu0 %v3628
  %5141 = vmatpush1.bf16.msra.mxu0 %v3627
  %5142 = vmatprep.subr.bf16.mxu0 %v3636
  %5143 = vmatpush1.bf16.msra.mxu0 %v3635
  %5144 = vmatprep.subr.bf16.mxu0 %v3644
  %5145 = vmatpush1.bf16.msra.mxu0 %v3643
  %5146 = vmatprep.subr.bf16.mxu0 %v3652
  %5147 = vmatpush1.bf16.msra.mxu0 %v3651
  %5148 = vmatprep.subr.bf16.mxu0 %v3660
  %5149 = vmatpush1.bf16.msra.mxu0 %v3659
  %5150 = vmatprep.subr.bf16.mxu0 %v3668
  %5151 = vmatpush1.bf16.msra.mxu0 %v3667
  %5152 = vmatprep.subr.bf16.mxu0 %v3676
  %5153 = vmatpush1.bf16.msra.mxu0 %v3675
  %5154 = vmatprep.subr.bf16.mxu0 %v3684
  %5155 = vmatpush1.bf16.msra.mxu0 %v3683
  %5156 = vmatprep.subr.bf16.mxu0 %v3692
  %5157 = vmatpush1.bf16.msra.mxu0 %v3691
  %5158 = vmatprep.subr.bf16.mxu0 %v3700
  %5159 = vmatpush1.bf16.msra.mxu0 %v3699
  %5160 = vmatprep.subr.bf16.mxu0 %v3708
  %5161 = vmatpush1.bf16.msra.mxu0 %v3707
  %5162 = vmatprep.subr.bf16.mxu0 %v3716
  %5163 = vmatpush1.bf16.msra.mxu0 %v3715
  %5164 = vmatprep.subr.bf16.mxu0 %v3724
  %5165 = vmatpush1.bf16.msra.mxu0 %v3723
  %5166 = vmatprep.subr.bf16.mxu0 %v3732
  %5167 = vmatpush1.bf16.msra.mxu0 %v3731
  %5168 = vmatprep.subr.bf16.mxu0 %v3740
  %5169 = vmatpush1.bf16.msra.mxu0 %v3739
  %5170 = vmatprep.mubr.bf16.mxu0 %v892
  %5171 = vmatmul.mubr.bf16.gmra.mrb[0].mxu0 %v890
  %v5172 = vpop.f32.mrb[0].mxu0
  %v5173 = vadd.f32 %v5132, %v5172
  %v5174 = vpop.f32.mrb[0].mxu0
  %v5175 = vadd.f32 %v5134, %v5174
  %v5176 = vpop.f32.mrb[0].mxu0
  %v5177 = vpop.f32.mrb[0].mxu0
  %5178 = vdwg.mxu0
  %5179 = vmatprep.subr.bf16.mxu0 %v3748
  %5180 = vmatpush1.bf16.msra.mxu0 %v3747
  %5181 = vmatprep.subr.bf16.mxu0 %v3756
  %5182 = vmatpush1.bf16.msra.mxu0 %v3755
  %5183 = vmatprep.subr.bf16.mxu0 %v3764
  %5184 = vmatpush1.bf16.msra.mxu0 %v3763
  %5185 = vmatprep.subr.bf16.mxu0 %v3772
  %5186 = vmatpush1.bf16.msra.mxu0 %v3771
  %5187 = vmatprep.subr.bf16.mxu0 %v3780
  %5188 = vmatpush1.bf16.msra.mxu0 %v3779
  %5189 = vmatprep.subr.bf16.mxu0 %v3788
  %5190 = vmatpush1.bf16.msra.mxu0 %v3787
  %5191 = vmatprep.subr.bf16.mxu0 %v3796
  %5192 = vmatpush1.bf16.msra.mxu0 %v3795
  %5193 = vmatprep.subr.bf16.mxu0 %v3804
  %5194 = vmatpush1.bf16.msra.mxu0 %v3803
  %5195 = vmatprep.subr.bf16.mxu0 %v3812
  %5196 = vmatpush1.bf16.msra.mxu0 %v3811
  %5197 = vmatprep.subr.bf16.mxu0 %v3820
  %5198 = vmatpush1.bf16.msra.mxu0 %v3819
  %5199 = vmatprep.subr.bf16.mxu0 %v3828
  %5200 = vmatpush1.bf16.msra.mxu0 %v3827
  %5201 = vmatprep.subr.bf16.mxu0 %v3836
  %5202 = vmatpush1.bf16.msra.mxu0 %v3835
  %5203 = vmatprep.subr.bf16.mxu0 %v3844
  %5204 = vmatpush1.bf16.msra.mxu0 %v3843
  %5205 = vmatprep.subr.bf16.mxu0 %v3852
  %5206 = vmatpush1.bf16.msra.mxu0 %v3851
  %5207 = vmatprep.subr.bf16.mxu0 %v3860
  %5208 = vmatpush1.bf16.msra.mxu0 %v3859
  %5209 = vmatprep.subr.bf16.mxu0 %v3868
  %5210 = vmatpush1.bf16.msra.mxu0 %v3867
  %5211 = vmatprep.mubr.bf16.mxu0 %v914
  %5212 = vmatmul.mubr.bf16.gmra.mrb[0].mxu0 %v907
  %v5213 = vpop.f32.mrb[0].mxu0
  %v5214 = vadd.f32 %v5173, %v5213
  %v5215 = vpop.f32.mrb[0].mxu0
  %v5216 = vadd.f32 %v5175, %v5215
  %v5217 = vpop.f32.mrb[0].mxu0
  %v5218 = vpop.f32.mrb[0].mxu0
  %5219 = vdwg.mxu0
  %5220 = vmatprep.subr.bf16.mxu0 %v3876
  %5221 = vmatpush1.bf16.msra.mxu0 %v3875
  %5222 = vmatprep.subr.bf16.mxu0 %v3884
  %5223 = vmatpush1.bf16.msra.mxu0 %v3883
  %5224 = vmatprep.subr.bf16.mxu0 %v3892
  %5225 = vmatpush1.bf16.msra.mxu0 %v3891
  %5226 = vmatprep.subr.bf16.mxu0 %v3900
  %5227 = vmatpush1.bf16.msra.mxu0 %v3899
  %5228 = vmatprep.subr.bf16.mxu0 %v3908
  %5229 = vmatpush1.bf16.msra.mxu0 %v3907
  %5230 = vmatprep.subr.bf16.mxu0 %v3916
  %5231 = vmatpush1.bf16.msra.mxu0 %v3915
  %5232 = vmatprep.subr.bf16.mxu0 %v3924
  %5233 = vmatpush1.bf16.msra.mxu0 %v3923
  %5234 = vmatprep.subr.bf16.mxu0 %v3932
  %5235 = vmatpush1.bf16.msra.mxu0 %v3931
  %5236 = vmatprep.subr.bf16.mxu0 %v3940
  %5237 = vmatpush1.bf16.msra.mxu0 %v3939
  %5238 = vmatprep.subr.bf16.mxu0 %v3948
  %5239 = vmatpush1.bf16.msra.mxu0 %v3947
  %5240 = vmatprep.subr.bf16.mxu0 %v3956
  %5241 = vmatpush1.bf16.msra.mxu0 %v3955
  %5242 = vmatprep.subr.bf16.mxu0 %v3964
  %5243 = vmatpush1.bf16.msra.mxu0 %v3963
  %5244 = vmatprep.subr.bf16.mxu0 %v3972
  %5245 = vmatpush1.bf16.msra.mxu0 %v3971
  %5246 = vmatprep.subr.bf16.mxu0 %v3980
  %5247 = vmatpush1.bf16.msra.mxu0 %v3979
  %5248 = vmatprep.subr.bf16.mxu0 %v3988
  %5249 = vmatpush1.bf16.msra.mxu0 %v3987
  %5250 = vmatprep.subr.bf16.mxu0 %v3996
  %5251 = vmatpush1.bf16.msra.mxu0 %v3995
  %5252 = vmatprep.mubr.bf16.mxu0 %v916
  %5253 = vmatmul.mubr.bf16.gmra.mrb[0].mxu0 %v915
  %v5254 = vpop.f32.mrb[0].mxu0
  %v5255 = vadd.f32 %v5214, %v5254
  %v5256 = vpop.f32.mrb[0].mxu0
  %v5257 = vadd.f32 %v5216, %v5256
  %v5258 = vpop.f32.mrb[0].mxu0
  %v5259 = vpop.f32.mrb[0].mxu0
  %5260 = vdwg.mxu0
  %5261 = vmatprep.subr.bf16.mxu0 %v3238
  %5262 = vmatpush1.bf16.msra.mxu0 %v3237
  %5263 = vmatprep.subr.bf16.mxu0 %v3246
  %5264 = vmatpush1.bf16.msra.mxu0 %v3245
  %5265 = vmatprep.subr.bf16.mxu0 %v3254
  %5266 = vmatpush1.bf16.msra.mxu0 %v3253
  %5267 = vmatprep.subr.bf16.mxu0 %v3262
  %5268 = vmatpush1.bf16.msra.mxu0 %v3261
  %5269 = vmatprep.subr.bf16.mxu0 %v3270
  %5270 = vmatpush1.bf16.msra.mxu0 %v3269
  %5271 = vmatprep.subr.bf16.mxu0 %v3278
  %5272 = vmatpush1.bf16.msra.mxu0 %v3277
  %5273 = vmatprep.subr.bf16.mxu0 %v3286
  %5274 = vmatpush1.bf16.msra.mxu0 %v3285
  %5275 = vmatprep.subr.bf16.mxu0 %v3294
  %5276 = vmatpush1.bf16.msra.mxu0 %v3293
  %5277 = vmatprep.subr.bf16.mxu0 %v3302
  %5278 = vmatpush1.bf16.msra.mxu0 %v3301
  %5279 = vmatprep.subr.bf16.mxu0 %v3310
  %5280 = vmatpush1.bf16.msra.mxu0 %v3309
  %5281 = vmatprep.subr.bf16.mxu0 %v3318
  %5282 = vmatpush1.bf16.msra.mxu0 %v3317
  %5283 = vmatprep.subr.bf16.mxu0 %v3326
  %5284 = vmatpush1.bf16.msra.mxu0 %v3325
  %5285 = vmatprep.subr.bf16.mxu0 %v3334
  %5286 = vmatpush1.bf16.msra.mxu0 %v3333
  %5287 = vmatprep.subr.bf16.mxu0 %v3342
  %5288 = vmatpush1.bf16.msra.mxu0 %v3341
  %5289 = vmatprep.subr.bf16.mxu0 %v3350
  %5290 = vmatpush1.bf16.msra.mxu0 %v3349
  %5291 = vmatprep.subr.bf16.mxu0 %v3358
  %5292 = vmatpush1.bf16.msra.mxu0 %v3357
  %5293 = vmatprep.mubr.bf16.mxu0 %v881
  %5294 = vmatmul.mubr.bf16.gmra.mrb[0].mxu0 %v867
  %v5295 = vpop.f32.mrb[0].mxu0
  %v5296 = vadd.f32 %v821, %v5295
  %v5297 = vpop.f32.mrb[0].mxu0
  %v5298 = vadd.f32 %v825, %v5297
  %v5299 = vpop.f32.mrb[0].mxu0
  %v5300 = vpop.f32.mrb[0].mxu0
  %5301 = vdwg.mxu0
  %5302 = vmatprep.subr.bf16.mxu0 %v3366
  %5303 = vmatpush1.bf16.msra.mxu0 %v3365
  %5304 = vmatprep.subr.bf16.mxu0 %v3374
  %5305 = vmatpush1.bf16.msra.mxu0 %v3373
  %5306 = vmatprep.subr.bf16.mxu0 %v3382
  %5307 = vmatpush1.bf16.msra.mxu0 %v3381
  %5308 = vmatprep.subr.bf16.mxu0 %v3390
  %5309 = vmatpush1.bf16.msra.mxu0 %v3389
  %5310 = vmatprep.subr.bf16.mxu0 %v3398
  %5311 = vmatpush1.bf16.msra.mxu0 %v3397
  %5312 = vmatprep.subr.bf16.mxu0 %v3406
  %5313 = vmatpush1.bf16.msra.mxu0 %v3405
  %5314 = vmatprep.subr.bf16.mxu0 %v3414
  %5315 = vmatpush1.bf16.msra.mxu0 %v3413
  %5316 = vmatprep.subr.bf16.mxu0 %v3422
  %5317 = vmatpush1.bf16.msra.mxu0 %v3421
  %5318 = vmatprep.subr.bf16.mxu0 %v3430
  %5319 = vmatpush1.bf16.msra.mxu0 %v3429
  %5320 = vmatprep.subr.bf16.mxu0 %v3438
  %5321 = vmatpush1.bf16.msra.mxu0 %v3437
  %5322 = vmatprep.subr.bf16.mxu0 %v3446
  %5323 = vmatpush1.bf16.msra.mxu0 %v3445
  %5324 = vmatprep.subr.bf16.mxu0 %v3454
  %5325 = vmatpush1.bf16.msra.mxu0 %v3453
  %5326 = vmatprep.subr.bf16.mxu0 %v3462
  %5327 = vmatpush1.bf16.msra.mxu0 %v3461
  %5328 = vmatprep.subr.bf16.mxu0 %v3470
  %5329 = vmatpush1.bf16.msra.mxu0 %v3469
  %5330 = vmatprep.subr.bf16.mxu0 %v3478
  %5331 = vmatpush1.bf16.msra.mxu0 %v3477
  %5332 = vmatprep.subr.bf16.mxu0 %v3486
  %5333 = vmatpush1.bf16.msra.mxu0 %v3485
  %5334 = vmatprep.mubr.bf16.mxu0 %v891
  %5335 = vmatmul.mubr.bf16.gmra.mrb[0].mxu0 %v889
  %v5336 = vpop.f32.mrb[0].mxu0
  %v5337 = vadd.f32 %v5296, %v5336
  %v5338 = vpop.f32.mrb[0].mxu0
  %v5339 = vadd.f32 %v5298, %v5338
  %v5340 = vpop.f32.mrb[0].mxu0
  %v5341 = vpop.f32.mrb[0].mxu0
  %5342 = vdwg.mxu0
  %5343 = vmatprep.subr.bf16.mxu0 %v3494
  %5344 = vmatpush1.bf16.msra.mxu0 %v3493
  %5345 = vmatprep.subr.bf16.mxu0 %v3502
  %5346 = vmatpush1.bf16.msra.mxu0 %v3501
  %5347 = vmatprep.subr.bf16.mxu0 %v3510
  %5348 = vmatpush1.bf16.msra.mxu0 %v3509
  %5349 = vmatprep.subr.bf16.mxu0 %v3518
  %5350 = vmatpush1.bf16.msra.mxu0 %v3517
  %5351 = vmatprep.subr.bf16.mxu0 %v3526
  %5352 = vmatpush1.bf16.msra.mxu0 %v3525
  %5353 = vmatprep.subr.bf16.mxu0 %v3534
  %5354 = vmatpush1.bf16.msra.mxu0 %v3533
  %5355 = vmatprep.subr.bf16.mxu0 %v3542
  %5356 = vmatpush1.bf16.msra.mxu0 %v3541
  %5357 = vmatprep.subr.bf16.mxu0 %v3550
  %5358 = vmatpush1.bf16.msra.mxu0 %v3549
  %5359 = vmatprep.subr.bf16.mxu0 %v3558
  %5360 = vmatpush1.bf16.msra.mxu0 %v3557
  %5361 = vmatprep.subr.bf16.mxu0 %v3566
  %5362 = vmatpush1.bf16.msra.mxu0 %v3565
  %5363 = vmatprep.subr.bf16.mxu0 %v3574
  %5364 = vmatpush1.bf16.msra.mxu0 %v3573
  %5365 = vmatprep.subr.bf16.mxu0 %v3582
  %5366 = vmatpush1.bf16.msra.mxu0 %v3581
  %5367 = vmatprep.subr.bf16.mxu0 %v3590
  %5368 = vmatpush1.bf16.msra.mxu0 %v3589
  %5369 = vmatprep.subr.bf16.mxu0 %v3598
  %5370 = vmatpush1.bf16.msra.mxu0 %v3597
  %5371 = vmatprep.subr.bf16.mxu0 %v3606
  %5372 = vmatpush1.bf16.msra.mxu0 %v3605
  %5373 = vmatprep.subr.bf16.mxu0 %v3614
  %5374 = vmatpush1.bf16.msra.mxu0 %v3613
  %5375 = vmatprep.mubr.bf16.mxu0 %v888
  %5376 = vmatmul.mubr.bf16.gmra.mrb[0].mxu0 %v874
  %v5377 = vpop.f32.mrb[0].mxu0
  %v5378 = vadd.f32 %v5337, %v5377
  %v5379 = vpop.f32.mrb[0].mxu0
  %v5380 = vadd.f32 %v5339, %v5379
  %v5381 = vpop.f32.mrb[0].mxu0
  %v5382 = vpop.f32.mrb[0].mxu0
  %5383 = vdwg.mxu0
  %5384 = vmatprep.subr.bf16.mxu0 %v3622
  %5385 = vmatpush1.bf16.msra.mxu0 %v3621
  %5386 = vmatprep.subr.bf16.mxu0 %v3630
  %5387 = vmatpush1.bf16.msra.mxu0 %v3629
  %5388 = vmatprep.subr.bf16.mxu0 %v3638
  %5389 = vmatpush1.bf16.msra.mxu0 %v3637
  %5390 = vmatprep.subr.bf16.mxu0 %v3646
  %5391 = vmatpush1.bf16.msra.mxu0 %v3645
  %5392 = vmatprep.subr.bf16.mxu0 %v3654
  %5393 = vmatpush1.bf16.msra.mxu0 %v3653
  %5394 = vmatprep.subr.bf16.mxu0 %v3662
  %5395 = vmatpush1.bf16.msra.mxu0 %v3661
  %5396 = vmatprep.subr.bf16.mxu0 %v3670
  %5397 = vmatpush1.bf16.msra.mxu0 %v3669
  %5398 = vmatprep.subr.bf16.mxu0 %v3678
  %5399 = vmatpush1.bf16.msra.mxu0 %v3677
  %5400 = vmatprep.subr.bf16.mxu0 %v3686
  %5401 = vmatpush1.bf16.msra.mxu0 %v3685
  %5402 = vmatprep.subr.bf16.mxu0 %v3694
  %5403 = vmatpush1.bf16.msra.mxu0 %v3693
  %5404 = vmatprep.subr.bf16.mxu0 %v3702
  %5405 = vmatpush1.bf16.msra.mxu0 %v3701
  %5406 = vmatprep.subr.bf16.mxu0 %v3710
  %5407 = vmatpush1.bf16.msra.mxu0 %v3709
  %5408 = vmatprep.subr.bf16.mxu0 %v3718
  %5409 = vmatpush1.bf16.msra.mxu0 %v3717
  %5410 = vmatprep.subr.bf16.mxu0 %v3726
  %5411 = vmatpush1.bf16.msra.mxu0 %v3725
  %5412 = vmatprep.subr.bf16.mxu0 %v3734
  %5413 = vmatpush1.bf16.msra.mxu0 %v3733
  %5414 = vmatprep.subr.bf16.mxu0 %v3742
  %5415 = vmatpush1.bf16.msra.mxu0 %v3741
  %5416 = vmatprep.mubr.bf16.mxu0 %v892
  %5417 = vmatmul.mubr.bf16.gmra.mrb[0].mxu0 %v890
  %v5418 = vpop.f32.mrb[0].mxu0
  %v5419 = vadd.f32 %v5378, %v5418
  %v5420 = vpop.f32.mrb[0].mxu0
  %v5421 = vadd.f32 %v5380, %v5420
  %v5422 = vpop.f32.mrb[0].mxu0
  %v5423 = vpop.f32.mrb[0].mxu0
  %5424 = vdwg.mxu0
  %5425 = vmatprep.subr.bf16.mxu0 %v3750
  %5426 = vmatpush1.bf16.msra.mxu0 %v3749
  %5427 = vmatprep.subr.bf16.mxu0 %v3758
  %5428 = vmatpush1.bf16.msra.mxu0 %v3757
  %5429 = vmatprep.subr.bf16.mxu0 %v3766
  %5430 = vmatpush1.bf16.msra.mxu0 %v3765
  %5431 = vmatprep.subr.bf16.mxu0 %v3774
  %5432 = vmatpush1.bf16.msra.mxu0 %v3773
  %5433 = vmatprep.subr.bf16.mxu0 %v3782
  %5434 = vmatpush1.bf16.msra.mxu0 %v3781
  %5435 = vmatprep.subr.bf16.mxu0 %v3790
  %5436 = vmatpush1.bf16.msra.mxu0 %v3789
  %5437 = vmatprep.subr.bf16.mxu0 %v3798
  %5438 = vmatpush1.bf16.msra.mxu0 %v3797
  %5439 = vmatprep.subr.bf16.mxu0 %v3806
  %5440 = vmatpush1.bf16.msra.mxu0 %v3805
  %5441 = vmatprep.subr.bf16.mxu0 %v3814
  %5442 = vmatpush1.bf16.msra.mxu0 %v3813
  %5443 = vmatprep.subr.bf16.mxu0 %v3822
  %5444 = vmatpush1.bf16.msra.mxu0 %v3821
  %5445 = vmatprep.subr.bf16.mxu0 %v3830
  %5446 = vmatpush1.bf16.msra.mxu0 %v3829
  %5447 = vmatprep.subr.bf16.mxu0 %v3838
  %5448 = vmatpush1.bf16.msra.mxu0 %v3837
  %5449 = vmatprep.subr.bf16.mxu0 %v3846
  %5450 = vmatpush1.bf16.msra.mxu0 %v3845
  %5451 = vmatprep.subr.bf16.mxu0 %v3854
  %5452 = vmatpush1.bf16.msra.mxu0 %v3853
  %5453 = vmatprep.subr.bf16.mxu0 %v3862
  %5454 = vmatpush1.bf16.msra.mxu0 %v3861
  %5455 = vmatprep.subr.bf16.mxu0 %v3870
  %5456 = vmatpush1.bf16.msra.mxu0 %v3869
  %5457 = vmatprep.mubr.bf16.mxu0 %v914
  %5458 = vmatmul.mubr.bf16.gmra.mrb[0].mxu0 %v907
  %v5459 = vpop.f32.mrb[0].mxu0
  %v5460 = vadd.f32 %v5419, %v5459
  %v5461 = vpop.f32.mrb[0].mxu0
  %v5462 = vadd.f32 %v5421, %v5461
  %v5463 = vpop.f32.mrb[0].mxu0
  %v5464 = vpop.f32.mrb[0].mxu0
  %5465 = vdwg.mxu0
  %5466 = vmatprep.subr.bf16.mxu0 %v3878
  %5467 = vmatpush1.bf16.msra.mxu0 %v3877
  %5468 = vmatprep.subr.bf16.mxu0 %v3886
  %5469 = vmatpush1.bf16.msra.mxu0 %v3885
  %5470 = vmatprep.subr.bf16.mxu0 %v3894
  %5471 = vmatpush1.bf16.msra.mxu0 %v3893
  %5472 = vmatprep.subr.bf16.mxu0 %v3902
  %5473 = vmatpush1.bf16.msra.mxu0 %v3901
  %5474 = vmatprep.subr.bf16.mxu0 %v3910
  %5475 = vmatpush1.bf16.msra.mxu0 %v3909
  %5476 = vmatprep.subr.bf16.mxu0 %v3918
  %5477 = vmatpush1.bf16.msra.mxu0 %v3917
  %5478 = vmatprep.subr.bf16.mxu0 %v3926
  %5479 = vmatpush1.bf16.msra.mxu0 %v3925
  %5480 = vmatprep.subr.bf16.mxu0 %v3934
  %5481 = vmatpush1.bf16.msra.mxu0 %v3933
  %5482 = vmatprep.subr.bf16.mxu0 %v3942
  %5483 = vmatpush1.bf16.msra.mxu0 %v3941
  %5484 = vmatprep.subr.bf16.mxu0 %v3950
  %5485 = vmatpush1.bf16.msra.mxu0 %v3949
  %5486 = vmatprep.subr.bf16.mxu0 %v3958
  %5487 = vmatpush1.bf16.msra.mxu0 %v3957
  %5488 = vmatprep.subr.bf16.mxu0 %v3966
  %5489 = vmatpush1.bf16.msra.mxu0 %v3965
  %5490 = vmatprep.subr.bf16.mxu0 %v3974
  %5491 = vmatpush1.bf16.msra.mxu0 %v3973
  %5492 = vmatprep.subr.bf16.mxu0 %v3982
  %5493 = vmatpush1.bf16.msra.mxu0 %v3981
  %5494 = vmatprep.subr.bf16.mxu0 %v3990
  %5495 = vmatpush1.bf16.msra.mxu0 %v3989
  %5496 = vmatprep.subr.bf16.mxu0 %v3998
  %5497 = vmatpush1.bf16.msra.mxu0 %v3997
  %5498 = vmatprep.mubr.bf16.mxu0 %v916
  %5499 = vmatmul.mubr.bf16.gmra.mrb[0].mxu0 %v915
  %v5500 = vpop.f32.mrb[0].mxu0
  %v5501 = vadd.f32 %v5460, %v5500
  %v5502 = vpop.f32.mrb[0].mxu0
  %v5503 = vadd.f32 %v5462, %v5502
  %v5504 = vpop.f32.mrb[0].mxu0
  %v5505 = vpop.f32.mrb[0].mxu0
  %5506 = vdwg.mxu0
  %5507 = vmatprep.subr.bf16.mxu0 %v3240
  %5508 = vmatpush1.bf16.msra.mxu0 %v3239
  %5509 = vmatprep.subr.bf16.mxu0 %v3248
  %5510 = vmatpush1.bf16.msra.mxu0 %v3247
  %5511 = vmatprep.subr.bf16.mxu0 %v3256
  %5512 = vmatpush1.bf16.msra.mxu0 %v3255
  %5513 = vmatprep.subr.bf16.mxu0 %v3264
  %5514 = vmatpush1.bf16.msra.mxu0 %v3263
  %5515 = vmatprep.subr.bf16.mxu0 %v3272
  %5516 = vmatpush1.bf16.msra.mxu0 %v3271
  %5517 = vmatprep.subr.bf16.mxu0 %v3280
  %5518 = vmatpush1.bf16.msra.mxu0 %v3279
  %5519 = vmatprep.subr.bf16.mxu0 %v3288
  %5520 = vmatpush1.bf16.msra.mxu0 %v3287
  %5521 = vmatprep.subr.bf16.mxu0 %v3296
  %5522 = vmatpush1.bf16.msra.mxu0 %v3295
  %5523 = vmatprep.subr.bf16.mxu0 %v3304
  %5524 = vmatpush1.bf16.msra.mxu0 %v3303
  %5525 = vmatprep.subr.bf16.mxu0 %v3312
  %5526 = vmatpush1.bf16.msra.mxu0 %v3311
  %5527 = vmatprep.subr.bf16.mxu0 %v3320
  %5528 = vmatpush1.bf16.msra.mxu0 %v3319
  %5529 = vmatprep.subr.bf16.mxu0 %v3328
  %5530 = vmatpush1.bf16.msra.mxu0 %v3327
  %5531 = vmatprep.subr.bf16.mxu0 %v3336
  %5532 = vmatpush1.bf16.msra.mxu0 %v3335
  %5533 = vmatprep.subr.bf16.mxu0 %v3344
  %5534 = vmatpush1.bf16.msra.mxu0 %v3343
  %5535 = vmatprep.subr.bf16.mxu0 %v3352
  %5536 = vmatpush1.bf16.msra.mxu0 %v3351
  %5537 = vmatprep.subr.bf16.mxu0 %v3360
  %5538 = vmatpush1.bf16.msra.mxu0 %v3359
  %5539 = vmatprep.mubr.bf16.mxu0 %v881
  %5540 = vmatmul.mubr.bf16.gmra.mrb[0].mxu0 %v867
  %v5541 = vpop.f32.mrb[0].mxu0
  %v5542 = vadd.f32 %v829, %v5541
  %v5543 = vpop.f32.mrb[0].mxu0
  %v5544 = vadd.f32 %v833, %v5543
  %v5545 = vpop.f32.mrb[0].mxu0
  %v5546 = vpop.f32.mrb[0].mxu0
  %5547 = vdwg.mxu0
  %5548 = vmatprep.subr.bf16.mxu0 %v3368
  %5549 = vmatpush1.bf16.msra.mxu0 %v3367
  %5550 = vmatprep.subr.bf16.mxu0 %v3376
  %5551 = vmatpush1.bf16.msra.mxu0 %v3375
  %5552 = vmatprep.subr.bf16.mxu0 %v3384
  %5553 = vmatpush1.bf16.msra.mxu0 %v3383
  %5554 = vmatprep.subr.bf16.mxu0 %v3392
  %5555 = vmatpush1.bf16.msra.mxu0 %v3391
  %5556 = vmatprep.subr.bf16.mxu0 %v3400
  %5557 = vmatpush1.bf16.msra.mxu0 %v3399
  %5558 = vmatprep.subr.bf16.mxu0 %v3408
  %5559 = vmatpush1.bf16.msra.mxu0 %v3407
  %5560 = vmatprep.subr.bf16.mxu0 %v3416
  %5561 = vmatpush1.bf16.msra.mxu0 %v3415
  %5562 = vmatprep.subr.bf16.mxu0 %v3424
  %5563 = vmatpush1.bf16.msra.mxu0 %v3423
  %5564 = vmatprep.subr.bf16.mxu0 %v3432
  %5565 = vmatpush1.bf16.msra.mxu0 %v3431
  %5566 = vmatprep.subr.bf16.mxu0 %v3440
  %5567 = vmatpush1.bf16.msra.mxu0 %v3439
  %5568 = vmatprep.subr.bf16.mxu0 %v3448
  %5569 = vmatpush1.bf16.msra.mxu0 %v3447
  %5570 = vmatprep.subr.bf16.mxu0 %v3456
  %5571 = vmatpush1.bf16.msra.mxu0 %v3455
  %5572 = vmatprep.subr.bf16.mxu0 %v3464
  %5573 = vmatpush1.bf16.msra.mxu0 %v3463
  %5574 = vmatprep.subr.bf16.mxu0 %v3472
  %5575 = vmatpush1.bf16.msra.mxu0 %v3471
  %5576 = vmatprep.subr.bf16.mxu0 %v3480
  %5577 = vmatpush1.bf16.msra.mxu0 %v3479
  %5578 = vmatprep.subr.bf16.mxu0 %v3488
  %5579 = vmatpush1.bf16.msra.mxu0 %v3487
  %5580 = vmatprep.mubr.bf16.mxu0 %v891
  %5581 = vmatmul.mubr.bf16.gmra.mrb[0].mxu0 %v889
  %v5582 = vpop.f32.mrb[0].mxu0
  %v5583 = vadd.f32 %v5542, %v5582
  %v5584 = vpop.f32.mrb[0].mxu0
  %v5585 = vadd.f32 %v5544, %v5584
  %v5586 = vpop.f32.mrb[0].mxu0
  %v5587 = vpop.f32.mrb[0].mxu0
  %5588 = vdwg.mxu0
  %5589 = vmatprep.subr.bf16.mxu0 %v3496
  %5590 = vmatpush1.bf16.msra.mxu0 %v3495
  %5591 = vmatprep.subr.bf16.mxu0 %v3504
  %5592 = vmatpush1.bf16.msra.mxu0 %v3503
  %5593 = vmatprep.subr.bf16.mxu0 %v3512
  %5594 = vmatpush1.bf16.msra.mxu0 %v3511
  %5595 = vmatprep.subr.bf16.mxu0 %v3520
  %5596 = vmatpush1.bf16.msra.mxu0 %v3519
  %5597 = vmatprep.subr.bf16.mxu0 %v3528
  %5598 = vmatpush1.bf16.msra.mxu0 %v3527
  %5599 = vmatprep.subr.bf16.mxu0 %v3536
  %5600 = vmatpush1.bf16.msra.mxu0 %v3535
  %5601 = vmatprep.subr.bf16.mxu0 %v3544
  %5602 = vmatpush1.bf16.msra.mxu0 %v3543
  %5603 = vmatprep.subr.bf16.mxu0 %v3552
  %5604 = vmatpush1.bf16.msra.mxu0 %v3551
  %5605 = vmatprep.subr.bf16.mxu0 %v3560
  %5606 = vmatpush1.bf16.msra.mxu0 %v3559
  %5607 = vmatprep.subr.bf16.mxu0 %v3568
  %5608 = vmatpush1.bf16.msra.mxu0 %v3567
  %5609 = vmatprep.subr.bf16.mxu0 %v3576
  %5610 = vmatpush1.bf16.msra.mxu0 %v3575
  %5611 = vmatprep.subr.bf16.mxu0 %v3584
  %5612 = vmatpush1.bf16.msra.mxu0 %v3583
  %5613 = vmatprep.subr.bf16.mxu0 %v3592
  %5614 = vmatpush1.bf16.msra.mxu0 %v3591
  %5615 = vmatprep.subr.bf16.mxu0 %v3600
  %5616 = vmatpush1.bf16.msra.mxu0 %v3599
  %5617 = vmatprep.subr.bf16.mxu0 %v3608
  %5618 = vmatpush1.bf16.msra.mxu0 %v3607
  %5619 = vmatprep.subr.bf16.mxu0 %v3616
  %5620 = vmatpush1.bf16.msra.mxu0 %v3615
  %5621 = vmatprep.mubr.bf16.mxu0 %v888
  %5622 = vmatmul.mubr.bf16.gmra.mrb[0].mxu0 %v874
  %v5623 = vpop.f32.mrb[0].mxu0
  %v5624 = vadd.f32 %v5583, %v5623
  %v5625 = vpop.f32.mrb[0].mxu0
  %v5626 = vadd.f32 %v5585, %v5625
  %v5627 = vpop.f32.mrb[0].mxu0
  %v5628 = vpop.f32.mrb[0].mxu0
  %5629 = vdwg.mxu0
  %5630 = vmatprep.subr.bf16.mxu0 %v3624
  %5631 = vmatpush1.bf16.msra.mxu0 %v3623
  %5632 = vmatprep.subr.bf16.mxu0 %v3632
  %5633 = vmatpush1.bf16.msra.mxu0 %v3631
  %5634 = vmatprep.subr.bf16.mxu0 %v3640
  %5635 = vmatpush1.bf16.msra.mxu0 %v3639
  %5636 = vmatprep.subr.bf16.mxu0 %v3648
  %5637 = vmatpush1.bf16.msra.mxu0 %v3647
  %5638 = vmatprep.subr.bf16.mxu0 %v3656
  %5639 = vmatpush1.bf16.msra.mxu0 %v3655
  %5640 = vmatprep.subr.bf16.mxu0 %v3664
  %5641 = vmatpush1.bf16.msra.mxu0 %v3663
  %5642 = vmatprep.subr.bf16.mxu0 %v3672
  %5643 = vmatpush1.bf16.msra.mxu0 %v3671
  %5644 = vmatprep.subr.bf16.mxu0 %v3680
  %5645 = vmatpush1.bf16.msra.mxu0 %v3679
  %5646 = vmatprep.subr.bf16.mxu0 %v3688
  %5647 = vmatpush1.bf16.msra.mxu0 %v3687
  %5648 = vmatprep.subr.bf16.mxu0 %v3696
  %5649 = vmatpush1.bf16.msra.mxu0 %v3695
  %5650 = vmatprep.subr.bf16.mxu0 %v3704
  %5651 = vmatpush1.bf16.msra.mxu0 %v3703
  %5652 = vmatprep.subr.bf16.mxu0 %v3712
  %5653 = vmatpush1.bf16.msra.mxu0 %v3711
  %5654 = vmatprep.subr.bf16.mxu0 %v3720
  %5655 = vmatpush1.bf16.msra.mxu0 %v3719
  %5656 = vmatprep.subr.bf16.mxu0 %v3728
  %5657 = vmatpush1.bf16.msra.mxu0 %v3727
  %5658 = vmatprep.subr.bf16.mxu0 %v3736
  %5659 = vmatpush1.bf16.msra.mxu0 %v3735
  %5660 = vmatprep.subr.bf16.mxu0 %v3744
  %5661 = vmatpush1.bf16.msra.mxu0 %v3743
  %5662 = vmatprep.mubr.bf16.mxu0 %v892
  %5663 = vmatmul.mubr.bf16.gmra.mrb[0].mxu0 %v890
  %v5664 = vpop.f32.mrb[0].mxu0
  %v5665 = vadd.f32 %v5624, %v5664
  %v5666 = vpop.f32.mrb[0].mxu0
  %v5667 = vadd.f32 %v5626, %v5666
  %v5668 = vpop.f32.mrb[0].mxu0
  %v5669 = vpop.f32.mrb[0].mxu0
  %5670 = vdwg.mxu0
  %5671 = vmatprep.subr.bf16.mxu0 %v3752
  %5672 = vmatpush1.bf16.msra.mxu0 %v3751
  %5673 = vmatprep.subr.bf16.mxu0 %v3760
  %5674 = vmatpush1.bf16.msra.mxu0 %v3759
  %5675 = vmatprep.subr.bf16.mxu0 %v3768
  %5676 = vmatpush1.bf16.msra.mxu0 %v3767
  %5677 = vmatprep.subr.bf16.mxu0 %v3776
  %5678 = vmatpush1.bf16.msra.mxu0 %v3775
  %5679 = vmatprep.subr.bf16.mxu0 %v3784
  %5680 = vmatpush1.bf16.msra.mxu0 %v3783
  %5681 = vmatprep.subr.bf16.mxu0 %v3792
  %5682 = vmatpush1.bf16.msra.mxu0 %v3791
  %5683 = vmatprep.subr.bf16.mxu0 %v3800
  %5684 = vmatpush1.bf16.msra.mxu0 %v3799
  %5685 = vmatprep.subr.bf16.mxu0 %v3808
  %5686 = vmatpush1.bf16.msra.mxu0 %v3807
  %5687 = vmatprep.subr.bf16.mxu0 %v3816
  %5688 = vmatpush1.bf16.msra.mxu0 %v3815
  %5689 = vmatprep.subr.bf16.mxu0 %v3824
  %5690 = vmatpush1.bf16.msra.mxu0 %v3823
  %5691 = vmatprep.subr.bf16.mxu0 %v3832
  %5692 = vmatpush1.bf16.msra.mxu0 %v3831
  %5693 = vmatprep.subr.bf16.mxu0 %v3840
  %5694 = vmatpush1.bf16.msra.mxu0 %v3839
  %5695 = vmatprep.subr.bf16.mxu0 %v3848
  %5696 = vmatpush1.bf16.msra.mxu0 %v3847
  %5697 = vmatprep.subr.bf16.mxu0 %v3856
  %5698 = vmatpush1.bf16.msra.mxu0 %v3855
  %5699 = vmatprep.subr.bf16.mxu0 %v3864
  %5700 = vmatpush1.bf16.msra.mxu0 %v3863
  %5701 = vmatprep.subr.bf16.mxu0 %v3872
  %5702 = vmatpush1.bf16.msra.mxu0 %v3871
  %5703 = vmatprep.mubr.bf16.mxu0 %v914
  %5704 = vmatmul.mubr.bf16.gmra.mrb[0].mxu0 %v907
  %v5705 = vpop.f32.mrb[0].mxu0
  %v5706 = vadd.f32 %v5665, %v5705
  %v5707 = vpop.f32.mrb[0].mxu0
  %v5708 = vadd.f32 %v5667, %v5707
  %v5709 = vpop.f32.mrb[0].mxu0
  %v5710 = vpop.f32.mrb[0].mxu0
  %5711 = vdwg.mxu0
  %5712 = vmatprep.subr.bf16.mxu0 %v3880
  %5713 = vmatpush1.bf16.msra.mxu0 %v3879
  %5714 = vmatprep.subr.bf16.mxu0 %v3888
  %5715 = vmatpush1.bf16.msra.mxu0 %v3887
  %5716 = vmatprep.subr.bf16.mxu0 %v3896
  %5717 = vmatpush1.bf16.msra.mxu0 %v3895
  %5718 = vmatprep.subr.bf16.mxu0 %v3904
  %5719 = vmatpush1.bf16.msra.mxu0 %v3903
  %5720 = vmatprep.subr.bf16.mxu0 %v3912
  %5721 = vmatpush1.bf16.msra.mxu0 %v3911
  %5722 = vmatprep.subr.bf16.mxu0 %v3920
  %5723 = vmatpush1.bf16.msra.mxu0 %v3919
  %5724 = vmatprep.subr.bf16.mxu0 %v3928
  %5725 = vmatpush1.bf16.msra.mxu0 %v3927
  %5726 = vmatprep.subr.bf16.mxu0 %v3936
  %5727 = vmatpush1.bf16.msra.mxu0 %v3935
  %5728 = vmatprep.subr.bf16.mxu0 %v3944
  %5729 = vmatpush1.bf16.msra.mxu0 %v3943
  %5730 = vmatprep.subr.bf16.mxu0 %v3952
  %5731 = vmatpush1.bf16.msra.mxu0 %v3951
  %5732 = vmatprep.subr.bf16.mxu0 %v3960
  %5733 = vmatpush1.bf16.msra.mxu0 %v3959
  %5734 = vmatprep.subr.bf16.mxu0 %v3968
  %5735 = vmatpush1.bf16.msra.mxu0 %v3967
  %5736 = vmatprep.subr.bf16.mxu0 %v3976
  %5737 = vmatpush1.bf16.msra.mxu0 %v3975
  %5738 = vmatprep.subr.bf16.mxu0 %v3984
  %5739 = vmatpush1.bf16.msra.mxu0 %v3983
  %5740 = vmatprep.subr.bf16.mxu0 %v3992
  %5741 = vmatpush1.bf16.msra.mxu0 %v3991
  %5742 = vmatprep.subr.bf16.mxu0 %v4000
  %5743 = vmatpush1.bf16.msra.mxu0 %v3999
  %5744 = vmatprep.mubr.bf16.mxu0 %v916
  %5745 = vmatmul.mubr.bf16.gmra.mrb[0].mxu0 %v915
  %v5746 = vpop.f32.mrb[0].mxu0
  %v5747 = vadd.f32 %v5706, %v5746
  %v5748 = vpop.f32.mrb[0].mxu0
  %v5749 = vadd.f32 %v5708, %v5748
  %v5750 = vpop.f32.mrb[0].mxu0
  %v5751 = vpop.f32.mrb[0].mxu0
  %5752 = vdwg.mxu0
  %v5753 = vmax.f32 %v5009, 0.0
  %v5754 = vmax.f32 %v5011, 0.0
  %v5755 = vmax.f32 %v5255, 0.0
  %v5756 = vmax.f32 %v5257, 0.0
  %v5757 = vmax.f32 %v5501, 0.0
  %v5758 = vmax.f32 %v5503, 0.0
  %v5759 = vmax.f32 %v5747, 0.0
  %v5760 = vmax.f32 %v5749, 0.0
  %v5761 = vpack.c.bf16 %v5753, %v5753
  %v5762 = vpack.c.bf16 %v5754, %v5754
  %v5763 = vpack.c.bf16 %v5755, %v5755
  %v5764 = vpack.c.bf16 %v5756, %v5756
  %v5765 = vpack.c.bf16 %v5757, %v5757
  %v5766 = vpack.c.bf16 %v5758, %v5758
  %v5767 = vpack.c.bf16 %v5759, %v5759
  %v5768 = vpack.c.bf16 %v5760, %v5760
  %v5769 = vld [vmem:[%s3] sm:$0xff]
  %v5770 = vld [vmem:[%s3 + $0x8] sm:$0xff]
  %v5771 = vld [vmem:[%s3 + $0x10] sm:$0xff]
  %v5772 = vld [vmem:[%s3 + $0x18] sm:$0xff]
  %v5773 = vld [vmem:[%s3 + $0x20] sm:$0xff]
  %v5774 = vld [vmem:[%s3 + $0x28] sm:$0xff]
  %v5775 = vld [vmem:[%s3 + $0x30] sm:$0xff]
  %v5776 = vld [vmem:[%s3 + $0x38] sm:$0xff]
  %v5777 = vld [vmem:[%s3 + $0x40] sm:$0xff]
  %v5778 = vld [vmem:[%s3 + $0x48] sm:$0xff]
  %v5779 = vld [vmem:[%s3 + $0x50] sm:$0xff]
  %v5780 = vld [vmem:[%s3 + $0x58] sm:$0xff]
  %v5781 = vld [vmem:[%s3 + $0x60] sm:$0xff]
  %v5782 = vld [vmem:[%s3 + $0x68] sm:$0xff]
  %v5783 = vld [vmem:[%s3 + $0x70] sm:$0xff]
  %v5784 = vld [vmem:[%s3 + $0x78] sm:$0xff]
  %v5785 = vld [vmem:[%s3 + $0x80] sm:$0xff]
  %v5786 = vld [vmem:[%s3 + $0x88] sm:$0xff]
  %v5787 = vld [vmem:[%s3 + $0x90] sm:$0xff]
  %v5788 = vld [vmem:[%s3 + $0x98] sm:$0xff]
  %v5789 = vld [vmem:[%s3 + $0xa0] sm:$0xff]
  %v5790 = vld [vmem:[%s3 + $0xa8] sm:$0xff]
  %v5791 = vld [vmem:[%s3 + $0xb0] sm:$0xff]
  %v5792 = vld [vmem:[%s3 + $0xb8] sm:$0xff]
  %v5793 = vld [vmem:[%s3 + $0xc0] sm:$0xff]
  %v5794 = vld [vmem:[%s3 + $0xc8] sm:$0xff]
  %v5795 = vld [vmem:[%s3 + $0xd0] sm:$0xff]
  %v5796 = vld [vmem:[%s3 + $0xd8] sm:$0xff]
  %v5797 = vld [vmem:[%s3 + $0xe0] sm:$0xff]
  %v5798 = vld [vmem:[%s3 + $0xe8] sm:$0xff]
  %v5799 = vld [vmem:[%s3 + $0xf0] sm:$0xff]
  %v5800 = vld [vmem:[%s3 + $0xf8] sm:$0xff]
  %v5801 = vld [vmem:[%s3 + $0x100] sm:$0xff]
  %v5802 = vld [vmem:[%s3 + $0x108] sm:$0xff]
  %v5803 = vld [vmem:[%s3 + $0x110] sm:$0xff]
  %v5804 = vld [vmem:[%s3 + $0x118] sm:$0xff]
  %v5805 = vld [vmem:[%s3 + $0x120] sm:$0xff]
  %v5806 = vld [vmem:[%s3 + $0x128] sm:$0xff]
  %v5807 = vld [vmem:[%s3 + $0x130] sm:$0xff]
  %v5808 = vld [vmem:[%s3 + $0x138] sm:$0xff]
  %v5809 = vld [vmem:[%s3 + $0x140] sm:$0xff]
  %v5810 = vld [vmem:[%s3 + $0x148] sm:$0xff]
  %v5811 = vld [vmem:[%s3 + $0x150] sm:$0xff]
  %v5812 = vld [vmem:[%s3 + $0x158] sm:$0xff]
  %v5813 = vld [vmem:[%s3 + $0x160] sm:$0xff]
  %v5814 = vld [vmem:[%s3 + $0x168] sm:$0xff]
  %v5815 = vld [vmem:[%s3 + $0x170] sm:$0xff]
  %v5816 = vld [vmem:[%s3 + $0x178] sm:$0xff]
  %v5817 = vld [vmem:[%s3 + $0x180] sm:$0xff]
  %v5818 = vld [vmem:[%s3 + $0x188] sm:$0xff]
  %v5819 = vld [vmem:[%s3 + $0x190] sm:$0xff]
  %v5820 = vld [vmem:[%s3 + $0x198] sm:$0xff]
  %v5821 = vld [vmem:[%s3 + $0x1a0] sm:$0xff]
  %v5822 = vld [vmem:[%s3 + $0x1a8] sm:$0xff]
  %v5823 = vld [vmem:[%s3 + $0x1b0] sm:$0xff]
  %v5824 = vld [vmem:[%s3 + $0x1b8] sm:$0xff]
  %v5825 = vld [vmem:[%s3 + $0x1c0] sm:$0xff]
  %v5826 = vld [vmem:[%s3 + $0x1c8] sm:$0xff]
  %v5827 = vld [vmem:[%s3 + $0x1d0] sm:$0xff]
  %v5828 = vld [vmem:[%s3 + $0x1d8] sm:$0xff]
  %v5829 = vld [vmem:[%s3 + $0x1e0] sm:$0xff]
  %v5830 = vld [vmem:[%s3 + $0x1e8] sm:$0xff]
  %v5831 = vld [vmem:[%s3 + $0x1f0] sm:$0xff]
  %v5832 = vld [vmem:[%s3 + $0x1f8] sm:$0xff]
  %v5833 = vld [vmem:[%s3 + $0x200] sm:$0xff]
  %v5834 = vld [vmem:[%s3 + $0x208] sm:$0xff]
  %v5835 = vld [vmem:[%s3 + $0x210] sm:$0xff]
  %v5836 = vld [vmem:[%s3 + $0x218] sm:$0xff]
  %v5837 = vld [vmem:[%s3 + $0x220] sm:$0xff]
  %v5838 = vld [vmem:[%s3 + $0x228] sm:$0xff]
  %v5839 = vld [vmem:[%s3 + $0x230] sm:$0xff]
  %v5840 = vld [vmem:[%s3 + $0x238] sm:$0xff]
  %v5841 = vld [vmem:[%s3 + $0x240] sm:$0xff]
  %v5842 = vld [vmem:[%s3 + $0x248] sm:$0xff]
  %v5843 = vld [vmem:[%s3 + $0x250] sm:$0xff]
  %v5844 = vld [vmem:[%s3 + $0x258] sm:$0xff]
  %v5845 = vld [vmem:[%s3 + $0x260] sm:$0xff]
  %v5846 = vld [vmem:[%s3 + $0x268] sm:$0xff]
  %v5847 = vld [vmem:[%s3 + $0x270] sm:$0xff]
  %v5848 = vld [vmem:[%s3 + $0x278] sm:$0xff]
  %v5849 = vld [vmem:[%s3 + $0x280] sm:$0xff]
  %v5850 = vld [vmem:[%s3 + $0x288] sm:$0xff]
  %v5851 = vld [vmem:[%s3 + $0x290] sm:$0xff]
  %v5852 = vld [vmem:[%s3 + $0x298] sm:$0xff]
  %v5853 = vld [vmem:[%s3 + $0x2a0] sm:$0xff]
  %v5854 = vld [vmem:[%s3 + $0x2a8] sm:$0xff]
  %v5855 = vld [vmem:[%s3 + $0x2b0] sm:$0xff]
  %v5856 = vld [vmem:[%s3 + $0x2b8] sm:$0xff]
  %v5857 = vld [vmem:[%s3 + $0x2c0] sm:$0xff]
  %v5858 = vld [vmem:[%s3 + $0x2c8] sm:$0xff]
  %v5859 = vld [vmem:[%s3 + $0x2d0] sm:$0xff]
  %v5860 = vld [vmem:[%s3 + $0x2d8] sm:$0xff]
  %v5861 = vld [vmem:[%s3 + $0x2e0] sm:$0xff]
  %v5862 = vld [vmem:[%s3 + $0x2e8] sm:$0xff]
  %v5863 = vld [vmem:[%s3 + $0x2f0] sm:$0xff]
  %v5864 = vld [vmem:[%s3 + $0x2f8] sm:$0xff]
  %v5865 = vld [vmem:[%s3 + $0x300] sm:$0xff]
  %v5866 = vld [vmem:[%s3 + $0x308] sm:$0xff]
  %v5867 = vld [vmem:[%s3 + $0x310] sm:$0xff]
  %v5868 = vld [vmem:[%s3 + $0x318] sm:$0xff]
  %v5869 = vld [vmem:[%s3 + $0x320] sm:$0xff]
  %v5870 = vld [vmem:[%s3 + $0x328] sm:$0xff]
  %v5871 = vld [vmem:[%s3 + $0x330] sm:$0xff]
  %v5872 = vld [vmem:[%s3 + $0x338] sm:$0xff]
  %v5873 = vld [vmem:[%s3 + $0x340] sm:$0xff]
  %v5874 = vld [vmem:[%s3 + $0x348] sm:$0xff]
  %v5875 = vld [vmem:[%s3 + $0x350] sm:$0xff]
  %v5876 = vld [vmem:[%s3 + $0x358] sm:$0xff]
  %v5877 = vld [vmem:[%s3 + $0x360] sm:$0xff]
  %v5878 = vld [vmem:[%s3 + $0x368] sm:$0xff]
  %v5879 = vld [vmem:[%s3 + $0x370] sm:$0xff]
  %v5880 = vld [vmem:[%s3 + $0x378] sm:$0xff]
  %v5881 = vld [vmem:[%s3 + $0x380] sm:$0xff]
  %v5882 = vld [vmem:[%s3 + $0x388] sm:$0xff]
  %v5883 = vld [vmem:[%s3 + $0x390] sm:$0xff]
  %v5884 = vld [vmem:[%s3 + $0x398] sm:$0xff]
  %v5885 = vld [vmem:[%s3 + $0x3a0] sm:$0xff]
  %v5886 = vld [vmem:[%s3 + $0x3a8] sm:$0xff]
  %v5887 = vld [vmem:[%s3 + $0x3b0] sm:$0xff]
  %v5888 = vld [vmem:[%s3 + $0x3b8] sm:$0xff]
  %v5889 = vld [vmem:[%s3 + $0x3c0] sm:$0xff]
  %v5890 = vld [vmem:[%s3 + $0x3c8] sm:$0xff]
  %v5891 = vld [vmem:[%s3 + $0x3d0] sm:$0xff]
  %v5892 = vld [vmem:[%s3 + $0x3d8] sm:$0xff]
  %v5893 = vld [vmem:[%s3 + $0x3e0] sm:$0xff]
  %v5894 = vld [vmem:[%s3 + $0x3e8] sm:$0xff]
  %v5895 = vld [vmem:[%s3 + $0x3f0] sm:$0xff]
  %v5896 = vld [vmem:[%s3 + $0x3f8] sm:$0xff]
  %v5897 = vld [vmem:[%s3 + $0x400] sm:$0xff]
  %v5898 = vld [vmem:[%s3 + $0x408] sm:$0xff]
  %v5899 = vld [vmem:[%s3 + $0x410] sm:$0xff]
  %v5900 = vld [vmem:[%s3 + $0x418] sm:$0xff]
  %v5901 = vld [vmem:[%s3 + $0x420] sm:$0xff]
  %v5902 = vld [vmem:[%s3 + $0x428] sm:$0xff]
  %v5903 = vld [vmem:[%s3 + $0x430] sm:$0xff]
  %v5904 = vld [vmem:[%s3 + $0x438] sm:$0xff]
  %v5905 = vld [vmem:[%s3 + $0x440] sm:$0xff]
  %v5906 = vld [vmem:[%s3 + $0x448] sm:$0xff]
  %v5907 = vld [vmem:[%s3 + $0x450] sm:$0xff]
  %v5908 = vld [vmem:[%s3 + $0x458] sm:$0xff]
  %v5909 = vld [vmem:[%s3 + $0x460] sm:$0xff]
  %v5910 = vld [vmem:[%s3 + $0x468] sm:$0xff]
  %v5911 = vld [vmem:[%s3 + $0x470] sm:$0xff]
  %v5912 = vld [vmem:[%s3 + $0x478] sm:$0xff]
  %v5913 = vld [vmem:[%s3 + $0x480] sm:$0xff]
  %v5914 = vld [vmem:[%s3 + $0x488] sm:$0xff]
  %v5915 = vld [vmem:[%s3 + $0x490] sm:$0xff]
  %v5916 = vld [vmem:[%s3 + $0x498] sm:$0xff]
  %v5917 = vld [vmem:[%s3 + $0x4a0] sm:$0xff]
  %v5918 = vld [vmem:[%s3 + $0x4a8] sm:$0xff]
  %v5919 = vld [vmem:[%s3 + $0x4b0] sm:$0xff]
  %v5920 = vld [vmem:[%s3 + $0x4b8] sm:$0xff]
  %v5921 = vld [vmem:[%s3 + $0x4c0] sm:$0xff]
  %v5922 = vld [vmem:[%s3 + $0x4c8] sm:$0xff]
  %v5923 = vld [vmem:[%s3 + $0x4d0] sm:$0xff]
  %v5924 = vld [vmem:[%s3 + $0x4d8] sm:$0xff]
  %v5925 = vld [vmem:[%s3 + $0x4e0] sm:$0xff]
  %v5926 = vld [vmem:[%s3 + $0x4e8] sm:$0xff]
  %v5927 = vld [vmem:[%s3 + $0x4f0] sm:$0xff]
  %v5928 = vld [vmem:[%s3 + $0x4f8] sm:$0xff]
  %v5929 = vld [vmem:[%s3 + $0x500] sm:$0xff]
  %v5930 = vld [vmem:[%s3 + $0x508] sm:$0xff]
  %v5931 = vld [vmem:[%s3 + $0x510] sm:$0xff]
  %v5932 = vld [vmem:[%s3 + $0x518] sm:$0xff]
  %v5933 = vld [vmem:[%s3 + $0x520] sm:$0xff]
  %v5934 = vld [vmem:[%s3 + $0x528] sm:$0xff]
  %v5935 = vld [vmem:[%s3 + $0x530] sm:$0xff]
  %v5936 = vld [vmem:[%s3 + $0x538] sm:$0xff]
  %v5937 = vld [vmem:[%s3 + $0x540] sm:$0xff]
  %v5938 = vld [vmem:[%s3 + $0x548] sm:$0xff]
  %v5939 = vld [vmem:[%s3 + $0x550] sm:$0xff]
  %v5940 = vld [vmem:[%s3 + $0x558] sm:$0xff]
  %v5941 = vld [vmem:[%s3 + $0x560] sm:$0xff]
  %v5942 = vld [vmem:[%s3 + $0x568] sm:$0xff]
  %v5943 = vld [vmem:[%s3 + $0x570] sm:$0xff]
  %v5944 = vld [vmem:[%s3 + $0x578] sm:$0xff]
  %v5945 = vld [vmem:[%s3 + $0x580] sm:$0xff]
  %v5946 = vld [vmem:[%s3 + $0x588] sm:$0xff]
  %v5947 = vld [vmem:[%s3 + $0x590] sm:$0xff]
  %v5948 = vld [vmem:[%s3 + $0x598] sm:$0xff]
  %v5949 = vld [vmem:[%s3 + $0x5a0] sm:$0xff]
  %v5950 = vld [vmem:[%s3 + $0x5a8] sm:$0xff]
  %v5951 = vld [vmem:[%s3 + $0x5b0] sm:$0xff]
  %v5952 = vld [vmem:[%s3 + $0x5b8] sm:$0xff]
  %v5953 = vld [vmem:[%s3 + $0x5c0] sm:$0xff]
  %v5954 = vld [vmem:[%s3 + $0x5c8] sm:$0xff]
  %v5955 = vld [vmem:[%s3 + $0x5d0] sm:$0xff]
  %v5956 = vld [vmem:[%s3 + $0x5d8] sm:$0xff]
  %v5957 = vld [vmem:[%s3 + $0x5e0] sm:$0xff]
  %v5958 = vld [vmem:[%s3 + $0x5e8] sm:$0xff]
  %v5959 = vld [vmem:[%s3 + $0x5f0] sm:$0xff]
  %v5960 = vld [vmem:[%s3 + $0x5f8] sm:$0xff]
  %v5961 = vld [vmem:[%s3 + $0x600] sm:$0xff]
  %v5962 = vld [vmem:[%s3 + $0x608] sm:$0xff]
  %v5963 = vld [vmem:[%s3 + $0x610] sm:$0xff]
  %v5964 = vld [vmem:[%s3 + $0x618] sm:$0xff]
  %v5965 = vld [vmem:[%s3 + $0x620] sm:$0xff]
  %v5966 = vld [vmem:[%s3 + $0x628] sm:$0xff]
  %v5967 = vld [vmem:[%s3 + $0x630] sm:$0xff]
  %v5968 = vld [vmem:[%s3 + $0x638] sm:$0xff]
  %v5969 = vld [vmem:[%s3 + $0x640] sm:$0xff]
  %v5970 = vld [vmem:[%s3 + $0x648] sm:$0xff]
  %v5971 = vld [vmem:[%s3 + $0x650] sm:$0xff]
  %v5972 = vld [vmem:[%s3 + $0x658] sm:$0xff]
  %v5973 = vld [vmem:[%s3 + $0x660] sm:$0xff]
  %v5974 = vld [vmem:[%s3 + $0x668] sm:$0xff]
  %v5975 = vld [vmem:[%s3 + $0x670] sm:$0xff]
  %v5976 = vld [vmem:[%s3 + $0x678] sm:$0xff]
  %v5977 = vld [vmem:[%s3 + $0x680] sm:$0xff]
  %v5978 = vld [vmem:[%s3 + $0x688] sm:$0xff]
  %v5979 = vld [vmem:[%s3 + $0x690] sm:$0xff]
  %v5980 = vld [vmem:[%s3 + $0x698] sm:$0xff]
  %v5981 = vld [vmem:[%s3 + $0x6a0] sm:$0xff]
  %v5982 = vld [vmem:[%s3 + $0x6a8] sm:$0xff]
  %v5983 = vld [vmem:[%s3 + $0x6b0] sm:$0xff]
  %v5984 = vld [vmem:[%s3 + $0x6b8] sm:$0xff]
  %v5985 = vld [vmem:[%s3 + $0x6c0] sm:$0xff]
  %v5986 = vld [vmem:[%s3 + $0x6c8] sm:$0xff]
  %v5987 = vld [vmem:[%s3 + $0x6d0] sm:$0xff]
  %v5988 = vld [vmem:[%s3 + $0x6d8] sm:$0xff]
  %v5989 = vld [vmem:[%s3 + $0x6e0] sm:$0xff]
  %v5990 = vld [vmem:[%s3 + $0x6e8] sm:$0xff]
  %v5991 = vld [vmem:[%s3 + $0x6f0] sm:$0xff]
  %v5992 = vld [vmem:[%s3 + $0x6f8] sm:$0xff]
  %v5993 = vld [vmem:[%s3 + $0x700] sm:$0xff]
  %v5994 = vld [vmem:[%s3 + $0x708] sm:$0xff]
  %v5995 = vld [vmem:[%s3 + $0x710] sm:$0xff]
  %v5996 = vld [vmem:[%s3 + $0x718] sm:$0xff]
  %v5997 = vld [vmem:[%s3 + $0x720] sm:$0xff]
  %v5998 = vld [vmem:[%s3 + $0x728] sm:$0xff]
  %v5999 = vld [vmem:[%s3 + $0x730] sm:$0xff]
  %v6000 = vld [vmem:[%s3 + $0x738] sm:$0xff]
  %v6001 = vld [vmem:[%s3 + $0x740] sm:$0xff]
  %v6002 = vld [vmem:[%s3 + $0x748] sm:$0xff]
  %v6003 = vld [vmem:[%s3 + $0x750] sm:$0xff]
  %v6004 = vld [vmem:[%s3 + $0x758] sm:$0xff]
  %v6005 = vld [vmem:[%s3 + $0x760] sm:$0xff]
  %v6006 = vld [vmem:[%s3 + $0x768] sm:$0xff]
  %v6007 = vld [vmem:[%s3 + $0x770] sm:$0xff]
  %v6008 = vld [vmem:[%s3 + $0x778] sm:$0xff]
  %v6009 = vld [vmem:[%s3 + $0x780] sm:$0xff]
  %v6010 = vld [vmem:[%s3 + $0x788] sm:$0xff]
  %v6011 = vld [vmem:[%s3 + $0x790] sm:$0xff]
  %v6012 = vld [vmem:[%s3 + $0x798] sm:$0xff]
  %v6013 = vld [vmem:[%s3 + $0x7a0] sm:$0xff]
  %v6014 = vld [vmem:[%s3 + $0x7a8] sm:$0xff]
  %v6015 = vld [vmem:[%s3 + $0x7b0] sm:$0xff]
  %v6016 = vld [vmem:[%s3 + $0x7b8] sm:$0xff]
  %v6017 = vld [vmem:[%s3 + $0x7c0] sm:$0xff]
  %v6018 = vld [vmem:[%s3 + $0x7c8] sm:$0xff]
  %v6019 = vld [vmem:[%s3 + $0x7d0] sm:$0xff]
  %v6020 = vld [vmem:[%s3 + $0x7d8] sm:$0xff]
  %v6021 = vld [vmem:[%s3 + $0x7e0] sm:$0xff]
  %v6022 = vld [vmem:[%s3 + $0x7e8] sm:$0xff]
  %v6023 = vld [vmem:[%s3 + $0x7f0] sm:$0xff]
  %v6024 = vld [vmem:[%s3 + $0x7f8] sm:$0xff]
  %v6025 = vld [vmem:[%s4] sm:$0xf]
  %v6027 = vlaneseq
  %v6028 = vshrl.u32 %v6027, 7
  %v6029 = vsub.s32 0, %v6028
  %v6030 = vrot.slane %v6025, %v6029
  %v6031 = vlaneseq
  %v6032 = vshrl.u32 %v6031, 7
  %v6033 = vsub.s32 1, %v6032
  %v6034 = vrot.slane %v6025, %v6033
  %v6035 = vlaneseq
  %v6036 = vshrl.u32 %v6035, 7
  %v6037 = vsub.s32 2, %v6036
  %v6038 = vrot.slane %v6025, %v6037
  %v6039 = vlaneseq
  %v6040 = vshrl.u32 %v6039, 7
  %v6041 = vsub.s32 3, %v6040
  %v6042 = vrot.slane %v6025, %v6041
  %v6303 = vunpack.c.l.b16 %v5769
  %v6304 = vunpack.c.h.b16 %v5769
  %v6305 = vunpack.c.l.b16 %v5770
  %v6306 = vunpack.c.h.b16 %v5770
  %v6307 = vunpack.c.l.b16 %v5771
  %v6308 = vunpack.c.h.b16 %v5771
  %v6309 = vunpack.c.l.b16 %v5772
  %v6310 = vunpack.c.h.b16 %v5772
  %v6311 = vunpack.c.l.b16 %v5773
  %v6312 = vunpack.c.h.b16 %v5773
  %v6313 = vunpack.c.l.b16 %v5774
  %v6314 = vunpack.c.h.b16 %v5774
  %v6315 = vunpack.c.l.b16 %v5775
  %v6316 = vunpack.c.h.b16 %v5775
  %v6317 = vunpack.c.l.b16 %v5776
  %v6318 = vunpack.c.h.b16 %v5776
  %v6319 = vunpack.c.l.b16 %v5777
  %v6320 = vunpack.c.h.b16 %v5777
  %v6321 = vunpack.c.l.b16 %v5778
  %v6322 = vunpack.c.h.b16 %v5778
  %v6323 = vunpack.c.l.b16 %v5779
  %v6324 = vunpack.c.h.b16 %v5779
  %v6325 = vunpack.c.l.b16 %v5780
  %v6326 = vunpack.c.h.b16 %v5780
  %v6327 = vunpack.c.l.b16 %v5781
  %v6328 = vunpack.c.h.b16 %v5781
  %v6329 = vunpack.c.l.b16 %v5782
  %v6330 = vunpack.c.h.b16 %v5782
  %v6331 = vunpack.c.l.b16 %v5783
  %v6332 = vunpack.c.h.b16 %v5783
  %v6333 = vunpack.c.l.b16 %v5784
  %v6334 = vunpack.c.h.b16 %v5784
  %v6335 = vunpack.c.l.b16 %v5785
  %v6336 = vunpack.c.h.b16 %v5785
  %v6337 = vunpack.c.l.b16 %v5786
  %v6338 = vunpack.c.h.b16 %v5786
  %v6339 = vunpack.c.l.b16 %v5787
  %v6340 = vunpack.c.h.b16 %v5787
  %v6341 = vunpack.c.l.b16 %v5788
  %v6342 = vunpack.c.h.b16 %v5788
  %v6343 = vunpack.c.l.b16 %v5789
  %v6344 = vunpack.c.h.b16 %v5789
  %v6345 = vunpack.c.l.b16 %v5790
  %v6346 = vunpack.c.h.b16 %v5790
  %v6347 = vunpack.c.l.b16 %v5791
  %v6348 = vunpack.c.h.b16 %v5791
  %v6349 = vunpack.c.l.b16 %v5792
  %v6350 = vunpack.c.h.b16 %v5792
  %v6351 = vunpack.c.l.b16 %v5793
  %v6352 = vunpack.c.h.b16 %v5793
  %v6353 = vunpack.c.l.b16 %v5794
  %v6354 = vunpack.c.h.b16 %v5794
  %v6355 = vunpack.c.l.b16 %v5795
  %v6356 = vunpack.c.h.b16 %v5795
  %v6357 = vunpack.c.l.b16 %v5796
  %v6358 = vunpack.c.h.b16 %v5796
  %v6359 = vunpack.c.l.b16 %v5797
  %v6360 = vunpack.c.h.b16 %v5797
  %v6361 = vunpack.c.l.b16 %v5798
  %v6362 = vunpack.c.h.b16 %v5798
  %v6363 = vunpack.c.l.b16 %v5799
  %v6364 = vunpack.c.h.b16 %v5799
  %v6365 = vunpack.c.l.b16 %v5800
  %v6366 = vunpack.c.h.b16 %v5800
  %v6367 = vunpack.c.l.b16 %v5801
  %v6368 = vunpack.c.h.b16 %v5801
  %v6369 = vunpack.c.l.b16 %v5802
  %v6370 = vunpack.c.h.b16 %v5802
  %v6371 = vunpack.c.l.b16 %v5803
  %v6372 = vunpack.c.h.b16 %v5803
  %v6373 = vunpack.c.l.b16 %v5804
  %v6374 = vunpack.c.h.b16 %v5804
  %v6375 = vunpack.c.l.b16 %v5805
  %v6376 = vunpack.c.h.b16 %v5805
  %v6377 = vunpack.c.l.b16 %v5806
  %v6378 = vunpack.c.h.b16 %v5806
  %v6379 = vunpack.c.l.b16 %v5807
  %v6380 = vunpack.c.h.b16 %v5807
  %v6381 = vunpack.c.l.b16 %v5808
  %v6382 = vunpack.c.h.b16 %v5808
  %v6383 = vunpack.c.l.b16 %v5809
  %v6384 = vunpack.c.h.b16 %v5809
  %v6385 = vunpack.c.l.b16 %v5810
  %v6386 = vunpack.c.h.b16 %v5810
  %v6387 = vunpack.c.l.b16 %v5811
  %v6388 = vunpack.c.h.b16 %v5811
  %v6389 = vunpack.c.l.b16 %v5812
  %v6390 = vunpack.c.h.b16 %v5812
  %v6391 = vunpack.c.l.b16 %v5813
  %v6392 = vunpack.c.h.b16 %v5813
  %v6393 = vunpack.c.l.b16 %v5814
  %v6394 = vunpack.c.h.b16 %v5814
  %v6395 = vunpack.c.l.b16 %v5815
  %v6396 = vunpack.c.h.b16 %v5815
  %v6397 = vunpack.c.l.b16 %v5816
  %v6398 = vunpack.c.h.b16 %v5816
  %v6399 = vunpack.c.l.b16 %v5817
  %v6400 = vunpack.c.h.b16 %v5817
  %v6401 = vunpack.c.l.b16 %v5818
  %v6402 = vunpack.c.h.b16 %v5818
  %v6403 = vunpack.c.l.b16 %v5819
  %v6404 = vunpack.c.h.b16 %v5819
  %v6405 = vunpack.c.l.b16 %v5820
  %v6406 = vunpack.c.h.b16 %v5820
  %v6407 = vunpack.c.l.b16 %v5821
  %v6408 = vunpack.c.h.b16 %v5821
  %v6409 = vunpack.c.l.b16 %v5822
  %v6410 = vunpack.c.h.b16 %v5822
  %v6411 = vunpack.c.l.b16 %v5823
  %v6412 = vunpack.c.h.b16 %v5823
  %v6413 = vunpack.c.l.b16 %v5824
  %v6414 = vunpack.c.h.b16 %v5824
  %v6415 = vunpack.c.l.b16 %v5825
  %v6416 = vunpack.c.h.b16 %v5825
  %v6417 = vunpack.c.l.b16 %v5826
  %v6418 = vunpack.c.h.b16 %v5826
  %v6419 = vunpack.c.l.b16 %v5827
  %v6420 = vunpack.c.h.b16 %v5827
  %v6421 = vunpack.c.l.b16 %v5828
  %v6422 = vunpack.c.h.b16 %v5828
  %v6423 = vunpack.c.l.b16 %v5829
  %v6424 = vunpack.c.h.b16 %v5829
  %v6425 = vunpack.c.l.b16 %v5830
  %v6426 = vunpack.c.h.b16 %v5830
  %v6427 = vunpack.c.l.b16 %v5831
  %v6428 = vunpack.c.h.b16 %v5831
  %v6429 = vunpack.c.l.b16 %v5832
  %v6430 = vunpack.c.h.b16 %v5832
  %v6431 = vunpack.c.l.b16 %v5833
  %v6432 = vunpack.c.h.b16 %v5833
  %v6433 = vunpack.c.l.b16 %v5834
  %v6434 = vunpack.c.h.b16 %v5834
  %v6435 = vunpack.c.l.b16 %v5835
  %v6436 = vunpack.c.h.b16 %v5835
  %v6437 = vunpack.c.l.b16 %v5836
  %v6438 = vunpack.c.h.b16 %v5836
  %v6439 = vunpack.c.l.b16 %v5837
  %v6440 = vunpack.c.h.b16 %v5837
  %v6441 = vunpack.c.l.b16 %v5838
  %v6442 = vunpack.c.h.b16 %v5838
  %v6443 = vunpack.c.l.b16 %v5839
  %v6444 = vunpack.c.h.b16 %v5839
  %v6445 = vunpack.c.l.b16 %v5840
  %v6446 = vunpack.c.h.b16 %v5840
  %v6447 = vunpack.c.l.b16 %v5841
  %v6448 = vunpack.c.h.b16 %v5841
  %v6449 = vunpack.c.l.b16 %v5842
  %v6450 = vunpack.c.h.b16 %v5842
  %v6451 = vunpack.c.l.b16 %v5843
  %v6452 = vunpack.c.h.b16 %v5843
  %v6453 = vunpack.c.l.b16 %v5844
  %v6454 = vunpack.c.h.b16 %v5844
  %v6455 = vunpack.c.l.b16 %v5845
  %v6456 = vunpack.c.h.b16 %v5845
  %v6457 = vunpack.c.l.b16 %v5846
  %v6458 = vunpack.c.h.b16 %v5846
  %v6459 = vunpack.c.l.b16 %v5847
  %v6460 = vunpack.c.h.b16 %v5847
  %v6461 = vunpack.c.l.b16 %v5848
  %v6462 = vunpack.c.h.b16 %v5848
  %v6463 = vunpack.c.l.b16 %v5849
  %v6464 = vunpack.c.h.b16 %v5849
  %v6465 = vunpack.c.l.b16 %v5850
  %v6466 = vunpack.c.h.b16 %v5850
  %v6467 = vunpack.c.l.b16 %v5851
  %v6468 = vunpack.c.h.b16 %v5851
  %v6469 = vunpack.c.l.b16 %v5852
  %v6470 = vunpack.c.h.b16 %v5852
  %v6471 = vunpack.c.l.b16 %v5853
  %v6472 = vunpack.c.h.b16 %v5853
  %v6473 = vunpack.c.l.b16 %v5854
  %v6474 = vunpack.c.h.b16 %v5854
  %v6475 = vunpack.c.l.b16 %v5855
  %v6476 = vunpack.c.h.b16 %v5855
  %v6477 = vunpack.c.l.b16 %v5856
  %v6478 = vunpack.c.h.b16 %v5856
  %v6479 = vunpack.c.l.b16 %v5857
  %v6480 = vunpack.c.h.b16 %v5857
  %v6481 = vunpack.c.l.b16 %v5858
  %v6482 = vunpack.c.h.b16 %v5858
  %v6483 = vunpack.c.l.b16 %v5859
  %v6484 = vunpack.c.h.b16 %v5859
  %v6485 = vunpack.c.l.b16 %v5860
  %v6486 = vunpack.c.h.b16 %v5860
  %v6487 = vunpack.c.l.b16 %v5861
  %v6488 = vunpack.c.h.b16 %v5861
  %v6489 = vunpack.c.l.b16 %v5862
  %v6490 = vunpack.c.h.b16 %v5862
  %v6491 = vunpack.c.l.b16 %v5863
  %v6492 = vunpack.c.h.b16 %v5863
  %v6493 = vunpack.c.l.b16 %v5864
  %v6494 = vunpack.c.h.b16 %v5864
  %v6495 = vunpack.c.l.b16 %v5865
  %v6496 = vunpack.c.h.b16 %v5865
  %v6497 = vunpack.c.l.b16 %v5866
  %v6498 = vunpack.c.h.b16 %v5866
  %v6499 = vunpack.c.l.b16 %v5867
  %v6500 = vunpack.c.h.b16 %v5867
  %v6501 = vunpack.c.l.b16 %v5868
  %v6502 = vunpack.c.h.b16 %v5868
  %v6503 = vunpack.c.l.b16 %v5869
  %v6504 = vunpack.c.h.b16 %v5869
  %v6505 = vunpack.c.l.b16 %v5870
  %v6506 = vunpack.c.h.b16 %v5870
  %v6507 = vunpack.c.l.b16 %v5871
  %v6508 = vunpack.c.h.b16 %v5871
  %v6509 = vunpack.c.l.b16 %v5872
  %v6510 = vunpack.c.h.b16 %v5872
  %v6511 = vunpack.c.l.b16 %v5873
  %v6512 = vunpack.c.h.b16 %v5873
  %v6513 = vunpack.c.l.b16 %v5874
  %v6514 = vunpack.c.h.b16 %v5874
  %v6515 = vunpack.c.l.b16 %v5875
  %v6516 = vunpack.c.h.b16 %v5875
  %v6517 = vunpack.c.l.b16 %v5876
  %v6518 = vunpack.c.h.b16 %v5876
  %v6519 = vunpack.c.l.b16 %v5877
  %v6520 = vunpack.c.h.b16 %v5877
  %v6521 = vunpack.c.l.b16 %v5878
  %v6522 = vunpack.c.h.b16 %v5878
  %v6523 = vunpack.c.l.b16 %v5879
  %v6524 = vunpack.c.h.b16 %v5879
  %v6525 = vunpack.c.l.b16 %v5880
  %v6526 = vunpack.c.h.b16 %v5880
  %v6527 = vunpack.c.l.b16 %v5881
  %v6528 = vunpack.c.h.b16 %v5881
  %v6529 = vunpack.c.l.b16 %v5882
  %v6530 = vunpack.c.h.b16 %v5882
  %v6531 = vunpack.c.l.b16 %v5883
  %v6532 = vunpack.c.h.b16 %v5883
  %v6533 = vunpack.c.l.b16 %v5884
  %v6534 = vunpack.c.h.b16 %v5884
  %v6535 = vunpack.c.l.b16 %v5885
  %v6536 = vunpack.c.h.b16 %v5885
  %v6537 = vunpack.c.l.b16 %v5886
  %v6538 = vunpack.c.h.b16 %v5886
  %v6539 = vunpack.c.l.b16 %v5887
  %v6540 = vunpack.c.h.b16 %v5887
  %v6541 = vunpack.c.l.b16 %v5888
  %v6542 = vunpack.c.h.b16 %v5888
  %v6543 = vunpack.c.l.b16 %v5889
  %v6544 = vunpack.c.h.b16 %v5889
  %v6545 = vunpack.c.l.b16 %v5890
  %v6546 = vunpack.c.h.b16 %v5890
  %v6547 = vunpack.c.l.b16 %v5891
  %v6548 = vunpack.c.h.b16 %v5891
  %v6549 = vunpack.c.l.b16 %v5892
  %v6550 = vunpack.c.h.b16 %v5892
  %v6551 = vunpack.c.l.b16 %v5893
  %v6552 = vunpack.c.h.b16 %v5893
  %v6553 = vunpack.c.l.b16 %v5894
  %v6554 = vunpack.c.h.b16 %v5894
  %v6555 = vunpack.c.l.b16 %v5895
  %v6556 = vunpack.c.h.b16 %v5895
  %v6557 = vunpack.c.l.b16 %v5896
  %v6558 = vunpack.c.h.b16 %v5896
  %v6559 = vunpack.c.l.b16 %v5897
  %v6560 = vunpack.c.h.b16 %v5897
  %v6561 = vunpack.c.l.b16 %v5898
  %v6562 = vunpack.c.h.b16 %v5898
  %v6563 = vunpack.c.l.b16 %v5899
  %v6564 = vunpack.c.h.b16 %v5899
  %v6565 = vunpack.c.l.b16 %v5900
  %v6566 = vunpack.c.h.b16 %v5900
  %v6567 = vunpack.c.l.b16 %v5901
  %v6568 = vunpack.c.h.b16 %v5901
  %v6569 = vunpack.c.l.b16 %v5902
  %v6570 = vunpack.c.h.b16 %v5902
  %v6571 = vunpack.c.l.b16 %v5903
  %v6572 = vunpack.c.h.b16 %v5903
  %v6573 = vunpack.c.l.b16 %v5904
  %v6574 = vunpack.c.h.b16 %v5904
  %v6575 = vunpack.c.l.b16 %v5905
  %v6576 = vunpack.c.h.b16 %v5905
  %v6577 = vunpack.c.l.b16 %v5906
  %v6578 = vunpack.c.h.b16 %v5906
  %v6579 = vunpack.c.l.b16 %v5907
  %v6580 = vunpack.c.h.b16 %v5907
  %v6581 = vunpack.c.l.b16 %v5908
  %v6582 = vunpack.c.h.b16 %v5908
  %v6583 = vunpack.c.l.b16 %v5909
  %v6584 = vunpack.c.h.b16 %v5909
  %v6585 = vunpack.c.l.b16 %v5910
  %v6586 = vunpack.c.h.b16 %v5910
  %v6587 = vunpack.c.l.b16 %v5911
  %v6588 = vunpack.c.h.b16 %v5911
  %v6589 = vunpack.c.l.b16 %v5912
  %v6590 = vunpack.c.h.b16 %v5912
  %v6591 = vunpack.c.l.b16 %v5913
  %v6592 = vunpack.c.h.b16 %v5913
  %v6593 = vunpack.c.l.b16 %v5914
  %v6594 = vunpack.c.h.b16 %v5914
  %v6595 = vunpack.c.l.b16 %v5915
  %v6596 = vunpack.c.h.b16 %v5915
  %v6597 = vunpack.c.l.b16 %v5916
  %v6598 = vunpack.c.h.b16 %v5916
  %v6599 = vunpack.c.l.b16 %v5917
  %v6600 = vunpack.c.h.b16 %v5917
  %v6601 = vunpack.c.l.b16 %v5918
  %v6602 = vunpack.c.h.b16 %v5918
  %v6603 = vunpack.c.l.b16 %v5919
  %v6604 = vunpack.c.h.b16 %v5919
  %v6605 = vunpack.c.l.b16 %v5920
  %v6606 = vunpack.c.h.b16 %v5920
  %v6607 = vunpack.c.l.b16 %v5921
  %v6608 = vunpack.c.h.b16 %v5921
  %v6609 = vunpack.c.l.b16 %v5922
  %v6610 = vunpack.c.h.b16 %v5922
  %v6611 = vunpack.c.l.b16 %v5923
  %v6612 = vunpack.c.h.b16 %v5923
  %v6613 = vunpack.c.l.b16 %v5924
  %v6614 = vunpack.c.h.b16 %v5924
  %v6615 = vunpack.c.l.b16 %v5925
  %v6616 = vunpack.c.h.b16 %v5925
  %v6617 = vunpack.c.l.b16 %v5926
  %v6618 = vunpack.c.h.b16 %v5926
  %v6619 = vunpack.c.l.b16 %v5927
  %v6620 = vunpack.c.h.b16 %v5927
  %v6621 = vunpack.c.l.b16 %v5928
  %v6622 = vunpack.c.h.b16 %v5928
  %v6623 = vunpack.c.l.b16 %v5929
  %v6624 = vunpack.c.h.b16 %v5929
  %v6625 = vunpack.c.l.b16 %v5930
  %v6626 = vunpack.c.h.b16 %v5930
  %v6627 = vunpack.c.l.b16 %v5931
  %v6628 = vunpack.c.h.b16 %v5931
  %v6629 = vunpack.c.l.b16 %v5932
  %v6630 = vunpack.c.h.b16 %v5932
  %v6631 = vunpack.c.l.b16 %v5933
  %v6632 = vunpack.c.h.b16 %v5933
  %v6633 = vunpack.c.l.b16 %v5934
  %v6634 = vunpack.c.h.b16 %v5934
  %v6635 = vunpack.c.l.b16 %v5935
  %v6636 = vunpack.c.h.b16 %v5935
  %v6637 = vunpack.c.l.b16 %v5936
  %v6638 = vunpack.c.h.b16 %v5936
  %v6639 = vunpack.c.l.b16 %v5937
  %v6640 = vunpack.c.h.b16 %v5937
  %v6641 = vunpack.c.l.b16 %v5938
  %v6642 = vunpack.c.h.b16 %v5938
  %v6643 = vunpack.c.l.b16 %v5939
  %v6644 = vunpack.c.h.b16 %v5939
  %v6645 = vunpack.c.l.b16 %v5940
  %v6646 = vunpack.c.h.b16 %v5940
  %v6647 = vunpack.c.l.b16 %v5941
  %v6648 = vunpack.c.h.b16 %v5941
  %v6649 = vunpack.c.l.b16 %v5942
  %v6650 = vunpack.c.h.b16 %v5942
  %v6651 = vunpack.c.l.b16 %v5943
  %v6652 = vunpack.c.h.b16 %v5943
  %v6653 = vunpack.c.l.b16 %v5944
  %v6654 = vunpack.c.h.b16 %v5944
  %v6655 = vunpack.c.l.b16 %v5945
  %v6656 = vunpack.c.h.b16 %v5945
  %v6657 = vunpack.c.l.b16 %v5946
  %v6658 = vunpack.c.h.b16 %v5946
  %v6659 = vunpack.c.l.b16 %v5947
  %v6660 = vunpack.c.h.b16 %v5947
  %v6661 = vunpack.c.l.b16 %v5948
  %v6662 = vunpack.c.h.b16 %v5948
  %v6663 = vunpack.c.l.b16 %v5949
  %v6664 = vunpack.c.h.b16 %v5949
  %v6665 = vunpack.c.l.b16 %v5950
  %v6666 = vunpack.c.h.b16 %v5950
  %v6667 = vunpack.c.l.b16 %v5951
  %v6668 = vunpack.c.h.b16 %v5951
  %v6669 = vunpack.c.l.b16 %v5952
  %v6670 = vunpack.c.h.b16 %v5952
  %v6671 = vunpack.c.l.b16 %v5953
  %v6672 = vunpack.c.h.b16 %v5953
  %v6673 = vunpack.c.l.b16 %v5954
  %v6674 = vunpack.c.h.b16 %v5954
  %v6675 = vunpack.c.l.b16 %v5955
  %v6676 = vunpack.c.h.b16 %v5955
  %v6677 = vunpack.c.l.b16 %v5956
  %v6678 = vunpack.c.h.b16 %v5956
  %v6679 = vunpack.c.l.b16 %v5957
  %v6680 = vunpack.c.h.b16 %v5957
  %v6681 = vunpack.c.l.b16 %v5958
  %v6682 = vunpack.c.h.b16 %v5958
  %v6683 = vunpack.c.l.b16 %v5959
  %v6684 = vunpack.c.h.b16 %v5959
  %v6685 = vunpack.c.l.b16 %v5960
  %v6686 = vunpack.c.h.b16 %v5960
  %v6687 = vunpack.c.l.b16 %v5961
  %v6688 = vunpack.c.h.b16 %v5961
  %v6689 = vunpack.c.l.b16 %v5962
  %v6690 = vunpack.c.h.b16 %v5962
  %v6691 = vunpack.c.l.b16 %v5963
  %v6692 = vunpack.c.h.b16 %v5963
  %v6693 = vunpack.c.l.b16 %v5964
  %v6694 = vunpack.c.h.b16 %v5964
  %v6695 = vunpack.c.l.b16 %v5965
  %v6696 = vunpack.c.h.b16 %v5965
  %v6697 = vunpack.c.l.b16 %v5966
  %v6698 = vunpack.c.h.b16 %v5966
  %v6699 = vunpack.c.l.b16 %v5967
  %v6700 = vunpack.c.h.b16 %v5967
  %v6701 = vunpack.c.l.b16 %v5968
  %v6702 = vunpack.c.h.b16 %v5968
  %v6703 = vunpack.c.l.b16 %v5969
  %v6704 = vunpack.c.h.b16 %v5969
  %v6705 = vunpack.c.l.b16 %v5970
  %v6706 = vunpack.c.h.b16 %v5970
  %v6707 = vunpack.c.l.b16 %v5971
  %v6708 = vunpack.c.h.b16 %v5971
  %v6709 = vunpack.c.l.b16 %v5972
  %v6710 = vunpack.c.h.b16 %v5972
  %v6711 = vunpack.c.l.b16 %v5973
  %v6712 = vunpack.c.h.b16 %v5973
  %v6713 = vunpack.c.l.b16 %v5974
  %v6714 = vunpack.c.h.b16 %v5974
  %v6715 = vunpack.c.l.b16 %v5975
  %v6716 = vunpack.c.h.b16 %v5975
  %v6717 = vunpack.c.l.b16 %v5976
  %v6718 = vunpack.c.h.b16 %v5976
  %v6719 = vunpack.c.l.b16 %v5977
  %v6720 = vunpack.c.h.b16 %v5977
  %v6721 = vunpack.c.l.b16 %v5978
  %v6722 = vunpack.c.h.b16 %v5978
  %v6723 = vunpack.c.l.b16 %v5979
  %v6724 = vunpack.c.h.b16 %v5979
  %v6725 = vunpack.c.l.b16 %v5980
  %v6726 = vunpack.c.h.b16 %v5980
  %v6727 = vunpack.c.l.b16 %v5981
  %v6728 = vunpack.c.h.b16 %v5981
  %v6729 = vunpack.c.l.b16 %v5982
  %v6730 = vunpack.c.h.b16 %v5982
  %v6731 = vunpack.c.l.b16 %v5983
  %v6732 = vunpack.c.h.b16 %v5983
  %v6733 = vunpack.c.l.b16 %v5984
  %v6734 = vunpack.c.h.b16 %v5984
  %v6735 = vunpack.c.l.b16 %v5985
  %v6736 = vunpack.c.h.b16 %v5985
  %v6737 = vunpack.c.l.b16 %v5986
  %v6738 = vunpack.c.h.b16 %v5986
  %v6739 = vunpack.c.l.b16 %v5987
  %v6740 = vunpack.c.h.b16 %v5987
  %v6741 = vunpack.c.l.b16 %v5988
  %v6742 = vunpack.c.h.b16 %v5988
  %v6743 = vunpack.c.l.b16 %v5989
  %v6744 = vunpack.c.h.b16 %v5989
  %v6745 = vunpack.c.l.b16 %v5990
  %v6746 = vunpack.c.h.b16 %v5990
  %v6747 = vunpack.c.l.b16 %v5991
  %v6748 = vunpack.c.h.b16 %v5991
  %v6749 = vunpack.c.l.b16 %v5992
  %v6750 = vunpack.c.h.b16 %v5992
  %v6751 = vunpack.c.l.b16 %v5993
  %v6752 = vunpack.c.h.b16 %v5993
  %v6753 = vunpack.c.l.b16 %v5994
  %v6754 = vunpack.c.h.b16 %v5994
  %v6755 = vunpack.c.l.b16 %v5995
  %v6756 = vunpack.c.h.b16 %v5995
  %v6757 = vunpack.c.l.b16 %v5996
  %v6758 = vunpack.c.h.b16 %v5996
  %v6759 = vunpack.c.l.b16 %v5997
  %v6760 = vunpack.c.h.b16 %v5997
  %v6761 = vunpack.c.l.b16 %v5998
  %v6762 = vunpack.c.h.b16 %v5998
  %v6763 = vunpack.c.l.b16 %v5999
  %v6764 = vunpack.c.h.b16 %v5999
  %v6765 = vunpack.c.l.b16 %v6000
  %v6766 = vunpack.c.h.b16 %v6000
  %v6767 = vunpack.c.l.b16 %v6001
  %v6768 = vunpack.c.h.b16 %v6001
  %v6769 = vunpack.c.l.b16 %v6002
  %v6770 = vunpack.c.h.b16 %v6002
  %v6771 = vunpack.c.l.b16 %v6003
  %v6772 = vunpack.c.h.b16 %v6003
  %v6773 = vunpack.c.l.b16 %v6004
  %v6774 = vunpack.c.h.b16 %v6004
  %v6775 = vunpack.c.l.b16 %v6005
  %v6776 = vunpack.c.h.b16 %v6005
  %v6777 = vunpack.c.l.b16 %v6006
  %v6778 = vunpack.c.h.b16 %v6006
  %v6779 = vunpack.c.l.b16 %v6007
  %v6780 = vunpack.c.h.b16 %v6007
  %v6781 = vunpack.c.l.b16 %v6008
  %v6782 = vunpack.c.h.b16 %v6008
  %v6783 = vunpack.c.l.b16 %v6009
  %v6784 = vunpack.c.h.b16 %v6009
  %v6785 = vunpack.c.l.b16 %v6010
  %v6786 = vunpack.c.h.b16 %v6010
  %v6787 = vunpack.c.l.b16 %v6011
  %v6788 = vunpack.c.h.b16 %v6011
  %v6789 = vunpack.c.l.b16 %v6012
  %v6790 = vunpack.c.h.b16 %v6012
  %v6791 = vunpack.c.l.b16 %v6013
  %v6792 = vunpack.c.h.b16 %v6013
  %v6793 = vunpack.c.l.b16 %v6014
  %v6794 = vunpack.c.h.b16 %v6014
  %v6795 = vunpack.c.l.b16 %v6015
  %v6796 = vunpack.c.h.b16 %v6015
  %v6797 = vunpack.c.l.b16 %v6016
  %v6798 = vunpack.c.h.b16 %v6016
  %v6799 = vunpack.c.l.b16 %v6017
  %v6800 = vunpack.c.h.b16 %v6017
  %v6801 = vunpack.c.l.b16 %v6018
  %v6802 = vunpack.c.h.b16 %v6018
  %v6803 = vunpack.c.l.b16 %v6019
  %v6804 = vunpack.c.h.b16 %v6019
  %v6805 = vunpack.c.l.b16 %v6020
  %v6806 = vunpack.c.h.b16 %v6020
  %v6807 = vunpack.c.l.b16 %v6021
  %v6808 = vunpack.c.h.b16 %v6021
  %v6809 = vunpack.c.l.b16 %v6022
  %v6810 = vunpack.c.h.b16 %v6022
  %v6811 = vunpack.c.l.b16 %v6023
  %v6812 = vunpack.c.h.b16 %v6023
  %v6813 = vunpack.c.l.b16 %v6024
  %v6814 = vunpack.c.h.b16 %v6024
  %v6815 = vpack.c.b16 %v6307, %v6303
  %v6816 = vpack.c.b16 %v6308, %v6304
  %v6817 = vpack.c.b16 %v6309, %v6305
  %v6818 = vpack.c.b16 %v6310, %v6306
  %v6819 = vpack.c.b16 %v6315, %v6311
  %v6820 = vpack.c.b16 %v6316, %v6312
  %v6821 = vpack.c.b16 %v6317, %v6313
  %v6822 = vpack.c.b16 %v6318, %v6314
  %v6823 = vpack.c.b16 %v6323, %v6319
  %v6824 = vpack.c.b16 %v6324, %v6320
  %v6825 = vpack.c.b16 %v6325, %v6321
  %v6826 = vpack.c.b16 %v6326, %v6322
  %v6827 = vpack.c.b16 %v6331, %v6327
  %v6828 = vpack.c.b16 %v6332, %v6328
  %v6829 = vpack.c.b16 %v6333, %v6329
  %v6830 = vpack.c.b16 %v6334, %v6330
  %v6831 = vpack.c.b16 %v6339, %v6335
  %v6832 = vpack.c.b16 %v6340, %v6336
  %v6833 = vpack.c.b16 %v6341, %v6337
  %v6834 = vpack.c.b16 %v6342, %v6338
  %v6835 = vpack.c.b16 %v6347, %v6343
  %v6836 = vpack.c.b16 %v6348, %v6344
  %v6837 = vpack.c.b16 %v6349, %v6345
  %v6838 = vpack.c.b16 %v6350, %v6346
  %v6839 = vpack.c.b16 %v6355, %v6351
  %v6840 = vpack.c.b16 %v6356, %v6352
  %v6841 = vpack.c.b16 %v6357, %v6353
  %v6842 = vpack.c.b16 %v6358, %v6354
  %v6843 = vpack.c.b16 %v6363, %v6359
  %v6844 = vpack.c.b16 %v6364, %v6360
  %v6845 = vpack.c.b16 %v6365, %v6361
  %v6846 = vpack.c.b16 %v6366, %v6362
  %v6847 = vpack.c.b16 %v6371, %v6367
  %v6848 = vpack.c.b16 %v6372, %v6368
  %v6849 = vpack.c.b16 %v6373, %v6369
  %v6850 = vpack.c.b16 %v6374, %v6370
  %v6851 = vpack.c.b16 %v6379, %v6375
  %v6852 = vpack.c.b16 %v6380, %v6376
  %v6853 = vpack.c.b16 %v6381, %v6377
  %v6854 = vpack.c.b16 %v6382, %v6378
  %v6855 = vpack.c.b16 %v6387, %v6383
  %v6856 = vpack.c.b16 %v6388, %v6384
  %v6857 = vpack.c.b16 %v6389, %v6385
  %v6858 = vpack.c.b16 %v6390, %v6386
  %v6859 = vpack.c.b16 %v6395, %v6391
  %v6860 = vpack.c.b16 %v6396, %v6392
  %v6861 = vpack.c.b16 %v6397, %v6393
  %v6862 = vpack.c.b16 %v6398, %v6394
  %v6863 = vpack.c.b16 %v6403, %v6399
  %v6864 = vpack.c.b16 %v6404, %v6400
  %v6865 = vpack.c.b16 %v6405, %v6401
  %v6866 = vpack.c.b16 %v6406, %v6402
  %v6867 = vpack.c.b16 %v6411, %v6407
  %v6868 = vpack.c.b16 %v6412, %v6408
  %v6869 = vpack.c.b16 %v6413, %v6409
  %v6870 = vpack.c.b16 %v6414, %v6410
  %v6871 = vpack.c.b16 %v6419, %v6415
  %v6872 = vpack.c.b16 %v6420, %v6416
  %v6873 = vpack.c.b16 %v6421, %v6417
  %v6874 = vpack.c.b16 %v6422, %v6418
  %v6875 = vpack.c.b16 %v6427, %v6423
  %v6876 = vpack.c.b16 %v6428, %v6424
  %v6877 = vpack.c.b16 %v6429, %v6425
  %v6878 = vpack.c.b16 %v6430, %v6426
  %v6879 = vpack.c.b16 %v6435, %v6431
  %v6880 = vpack.c.b16 %v6436, %v6432
  %v6881 = vpack.c.b16 %v6437, %v6433
  %v6882 = vpack.c.b16 %v6438, %v6434
  %v6883 = vpack.c.b16 %v6443, %v6439
  %v6884 = vpack.c.b16 %v6444, %v6440
  %v6885 = vpack.c.b16 %v6445, %v6441
  %v6886 = vpack.c.b16 %v6446, %v6442
  %v6887 = vpack.c.b16 %v6451, %v6447
  %v6888 = vpack.c.b16 %v6452, %v6448
  %v6889 = vpack.c.b16 %v6453, %v6449
  %v6890 = vpack.c.b16 %v6454, %v6450
  %v6891 = vpack.c.b16 %v6459, %v6455
  %v6892 = vpack.c.b16 %v6460, %v6456
  %v6893 = vpack.c.b16 %v6461, %v6457
  %v6894 = vpack.c.b16 %v6462, %v6458
  %v6895 = vpack.c.b16 %v6467, %v6463
  %v6896 = vpack.c.b16 %v6468, %v6464
  %v6897 = vpack.c.b16 %v6469, %v6465
  %v6898 = vpack.c.b16 %v6470, %v6466
  %v6899 = vpack.c.b16 %v6475, %v6471
  %v6900 = vpack.c.b16 %v6476, %v6472
  %v6901 = vpack.c.b16 %v6477, %v6473
  %v6902 = vpack.c.b16 %v6478, %v6474
  %v6903 = vpack.c.b16 %v6483, %v6479
  %v6904 = vpack.c.b16 %v6484, %v6480
  %v6905 = vpack.c.b16 %v6485, %v6481
  %v6906 = vpack.c.b16 %v6486, %v6482
  %v6907 = vpack.c.b16 %v6491, %v6487
  %v6908 = vpack.c.b16 %v6492, %v6488
  %v6909 = vpack.c.b16 %v6493, %v6489
  %v6910 = vpack.c.b16 %v6494, %v6490
  %v6911 = vpack.c.b16 %v6499, %v6495
  %v6912 = vpack.c.b16 %v6500, %v6496
  %v6913 = vpack.c.b16 %v6501, %v6497
  %v6914 = vpack.c.b16 %v6502, %v6498
  %v6915 = vpack.c.b16 %v6507, %v6503
  %v6916 = vpack.c.b16 %v6508, %v6504
  %v6917 = vpack.c.b16 %v6509, %v6505
  %v6918 = vpack.c.b16 %v6510, %v6506
  %v6919 = vpack.c.b16 %v6515, %v6511
  %v6920 = vpack.c.b16 %v6516, %v6512
  %v6921 = vpack.c.b16 %v6517, %v6513
  %v6922 = vpack.c.b16 %v6518, %v6514
  %v6923 = vpack.c.b16 %v6523, %v6519
  %v6924 = vpack.c.b16 %v6524, %v6520
  %v6925 = vpack.c.b16 %v6525, %v6521
  %v6926 = vpack.c.b16 %v6526, %v6522
  %v6927 = vpack.c.b16 %v6531, %v6527
  %v6928 = vpack.c.b16 %v6532, %v6528
  %v6929 = vpack.c.b16 %v6533, %v6529
  %v6930 = vpack.c.b16 %v6534, %v6530
  %v6931 = vpack.c.b16 %v6539, %v6535
  %v6932 = vpack.c.b16 %v6540, %v6536
  %v6933 = vpack.c.b16 %v6541, %v6537
  %v6934 = vpack.c.b16 %v6542, %v6538
  %v6935 = vpack.c.b16 %v6547, %v6543
  %v6936 = vpack.c.b16 %v6548, %v6544
  %v6937 = vpack.c.b16 %v6549, %v6545
  %v6938 = vpack.c.b16 %v6550, %v6546
  %v6939 = vpack.c.b16 %v6555, %v6551
  %v6940 = vpack.c.b16 %v6556, %v6552
  %v6941 = vpack.c.b16 %v6557, %v6553
  %v6942 = vpack.c.b16 %v6558, %v6554
  %v6943 = vpack.c.b16 %v6563, %v6559
  %v6944 = vpack.c.b16 %v6564, %v6560
  %v6945 = vpack.c.b16 %v6565, %v6561
  %v6946 = vpack.c.b16 %v6566, %v6562
  %v6947 = vpack.c.b16 %v6571, %v6567
  %v6948 = vpack.c.b16 %v6572, %v6568
  %v6949 = vpack.c.b16 %v6573, %v6569
  %v6950 = vpack.c.b16 %v6574, %v6570
  %v6951 = vpack.c.b16 %v6579, %v6575
  %v6952 = vpack.c.b16 %v6580, %v6576
  %v6953 = vpack.c.b16 %v6581, %v6577
  %v6954 = vpack.c.b16 %v6582, %v6578
  %v6955 = vpack.c.b16 %v6587, %v6583
  %v6956 = vpack.c.b16 %v6588, %v6584
  %v6957 = vpack.c.b16 %v6589, %v6585
  %v6958 = vpack.c.b16 %v6590, %v6586
  %v6959 = vpack.c.b16 %v6595, %v6591
  %v6960 = vpack.c.b16 %v6596, %v6592
  %v6961 = vpack.c.b16 %v6597, %v6593
  %v6962 = vpack.c.b16 %v6598, %v6594
  %v6963 = vpack.c.b16 %v6603, %v6599
  %v6964 = vpack.c.b16 %v6604, %v6600
  %v6965 = vpack.c.b16 %v6605, %v6601
  %v6966 = vpack.c.b16 %v6606, %v6602
  %v6967 = vpack.c.b16 %v6611, %v6607
  %v6968 = vpack.c.b16 %v6612, %v6608
  %v6969 = vpack.c.b16 %v6613, %v6609
  %v6970 = vpack.c.b16 %v6614, %v6610
  %v6971 = vpack.c.b16 %v6619, %v6615
  %v6972 = vpack.c.b16 %v6620, %v6616
  %v6973 = vpack.c.b16 %v6621, %v6617
  %v6974 = vpack.c.b16 %v6622, %v6618
  %v6975 = vpack.c.b16 %v6627, %v6623
  %v6976 = vpack.c.b16 %v6628, %v6624
  %v6977 = vpack.c.b16 %v6629, %v6625
  %v6978 = vpack.c.b16 %v6630, %v6626
  %v6979 = vpack.c.b16 %v6635, %v6631
  %v6980 = vpack.c.b16 %v6636, %v6632
  %v6981 = vpack.c.b16 %v6637, %v6633
  %v6982 = vpack.c.b16 %v6638, %v6634
  %v6983 = vpack.c.b16 %v6643, %v6639
  %v6984 = vpack.c.b16 %v6644, %v6640
  %v6985 = vpack.c.b16 %v6645, %v6641
  %v6986 = vpack.c.b16 %v6646, %v6642
  %v6987 = vpack.c.b16 %v6651, %v6647
  %v6988 = vpack.c.b16 %v6652, %v6648
  %v6989 = vpack.c.b16 %v6653, %v6649
  %v6990 = vpack.c.b16 %v6654, %v6650
  %v6991 = vpack.c.b16 %v6659, %v6655
  %v6992 = vpack.c.b16 %v6660, %v6656
  %v6993 = vpack.c.b16 %v6661, %v6657
  %v6994 = vpack.c.b16 %v6662, %v6658
  %v6995 = vpack.c.b16 %v6667, %v6663
  %v6996 = vpack.c.b16 %v6668, %v6664
  %v6997 = vpack.c.b16 %v6669, %v6665
  %v6998 = vpack.c.b16 %v6670, %v6666
  %v6999 = vpack.c.b16 %v6675, %v6671
  %v7000 = vpack.c.b16 %v6676, %v6672
  %v7001 = vpack.c.b16 %v6677, %v6673
  %v7002 = vpack.c.b16 %v6678, %v6674
  %v7003 = vpack.c.b16 %v6683, %v6679
  %v7004 = vpack.c.b16 %v6684, %v6680
  %v7005 = vpack.c.b16 %v6685, %v6681
  %v7006 = vpack.c.b16 %v6686, %v6682
  %v7007 = vpack.c.b16 %v6691, %v6687
  %v7008 = vpack.c.b16 %v6692, %v6688
  %v7009 = vpack.c.b16 %v6693, %v6689
  %v7010 = vpack.c.b16 %v6694, %v6690
  %v7011 = vpack.c.b16 %v6699, %v6695
  %v7012 = vpack.c.b16 %v6700, %v6696
  %v7013 = vpack.c.b16 %v6701, %v6697
  %v7014 = vpack.c.b16 %v6702, %v6698
  %v7015 = vpack.c.b16 %v6707, %v6703
  %v7016 = vpack.c.b16 %v6708, %v6704
  %v7017 = vpack.c.b16 %v6709, %v6705
  %v7018 = vpack.c.b16 %v6710, %v6706
  %v7019 = vpack.c.b16 %v6715, %v6711
  %v7020 = vpack.c.b16 %v6716, %v6712
  %v7021 = vpack.c.b16 %v6717, %v6713
  %v7022 = vpack.c.b16 %v6718, %v6714
  %v7023 = vpack.c.b16 %v6723, %v6719
  %v7024 = vpack.c.b16 %v6724, %v6720
  %v7025 = vpack.c.b16 %v6725, %v6721
  %v7026 = vpack.c.b16 %v6726, %v6722
  %v7027 = vpack.c.b16 %v6731, %v6727
  %v7028 = vpack.c.b16 %v6732, %v6728
  %v7029 = vpack.c.b16 %v6733, %v6729
  %v7030 = vpack.c.b16 %v6734, %v6730
  %v7031 = vpack.c.b16 %v6739, %v6735
  %v7032 = vpack.c.b16 %v6740, %v6736
  %v7033 = vpack.c.b16 %v6741, %v6737
  %v7034 = vpack.c.b16 %v6742, %v6738
  %v7035 = vpack.c.b16 %v6747, %v6743
  %v7036 = vpack.c.b16 %v6748, %v6744
  %v7037 = vpack.c.b16 %v6749, %v6745
  %v7038 = vpack.c.b16 %v6750, %v6746
  %v7039 = vpack.c.b16 %v6755, %v6751
  %v7040 = vpack.c.b16 %v6756, %v6752
  %v7041 = vpack.c.b16 %v6757, %v6753
  %v7042 = vpack.c.b16 %v6758, %v6754
  %v7043 = vpack.c.b16 %v6763, %v6759
  %v7044 = vpack.c.b16 %v6764, %v6760
  %v7045 = vpack.c.b16 %v6765, %v6761
  %v7046 = vpack.c.b16 %v6766, %v6762
  %v7047 = vpack.c.b16 %v6771, %v6767
  %v7048 = vpack.c.b16 %v6772, %v6768
  %v7049 = vpack.c.b16 %v6773, %v6769
  %v7050 = vpack.c.b16 %v6774, %v6770
  %v7051 = vpack.c.b16 %v6779, %v6775
  %v7052 = vpack.c.b16 %v6780, %v6776
  %v7053 = vpack.c.b16 %v6781, %v6777
  %v7054 = vpack.c.b16 %v6782, %v6778
  %v7055 = vpack.c.b16 %v6787, %v6783
  %v7056 = vpack.c.b16 %v6788, %v6784
  %v7057 = vpack.c.b16 %v6789, %v6785
  %v7058 = vpack.c.b16 %v6790, %v6786
  %v7059 = vpack.c.b16 %v6795, %v6791
  %v7060 = vpack.c.b16 %v6796, %v6792
  %v7061 = vpack.c.b16 %v6797, %v6793
  %v7062 = vpack.c.b16 %v6798, %v6794
  %v7063 = vpack.c.b16 %v6803, %v6799
  %v7064 = vpack.c.b16 %v6804, %v6800
  %v7065 = vpack.c.b16 %v6805, %v6801
  %v7066 = vpack.c.b16 %v6806, %v6802
  %v7067 = vpack.c.b16 %v6811, %v6807
  %v7068 = vpack.c.b16 %v6812, %v6808
  %v7069 = vpack.c.b16 %v6813, %v6809
  %v7070 = vpack.c.b16 %v6814, %v6810
  %7327 = vmatprep.subr.bf16.mxu0 %v6816
  %7328 = vmatpush1.bf16.msra.mxu0 %v6815
  %7329 = vmatprep.subr.bf16.mxu0 %v6820
  %7330 = vmatpush1.bf16.msra.mxu0 %v6819
  %7331 = vmatprep.subr.bf16.mxu0 %v6824
  %7332 = vmatpush1.bf16.msra.mxu0 %v6823
  %7333 = vmatprep.subr.bf16.mxu0 %v6828
  %7334 = vmatpush1.bf16.msra.mxu0 %v6827
  %7335 = vmatprep.subr.bf16.mxu0 %v6832
  %7336 = vmatpush1.bf16.msra.mxu0 %v6831
  %7337 = vmatprep.subr.bf16.mxu0 %v6836
  %7338 = vmatpush1.bf16.msra.mxu0 %v6835
  %7339 = vmatprep.subr.bf16.mxu0 %v6840
  %7340 = vmatpush1.bf16.msra.mxu0 %v6839
  %7341 = vmatprep.subr.bf16.mxu0 %v6844
  %7342 = vmatpush1.bf16.msra.mxu0 %v6843
  %7343 = vmatprep.subr.bf16.mxu0 %v6848
  %7344 = vmatpush1.bf16.msra.mxu0 %v6847
  %7345 = vmatprep.subr.bf16.mxu0 %v6852
  %7346 = vmatpush1.bf16.msra.mxu0 %v6851
  %7347 = vmatprep.subr.bf16.mxu0 %v6856
  %7348 = vmatpush1.bf16.msra.mxu0 %v6855
  %7349 = vmatprep.subr.bf16.mxu0 %v6860
  %7350 = vmatpush1.bf16.msra.mxu0 %v6859
  %7351 = vmatprep.subr.bf16.mxu0 %v6864
  %7352 = vmatpush1.bf16.msra.mxu0 %v6863
  %7353 = vmatprep.subr.bf16.mxu0 %v6868
  %7354 = vmatpush1.bf16.msra.mxu0 %v6867
  %7355 = vmatprep.subr.bf16.mxu0 %v6872
  %7356 = vmatpush1.bf16.msra.mxu0 %v6871
  %7357 = vmatprep.subr.bf16.mxu0 %v6876
  %7358 = vmatpush1.bf16.msra.mxu0 %v6875
  %7359 = vmatprep.mubr.bf16.mxu0 %v5762
  %7360 = vmatmul.mubr.bf16.gmra.mrb[0].mxu0 %v5761
  %v7361 = vpop.f32.mrb[0].mxu0
  %v7362 = vadd.f32 %v6030, %v7361
  %v7363 = vpop.f32.mrb[0].mxu0
  %v7364 = vadd.f32 %v6034, %v7363
  %v7365 = vpop.f32.mrb[0].mxu0
  %v7366 = vpop.f32.mrb[0].mxu0
  %7367 = vdwg.mxu0
  %7368 = vmatprep.subr.bf16.mxu0 %v6880
  %7369 = vmatpush1.bf16.msra.mxu0 %v6879
  %7370 = vmatprep.subr.bf16.mxu0 %v6884
  %7371 = vmatpush1.bf16.msra.mxu0 %v6883
  %7372 = vmatprep.subr.bf16.mxu0 %v6888
  %7373 = vmatpush1.bf16.msra.mxu0 %v6887
  %7374 = vmatprep.subr.bf16.mxu0 %v6892
  %7375 = vmatpush1.bf16.msra.mxu0 %v6891
  %7376 = vmatprep.subr.bf16.mxu0 %v6896
  %7377 = vmatpush1.bf16.msra.mxu0 %v6895
  %7378 = vmatprep.subr.bf16.mxu0 %v6900
  %7379 = vmatpush1.bf16.msra.mxu0 %v6899
  %7380 = vmatprep.subr.bf16.mxu0 %v6904
  %7381 = vmatpush1.bf16.msra.mxu0 %v6903
  %7382 = vmatprep.subr.bf16.mxu0 %v6908
  %7383 = vmatpush1.bf16.msra.mxu0 %v6907
  %7384 = vmatprep.subr.bf16.mxu0 %v6912
  %7385 = vmatpush1.bf16.msra.mxu0 %v6911
  %7386 = vmatprep.subr.bf16.mxu0 %v6916
  %7387 = vmatpush1.bf16.msra.mxu0 %v6915
  %7388 = vmatprep.subr.bf16.mxu0 %v6920
  %7389 = vmatpush1.bf16.msra.mxu0 %v6919
  %7390 = vmatprep.subr.bf16.mxu0 %v6924
  %7391 = vmatpush1.bf16.msra.mxu0 %v6923
  %7392 = vmatprep.subr.bf16.mxu0 %v6928
  %7393 = vmatpush1.bf16.msra.mxu0 %v6927
  %7394 = vmatprep.subr.bf16.mxu0 %v6932
  %7395 = vmatpush1.bf16.msra.mxu0 %v6931
  %7396 = vmatprep.subr.bf16.mxu0 %v6936
  %7397 = vmatpush1.bf16.msra.mxu0 %v6935
  %7398 = vmatprep.subr.bf16.mxu0 %v6940
  %7399 = vmatpush1.bf16.msra.mxu0 %v6939
  %7400 = vmatprep.mubr.bf16.mxu0 %v5764
  %7401 = vmatmul.mubr.bf16.gmra.mrb[0].mxu0 %v5763
  %v7402 = vpop.f32.mrb[0].mxu0
  %v7403 = vadd.f32 %v7362, %v7402
  %v7404 = vpop.f32.mrb[0].mxu0
  %v7405 = vadd.f32 %v7364, %v7404
  %v7406 = vpop.f32.mrb[0].mxu0
  %v7407 = vpop.f32.mrb[0].mxu0
  %7408 = vdwg.mxu0
  %7409 = vmatprep.subr.bf16.mxu0 %v6944
  %7410 = vmatpush1.bf16.msra.mxu0 %v6943
  %7411 = vmatprep.subr.bf16.mxu0 %v6948
  %7412 = vmatpush1.bf16.msra.mxu0 %v6947
  %7413 = vmatprep.subr.bf16.mxu0 %v6952
  %7414 = vmatpush1.bf16.msra.mxu0 %v6951
  %7415 = vmatprep.subr.bf16.mxu0 %v6956
  %7416 = vmatpush1.bf16.msra.mxu0 %v6955
  %7417 = vmatprep.subr.bf16.mxu0 %v6960
  %7418 = vmatpush1.bf16.msra.mxu0 %v6959
  %7419 = vmatprep.subr.bf16.mxu0 %v6964
  %7420 = vmatpush1.bf16.msra.mxu0 %v6963
  %7421 = vmatprep.subr.bf16.mxu0 %v6968
  %7422 = vmatpush1.bf16.msra.mxu0 %v6967
  %7423 = vmatprep.subr.bf16.mxu0 %v6972
  %7424 = vmatpush1.bf16.msra.mxu0 %v6971
  %7425 = vmatprep.subr.bf16.mxu0 %v6976
  %7426 = vmatpush1.bf16.msra.mxu0 %v6975
  %7427 = vmatprep.subr.bf16.mxu0 %v6980
  %7428 = vmatpush1.bf16.msra.mxu0 %v6979
  %7429 = vmatprep.subr.bf16.mxu0 %v6984
  %7430 = vmatpush1.bf16.msra.mxu0 %v6983
  %7431 = vmatprep.subr.bf16.mxu0 %v6988
  %7432 = vmatpush1.bf16.msra.mxu0 %v6987
  %7433 = vmatprep.subr.bf16.mxu0 %v6992
  %7434 = vmatpush1.bf16.msra.mxu0 %v6991
  %7435 = vmatprep.subr.bf16.mxu0 %v6996
  %7436 = vmatpush1.bf16.msra.mxu0 %v6995
  %7437 = vmatprep.subr.bf16.mxu0 %v7000
  %7438 = vmatpush1.bf16.msra.mxu0 %v6999
  %7439 = vmatprep.subr.bf16.mxu0 %v7004
  %7440 = vmatpush1.bf16.msra.mxu0 %v7003
  %7441 = vmatprep.mubr.bf16.mxu0 %v5766
  %7442 = vmatmul.mubr.bf16.gmra.mrb[0].mxu0 %v5765
  %v7443 = vpop.f32.mrb[0].mxu0
  %v7444 = vadd.f32 %v7403, %v7443
  %v7445 = vpop.f32.mrb[0].mxu0
  %v7446 = vadd.f32 %v7405, %v7445
  %v7447 = vpop.f32.mrb[0].mxu0
  %v7448 = vpop.f32.mrb[0].mxu0
  %7449 = vdwg.mxu0
  %7450 = vmatprep.subr.bf16.mxu0 %v7008
  %7451 = vmatpush1.bf16.msra.mxu0 %v7007
  %7452 = vmatprep.subr.bf16.mxu0 %v7012
  %7453 = vmatpush1.bf16.msra.mxu0 %v7011
  %7454 = vmatprep.subr.bf16.mxu0 %v7016
  %7455 = vmatpush1.bf16.msra.mxu0 %v7015
  %7456 = vmatprep.subr.bf16.mxu0 %v7020
  %7457 = vmatpush1.bf16.msra.mxu0 %v7019
  %7458 = vmatprep.subr.bf16.mxu0 %v7024
  %7459 = vmatpush1.bf16.msra.mxu0 %v7023
  %7460 = vmatprep.subr.bf16.mxu0 %v7028
  %7461 = vmatpush1.bf16.msra.mxu0 %v7027
  %7462 = vmatprep.subr.bf16.mxu0 %v7032
  %7463 = vmatpush1.bf16.msra.mxu0 %v7031
  %7464 = vmatprep.subr.bf16.mxu0 %v7036
  %7465 = vmatpush1.bf16.msra.mxu0 %v7035
  %7466 = vmatprep.subr.bf16.mxu0 %v7040
  %7467 = vmatpush1.bf16.msra.mxu0 %v7039
  %7468 = vmatprep.subr.bf16.mxu0 %v7044
  %7469 = vmatpush1.bf16.msra.mxu0 %v7043
  %7470 = vmatprep.subr.bf16.mxu0 %v7048
  %7471 = vmatpush1.bf16.msra.mxu0 %v7047
  %7472 = vmatprep.subr.bf16.mxu0 %v7052
  %7473 = vmatpush1.bf16.msra.mxu0 %v7051
  %7474 = vmatprep.subr.bf16.mxu0 %v7056
  %7475 = vmatpush1.bf16.msra.mxu0 %v7055
  %7476 = vmatprep.subr.bf16.mxu0 %v7060
  %7477 = vmatpush1.bf16.msra.mxu0 %v7059
  %7478 = vmatprep.subr.bf16.mxu0 %v7064
  %7479 = vmatpush1.bf16.msra.mxu0 %v7063
  %7480 = vmatprep.subr.bf16.mxu0 %v7068
  %7481 = vmatpush1.bf16.msra.mxu0 %v7067
  %7482 = vmatprep.mubr.bf16.mxu0 %v5768
  %7483 = vmatmul.mubr.bf16.gmra.mrb[0].mxu0 %v5767
  %v7484 = vpop.f32.mrb[0].mxu0
  %v7485 = vadd.f32 %v7444, %v7484
  %v7486 = vpop.f32.mrb[0].mxu0
  %v7487 = vadd.f32 %v7446, %v7486
  %v7488 = vpop.f32.mrb[0].mxu0
  %v7489 = vpop.f32.mrb[0].mxu0
  %7490 = vdwg.mxu0
  %7491 = vmatprep.subr.bf16.mxu0 %v6818
  %7492 = vmatpush1.bf16.msra.mxu0 %v6817
  %7493 = vmatprep.subr.bf16.mxu0 %v6822
  %7494 = vmatpush1.bf16.msra.mxu0 %v6821
  %7495 = vmatprep.subr.bf16.mxu0 %v6826
  %7496 = vmatpush1.bf16.msra.mxu0 %v6825
  %7497 = vmatprep.subr.bf16.mxu0 %v6830
  %7498 = vmatpush1.bf16.msra.mxu0 %v6829
  %7499 = vmatprep.subr.bf16.mxu0 %v6834
  %7500 = vmatpush1.bf16.msra.mxu0 %v6833
  %7501 = vmatprep.subr.bf16.mxu0 %v6838
  %7502 = vmatpush1.bf16.msra.mxu0 %v6837
  %7503 = vmatprep.subr.bf16.mxu0 %v6842
  %7504 = vmatpush1.bf16.msra.mxu0 %v6841
  %7505 = vmatprep.subr.bf16.mxu0 %v6846
  %7506 = vmatpush1.bf16.msra.mxu0 %v6845
  %7507 = vmatprep.subr.bf16.mxu0 %v6850
  %7508 = vmatpush1.bf16.msra.mxu0 %v6849
  %7509 = vmatprep.subr.bf16.mxu0 %v6854
  %7510 = vmatpush1.bf16.msra.mxu0 %v6853
  %7511 = vmatprep.subr.bf16.mxu0 %v6858
  %7512 = vmatpush1.bf16.msra.mxu0 %v6857
  %7513 = vmatprep.subr.bf16.mxu0 %v6862
  %7514 = vmatpush1.bf16.msra.mxu0 %v6861
  %7515 = vmatprep.subr.bf16.mxu0 %v6866
  %7516 = vmatpush1.bf16.msra.mxu0 %v6865
  %7517 = vmatprep.subr.bf16.mxu0 %v6870
  %7518 = vmatpush1.bf16.msra.mxu0 %v6869
  %7519 = vmatprep.subr.bf16.mxu0 %v6874
  %7520 = vmatpush1.bf16.msra.mxu0 %v6873
  %7521 = vmatprep.subr.bf16.mxu0 %v6878
  %7522 = vmatpush1.bf16.msra.mxu0 %v6877
  %7523 = vmatprep.mubr.bf16.mxu0 %v5762
  %7524 = vmatmul.mubr.bf16.gmra.mrb[0].mxu0 %v5761
  %v7525 = vpop.f32.mrb[0].mxu0
  %v7526 = vadd.f32 %v6038, %v7525
  %v7527 = vpop.f32.mrb[0].mxu0
  %v7528 = vadd.f32 %v6042, %v7527
  %v7529 = vpop.f32.mrb[0].mxu0
  %v7530 = vpop.f32.mrb[0].mxu0
  %7531 = vdwg.mxu0
  %7532 = vmatprep.subr.bf16.mxu0 %v6882
  %7533 = vmatpush1.bf16.msra.mxu0 %v6881
  %7534 = vmatprep.subr.bf16.mxu0 %v6886
  %7535 = vmatpush1.bf16.msra.mxu0 %v6885
  %7536 = vmatprep.subr.bf16.mxu0 %v6890
  %7537 = vmatpush1.bf16.msra.mxu0 %v6889
  %7538 = vmatprep.subr.bf16.mxu0 %v6894
  %7539 = vmatpush1.bf16.msra.mxu0 %v6893
  %7540 = vmatprep.subr.bf16.mxu0 %v6898
  %7541 = vmatpush1.bf16.msra.mxu0 %v6897
  %7542 = vmatprep.subr.bf16.mxu0 %v6902
  %7543 = vmatpush1.bf16.msra.mxu0 %v6901
  %7544 = vmatprep.subr.bf16.mxu0 %v6906
  %7545 = vmatpush1.bf16.msra.mxu0 %v6905
  %7546 = vmatprep.subr.bf16.mxu0 %v6910
  %7547 = vmatpush1.bf16.msra.mxu0 %v6909
  %7548 = vmatprep.subr.bf16.mxu0 %v6914
  %7549 = vmatpush1.bf16.msra.mxu0 %v6913
  %7550 = vmatprep.subr.bf16.mxu0 %v6918
  %7551 = vmatpush1.bf16.msra.mxu0 %v6917
  %7552 = vmatprep.subr.bf16.mxu0 %v6922
  %7553 = vmatpush1.bf16.msra.mxu0 %v6921
  %7554 = vmatprep.subr.bf16.mxu0 %v6926
  %7555 = vmatpush1.bf16.msra.mxu0 %v6925
  %7556 = vmatprep.subr.bf16.mxu0 %v6930
  %7557 = vmatpush1.bf16.msra.mxu0 %v6929
  %7558 = vmatprep.subr.bf16.mxu0 %v6934
  %7559 = vmatpush1.bf16.msra.mxu0 %v6933
  %7560 = vmatprep.subr.bf16.mxu0 %v6938
  %7561 = vmatpush1.bf16.msra.mxu0 %v6937
  %7562 = vmatprep.subr.bf16.mxu0 %v6942
  %7563 = vmatpush1.bf16.msra.mxu0 %v6941
  %7564 = vmatprep.mubr.bf16.mxu0 %v5764
  %7565 = vmatmul.mubr.bf16.gmra.mrb[0].mxu0 %v5763
  %v7566 = vpop.f32.mrb[0].mxu0
  %v7567 = vadd.f32 %v7526, %v7566
  %v7568 = vpop.f32.mrb[0].mxu0
  %v7569 = vadd.f32 %v7528, %v7568
  %v7570 = vpop.f32.mrb[0].mxu0
  %v7571 = vpop.f32.mrb[0].mxu0
  %7572 = vdwg.mxu0
  %7573 = vmatprep.subr.bf16.mxu0 %v6946
  %7574 = vmatpush1.bf16.msra.mxu0 %v6945
  %7575 = vmatprep.subr.bf16.mxu0 %v6950
  %7576 = vmatpush1.bf16.msra.mxu0 %v6949
  %7577 = vmatprep.subr.bf16.mxu0 %v6954
  %7578 = vmatpush1.bf16.msra.mxu0 %v6953
  %7579 = vmatprep.subr.bf16.mxu0 %v6958
  %7580 = vmatpush1.bf16.msra.mxu0 %v6957
  %7581 = vmatprep.subr.bf16.mxu0 %v6962
  %7582 = vmatpush1.bf16.msra.mxu0 %v6961
  %7583 = vmatprep.subr.bf16.mxu0 %v6966
  %7584 = vmatpush1.bf16.msra.mxu0 %v6965
  %7585 = vmatprep.subr.bf16.mxu0 %v6970
  %7586 = vmatpush1.bf16.msra.mxu0 %v6969
  %7587 = vmatprep.subr.bf16.mxu0 %v6974
  %7588 = vmatpush1.bf16.msra.mxu0 %v6973
  %7589 = vmatprep.subr.bf16.mxu0 %v6978
  %7590 = vmatpush1.bf16.msra.mxu0 %v6977
  %7591 = vmatprep.subr.bf16.mxu0 %v6982
  %7592 = vmatpush1.bf16.msra.mxu0 %v6981
  %7593 = vmatprep.subr.bf16.mxu0 %v6986
  %7594 = vmatpush1.bf16.msra.mxu0 %v6985
  %7595 = vmatprep.subr.bf16.mxu0 %v6990
  %7596 = vmatpush1.bf16.msra.mxu0 %v6989
  %7597 = vmatprep.subr.bf16.mxu0 %v6994
  %7598 = vmatpush1.bf16.msra.mxu0 %v6993
  %7599 = vmatprep.subr.bf16.mxu0 %v6998
  %7600 = vmatpush1.bf16.msra.mxu0 %v6997
  %7601 = vmatprep.subr.bf16.mxu0 %v7002
  %7602 = vmatpush1.bf16.msra.mxu0 %v7001
  %7603 = vmatprep.subr.bf16.mxu0 %v7006
  %7604 = vmatpush1.bf16.msra.mxu0 %v7005
  %7605 = vmatprep.mubr.bf16.mxu0 %v5766
  %7606 = vmatmul.mubr.bf16.gmra.mrb[0].mxu0 %v5765
  %v7607 = vpop.f32.mrb[0].mxu0
  %v7608 = vadd.f32 %v7567, %v7607
  %v7609 = vpop.f32.mrb[0].mxu0
  %v7610 = vadd.f32 %v7569, %v7609
  %v7611 = vpop.f32.mrb[0].mxu0
  %v7612 = vpop.f32.mrb[0].mxu0
  %7613 = vdwg.mxu0
  %7614 = vmatprep.subr.bf16.mxu0 %v7010
  %7615 = vmatpush1.bf16.msra.mxu0 %v7009
  %7616 = vmatprep.subr.bf16.mxu0 %v7014
  %7617 = vmatpush1.bf16.msra.mxu0 %v7013
  %7618 = vmatprep.subr.bf16.mxu0 %v7018
  %7619 = vmatpush1.bf16.msra.mxu0 %v7017
  %7620 = vmatprep.subr.bf16.mxu0 %v7022
  %7621 = vmatpush1.bf16.msra.mxu0 %v7021
  %7622 = vmatprep.subr.bf16.mxu0 %v7026
  %7623 = vmatpush1.bf16.msra.mxu0 %v7025
  %7624 = vmatprep.subr.bf16.mxu0 %v7030
  %7625 = vmatpush1.bf16.msra.mxu0 %v7029
  %7626 = vmatprep.subr.bf16.mxu0 %v7034
  %7627 = vmatpush1.bf16.msra.mxu0 %v7033
  %7628 = vmatprep.subr.bf16.mxu0 %v7038
  %7629 = vmatpush1.bf16.msra.mxu0 %v7037
  %7630 = vmatprep.subr.bf16.mxu0 %v7042
  %7631 = vmatpush1.bf16.msra.mxu0 %v7041
  %7632 = vmatprep.subr.bf16.mxu0 %v7046
  %7633 = vmatpush1.bf16.msra.mxu0 %v7045
  %7634 = vmatprep.subr.bf16.mxu0 %v7050
  %7635 = vmatpush1.bf16.msra.mxu0 %v7049
  %7636 = vmatprep.subr.bf16.mxu0 %v7054
  %7637 = vmatpush1.bf16.msra.mxu0 %v7053
  %7638 = vmatprep.subr.bf16.mxu0 %v7058
  %7639 = vmatpush1.bf16.msra.mxu0 %v7057
  %7640 = vmatprep.subr.bf16.mxu0 %v7062
  %7641 = vmatpush1.bf16.msra.mxu0 %v7061
  %7642 = vmatprep.subr.bf16.mxu0 %v7066
  %7643 = vmatpush1.bf16.msra.mxu0 %v7065
  %7644 = vmatprep.subr.bf16.mxu0 %v7070
  %7645 = vmatpush1.bf16.msra.mxu0 %v7069
  %7646 = vmatprep.mubr.bf16.mxu0 %v5768
  %7647 = vmatmul.mubr.bf16.gmra.mrb[0].mxu0 %v5767
  %v7648 = vpop.f32.mrb[0].mxu0
  %v7649 = vadd.f32 %v7608, %v7648
  %v7650 = vpop.f32.mrb[0].mxu0
  %v7651 = vadd.f32 %v7610, %v7650
  %v7652 = vpop.f32.mrb[0].mxu0
  %v7653 = vpop.f32.mrb[0].mxu0
  %7654 = vdwg.mxu0
  %v7655 = vmax.f32 %v7485, 0.0
  %v7656 = vmax.f32 %v7487, 0.0
  %v7657 = vmax.f32 %v7649, 0.0
  %v7658 = vmax.f32 %v7651, 0.0
  %v7659 = vpack.c.bf16 %v7655, %v7655
  %v7660 = vpack.c.bf16 %v7656, %v7656
  %v7661 = vpack.c.bf16 %v7657, %v7657
  %v7662 = vpack.c.bf16 %v7658, %v7658
  %v7663 = vld [vmem:[%s5] sm:$0xf]
  %v7664 = vld [vmem:[%s5 + $0x4] sm:$0xf]
  %v7665 = vld [vmem:[%s5 + $0x8] sm:$0xf]
  %v7666 = vld [vmem:[%s5 + $0xc] sm:$0xf]
  %v7667 = vld [vmem:[%s5 + $0x10] sm:$0xf]
  %v7668 = vld [vmem:[%s5 + $0x14] sm:$0xf]
  %v7669 = vld [vmem:[%s5 + $0x18] sm:$0xf]
  %v7670 = vld [vmem:[%s5 + $0x1c] sm:$0xf]
  %v7671 = vld [vmem:[%s5 + $0x20] sm:$0xf]
  %v7672 = vld [vmem:[%s5 + $0x24] sm:$0xf]
  %v7673 = vld [vmem:[%s5 + $0x28] sm:$0xf]
  %v7674 = vld [vmem:[%s5 + $0x2c] sm:$0xf]
  %v7675 = vld [vmem:[%s5 + $0x30] sm:$0xf]
  %v7676 = vld [vmem:[%s5 + $0x34] sm:$0xf]
  %v7677 = vld [vmem:[%s5 + $0x38] sm:$0xf]
  %v7678 = vld [vmem:[%s5 + $0x3c] sm:$0xf]
  %v7679 = vld [vmem:[%s5 + $0x40] sm:$0xf]
  %v7680 = vld [vmem:[%s5 + $0x44] sm:$0xf]
  %v7681 = vld [vmem:[%s5 + $0x48] sm:$0xf]
  %v7682 = vld [vmem:[%s5 + $0x4c] sm:$0xf]
  %v7683 = vld [vmem:[%s5 + $0x50] sm:$0xf]
  %v7684 = vld [vmem:[%s5 + $0x54] sm:$0xf]
  %v7685 = vld [vmem:[%s5 + $0x58] sm:$0xf]
  %v7686 = vld [vmem:[%s5 + $0x5c] sm:$0xf]
  %v7687 = vld [vmem:[%s5 + $0x60] sm:$0xf]
  %v7688 = vld [vmem:[%s5 + $0x64] sm:$0xf]
  %v7689 = vld [vmem:[%s5 + $0x68] sm:$0xf]
  %v7690 = vld [vmem:[%s5 + $0x6c] sm:$0xf]
  %v7691 = vld [vmem:[%s5 + $0x70] sm:$0xf]
  %v7692 = vld [vmem:[%s5 + $0x74] sm:$0xf]
  %v7693 = vld [vmem:[%s5 + $0x78] sm:$0xf]
  %v7694 = vld [vmem:[%s5 + $0x7c] sm:$0xf]
  %v7695 = vld [vmem:[%s5 + $0x80] sm:$0xf]
  %v7696 = vld [vmem:[%s5 + $0x84] sm:$0xf]
  %v7697 = vld [vmem:[%s5 + $0x88] sm:$0xf]
  %v7698 = vld [vmem:[%s5 + $0x8c] sm:$0xf]
  %v7699 = vld [vmem:[%s5 + $0x90] sm:$0xf]
  %v7700 = vld [vmem:[%s5 + $0x94] sm:$0xf]
  %v7701 = vld [vmem:[%s5 + $0x98] sm:$0xf]
  %v7702 = vld [vmem:[%s5 + $0x9c] sm:$0xf]
  %v7703 = vld [vmem:[%s5 + $0xa0] sm:$0xf]
  %v7704 = vld [vmem:[%s5 + $0xa4] sm:$0xf]
  %v7705 = vld [vmem:[%s5 + $0xa8] sm:$0xf]
  %v7706 = vld [vmem:[%s5 + $0xac] sm:$0xf]
  %v7707 = vld [vmem:[%s5 + $0xb0] sm:$0xf]
  %v7708 = vld [vmem:[%s5 + $0xb4] sm:$0xf]
  %v7709 = vld [vmem:[%s5 + $0xb8] sm:$0xf]
  %v7710 = vld [vmem:[%s5 + $0xbc] sm:$0xf]
  %v7711 = vld [vmem:[%s5 + $0xc0] sm:$0xf]
  %v7712 = vld [vmem:[%s5 + $0xc4] sm:$0xf]
  %v7713 = vld [vmem:[%s5 + $0xc8] sm:$0xf]
  %v7714 = vld [vmem:[%s5 + $0xcc] sm:$0xf]
  %v7715 = vld [vmem:[%s5 + $0xd0] sm:$0xf]
  %v7716 = vld [vmem:[%s5 + $0xd4] sm:$0xf]
  %v7717 = vld [vmem:[%s5 + $0xd8] sm:$0xf]
  %v7718 = vld [vmem:[%s5 + $0xdc] sm:$0xf]
  %v7719 = vld [vmem:[%s5 + $0xe0] sm:$0xf]
  %v7720 = vld [vmem:[%s5 + $0xe4] sm:$0xf]
  %v7721 = vld [vmem:[%s5 + $0xe8] sm:$0xf]
  %v7722 = vld [vmem:[%s5 + $0xec] sm:$0xf]
  %v7723 = vld [vmem:[%s5 + $0xf0] sm:$0xf]
  %v7724 = vld [vmem:[%s5 + $0xf4] sm:$0xf]
  %v7725 = vld [vmem:[%s5 + $0xf8] sm:$0xf]
  %v7726 = vld [vmem:[%s5 + $0xfc] sm:$0xf]
  %v7727 = vld [vmem:[%s6] sm:$0x1]
  %v7729 = vlaneseq
  %v7730 = vshrl.u32 %v7729, 7
  %v7731 = vsub.s32 0, %v7730
  %v7732 = vrot.slane %v7727, %v7731
  %v7798 = vunpack.c.l.b16 %v7663
  %v7799 = vunpack.c.l.b16 %v7664
  %v7800 = vunpack.c.l.b16 %v7665
  %v7801 = vunpack.c.l.b16 %v7666
  %v7802 = vunpack.c.l.b16 %v7667
  %v7803 = vunpack.c.l.b16 %v7668
  %v7804 = vunpack.c.l.b16 %v7669
  %v7805 = vunpack.c.l.b16 %v7670
  %v7806 = vunpack.c.l.b16 %v7671
  %v7807 = vunpack.c.l.b16 %v7672
  %v7808 = vunpack.c.l.b16 %v7673
  %v7809 = vunpack.c.l.b16 %v7674
  %v7810 = vunpack.c.l.b16 %v7675
  %v7811 = vunpack.c.l.b16 %v7676
  %v7812 = vunpack.c.l.b16 %v7677
  %v7813 = vunpack.c.l.b16 %v7678
  %v7814 = vunpack.c.l.b16 %v7679
  %v7815 = vunpack.c.l.b16 %v7680
  %v7816 = vunpack.c.l.b16 %v7681
  %v7817 = vunpack.c.l.b16 %v7682
  %v7818 = vunpack.c.l.b16 %v7683
  %v7819 = vunpack.c.l.b16 %v7684
  %v7820 = vunpack.c.l.b16 %v7685
  %v7821 = vunpack.c.l.b16 %v7686
  %v7822 = vunpack.c.l.b16 %v7687
  %v7823 = vunpack.c.l.b16 %v7688
  %v7824 = vunpack.c.l.b16 %v7689
  %v7825 = vunpack.c.l.b16 %v7690
  %v7826 = vunpack.c.l.b16 %v7691
  %v7827 = vunpack.c.l.b16 %v7692
  %v7828 = vunpack.c.l.b16 %v7693
  %v7829 = vunpack.c.l.b16 %v7694
  %v7830 = vunpack.c.l.b16 %v7695
  %v7831 = vunpack.c.l.b16 %v7696
  %v7832 = vunpack.c.l.b16 %v7697
  %v7833 = vunpack.c.l.b16 %v7698
  %v7834 = vunpack.c.l.b16 %v7699
  %v7835 = vunpack.c.l.b16 %v7700
  %v7836 = vunpack.c.l.b16 %v7701
  %v7837 = vunpack.c.l.b16 %v7702
  %v7838 = vunpack.c.l.b16 %v7703
  %v7839 = vunpack.c.l.b16 %v7704
  %v7840 = vunpack.c.l.b16 %v7705
  %v7841 = vunpack.c.l.b16 %v7706
  %v7842 = vunpack.c.l.b16 %v7707
  %v7843 = vunpack.c.l.b16 %v7708
  %v7844 = vunpack.c.l.b16 %v7709
  %v7845 = vunpack.c.l.b16 %v7710
  %v7846 = vunpack.c.l.b16 %v7711
  %v7847 = vunpack.c.l.b16 %v7712
  %v7848 = vunpack.c.l.b16 %v7713
  %v7849 = vunpack.c.l.b16 %v7714
  %v7850 = vunpack.c.l.b16 %v7715
  %v7851 = vunpack.c.l.b16 %v7716
  %v7852 = vunpack.c.l.b16 %v7717
  %v7853 = vunpack.c.l.b16 %v7718
  %v7854 = vunpack.c.l.b16 %v7719
  %v7855 = vunpack.c.l.b16 %v7720
  %v7856 = vunpack.c.l.b16 %v7721
  %v7857 = vunpack.c.l.b16 %v7722
  %v7858 = vunpack.c.l.b16 %v7723
  %v7859 = vunpack.c.l.b16 %v7724
  %v7860 = vunpack.c.l.b16 %v7725
  %v7861 = vunpack.c.l.b16 %v7726
  %v7862 = vpack.c.b16 %v7799, %v7798
  %v7863 = vpack.c.b16 %v7801, %v7800
  %v7864 = vpack.c.b16 %v7803, %v7802
  %v7865 = vpack.c.b16 %v7805, %v7804
  %v7866 = vpack.c.b16 %v7807, %v7806
  %v7867 = vpack.c.b16 %v7809, %v7808
  %v7868 = vpack.c.b16 %v7811, %v7810
  %v7869 = vpack.c.b16 %v7813, %v7812
  %v7870 = vpack.c.b16 %v7815, %v7814
  %v7871 = vpack.c.b16 %v7817, %v7816
  %v7872 = vpack.c.b16 %v7819, %v7818
  %v7873 = vpack.c.b16 %v7821, %v7820
  %v7874 = vpack.c.b16 %v7823, %v7822
  %v7875 = vpack.c.b16 %v7825, %v7824
  %v7876 = vpack.c.b16 %v7827, %v7826
  %v7877 = vpack.c.b16 %v7829, %v7828
  %v7878 = vpack.c.b16 %v7831, %v7830
  %v7879 = vpack.c.b16 %v7833, %v7832
  %v7880 = vpack.c.b16 %v7835, %v7834
  %v7881 = vpack.c.b16 %v7837, %v7836
  %v7882 = vpack.c.b16 %v7839, %v7838
  %v7883 = vpack.c.b16 %v7841, %v7840
  %v7884 = vpack.c.b16 %v7843, %v7842
  %v7885 = vpack.c.b16 %v7845, %v7844
  %v7886 = vpack.c.b16 %v7847, %v7846
  %v7887 = vpack.c.b16 %v7849, %v7848
  %v7888 = vpack.c.b16 %v7851, %v7850
  %v7889 = vpack.c.b16 %v7853, %v7852
  %v7890 = vpack.c.b16 %v7855, %v7854
  %v7891 = vpack.c.b16 %v7857, %v7856
  %v7892 = vpack.c.b16 %v7859, %v7858
  %v7893 = vpack.c.b16 %v7861, %v7860
  %7926 = vmatprep.subr.bf16.mxu0 0
  %7927 = vmatpush1.bf16.msra.mxu0 %v7862
  %7928 = vmatprep.subr.bf16.mxu0 0
  %7929 = vmatpush1.bf16.msra.mxu0 %v7863
  %7930 = vmatprep.subr.bf16.mxu0 0
  %7931 = vmatpush1.bf16.msra.mxu0 %v7864
  %7932 = vmatprep.subr.bf16.mxu0 0
  %7933 = vmatpush1.bf16.msra.mxu0 %v7865
  %7934 = vmatprep.subr.bf16.mxu0 0
  %7935 = vmatpush1.bf16.msra.mxu0 %v7866
  %7936 = vmatprep.subr.bf16.mxu0 0
  %7937 = vmatpush1.bf16.msra.mxu0 %v7867
  %7938 = vmatprep.subr.bf16.mxu0 0
  %7939 = vmatpush1.bf16.msra.mxu0 %v7868
  %7940 = vmatprep.subr.bf16.mxu0 0
  %7941 = vmatpush1.bf16.msra.mxu0 %v7869
  %7942 = vmatprep.subr.bf16.mxu0 0
  %7943 = vmatpush1.bf16.msra.mxu0 %v7870
  %7944 = vmatprep.subr.bf16.mxu0 0
  %7945 = vmatpush1.bf16.msra.mxu0 %v7871
  %7946 = vmatprep.subr.bf16.mxu0 0
  %7947 = vmatpush1.bf16.msra.mxu0 %v7872
  %7948 = vmatprep.subr.bf16.mxu0 0
  %7949 = vmatpush1.bf16.msra.mxu0 %v7873
  %7950 = vmatprep.subr.bf16.mxu0 0
  %7951 = vmatpush1.bf16.msra.mxu0 %v7874
  %7952 = vmatprep.subr.bf16.mxu0 0
  %7953 = vmatpush1.bf16.msra.mxu0 %v7875
  %7954 = vmatprep.subr.bf16.mxu0 0
  %7955 = vmatpush1.bf16.msra.mxu0 %v7876
  %7956 = vmatprep.subr.bf16.mxu0 0
  %7957 = vmatpush1.bf16.msra.mxu0 %v7877
  %7958 = vmatprep.mubr.bf16.mxu0 %v7660
  %7959 = vmatmul.mubr.bf16.gmra.mrb[0].mxu0 %v7659
  %v7960 = vpop.f32.mrb[0].mxu0
  %v7961 = vadd.f32 %v7732, %v7960
  %v7962 = vpop.f32.mrb[0].mxu0
  %v7963 = vpop.f32.mrb[0].mxu0
  %v7964 = vpop.f32.mrb[0].mxu0
  %7965 = vdwg.mxu0
  %7966 = vmatprep.subr.bf16.mxu0 0
  %7967 = vmatpush1.bf16.msra.mxu0 %v7878
  %7968 = vmatprep.subr.bf16.mxu0 0
  %7969 = vmatpush1.bf16.msra.mxu0 %v7879
  %7970 = vmatprep.subr.bf16.mxu0 0
  %7971 = vmatpush1.bf16.msra.mxu0 %v7880
  %7972 = vmatprep.subr.bf16.mxu0 0
  %7973 = vmatpush1.bf16.msra.mxu0 %v7881
  %7974 = vmatprep.subr.bf16.mxu0 0
  %7975 = vmatpush1.bf16.msra.mxu0 %v7882
  %7976 = vmatprep.subr.bf16.mxu0 0
  %7977 = vmatpush1.bf16.msra.mxu0 %v7883
  %7978 = vmatprep.subr.bf16.mxu0 0
  %7979 = vmatpush1.bf16.msra.mxu0 %v7884
  %7980 = vmatprep.subr.bf16.mxu0 0
  %7981 = vmatpush1.bf16.msra.mxu0 %v7885
  %7982 = vmatprep.subr.bf16.mxu0 0
  %7983 = vmatpush1.bf16.msra.mxu0 %v7886
  %7984 = vmatprep.subr.bf16.mxu0 0
  %7985 = vmatpush1.bf16.msra.mxu0 %v7887
  %7986 = vmatprep.subr.bf16.mxu0 0
  %7987 = vmatpush1.bf16.msra.mxu0 %v7888
  %7988 = vmatprep.subr.bf16.mxu0 0
  %7989 = vmatpush1.bf16.msra.mxu0 %v7889
  %7990 = vmatprep.subr.bf16.mxu0 0
  %7991 = vmatpush1.bf16.msra.mxu0 %v7890
  %7992 = vmatprep.subr.bf16.mxu0 0
  %7993 = vmatpush1.bf16.msra.mxu0 %v7891
  %7994 = vmatprep.subr.bf16.mxu0 0
  %7995 = vmatpush1.bf16.msra.mxu0 %v7892
  %7996 = vmatprep.subr.bf16.mxu0 0
  %7997 = vmatpush1.bf16.msra.mxu0 %v7893
  %7998 = vmatprep.mubr.bf16.mxu0 %v7662
  %7999 = vmatmul.mubr.bf16.gmra.mrb[0].mxu0 %v7661
  %v8000 = vpop.f32.mrb[0].mxu0
  %v8001 = vadd.f32 %v7961, %v8000
  %v8002 = vpop.f32.mrb[0].mxu0
  %v8003 = vpop.f32.mrb[0].mxu0
  %v8004 = vpop.f32.mrb[0].mxu0
  %8005 = vdwg.mxu0
  %v8006 = vmax.f32 %v8001, 0.0
  %v8015 = vcombine.low %v5753, %v5754
  %v8016 = vcombine.low %v5755, %v5756
  %v8018 = vunpack.c.l.s4 1983009808
  %v8019 = vunpack.c.0.s8 %v8018
  %v8020 = vlaneseq
  %v8021 = vshrl.u32 %v8020, 7
  %v8022 = vsub.s32 %v8019, %v8021
  %v8023 = vrot.slane %v8015, %v8022
  %v8025 = vunpack.c.l.s4 1983009808
  %v8026 = vunpack.c.0.s8 %v8025
  %v8027 = vlaneseq
  %v8028 = vshrl.u32 %v8027, 7
  %v8029 = vsub.s32 %v8026, %v8028
  %v8030 = vrot.slane %v8016, %v8029
  %v8031 = vcombine.low %v8023, %v8030
  %v8032 = vcombine.low %v5757, %v5758
  %v8033 = vcombine.low %v5759, %v5760
  %v8035 = vunpack.c.l.s4 1983009808
  %v8036 = vunpack.c.0.s8 %v8035
  %v8037 = vlaneseq
  %v8038 = vshrl.u32 %v8037, 7
  %v8039 = vsub.s32 %v8036, %v8038
  %v8040 = vrot.slane %v8032, %v8039
  %v8042 = vunpack.c.l.s4 1983009808
  %v8043 = vunpack.c.0.s8 %v8042
  %v8044 = vlaneseq
  %v8045 = vshrl.u32 %v8044, 7
  %v8046 = vsub.s32 %v8043, %v8045
  %v8047 = vrot.slane %v8033, %v8046
  %v8048 = vcombine.low %v8040, %v8047
  %8051 = vst [vmem:[%s7] sm:$0xff] %v8031
  %8052 = vst [vmem:[%s7 + $0x8] sm:$0xff] %v8048
  %v8057 = vcombine.low %v7655, %v7656
  %v8058 = vcombine.low %v7657, %v7658
  %v8060 = vunpack.c.l.s4 1983009808
  %v8061 = vunpack.c.0.s8 %v8060
  %v8062 = vlaneseq
  %v8063 = vshrl.u32 %v8062, 7
  %v8064 = vsub.s32 %v8061, %v8063
  %v8065 = vrot.slane %v8057, %v8064
  %v8067 = vunpack.c.l.s4 1983009808
  %v8068 = vunpack.c.0.s8 %v8067
  %v8069 = vlaneseq
  %v8070 = vshrl.u32 %v8069, 7
  %v8071 = vsub.s32 %v8068, %v8070
  %v8072 = vrot.slane %v8058, %v8071
  %v8073 = vcombine.low %v8065, %v8072
  %8075 = vst [vmem:[%s8] sm:$0xff] %v8073
  %8076 = vst [vmem:[%s9] sm:$0x3] %v8006
  // Predicated region
  $region30: #{cnn_features_forward.1} parent=0 // pred_check
    _
  $region31: #{cnn_features_forward.1} parent=0 // pred_check_branch
    %8078 = sbr.rel (0) target = $region33
  $region32: #{cnn_features_forward.1} parent=0 // pred_region
    _
  $region33: #{cnn_features_forward.1} parent=0 // pred_fallthru
    _
  // Predicated region
  $region34: #{cnn_features_forward.1} parent=0 // pred_check
    _
  $region35: #{cnn_features_forward.1} parent=0 // pred_check_branch
    %8080 = sbr.rel (0) target = $region37
  $region36: #{cnn_features_forward.1} parent=0 // pred_region
    _
  $region37: #{cnn_features_forward.1} parent=0 // pred_fallthru
    _
  // Predicated region
  $region38: #{cnn_features_forward.1} parent=0 // pred_check
    _
  $region39: #{cnn_features_forward.1} parent=0 // pred_check_branch
    %8082 = sbr.rel (0) target = $region41
  $region40: #{cnn_features_forward.1} parent=0 // pred_region
    _
  $region41: #{cnn_features_forward.1} parent=0 // pred_fallthru
    _
  // Predicated region
  $region42: #{cnn_features_forward.1} parent=0 // pred_check
    _
  $region43: #{cnn_features_forward.1} parent=0 // pred_check_branch
    %8084 = sbr.rel (0) target = $region45
  $region44: #{cnn_features_forward.1} parent=0 // pred_region
    _
  $region45: #{cnn_features_forward.1} parent=0 // pred_fallthru
    _
  // Predicated region
  $region46: #{cnn_features_forward.1} parent=0 // pred_check
    _
  $region47: #{cnn_features_forward.1} parent=0 // pred_check_branch
    %8086 = sbr.rel (0) target = $region49
  $region48: #{cnn_features_forward.1} parent=0 // pred_region
    _
  $region49: #{cnn_features_forward.1} parent=0 // pred_fallthru
    _
  // Predicated region
  $region50: #{cnn_features_forward.1} parent=0 // pred_check
    _
  $region51: #{cnn_features_forward.1} parent=0 // pred_check_branch
    %8088 = sbr.rel (0) target = $region53
  $region52: #{cnn_features_forward.1} parent=0 // pred_region
    _
  $region53: #{cnn_features_forward.1} parent=0 // pred_fallthru
    _

</llo_original>
